<compile_context>
chip_gen: v6e
topology: v6e:2x2x1
jax: 0.10.0
libtpu: 0.0.40
codegen_flags: <defaults>
</compile_context>

<pallas_src>
import jax
import jax.numpy as jnp
from jax import lax
from jax.experimental import pallas as pl
from jax.experimental.pallas import tpu as pltpu

# ----------------------------- problem sizes --------------------------------
L = 8                     # sequence length
IN = 9                    # input features (9 engineered features)
INP = 16                  # input features zero-padded to 16 lanes
H = 32                    # hidden_size
O = 1                     # output_size
NUM_LAYERS = 2            # transformer encoder layers
NH = 8                    # nhead
HD = H // NH              # head dim

BS = 8                    # sequences processed per grid step
TOK = BS * L              # tokens per grid step      = 64
RT = BS * NH * L          # stacked (seq, head, tok)  = 512

SCALE = 1.0 / float(HD) ** 0.5
_SQRT2_INV = 0.7071067811865476
NEG_BIG = -1e30


def _round8(n):
    return ((n + 7) // 8) * 8


def _round16(n):
    return ((n + 15) // 16) * 16


# ----------------------- parameter spec (consumption order) ------------------
def _param_specs():
    specs = []

    def lin(fin, fout):
        specs.append(((fin, fout), "w"))
        specs.append(((1, fout), "b"))

    def ln():
        specs.append(((1, H), "ln_g"))
        specs.append(((1, H), "ln_b"))

    lin(IN, H)                                 # input_proj
    lin(H, 2 * H); lin(2 * H, H)               # pos_encoder (Linear, GELU, Linear)
    ln()                                       # norm1
    for _ in range(NUM_LAYERS):                # post-norm encoder layers
        lin(H, H); lin(H, H); lin(H, H)        # self_attn Wq, Wk, Wv
        lin(H, H)                              # self_attn out_proj
        ln()                                   # layer norm1
        lin(H, 4 * H); lin(4 * H, H)           # feed-forward (GELU activation)
        ln()                                   # layer norm2
    lin(H, H); lin(H, H); lin(H, H)            # extra attention Wq, Wk, Wv
    lin(H, H)                                  # extra attention out_proj
    ln()                                       # norm2
    lin(H, H); lin(H, H // 2); lin(H // 2, O)  # fc1, fc2, fc3
    return specs


PARAM_SPECS = _param_specs()


# ----------------------- dense (lane-packed) slab layout ---------------------
def _build_layout(specs):
    """Shelf-pack weight matrices: several matrices per 128-lane row band.

    Returns entries (kind, row0, lane0, rows_padded, rows, cols).  Weight row
    bands are 16-row multiples so bf16 sublane tiles stay aligned; bias /
    LayerNorm rows get one f32 row each in the V slab.
    """
    shelves = []            # {"h": height, "lanes": used}
    by_height = {}
    tmp = []
    vrow = 0
    for (rows, cols), kind in specs:
        if kind == "w":
            hpad = _round16(rows)
            placed = None
            for si in by_height.get(hpad, []):
                if shelves[si]["lanes"] + cols <= 128:
                    placed = si
                    break
            if placed is None:
                placed = len(shelves)
                shelves.append({"h": hpad, "lanes": 0})
                by_height.setdefault(hpad, []).append(placed)
            lane0 = shelves[placed]["lanes"]
            shelves[placed]["lanes"] += cols
            tmp.append(("w", placed, lane0, hpad, rows, cols))
        else:
            tmp.append(("v", vrow, 0, 1, 1, cols))
            vrow += 1

    row0s, r = [], 0
    for sh in shelves:
        row0s.append(r)
        r += sh["h"]
    w_rows = max(_round16(r), 16)
    v_rows = max(_round8(vrow), 8)

    layout = []
    for ent in tmp:
        if ent[0] == "w":
            _, si, lane0, hpad, rows, cols = ent
            layout.append(("w", row0s[si], lane0, hpad, rows, cols))
        else:
            layout.append(ent)
    return layout, w_rows, v_rows


LAYOUT, W_ROWS, V_ROWS = _build_layout(PARAM_SPECS)


def init_params(key):
    """Deterministic synthetic weights in exact kernel consumption order."""
    params = []
    fan_in = 1
    for i, (shape, kind) in enumerate(PARAM_SPECS):
        k = jax.random.fold_in(key, i)
        if kind == "w":
            fan_in = shape[0]
            s = float(fan_in) ** -0.5
            params.append(jax.random.uniform(k, shape, jnp.float32, -s, s))
        elif kind == "b":
            s = float(fan_in) ** -0.5
            params.append(jax.random.uniform(k, shape, jnp.float32, -s, s))
        elif kind == "ln_g":
            params.append(jnp.ones(shape, jnp.float32))
        else:
            params.append(jnp.zeros(shape, jnp.float32))
    return params


def pack_params(params):
    """Pack parameters into a dense bf16 weight slab + small f32 bias slab."""
    w = jnp.zeros((W_ROWS, 128), jnp.float32)
    v = jnp.zeros((V_ROWS, 128), jnp.float32)
    for p, (kind, r0, c0, _hpad, rows, cols) in zip(params, LAYOUT):
        p = jnp.asarray(p, jnp.float32).reshape(rows, cols)
        if kind == "w":
            w = w.at[r0:r0 + rows, c0:c0 + cols].set(p)
        else:
            v = v.at[r0:r0 + 1, :cols].set(p)
    return w.astype(jnp.bfloat16), v


def attention_constants():
    """Static head-batching selector / mask matrices (built once, resident)."""
    r = jnp.arange(RT)
    c = jnp.arange(TOK)
    b_r = r // (NH * L)
    h_r = (r // L) % NH
    i_r = r % L
    b_c = c // L
    i_c = c % L
    same_batch = b_r[:, None] == b_c[None, :]
    r_rep = (same_batch & (i_r[:, None] == i_c[None, :])).astype(jnp.bfloat16)
    batch_bias = jnp.where(same_batch, 0.0, NEG_BIG).astype(jnp.float32)
    lanes = jnp.arange(H)
    head_mask = (h_r[:, None] == (lanes[None, :] // HD)).astype(jnp.bfloat16)
    t = jnp.arange(TOK)
    p_collapse = ((b_r[None, :] == (t[:, None] // L)) &
                  (i_r[None, :] == (t[:, None] % L))).astype(jnp.bfloat16)
    return r_rep, batch_bias, head_mask, p_collapse


# ------------------------------ the kernel -----------------------------------
def model_kernel(x_ref, w_ref, v_ref, rrep_ref, bbias_ref, hmask_ref,
                 pcol_ref, out_ref):
    f32 = jnp.float32
    bf16 = jnp.bfloat16

    lay = iter(LAYOUT)

    def nxt():
        kind, r0, c0, hpad, _rows, cols = next(lay)
        if kind == "w":
            return w_ref[r0:r0 + hpad, c0:c0 + cols]       # bf16, aligned slot
        return v_ref[r0:r0 + 1, :cols]                     # f32 bias / LN row

    def matmul(a, b):
        return jnp.dot(a.astype(bf16), b.astype(bf16),
                       preferred_element_type=f32)

    def matmul_t(a, b):                                    # a @ b.T
        return lax.dot_general(a.astype(bf16), b.astype(bf16),
                               (((1,), (1,)), ((), ())),
                               preferred_element_type=f32)

    def linear(a):
        w = nxt()
        bias = nxt()
        return matmul(a, w) + bias

    def erf(z):
        # Abramowitz & Stegun 7.1.26, exact f32 divide (correctness feedback).
        a1, a2, a3, a4, a5 = (0.254829592, -0.284496736, 1.421413741,
                              -1.453152027, 1.061405429)
        pc = 0.3275911
        az = jnp.abs(z)
        t = 1.0 / (1.0 + pc * az)
        poly = ((((a5 * t + a4) * t + a3) * t + a2) * t + a1) * t
        y = 1.0 - poly * jnp.exp(-az * az)
        return jnp.where(z >= 0, y, -y)

    def gelu(z):
        return 0.5 * z * (1.0 + erf(z * _SQRT2_INV))

    def layernorm(z, eps=1e-5):
        g = nxt()
        bb = nxt()
        mu = jnp.mean(z, axis=-1, keepdims=True)
        ms = jnp.mean(z * z, axis=-1, keepdims=True)       # independent reductions
        var = ms - mu * mu
        return (z - mu) * lax.rsqrt(var + eps) * g + bb

    def mha(hcur):
        """torch.nn.MultiheadAttention(H, NH, batch_first=True) self-attention,
        fully head-batched via the resident selector matrices."""
        wq, bq = nxt(), nxt()
        wk, bk = nxt(), nxt()
        wv, bv = nxt(), nxt()
        q = (matmul(hcur, wq) + bq) * SCALE
        k = matmul(hcur, wk) + bk
        v = matmul(hcur, wv) + bv

        hmask = hmask_ref[...].astype(f32)                 # (RT, H)
        q_stack = matmul(rrep_ref[...], q) * hmask         # (RT, H)
        s = matmul_t(q_stack, k) + bbias_ref[...]          # (RT, TOK)
        s = s - jnp.max(s, axis=-1, keepdims=True)
        e = jnp.exp(s)
        att = e / jnp.sum(e, axis=-1, keepdims=True)       # exact divide

        ctx = matmul(att, v) * hmask                       # (RT, H)
        ctx = matmul(pcol_ref[...], ctx)                   # (TOK, H)

        wo, bo = nxt(), nxt()
        return matmul(ctx, wo) + bo

    # static "last token of each sequence" selector (tiny; built in-kernel)
    b4 = lax.broadcasted_iota(jnp.int32, (BS, TOK), 0)
    t4 = lax.broadcasted_iota(jnp.int32, (BS, TOK), 1)
    last_tok = (t4 == b4 * L + (L - 1)).astype(f32)

    # ------------------------------ forward ---------------------------------
    x = x_ref[...]                                         # (TOK, INP) bf16

    h = linear(x)                                          # input_proj
    pos = gelu(linear(h))                                  # pos_encoder L1+GELU
    pos = linear(pos)                                      # pos_encoder L2
    h = layernorm(h + pos)                                 # norm1

    for _ in range(NUM_LAYERS):                            # post-norm encoder
        sa = mha(h)
        h = layernorm(h + sa)
        ff = gelu(linear(h))
        ff = linear(ff)
        h = layernorm(h + ff)

    t_out = h                                              # transformer_out
    attn = mha(t_out)                                      # extra attention

    feats = matmul(last_tok, attn + t_out)                 # last-token gather
    feats = layernorm(feats)                               # norm2

    y = gelu(linear(feats))                                # fc1 + GELU
    y = gelu(linear(y))                                    # fc2 + GELU
    out = linear(y)                                        # fc3 -> (BS, 1)

    assert next(lay, None) is None, "parameter layout / consumption mismatch"
    out_ref[...] = out.astype(out_ref.dtype)


# ------------------------------- wrapper --------------------------------------
@jax.jit
def forward(x, w_slab, v_slab, r_rep, batch_bias, head_mask, p_collapse):
    """x: (batch, L, IN) float32 -> (batch, O) float32."""
    batch = x.shape[0]
    bpad = -(-batch // BS) * BS
    xp = jnp.zeros((bpad, L, INP), jnp.float32)
    xp = xp.at[:batch, :, :IN].set(x)                      # explicit zero pads
    x2 = xp.reshape(bpad * L, INP).astype(jnp.bfloat16)

    g = bpad // BS
    out = pl.pallas_call(
        model_kernel,
        out_shape=jax.ShapeDtypeStruct((bpad, O), jnp.float32),
        grid=(g,),
        in_specs=[
            pl.BlockSpec((TOK, INP), lambda i: (i, 0)),           # x (per step)
            pl.BlockSpec((W_ROWS, 128), lambda i: (0, 0)),        # weights (resident)
            pl.BlockSpec((V_ROWS, 128), lambda i: (0, 0)),        # biases  (resident)
            pl.BlockSpec((RT, TOK), lambda i: (0, 0)),            # r_rep
            pl.BlockSpec((RT, TOK), lambda i: (0, 0)),            # batch_bias
            pl.BlockSpec((RT, H), lambda i: (0, 0)),              # head_mask
            pl.BlockSpec((TOK, RT), lambda i: (0, 0)),            # p_collapse
        ],
        out_specs=pl.BlockSpec((BS, O), lambda i: (i, 0)),
        compiler_params=pltpu.CompilerParams(
            dimension_semantics=("parallel",)),
        cost_estimate=pl.CostEstimate(flops=30_000_000 * g,
                                      transcendentals=130_000 * g,
                                      bytes_accessed=450_000 + 6_000 * g),
    )(x2, w_slab, v_slab, r_rep, batch_bias, head_mask, p_collapse)
    return out[:batch]


if __name__ == "__main__":
    key = jax.random.PRNGKey(0)
    kx, kp = jax.random.split(key)

    BATCH = 16                                   # 2 grid steps of 8 sequences
    x = jax.random.normal(kx, (BATCH, L, IN), jnp.float32)

    params = init_params(kp)
    w_slab, v_slab = pack_params(params)
    consts = attention_constants()

    out = forward(x, w_slab, v_slab, *consts)
    jax.block_until_ready(out)
    assert out.shape == (BATCH, O), out.shape
    assert bool(jnp.all(jnp.isfinite(out)))
    print("KERNEL_OK")
</pallas_src>

<mosaic_0001>
module attributes {stable_mosaic.version = 11 : i64} {
  func.func @model_kernel(%arg0: i32, %arg1: memref<64x16xbf16, #tpu.memory_space<vmem>>, %arg2: memref<400x128xbf16, #tpu.memory_space<vmem>>, %arg3: memref<40x128xf32, #tpu.memory_space<vmem>>, %arg4: memref<512x64xbf16, #tpu.memory_space<vmem>>, %arg5: memref<512x64xf32, #tpu.memory_space<vmem>>, %arg6: memref<512x32xbf16, #tpu.memory_space<vmem>>, %arg7: memref<64x512xbf16, #tpu.memory_space<vmem>>, %arg8: memref<8x1xf32, #tpu.memory_space<vmem>>) attributes {dimension_semantics = [#tpu.dimension_semantics<parallel>], iteration_bounds = array<i64: 2>, scalar_prefetch = 0 : i64, scratch_operands = 0 : i64, tpu.core_type = #tpu.core_type<tc>, window_params = [{transform_indices = @transform_0, window_bounds = array<i64: 64, 16>}, {pipeline_mode = #tpu.pipeline_mode<synchronous>, transform_indices = @transform_1, window_bounds = array<i64: 400, 128>}, {pipeline_mode = #tpu.pipeline_mode<synchronous>, transform_indices = @transform_2, window_bounds = array<i64: 40, 128>}, {pipeline_mode = #tpu.pipeline_mode<synchronous>, transform_indices = @transform_3, window_bounds = array<i64: 512, 64>}, {pipeline_mode = #tpu.pipeline_mode<synchronous>, transform_indices = @transform_4, window_bounds = array<i64: 512, 64>}, {pipeline_mode = #tpu.pipeline_mode<synchronous>, transform_indices = @transform_5, window_bounds = array<i64: 512, 32>}, {pipeline_mode = #tpu.pipeline_mode<synchronous>, transform_indices = @transform_6, window_bounds = array<i64: 64, 512>}, {transform_indices = @transform_7, window_bounds = array<i64: 8, 1>}]} {
    %0 = tpu.iota {dimensions = array<i32: 0>} : vector<8x64xi32>
    %1 = tpu.iota {dimensions = array<i32: 1>} : vector<8x64xi32>
    %c8_i32 = arith.constant 8 : i32
    %2 = vector.broadcast %c8_i32 : i32 to vector<8x64xi32>
    %3 = arith.muli %0, %2 : vector<8x64xi32>
    %c7_i32 = arith.constant 7 : i32
    %4 = vector.broadcast %c7_i32 : i32 to vector<8x64xi32>
    %5 = arith.addi %3, %4 : vector<8x64xi32>
    %6 = arith.cmpi eq, %1, %5 : vector<8x64xi32>
    %7 = arith.extui %6 : vector<8x64xi1> to vector<8x64xi32>
    %8 = arith.sitofp %7 : vector<8x64xi32> to vector<8x64xf32>
    %c0 = arith.constant 0 : index
    %c0_0 = arith.constant 0 : index
    %9 = vector.load %arg1[%c0, %c0_0] : memref<64x16xbf16, #tpu.memory_space<vmem>>, vector<64x16xbf16>
    %c0_1 = arith.constant 0 : index
    %c0_2 = arith.constant 0 : index
    %10 = vector.load %arg2[%c0_1, %c0_2] : memref<400x128xbf16, #tpu.memory_space<vmem>>, vector<16x32xbf16>
    %c0_3 = arith.constant 0 : index
    %c0_4 = arith.constant 0 : index
    %11 = vector.load %arg3[%c0_3, %c0_4] : memref<40x128xf32, #tpu.memory_space<vmem>>, vector<1x32xf32>
    %cst = arith.constant dense<0.000000e+00> : vector<64x32xf32>
    %12 = tpu.matmul %9, %10, %cst {dimension_numbers = #tpu.dot_dimension_numbers<[1], [0], [0], [1], [0, 0, 1, 1], [], []>} : vector<64x16xbf16>, vector<16x32xbf16>, vector<64x32xf32> -> vector<64x32xf32>
    %13 = vector.broadcast %11 : vector<1x32xf32> to vector<64x32xf32>
    %14 = arith.addf %12, %13 : vector<64x32xf32>
    %c16 = arith.constant 16 : index
    %c0_5 = arith.constant 0 : index
    %15 = vector.load %arg2[%c16, %c0_5] : memref<400x128xbf16, #tpu.memory_space<vmem>>, vector<32x64xbf16>
    %c1 = arith.constant 1 : index
    %c0_6 = arith.constant 0 : index
    %16 = vector.load %arg3[%c1, %c0_6] : memref<40x128xf32, #tpu.memory_space<vmem>>, vector<1x64xf32>
    %17 = arith.truncf %14 : vector<64x32xf32> to vector<64x32xbf16>
    %cst_7 = arith.constant dense<0.000000e+00> : vector<64x64xf32>
    %18 = tpu.matmul %17, %15, %cst_7 {dimension_numbers = #tpu.dot_dimension_numbers<[1], [0], [0], [1], [0, 0, 1, 1], [], []>} : vector<64x32xbf16>, vector<32x64xbf16>, vector<64x64xf32> -> vector<64x64xf32>
    %19 = vector.broadcast %16 : vector<1x64xf32> to vector<64x64xf32>
    %20 = arith.addf %18, %19 : vector<64x64xf32>
    %cst_8 = arith.constant 5.000000e-01 : f32
    %21 = vector.broadcast %cst_8 : f32 to vector<64x64xf32>
    %22 = arith.mulf %21, %20 : vector<64x64xf32>
    %cst_9 = arith.constant 0.707106769 : f32
    %23 = vector.broadcast %cst_9 : f32 to vector<64x64xf32>
    %24 = arith.mulf %20, %23 : vector<64x64xf32>
    %25 = math.absf %24 : vector<64x64xf32>
    %cst_10 = arith.constant 0.327591091 : f32
    %26 = vector.broadcast %cst_10 : f32 to vector<64x64xf32>
    %27 = arith.mulf %26, %25 : vector<64x64xf32>
    %cst_11 = arith.constant 1.000000e+00 : f32
    %28 = vector.broadcast %cst_11 : f32 to vector<64x64xf32>
    %29 = arith.addf %28, %27 : vector<64x64xf32>
    %cst_12 = arith.constant 1.000000e+00 : f32
    %30 = vector.broadcast %cst_12 : f32 to vector<64x64xf32>
    %31 = arith.divf %30, %29 : vector<64x64xf32>
    %cst_13 = arith.constant 1.06140542 : f32
    %32 = vector.broadcast %cst_13 : f32 to vector<64x64xf32>
    %33 = arith.mulf %32, %31 : vector<64x64xf32>
    %cst_14 = arith.constant -1.45315206 : f32
    %34 = vector.broadcast %cst_14 : f32 to vector<64x64xf32>
    %35 = arith.addf %33, %34 : vector<64x64xf32>
    %36 = arith.mulf %35, %31 : vector<64x64xf32>
    %cst_15 = arith.constant 1.42141378 : f32
    %37 = vector.broadcast %cst_15 : f32 to vector<64x64xf32>
    %38 = arith.addf %36, %37 : vector<64x64xf32>
    %39 = arith.mulf %38, %31 : vector<64x64xf32>
    %cst_16 = arith.constant -0.284496725 : f32
    %40 = vector.broadcast %cst_16 : f32 to vector<64x64xf32>
    %41 = arith.addf %39, %40 : vector<64x64xf32>
    %42 = arith.mulf %41, %31 : vector<64x64xf32>
    %cst_17 = arith.constant 0.254829586 : f32
    %43 = vector.broadcast %cst_17 : f32 to vector<64x64xf32>
    %44 = arith.addf %42, %43 : vector<64x64xf32>
    %45 = arith.mulf %44, %31 : vector<64x64xf32>
    %cst_18 = arith.constant 0.000000e+00 : f32
    %46 = vector.broadcast %cst_18 : f32 to vector<64x64xf32>
    %47 = arith.subf %46, %25 : vector<64x64xf32>
    %48 = arith.mulf %47, %25 : vector<64x64xf32>
    %49 = math.exp %48 : vector<64x64xf32>
    %50 = arith.mulf %45, %49 : vector<64x64xf32>
    %cst_19 = arith.constant 1.000000e+00 : f32
    %51 = vector.broadcast %cst_19 : f32 to vector<64x64xf32>
    %52 = arith.subf %51, %50 : vector<64x64xf32>
    %cst_20 = arith.constant 0.000000e+00 : f32
    %53 = vector.broadcast %cst_20 : f32 to vector<64x64xf32>
    %54 = arith.cmpf oge, %24, %53 : vector<64x64xf32>
    %cst_21 = arith.constant 0.000000e+00 : f32
    %55 = vector.broadcast %cst_21 : f32 to vector<64x64xf32>
    %56 = arith.subf %55, %52 : vector<64x64xf32>
    %57 = arith.select %54, %52, %56 : vector<64x64xi1>, vector<64x64xf32>
    %cst_22 = arith.constant 1.000000e+00 : f32
    %58 = vector.broadcast %cst_22 : f32 to vector<64x64xf32>
    %59 = arith.addf %58, %57 : vector<64x64xf32>
    %60 = arith.mulf %22, %59 : vector<64x64xf32>
    %c48 = arith.constant 48 : index
    %c0_23 = arith.constant 0 : index
    %61 = vector.load %arg2[%c48, %c0_23] : memref<400x128xbf16, #tpu.memory_space<vmem>>, vector<64x32xbf16>
    %c2 = arith.constant 2 : index
    %c0_24 = arith.constant 0 : index
    %62 = vector.load %arg3[%c2, %c0_24] : memref<40x128xf32, #tpu.memory_space<vmem>>, vector<1x32xf32>
    %63 = arith.truncf %60 : vector<64x64xf32> to vector<64x64xbf16>
    %cst_25 = arith.constant dense<0.000000e+00> : vector<64x32xf32>
    %64 = tpu.matmul %63, %61, %cst_25 {dimension_numbers = #tpu.dot_dimension_numbers<[1], [0], [0], [1], [0, 0, 1, 1], [], []>} : vector<64x64xbf16>, vector<64x32xbf16>, vector<64x32xf32> -> vector<64x32xf32>
    %65 = vector.broadcast %62 : vector<1x32xf32> to vector<64x32xf32>
    %66 = arith.addf %64, %65 : vector<64x32xf32>
    %67 = arith.addf %14, %66 : vector<64x32xf32>
    %c3 = arith.constant 3 : index
    %c0_26 = arith.constant 0 : index
    %68 = vector.load %arg3[%c3, %c0_26] : memref<40x128xf32, #tpu.memory_space<vmem>>, vector<1x32xf32>
    %c4 = arith.constant 4 : index
    %c0_27 = arith.constant 0 : index
    %69 = vector.load %arg3[%c4, %c0_27] : memref<40x128xf32, #tpu.memory_space<vmem>>, vector<1x32xf32>
    %cst_28 = arith.constant dense<0.000000e+00> : vector<64xf32>
    %70 = vector.multi_reduction <add>, %67, %cst_28 [1] : vector<64x32xf32> to vector<64xf32>
    %71 = vector.shape_cast %70 : vector<64xf32> to vector<64x1xf32>
    %cst_29 = arith.constant 3.200000e+01 : f32
    %72 = vector.broadcast %cst_29 : f32 to vector<64x1xf32>
    %73 = arith.divf %71, %72 : vector<64x1xf32>
    %74 = arith.mulf %67, %67 : vector<64x32xf32>
    %cst_30 = arith.constant dense<0.000000e+00> : vector<64xf32>
    %75 = vector.multi_reduction <add>, %74, %cst_30 [1] : vector<64x32xf32> to vector<64xf32>
    %76 = vector.shape_cast %75 : vector<64xf32> to vector<64x1xf32>
    %cst_31 = arith.constant 3.200000e+01 : f32
    %77 = vector.broadcast %cst_31 : f32 to vector<64x1xf32>
    %78 = arith.divf %76, %77 : vector<64x1xf32>
    %79 = arith.mulf %73, %73 : vector<64x1xf32>
    %80 = arith.subf %78, %79 : vector<64x1xf32>
    %81 = vector.broadcast %73 : vector<64x1xf32> to vector<64x32xf32>
    %82 = arith.subf %67, %81 : vector<64x32xf32>
    %cst_32 = arith.constant 9.99999974E-6 : f32
    %83 = vector.broadcast %cst_32 : f32 to vector<64x1xf32>
    %84 = arith.addf %80, %83 : vector<64x1xf32>
    %85 = math.rsqrt %84 : vector<64x1xf32>
    %86 = vector.broadcast %85 : vector<64x1xf32> to vector<64x32xf32>
    %87 = arith.mulf %82, %86 : vector<64x32xf32>
    %88 = vector.broadcast %68 : vector<1x32xf32> to vector<64x32xf32>
    %89 = arith.mulf %87, %88 : vector<64x32xf32>
    %90 = vector.broadcast %69 : vector<1x32xf32> to vector<64x32xf32>
    %91 = arith.addf %89, %90 : vector<64x32xf32>
    %c16_33 = arith.constant 16 : index
    %c64 = arith.constant 64 : index
    %92 = vector.load %arg2[%c16_33, %c64] : memref<400x128xbf16, #tpu.memory_space<vmem>>, vector<32x32xbf16>
    %c5 = arith.constant 5 : index
    %c0_34 = arith.constant 0 : index
    %93 = vector.load %arg3[%c5, %c0_34] : memref<40x128xf32, #tpu.memory_space<vmem>>, vector<1x32xf32>
    %c16_35 = arith.constant 16 : index
    %c96 = arith.constant 96 : index
    %94 = vector.load %arg2[%c16_35, %c96] : memref<400x128xbf16, #tpu.memory_space<vmem>>, vector<32x32xbf16>
    %c6 = arith.constant 6 : index
    %c0_36 = arith.constant 0 : index
    %95 = vector.load %arg3[%c6, %c0_36] : memref<40x128xf32, #tpu.memory_space<vmem>>, vector<1x32xf32>
    %c112 = arith.constant 112 : index
    %c0_37 = arith.constant 0 : index
    %96 = vector.load %arg2[%c112, %c0_37] : memref<400x128xbf16, #tpu.memory_space<vmem>>, vector<32x32xbf16>
    %c7 = arith.constant 7 : index
    %c0_38 = arith.constant 0 : index
    %97 = vector.load %arg3[%c7, %c0_38] : memref<40x128xf32, #tpu.memory_space<vmem>>, vector<1x32xf32>
    %98 = arith.truncf %91 : vector<64x32xf32> to vector<64x32xbf16>
    %cst_39 = arith.constant dense<0.000000e+00> : vector<64x32xf32>
    %99 = tpu.matmul %98, %92, %cst_39 {dimension_numbers = #tpu.dot_dimension_numbers<[1], [0], [0], [1], [0, 0, 1, 1], [], []>} : vector<64x32xbf16>, vector<32x32xbf16>, vector<64x32xf32> -> vector<64x32xf32>
    %100 = vector.broadcast %93 : vector<1x32xf32> to vector<64x32xf32>
    %101 = arith.addf %99, %100 : vector<64x32xf32>
    %cst_40 = arith.constant 5.000000e-01 : f32
    %102 = vector.broadcast %cst_40 : f32 to vector<64x32xf32>
    %103 = arith.mulf %101, %102 : vector<64x32xf32>
    %104 = arith.truncf %91 : vector<64x32xf32> to vector<64x32xbf16>
    %cst_41 = arith.constant dense<0.000000e+00> : vector<64x32xf32>
    %105 = tpu.matmul %104, %94, %cst_41 {dimension_numbers = #tpu.dot_dimension_numbers<[1], [0], [0], [1], [0, 0, 1, 1], [], []>} : vector<64x32xbf16>, vector<32x32xbf16>, vector<64x32xf32> -> vector<64x32xf32>
    %106 = vector.broadcast %95 : vector<1x32xf32> to vector<64x32xf32>
    %107 = arith.addf %105, %106 : vector<64x32xf32>
    %108 = arith.truncf %91 : vector<64x32xf32> to vector<64x32xbf16>
    %cst_42 = arith.constant dense<0.000000e+00> : vector<64x32xf32>
    %109 = tpu.matmul %108, %96, %cst_42 {dimension_numbers = #tpu.dot_dimension_numbers<[1], [0], [0], [1], [0, 0, 1, 1], [], []>} : vector<64x32xbf16>, vector<32x32xbf16>, vector<64x32xf32> -> vector<64x32xf32>
    %110 = vector.broadcast %97 : vector<1x32xf32> to vector<64x32xf32>
    %111 = arith.addf %109, %110 : vector<64x32xf32>
    %c0_43 = arith.constant 0 : index
    %c0_44 = arith.constant 0 : index
    %112 = vector.load %arg6[%c0_43, %c0_44] : memref<512x32xbf16, #tpu.memory_space<vmem>>, vector<512x32xbf16>
    %113 = arith.extf %112 : vector<512x32xbf16> to vector<512x32xf32>
    %c0_45 = arith.constant 0 : index
    %c0_46 = arith.constant 0 : index
    %114 = vector.load %arg4[%c0_45, %c0_46] : memref<512x64xbf16, #tpu.memory_space<vmem>>, vector<512x64xbf16>
    %115 = arith.truncf %103 : vector<64x32xf32> to vector<64x32xbf16>
    %cst_47 = arith.constant dense<0.000000e+00> : vector<512x32xf32>
    %116 = tpu.matmul %114, %115, %cst_47 {dimension_numbers = #tpu.dot_dimension_numbers<[1], [0], [0], [1], [0, 0, 1, 1], [], []>} : vector<512x64xbf16>, vector<64x32xbf16>, vector<512x32xf32> -> vector<512x32xf32>
    %117 = arith.mulf %116, %113 : vector<512x32xf32>
    %118 = arith.truncf %117 : vector<512x32xf32> to vector<512x32xbf16>
    %119 = arith.truncf %107 : vector<64x32xf32> to vector<64x32xbf16>
    %cst_48 = arith.constant dense<0.000000e+00> : vector<512x64xf32>
    %120 = tpu.matmul %118, %119, %cst_48 {dimension_numbers = #tpu.dot_dimension_numbers<[1], [1], [0], [0], [0, 0, 1, 0], [], []>} : vector<512x32xbf16>, vector<64x32xbf16>, vector<512x64xf32> -> vector<512x64xf32>
    %c0_49 = arith.constant 0 : index
    %c0_50 = arith.constant 0 : index
    %121 = vector.load %arg5[%c0_49, %c0_50] : memref<512x64xf32, #tpu.memory_space<vmem>>, vector<512x64xf32>
    %122 = arith.addf %120, %121 : vector<512x64xf32>
    %cst_51 = arith.constant dense<0xFF800000> : vector<512xf32>
    %123 = vector.multi_reduction <maximumf>, %122, %cst_51 [1] : vector<512x64xf32> to vector<512xf32>
    %124 = vector.shape_cast %123 : vector<512xf32> to vector<512x1xf32>
    %125 = vector.broadcast %124 : vector<512x1xf32> to vector<512x64xf32>
    %126 = arith.subf %122, %125 : vector<512x64xf32>
    %127 = math.exp %126 : vector<512x64xf32>
    %cst_52 = arith.constant dense<0.000000e+00> : vector<512xf32>
    %128 = vector.multi_reduction <add>, %127, %cst_52 [1] : vector<512x64xf32> to vector<512xf32>
    %129 = vector.shape_cast %128 : vector<512xf32> to vector<512x1xf32>
    %130 = vector.broadcast %129 : vector<512x1xf32> to vector<512x64xf32>
    %131 = arith.divf %127, %130 : vector<512x64xf32>
    %132 = arith.truncf %131 : vector<512x64xf32> to vector<512x64xbf16>
    %133 = arith.truncf %111 : vector<64x32xf32> to vector<64x32xbf16>
    %cst_53 = arith.constant dense<0.000000e+00> : vector<512x32xf32>
    %134 = tpu.matmul %132, %133, %cst_53 {dimension_numbers = #tpu.dot_dimension_numbers<[1], [0], [0], [1], [0, 0, 1, 1], [], []>} : vector<512x64xbf16>, vector<64x32xbf16>, vector<512x32xf32> -> vector<512x32xf32>
    %135 = arith.mulf %134, %113 : vector<512x32xf32>
    %c0_54 = arith.constant 0 : index
    %c0_55 = arith.constant 0 : index
    %136 = vector.load %arg7[%c0_54, %c0_55] : memref<64x512xbf16, #tpu.memory_space<vmem>>, vector<64x512xbf16>
    %137 = arith.truncf %135 : vector<512x32xf32> to vector<512x32xbf16>
    %cst_56 = arith.constant dense<0.000000e+00> : vector<64x32xf32>
    %138 = tpu.matmul %136, %137, %cst_56 {dimension_numbers = #tpu.dot_dimension_numbers<[1], [0], [0], [1], [0, 0, 1, 1], [], []>} : vector<64x512xbf16>, vector<512x32xbf16>, vector<64x32xf32> -> vector<64x32xf32>
    %c112_57 = arith.constant 112 : index
    %c32 = arith.constant 32 : index
    %139 = vector.load %arg2[%c112_57, %c32] : memref<400x128xbf16, #tpu.memory_space<vmem>>, vector<32x32xbf16>
    %c8 = arith.constant 8 : index
    %c0_58 = arith.constant 0 : index
    %140 = vector.load %arg3[%c8, %c0_58] : memref<40x128xf32, #tpu.memory_space<vmem>>, vector<1x32xf32>
    %141 = arith.truncf %138 : vector<64x32xf32> to vector<64x32xbf16>
    %cst_59 = arith.constant dense<0.000000e+00> : vector<64x32xf32>
    %142 = tpu.matmul %141, %139, %cst_59 {dimension_numbers = #tpu.dot_dimension_numbers<[1], [0], [0], [1], [0, 0, 1, 1], [], []>} : vector<64x32xbf16>, vector<32x32xbf16>, vector<64x32xf32> -> vector<64x32xf32>
    %143 = vector.broadcast %140 : vector<1x32xf32> to vector<64x32xf32>
    %144 = arith.addf %142, %143 : vector<64x32xf32>
    %145 = arith.addf %91, %144 : vector<64x32xf32>
    %c9 = arith.constant 9 : index
    %c0_60 = arith.constant 0 : index
    %146 = vector.load %arg3[%c9, %c0_60] : memref<40x128xf32, #tpu.memory_space<vmem>>, vector<1x32xf32>
    %c10 = arith.constant 10 : index
    %c0_61 = arith.constant 0 : index
    %147 = vector.load %arg3[%c10, %c0_61] : memref<40x128xf32, #tpu.memory_space<vmem>>, vector<1x32xf32>
    %cst_62 = arith.constant dense<0.000000e+00> : vector<64xf32>
    %148 = vector.multi_reduction <add>, %145, %cst_62 [1] : vector<64x32xf32> to vector<64xf32>
    %149 = vector.shape_cast %148 : vector<64xf32> to vector<64x1xf32>
    %cst_63 = arith.constant 3.200000e+01 : f32
    %150 = vector.broadcast %cst_63 : f32 to vector<64x1xf32>
    %151 = arith.divf %149, %150 : vector<64x1xf32>
    %152 = arith.mulf %145, %145 : vector<64x32xf32>
    %cst_64 = arith.constant dense<0.000000e+00> : vector<64xf32>
    %153 = vector.multi_reduction <add>, %152, %cst_64 [1] : vector<64x32xf32> to vector<64xf32>
    %154 = vector.shape_cast %153 : vector<64xf32> to vector<64x1xf32>
    %cst_65 = arith.constant 3.200000e+01 : f32
    %155 = vector.broadcast %cst_65 : f32 to vector<64x1xf32>
    %156 = arith.divf %154, %155 : vector<64x1xf32>
    %157 = arith.mulf %151, %151 : vector<64x1xf32>
    %158 = arith.subf %156, %157 : vector<64x1xf32>
    %159 = vector.broadcast %151 : vector<64x1xf32> to vector<64x32xf32>
    %160 = arith.subf %145, %159 : vector<64x32xf32>
    %cst_66 = arith.constant 9.99999974E-6 : f32
    %161 = vector.broadcast %cst_66 : f32 to vector<64x1xf32>
    %162 = arith.addf %158, %161 : vector<64x1xf32>
    %163 = math.rsqrt %162 : vector<64x1xf32>
    %164 = vector.broadcast %163 : vector<64x1xf32> to vector<64x32xf32>
    %165 = arith.mulf %160, %164 : vector<64x32xf32>
    %166 = vector.broadcast %146 : vector<1x32xf32> to vector<64x32xf32>
    %167 = arith.mulf %165, %166 : vector<64x32xf32>
    %168 = vector.broadcast %147 : vector<1x32xf32> to vector<64x32xf32>
    %169 = arith.addf %167, %168 : vector<64x32xf32>
    %c144 = arith.constant 144 : index
    %c0_67 = arith.constant 0 : index
    %170 = vector.load %arg2[%c144, %c0_67] : memref<400x128xbf16, #tpu.memory_space<vmem>>, vector<32x128xbf16>
    %c11 = arith.constant 11 : index
    %c0_68 = arith.constant 0 : index
    %171 = vector.load %arg3[%c11, %c0_68] : memref<40x128xf32, #tpu.memory_space<vmem>>, vector<1x128xf32>
    %172 = arith.truncf %169 : vector<64x32xf32> to vector<64x32xbf16>
    %cst_69 = arith.constant dense<0.000000e+00> : vector<64x128xf32>
    %173 = tpu.matmul %172, %170, %cst_69 {dimension_numbers = #tpu.dot_dimension_numbers<[1], [0], [0], [1], [0, 0, 1, 1], [], []>} : vector<64x32xbf16>, vector<32x128xbf16>, vector<64x128xf32> -> vector<64x128xf32>
    %174 = vector.broadcast %171 : vector<1x128xf32> to vector<64x128xf32>
    %175 = arith.addf %173, %174 : vector<64x128xf32>
    %cst_70 = arith.constant 5.000000e-01 : f32
    %176 = vector.broadcast %cst_70 : f32 to vector<64x128xf32>
    %177 = arith.mulf %176, %175 : vector<64x128xf32>
    %cst_71 = arith.constant 0.707106769 : f32
    %178 = vector.broadcast %cst_71 : f32 to vector<64x128xf32>
    %179 = arith.mulf %175, %178 : vector<64x128xf32>
    %180 = math.absf %179 : vector<64x128xf32>
    %cst_72 = arith.constant 0.327591091 : f32
    %181 = vector.broadcast %cst_72 : f32 to vector<64x128xf32>
    %182 = arith.mulf %181, %180 : vector<64x128xf32>
    %cst_73 = arith.constant 1.000000e+00 : f32
    %183 = vector.broadcast %cst_73 : f32 to vector<64x128xf32>
    %184 = arith.addf %183, %182 : vector<64x128xf32>
    %cst_74 = arith.constant 1.000000e+00 : f32
    %185 = vector.broadcast %cst_74 : f32 to vector<64x128xf32>
    %186 = arith.divf %185, %184 : vector<64x128xf32>
    %cst_75 = arith.constant 1.06140542 : f32
    %187 = vector.broadcast %cst_75 : f32 to vector<64x128xf32>
    %188 = arith.mulf %187, %186 : vector<64x128xf32>
    %cst_76 = arith.constant -1.45315206 : f32
    %189 = vector.broadcast %cst_76 : f32 to vector<64x128xf32>
    %190 = arith.addf %188, %189 : vector<64x128xf32>
    %191 = arith.mulf %190, %186 : vector<64x128xf32>
    %cst_77 = arith.constant 1.42141378 : f32
    %192 = vector.broadcast %cst_77 : f32 to vector<64x128xf32>
    %193 = arith.addf %191, %192 : vector<64x128xf32>
    %194 = arith.mulf %193, %186 : vector<64x128xf32>
    %cst_78 = arith.constant -0.284496725 : f32
    %195 = vector.broadcast %cst_78 : f32 to vector<64x128xf32>
    %196 = arith.addf %194, %195 : vector<64x128xf32>
    %197 = arith.mulf %196, %186 : vector<64x128xf32>
    %cst_79 = arith.constant 0.254829586 : f32
    %198 = vector.broadcast %cst_79 : f32 to vector<64x128xf32>
    %199 = arith.addf %197, %198 : vector<64x128xf32>
    %200 = arith.mulf %199, %186 : vector<64x128xf32>
    %cst_80 = arith.constant 0.000000e+00 : f32
    %201 = vector.broadcast %cst_80 : f32 to vector<64x128xf32>
    %202 = arith.subf %201, %180 : vector<64x128xf32>
    %203 = arith.mulf %202, %180 : vector<64x128xf32>
    %204 = math.exp %203 : vector<64x128xf32>
    %205 = arith.mulf %200, %204 : vector<64x128xf32>
    %cst_81 = arith.constant 1.000000e+00 : f32
    %206 = vector.broadcast %cst_81 : f32 to vector<64x128xf32>
    %207 = arith.subf %206, %205 : vector<64x128xf32>
    %cst_82 = arith.constant 0.000000e+00 : f32
    %208 = vector.broadcast %cst_82 : f32 to vector<64x128xf32>
    %209 = arith.cmpf oge, %179, %208 : vector<64x128xf32>
    %cst_83 = arith.constant 0.000000e+00 : f32
    %210 = vector.broadcast %cst_83 : f32 to vector<64x128xf32>
    %211 = arith.subf %210, %207 : vector<64x128xf32>
    %212 = arith.select %209, %207, %211 : vector<64x128xi1>, vector<64x128xf32>
    %cst_84 = arith.constant 1.000000e+00 : f32
    %213 = vector.broadcast %cst_84 : f32 to vector<64x128xf32>
    %214 = arith.addf %213, %212 : vector<64x128xf32>
    %215 = arith.mulf %177, %214 : vector<64x128xf32>
    %c176 = arith.constant 176 : index
    %c0_85 = arith.constant 0 : index
    %216 = vector.load %arg2[%c176, %c0_85] : memref<400x128xbf16, #tpu.memory_space<vmem>>, vector<128x32xbf16>
    %c12 = arith.constant 12 : index
    %c0_86 = arith.constant 0 : index
    %217 = vector.load %arg3[%c12, %c0_86] : memref<40x128xf32, #tpu.memory_space<vmem>>, vector<1x32xf32>
    %218 = arith.truncf %215 : vector<64x128xf32> to vector<64x128xbf16>
    %cst_87 = arith.constant dense<0.000000e+00> : vector<64x32xf32>
    %219 = tpu.matmul %218, %216, %cst_87 {dimension_numbers = #tpu.dot_dimension_numbers<[1], [0], [0], [1], [0, 0, 1, 1], [], []>} : vector<64x128xbf16>, vector<128x32xbf16>, vector<64x32xf32> -> vector<64x32xf32>
    %220 = vector.broadcast %217 : vector<1x32xf32> to vector<64x32xf32>
    %221 = arith.addf %219, %220 : vector<64x32xf32>
    %222 = arith.addf %169, %221 : vector<64x32xf32>
    %c13 = arith.constant 13 : index
    %c0_88 = arith.constant 0 : index
    %223 = vector.load %arg3[%c13, %c0_88] : memref<40x128xf32, #tpu.memory_space<vmem>>, vector<1x32xf32>
    %c14 = arith.constant 14 : index
    %c0_89 = arith.constant 0 : index
    %224 = vector.load %arg3[%c14, %c0_89] : memref<40x128xf32, #tpu.memory_space<vmem>>, vector<1x32xf32>
    %cst_90 = arith.constant dense<0.000000e+00> : vector<64xf32>
    %225 = vector.multi_reduction <add>, %222, %cst_90 [1] : vector<64x32xf32> to vector<64xf32>
    %226 = vector.shape_cast %225 : vector<64xf32> to vector<64x1xf32>
    %cst_91 = arith.constant 3.200000e+01 : f32
    %227 = vector.broadcast %cst_91 : f32 to vector<64x1xf32>
    %228 = arith.divf %226, %227 : vector<64x1xf32>
    %229 = arith.mulf %222, %222 : vector<64x32xf32>
    %cst_92 = arith.constant dense<0.000000e+00> : vector<64xf32>
    %230 = vector.multi_reduction <add>, %229, %cst_92 [1] : vector<64x32xf32> to vector<64xf32>
    %231 = vector.shape_cast %230 : vector<64xf32> to vector<64x1xf32>
    %cst_93 = arith.constant 3.200000e+01 : f32
    %232 = vector.broadcast %cst_93 : f32 to vector<64x1xf32>
    %233 = arith.divf %231, %232 : vector<64x1xf32>
    %234 = arith.mulf %228, %228 : vector<64x1xf32>
    %235 = arith.subf %233, %234 : vector<64x1xf32>
    %236 = vector.broadcast %228 : vector<64x1xf32> to vector<64x32xf32>
    %237 = arith.subf %222, %236 : vector<64x32xf32>
    %cst_94 = arith.constant 9.99999974E-6 : f32
    %238 = vector.broadcast %cst_94 : f32 to vector<64x1xf32>
    %239 = arith.addf %235, %238 : vector<64x1xf32>
    %240 = math.rsqrt %239 : vector<64x1xf32>
    %241 = vector.broadcast %240 : vector<64x1xf32> to vector<64x32xf32>
    %242 = arith.mulf %237, %241 : vector<64x32xf32>
    %243 = vector.broadcast %223 : vector<1x32xf32> to vector<64x32xf32>
    %244 = arith.mulf %242, %243 : vector<64x32xf32>
    %245 = vector.broadcast %224 : vector<1x32xf32> to vector<64x32xf32>
    %246 = arith.addf %244, %245 : vector<64x32xf32>
    %c112_95 = arith.constant 112 : index
    %c64_96 = arith.constant 64 : index
    %247 = vector.load %arg2[%c112_95, %c64_96] : memref<400x128xbf16, #tpu.memory_space<vmem>>, vector<32x32xbf16>
    %c15 = arith.constant 15 : index
    %c0_97 = arith.constant 0 : index
    %248 = vector.load %arg3[%c15, %c0_97] : memref<40x128xf32, #tpu.memory_space<vmem>>, vector<1x32xf32>
    %c112_98 = arith.constant 112 : index
    %c96_99 = arith.constant 96 : index
    %249 = vector.load %arg2[%c112_98, %c96_99] : memref<400x128xbf16, #tpu.memory_space<vmem>>, vector<32x32xbf16>
    %c16_100 = arith.constant 16 : index
    %c0_101 = arith.constant 0 : index
    %250 = vector.load %arg3[%c16_100, %c0_101] : memref<40x128xf32, #tpu.memory_space<vmem>>, vector<1x32xf32>
    %c304 = arith.constant 304 : index
    %c0_102 = arith.constant 0 : index
    %251 = vector.load %arg2[%c304, %c0_102] : memref<400x128xbf16, #tpu.memory_space<vmem>>, vector<32x32xbf16>
    %c17 = arith.constant 17 : index
    %c0_103 = arith.constant 0 : index
    %252 = vector.load %arg3[%c17, %c0_103] : memref<40x128xf32, #tpu.memory_space<vmem>>, vector<1x32xf32>
    %253 = arith.truncf %246 : vector<64x32xf32> to vector<64x32xbf16>
    %cst_104 = arith.constant dense<0.000000e+00> : vector<64x32xf32>
    %254 = tpu.matmul %253, %247, %cst_104 {dimension_numbers = #tpu.dot_dimension_numbers<[1], [0], [0], [1], [0, 0, 1, 1], [], []>} : vector<64x32xbf16>, vector<32x32xbf16>, vector<64x32xf32> -> vector<64x32xf32>
    %255 = vector.broadcast %248 : vector<1x32xf32> to vector<64x32xf32>
    %256 = arith.addf %254, %255 : vector<64x32xf32>
    %cst_105 = arith.constant 5.000000e-01 : f32
    %257 = vector.broadcast %cst_105 : f32 to vector<64x32xf32>
    %258 = arith.mulf %256, %257 : vector<64x32xf32>
    %259 = arith.truncf %246 : vector<64x32xf32> to vector<64x32xbf16>
    %cst_106 = arith.constant dense<0.000000e+00> : vector<64x32xf32>
    %260 = tpu.matmul %259, %249, %cst_106 {dimension_numbers = #tpu.dot_dimension_numbers<[1], [0], [0], [1], [0, 0, 1, 1], [], []>} : vector<64x32xbf16>, vector<32x32xbf16>, vector<64x32xf32> -> vector<64x32xf32>
    %261 = vector.broadcast %250 : vector<1x32xf32> to vector<64x32xf32>
    %262 = arith.addf %260, %261 : vector<64x32xf32>
    %263 = arith.truncf %246 : vector<64x32xf32> to vector<64x32xbf16>
    %cst_107 = arith.constant dense<0.000000e+00> : vector<64x32xf32>
    %264 = tpu.matmul %263, %251, %cst_107 {dimension_numbers = #tpu.dot_dimension_numbers<[1], [0], [0], [1], [0, 0, 1, 1], [], []>} : vector<64x32xbf16>, vector<32x32xbf16>, vector<64x32xf32> -> vector<64x32xf32>
    %265 = vector.broadcast %252 : vector<1x32xf32> to vector<64x32xf32>
    %266 = arith.addf %264, %265 : vector<64x32xf32>
    %c0_108 = arith.constant 0 : index
    %c0_109 = arith.constant 0 : index
    %267 = vector.load %arg6[%c0_108, %c0_109] : memref<512x32xbf16, #tpu.memory_space<vmem>>, vector<512x32xbf16>
    %268 = arith.extf %267 : vector<512x32xbf16> to vector<512x32xf32>
    %c0_110 = arith.constant 0 : index
    %c0_111 = arith.constant 0 : index
    %269 = vector.load %arg4[%c0_110, %c0_111] : memref<512x64xbf16, #tpu.memory_space<vmem>>, vector<512x64xbf16>
    %270 = arith.truncf %258 : vector<64x32xf32> to vector<64x32xbf16>
    %cst_112 = arith.constant dense<0.000000e+00> : vector<512x32xf32>
    %271 = tpu.matmul %269, %270, %cst_112 {dimension_numbers = #tpu.dot_dimension_numbers<[1], [0], [0], [1], [0, 0, 1, 1], [], []>} : vector<512x64xbf16>, vector<64x32xbf16>, vector<512x32xf32> -> vector<512x32xf32>
    %272 = arith.mulf %271, %268 : vector<512x32xf32>
    %273 = arith.truncf %272 : vector<512x32xf32> to vector<512x32xbf16>
    %274 = arith.truncf %262 : vector<64x32xf32> to vector<64x32xbf16>
    %cst_113 = arith.constant dense<0.000000e+00> : vector<512x64xf32>
    %275 = tpu.matmul %273, %274, %cst_113 {dimension_numbers = #tpu.dot_dimension_numbers<[1], [1], [0], [0], [0, 0, 1, 0], [], []>} : vector<512x32xbf16>, vector<64x32xbf16>, vector<512x64xf32> -> vector<512x64xf32>
    %c0_114 = arith.constant 0 : index
    %c0_115 = arith.constant 0 : index
    %276 = vector.load %arg5[%c0_114, %c0_115] : memref<512x64xf32, #tpu.memory_space<vmem>>, vector<512x64xf32>
    %277 = arith.addf %275, %276 : vector<512x64xf32>
    %cst_116 = arith.constant dense<0xFF800000> : vector<512xf32>
    %278 = vector.multi_reduction <maximumf>, %277, %cst_116 [1] : vector<512x64xf32> to vector<512xf32>
    %279 = vector.shape_cast %278 : vector<512xf32> to vector<512x1xf32>
    %280 = vector.broadcast %279 : vector<512x1xf32> to vector<512x64xf32>
    %281 = arith.subf %277, %280 : vector<512x64xf32>
    %282 = math.exp %281 : vector<512x64xf32>
    %cst_117 = arith.constant dense<0.000000e+00> : vector<512xf32>
    %283 = vector.multi_reduction <add>, %282, %cst_117 [1] : vector<512x64xf32> to vector<512xf32>
    %284 = vector.shape_cast %283 : vector<512xf32> to vector<512x1xf32>
    %285 = vector.broadcast %284 : vector<512x1xf32> to vector<512x64xf32>
    %286 = arith.divf %282, %285 : vector<512x64xf32>
    %287 = arith.truncf %286 : vector<512x64xf32> to vector<512x64xbf16>
    %288 = arith.truncf %266 : vector<64x32xf32> to vector<64x32xbf16>
    %cst_118 = arith.constant dense<0.000000e+00> : vector<512x32xf32>
    %289 = tpu.matmul %287, %288, %cst_118 {dimension_numbers = #tpu.dot_dimension_numbers<[1], [0], [0], [1], [0, 0, 1, 1], [], []>} : vector<512x64xbf16>, vector<64x32xbf16>, vector<512x32xf32> -> vector<512x32xf32>
    %290 = arith.mulf %289, %268 : vector<512x32xf32>
    %c0_119 = arith.constant 0 : index
    %c0_120 = arith.constant 0 : index
    %291 = vector.load %arg7[%c0_119, %c0_120] : memref<64x512xbf16, #tpu.memory_space<vmem>>, vector<64x512xbf16>
    %292 = arith.truncf %290 : vector<512x32xf32> to vector<512x32xbf16>
    %cst_121 = arith.constant dense<0.000000e+00> : vector<64x32xf32>
    %293 = tpu.matmul %291, %292, %cst_121 {dimension_numbers = #tpu.dot_dimension_numbers<[1], [0], [0], [1], [0, 0, 1, 1], [], []>} : vector<64x512xbf16>, vector<512x32xbf16>, vector<64x32xf32> -> vector<64x32xf32>
    %c304_122 = arith.constant 304 : index
    %c32_123 = arith.constant 32 : index
    %294 = vector.load %arg2[%c304_122, %c32_123] : memref<400x128xbf16, #tpu.memory_space<vmem>>, vector<32x32xbf16>
    %c18 = arith.constant 18 : index
    %c0_124 = arith.constant 0 : index
    %295 = vector.load %arg3[%c18, %c0_124] : memref<40x128xf32, #tpu.memory_space<vmem>>, vector<1x32xf32>
    %296 = arith.truncf %293 : vector<64x32xf32> to vector<64x32xbf16>
    %cst_125 = arith.constant dense<0.000000e+00> : vector<64x32xf32>
    %297 = tpu.matmul %296, %294, %cst_125 {dimension_numbers = #tpu.dot_dimension_numbers<[1], [0], [0], [1], [0, 0, 1, 1], [], []>} : vector<64x32xbf16>, vector<32x32xbf16>, vector<64x32xf32> -> vector<64x32xf32>
    %298 = vector.broadcast %295 : vector<1x32xf32> to vector<64x32xf32>
    %299 = arith.addf %297, %298 : vector<64x32xf32>
    %300 = arith.addf %246, %299 : vector<64x32xf32>
    %c19 = arith.constant 19 : index
    %c0_126 = arith.constant 0 : index
    %301 = vector.load %arg3[%c19, %c0_126] : memref<40x128xf32, #tpu.memory_space<vmem>>, vector<1x32xf32>
    %c20 = arith.constant 20 : index
    %c0_127 = arith.constant 0 : index
    %302 = vector.load %arg3[%c20, %c0_127] : memref<40x128xf32, #tpu.memory_space<vmem>>, vector<1x32xf32>
    %cst_128 = arith.constant dense<0.000000e+00> : vector<64xf32>
    %303 = vector.multi_reduction <add>, %300, %cst_128 [1] : vector<64x32xf32> to vector<64xf32>
    %304 = vector.shape_cast %303 : vector<64xf32> to vector<64x1xf32>
    %cst_129 = arith.constant 3.200000e+01 : f32
    %305 = vector.broadcast %cst_129 : f32 to vector<64x1xf32>
    %306 = arith.divf %304, %305 : vector<64x1xf32>
    %307 = arith.mulf %300, %300 : vector<64x32xf32>
    %cst_130 = arith.constant dense<0.000000e+00> : vector<64xf32>
    %308 = vector.multi_reduction <add>, %307, %cst_130 [1] : vector<64x32xf32> to vector<64xf32>
    %309 = vector.shape_cast %308 : vector<64xf32> to vector<64x1xf32>
    %cst_131 = arith.constant 3.200000e+01 : f32
    %310 = vector.broadcast %cst_131 : f32 to vector<64x1xf32>
    %311 = arith.divf %309, %310 : vector<64x1xf32>
    %312 = arith.mulf %306, %306 : vector<64x1xf32>
    %313 = arith.subf %311, %312 : vector<64x1xf32>
    %314 = vector.broadcast %306 : vector<64x1xf32> to vector<64x32xf32>
    %315 = arith.subf %300, %314 : vector<64x32xf32>
    %cst_132 = arith.constant 9.99999974E-6 : f32
    %316 = vector.broadcast %cst_132 : f32 to vector<64x1xf32>
    %317 = arith.addf %313, %316 : vector<64x1xf32>
    %318 = math.rsqrt %317 : vector<64x1xf32>
    %319 = vector.broadcast %318 : vector<64x1xf32> to vector<64x32xf32>
    %320 = arith.mulf %315, %319 : vector<64x32xf32>
    %321 = vector.broadcast %301 : vector<1x32xf32> to vector<64x32xf32>
    %322 = arith.mulf %320, %321 : vector<64x32xf32>
    %323 = vector.broadcast %302 : vector<1x32xf32> to vector<64x32xf32>
    %324 = arith.addf %322, %323 : vector<64x32xf32>
    %c336 = arith.constant 336 : index
    %c0_133 = arith.constant 0 : index
    %325 = vector.load %arg2[%c336, %c0_133] : memref<400x128xbf16, #tpu.memory_space<vmem>>, vector<32x128xbf16>
    %c21 = arith.constant 21 : index
    %c0_134 = arith.constant 0 : index
    %326 = vector.load %arg3[%c21, %c0_134] : memref<40x128xf32, #tpu.memory_space<vmem>>, vector<1x128xf32>
    %327 = arith.truncf %324 : vector<64x32xf32> to vector<64x32xbf16>
    %cst_135 = arith.constant dense<0.000000e+00> : vector<64x128xf32>
    %328 = tpu.matmul %327, %325, %cst_135 {dimension_numbers = #tpu.dot_dimension_numbers<[1], [0], [0], [1], [0, 0, 1, 1], [], []>} : vector<64x32xbf16>, vector<32x128xbf16>, vector<64x128xf32> -> vector<64x128xf32>
    %329 = vector.broadcast %326 : vector<1x128xf32> to vector<64x128xf32>
    %330 = arith.addf %328, %329 : vector<64x128xf32>
    %cst_136 = arith.constant 5.000000e-01 : f32
    %331 = vector.broadcast %cst_136 : f32 to vector<64x128xf32>
    %332 = arith.mulf %331, %330 : vector<64x128xf32>
    %cst_137 = arith.constant 0.707106769 : f32
    %333 = vector.broadcast %cst_137 : f32 to vector<64x128xf32>
    %334 = arith.mulf %330, %333 : vector<64x128xf32>
    %335 = math.absf %334 : vector<64x128xf32>
    %cst_138 = arith.constant 0.327591091 : f32
    %336 = vector.broadcast %cst_138 : f32 to vector<64x128xf32>
    %337 = arith.mulf %336, %335 : vector<64x128xf32>
    %cst_139 = arith.constant 1.000000e+00 : f32
    %338 = vector.broadcast %cst_139 : f32 to vector<64x128xf32>
    %339 = arith.addf %338, %337 : vector<64x128xf32>
    %cst_140 = arith.constant 1.000000e+00 : f32
    %340 = vector.broadcast %cst_140 : f32 to vector<64x128xf32>
    %341 = arith.divf %340, %339 : vector<64x128xf32>
    %cst_141 = arith.constant 1.06140542 : f32
    %342 = vector.broadcast %cst_141 : f32 to vector<64x128xf32>
    %343 = arith.mulf %342, %341 : vector<64x128xf32>
    %cst_142 = arith.constant -1.45315206 : f32
    %344 = vector.broadcast %cst_142 : f32 to vector<64x128xf32>
    %345 = arith.addf %343, %344 : vector<64x128xf32>
    %346 = arith.mulf %345, %341 : vector<64x128xf32>
    %cst_143 = arith.constant 1.42141378 : f32
    %347 = vector.broadcast %cst_143 : f32 to vector<64x128xf32>
    %348 = arith.addf %346, %347 : vector<64x128xf32>
    %349 = arith.mulf %348, %341 : vector<64x128xf32>
    %cst_144 = arith.constant -0.284496725 : f32
    %350 = vector.broadcast %cst_144 : f32 to vector<64x128xf32>
    %351 = arith.addf %349, %350 : vector<64x128xf32>
    %352 = arith.mulf %351, %341 : vector<64x128xf32>
    %cst_145 = arith.constant 0.254829586 : f32
    %353 = vector.broadcast %cst_145 : f32 to vector<64x128xf32>
    %354 = arith.addf %352, %353 : vector<64x128xf32>
    %355 = arith.mulf %354, %341 : vector<64x128xf32>
    %cst_146 = arith.constant 0.000000e+00 : f32
    %356 = vector.broadcast %cst_146 : f32 to vector<64x128xf32>
    %357 = arith.subf %356, %335 : vector<64x128xf32>
    %358 = arith.mulf %357, %335 : vector<64x128xf32>
    %359 = math.exp %358 : vector<64x128xf32>
    %360 = arith.mulf %355, %359 : vector<64x128xf32>
    %cst_147 = arith.constant 1.000000e+00 : f32
    %361 = vector.broadcast %cst_147 : f32 to vector<64x128xf32>
    %362 = arith.subf %361, %360 : vector<64x128xf32>
    %cst_148 = arith.constant 0.000000e+00 : f32
    %363 = vector.broadcast %cst_148 : f32 to vector<64x128xf32>
    %364 = arith.cmpf oge, %334, %363 : vector<64x128xf32>
    %cst_149 = arith.constant 0.000000e+00 : f32
    %365 = vector.broadcast %cst_149 : f32 to vector<64x128xf32>
    %366 = arith.subf %365, %362 : vector<64x128xf32>
    %367 = arith.select %364, %362, %366 : vector<64x128xi1>, vector<64x128xf32>
    %cst_150 = arith.constant 1.000000e+00 : f32
    %368 = vector.broadcast %cst_150 : f32 to vector<64x128xf32>
    %369 = arith.addf %368, %367 : vector<64x128xf32>
    %370 = arith.mulf %332, %369 : vector<64x128xf32>
    %c176_151 = arith.constant 176 : index
    %c32_152 = arith.constant 32 : index
    %371 = vector.load %arg2[%c176_151, %c32_152] : memref<400x128xbf16, #tpu.memory_space<vmem>>, vector<128x32xbf16>
    %c22 = arith.constant 22 : index
    %c0_153 = arith.constant 0 : index
    %372 = vector.load %arg3[%c22, %c0_153] : memref<40x128xf32, #tpu.memory_space<vmem>>, vector<1x32xf32>
    %373 = arith.truncf %370 : vector<64x128xf32> to vector<64x128xbf16>
    %cst_154 = arith.constant dense<0.000000e+00> : vector<64x32xf32>
    %374 = tpu.matmul %373, %371, %cst_154 {dimension_numbers = #tpu.dot_dimension_numbers<[1], [0], [0], [1], [0, 0, 1, 1], [], []>} : vector<64x128xbf16>, vector<128x32xbf16>, vector<64x32xf32> -> vector<64x32xf32>
    %375 = vector.broadcast %372 : vector<1x32xf32> to vector<64x32xf32>
    %376 = arith.addf %374, %375 : vector<64x32xf32>
    %377 = arith.addf %324, %376 : vector<64x32xf32>
    %c23 = arith.constant 23 : index
    %c0_155 = arith.constant 0 : index
    %378 = vector.load %arg3[%c23, %c0_155] : memref<40x128xf32, #tpu.memory_space<vmem>>, vector<1x32xf32>
    %c24 = arith.constant 24 : index
    %c0_156 = arith.constant 0 : index
    %379 = vector.load %arg3[%c24, %c0_156] : memref<40x128xf32, #tpu.memory_space<vmem>>, vector<1x32xf32>
    %cst_157 = arith.constant dense<0.000000e+00> : vector<64xf32>
    %380 = vector.multi_reduction <add>, %377, %cst_157 [1] : vector<64x32xf32> to vector<64xf32>
    %381 = vector.shape_cast %380 : vector<64xf32> to vector<64x1xf32>
    %cst_158 = arith.constant 3.200000e+01 : f32
    %382 = vector.broadcast %cst_158 : f32 to vector<64x1xf32>
    %383 = arith.divf %381, %382 : vector<64x1xf32>
    %384 = arith.mulf %377, %377 : vector<64x32xf32>
    %cst_159 = arith.constant dense<0.000000e+00> : vector<64xf32>
    %385 = vector.multi_reduction <add>, %384, %cst_159 [1] : vector<64x32xf32> to vector<64xf32>
    %386 = vector.shape_cast %385 : vector<64xf32> to vector<64x1xf32>
    %cst_160 = arith.constant 3.200000e+01 : f32
    %387 = vector.broadcast %cst_160 : f32 to vector<64x1xf32>
    %388 = arith.divf %386, %387 : vector<64x1xf32>
    %389 = arith.mulf %383, %383 : vector<64x1xf32>
    %390 = arith.subf %388, %389 : vector<64x1xf32>
    %391 = vector.broadcast %383 : vector<64x1xf32> to vector<64x32xf32>
    %392 = arith.subf %377, %391 : vector<64x32xf32>
    %cst_161 = arith.constant 9.99999974E-6 : f32
    %393 = vector.broadcast %cst_161 : f32 to vector<64x1xf32>
    %394 = arith.addf %390, %393 : vector<64x1xf32>
    %395 = math.rsqrt %394 : vector<64x1xf32>
    %396 = vector.broadcast %395 : vector<64x1xf32> to vector<64x32xf32>
    %397 = arith.mulf %392, %396 : vector<64x32xf32>
    %398 = vector.broadcast %378 : vector<1x32xf32> to vector<64x32xf32>
    %399 = arith.mulf %397, %398 : vector<64x32xf32>
    %400 = vector.broadcast %379 : vector<1x32xf32> to vector<64x32xf32>
    %401 = arith.addf %399, %400 : vector<64x32xf32>
    %c304_162 = arith.constant 304 : index
    %c64_163 = arith.constant 64 : index
    %402 = vector.load %arg2[%c304_162, %c64_163] : memref<400x128xbf16, #tpu.memory_space<vmem>>, vector<32x32xbf16>
    %c25 = arith.constant 25 : index
    %c0_164 = arith.constant 0 : index
    %403 = vector.load %arg3[%c25, %c0_164] : memref<40x128xf32, #tpu.memory_space<vmem>>, vector<1x32xf32>
    %c304_165 = arith.constant 304 : index
    %c96_166 = arith.constant 96 : index
    %404 = vector.load %arg2[%c304_165, %c96_166] : memref<400x128xbf16, #tpu.memory_space<vmem>>, vector<32x32xbf16>
    %c26 = arith.constant 26 : index
    %c0_167 = arith.constant 0 : index
    %405 = vector.load %arg3[%c26, %c0_167] : memref<40x128xf32, #tpu.memory_space<vmem>>, vector<1x32xf32>
    %c368 = arith.constant 368 : index
    %c0_168 = arith.constant 0 : index
    %406 = vector.load %arg2[%c368, %c0_168] : memref<400x128xbf16, #tpu.memory_space<vmem>>, vector<32x32xbf16>
    %c27 = arith.constant 27 : index
    %c0_169 = arith.constant 0 : index
    %407 = vector.load %arg3[%c27, %c0_169] : memref<40x128xf32, #tpu.memory_space<vmem>>, vector<1x32xf32>
    %408 = arith.truncf %401 : vector<64x32xf32> to vector<64x32xbf16>
    %cst_170 = arith.constant dense<0.000000e+00> : vector<64x32xf32>
    %409 = tpu.matmul %408, %402, %cst_170 {dimension_numbers = #tpu.dot_dimension_numbers<[1], [0], [0], [1], [0, 0, 1, 1], [], []>} : vector<64x32xbf16>, vector<32x32xbf16>, vector<64x32xf32> -> vector<64x32xf32>
    %410 = vector.broadcast %403 : vector<1x32xf32> to vector<64x32xf32>
    %411 = arith.addf %409, %410 : vector<64x32xf32>
    %cst_171 = arith.constant 5.000000e-01 : f32
    %412 = vector.broadcast %cst_171 : f32 to vector<64x32xf32>
    %413 = arith.mulf %411, %412 : vector<64x32xf32>
    %414 = arith.truncf %401 : vector<64x32xf32> to vector<64x32xbf16>
    %cst_172 = arith.constant dense<0.000000e+00> : vector<64x32xf32>
    %415 = tpu.matmul %414, %404, %cst_172 {dimension_numbers = #tpu.dot_dimension_numbers<[1], [0], [0], [1], [0, 0, 1, 1], [], []>} : vector<64x32xbf16>, vector<32x32xbf16>, vector<64x32xf32> -> vector<64x32xf32>
    %416 = vector.broadcast %405 : vector<1x32xf32> to vector<64x32xf32>
    %417 = arith.addf %415, %416 : vector<64x32xf32>
    %418 = arith.truncf %401 : vector<64x32xf32> to vector<64x32xbf16>
    %cst_173 = arith.constant dense<0.000000e+00> : vector<64x32xf32>
    %419 = tpu.matmul %418, %406, %cst_173 {dimension_numbers = #tpu.dot_dimension_numbers<[1], [0], [0], [1], [0, 0, 1, 1], [], []>} : vector<64x32xbf16>, vector<32x32xbf16>, vector<64x32xf32> -> vector<64x32xf32>
    %420 = vector.broadcast %407 : vector<1x32xf32> to vector<64x32xf32>
    %421 = arith.addf %419, %420 : vector<64x32xf32>
    %c0_174 = arith.constant 0 : index
    %c0_175 = arith.constant 0 : index
    %422 = vector.load %arg6[%c0_174, %c0_175] : memref<512x32xbf16, #tpu.memory_space<vmem>>, vector<512x32xbf16>
    %423 = arith.extf %422 : vector<512x32xbf16> to vector<512x32xf32>
    %c0_176 = arith.constant 0 : index
    %c0_177 = arith.constant 0 : index
    %424 = vector.load %arg4[%c0_176, %c0_177] : memref<512x64xbf16, #tpu.memory_space<vmem>>, vector<512x64xbf16>
    %425 = arith.truncf %413 : vector<64x32xf32> to vector<64x32xbf16>
    %cst_178 = arith.constant dense<0.000000e+00> : vector<512x32xf32>
    %426 = tpu.matmul %424, %425, %cst_178 {dimension_numbers = #tpu.dot_dimension_numbers<[1], [0], [0], [1], [0, 0, 1, 1], [], []>} : vector<512x64xbf16>, vector<64x32xbf16>, vector<512x32xf32> -> vector<512x32xf32>
    %427 = arith.mulf %426, %423 : vector<512x32xf32>
    %428 = arith.truncf %427 : vector<512x32xf32> to vector<512x32xbf16>
    %429 = arith.truncf %417 : vector<64x32xf32> to vector<64x32xbf16>
    %cst_179 = arith.constant dense<0.000000e+00> : vector<512x64xf32>
    %430 = tpu.matmul %428, %429, %cst_179 {dimension_numbers = #tpu.dot_dimension_numbers<[1], [1], [0], [0], [0, 0, 1, 0], [], []>} : vector<512x32xbf16>, vector<64x32xbf16>, vector<512x64xf32> -> vector<512x64xf32>
    %c0_180 = arith.constant 0 : index
    %c0_181 = arith.constant 0 : index
    %431 = vector.load %arg5[%c0_180, %c0_181] : memref<512x64xf32, #tpu.memory_space<vmem>>, vector<512x64xf32>
    %432 = arith.addf %430, %431 : vector<512x64xf32>
    %cst_182 = arith.constant dense<0xFF800000> : vector<512xf32>
    %433 = vector.multi_reduction <maximumf>, %432, %cst_182 [1] : vector<512x64xf32> to vector<512xf32>
    %434 = vector.shape_cast %433 : vector<512xf32> to vector<512x1xf32>
    %435 = vector.broadcast %434 : vector<512x1xf32> to vector<512x64xf32>
    %436 = arith.subf %432, %435 : vector<512x64xf32>
    %437 = math.exp %436 : vector<512x64xf32>
    %cst_183 = arith.constant dense<0.000000e+00> : vector<512xf32>
    %438 = vector.multi_reduction <add>, %437, %cst_183 [1] : vector<512x64xf32> to vector<512xf32>
    %439 = vector.shape_cast %438 : vector<512xf32> to vector<512x1xf32>
    %440 = vector.broadcast %439 : vector<512x1xf32> to vector<512x64xf32>
    %441 = arith.divf %437, %440 : vector<512x64xf32>
    %442 = arith.truncf %441 : vector<512x64xf32> to vector<512x64xbf16>
    %443 = arith.truncf %421 : vector<64x32xf32> to vector<64x32xbf16>
    %cst_184 = arith.constant dense<0.000000e+00> : vector<512x32xf32>
    %444 = tpu.matmul %442, %443, %cst_184 {dimension_numbers = #tpu.dot_dimension_numbers<[1], [0], [0], [1], [0, 0, 1, 1], [], []>} : vector<512x64xbf16>, vector<64x32xbf16>, vector<512x32xf32> -> vector<512x32xf32>
    %445 = arith.mulf %444, %423 : vector<512x32xf32>
    %c0_185 = arith.constant 0 : index
    %c0_186 = arith.constant 0 : index
    %446 = vector.load %arg7[%c0_185, %c0_186] : memref<64x512xbf16, #tpu.memory_space<vmem>>, vector<64x512xbf16>
    %447 = arith.truncf %445 : vector<512x32xf32> to vector<512x32xbf16>
    %cst_187 = arith.constant dense<0.000000e+00> : vector<64x32xf32>
    %448 = tpu.matmul %446, %447, %cst_187 {dimension_numbers = #tpu.dot_dimension_numbers<[1], [0], [0], [1], [0, 0, 1, 1], [], []>} : vector<64x512xbf16>, vector<512x32xbf16>, vector<64x32xf32> -> vector<64x32xf32>
    %c368_188 = arith.constant 368 : index
    %c32_189 = arith.constant 32 : index
    %449 = vector.load %arg2[%c368_188, %c32_189] : memref<400x128xbf16, #tpu.memory_space<vmem>>, vector<32x32xbf16>
    %c28 = arith.constant 28 : index
    %c0_190 = arith.constant 0 : index
    %450 = vector.load %arg3[%c28, %c0_190] : memref<40x128xf32, #tpu.memory_space<vmem>>, vector<1x32xf32>
    %451 = arith.truncf %448 : vector<64x32xf32> to vector<64x32xbf16>
    %cst_191 = arith.constant dense<0.000000e+00> : vector<64x32xf32>
    %452 = tpu.matmul %451, %449, %cst_191 {dimension_numbers = #tpu.dot_dimension_numbers<[1], [0], [0], [1], [0, 0, 1, 1], [], []>} : vector<64x32xbf16>, vector<32x32xbf16>, vector<64x32xf32> -> vector<64x32xf32>
    %453 = vector.broadcast %450 : vector<1x32xf32> to vector<64x32xf32>
    %454 = arith.addf %452, %453 : vector<64x32xf32>
    %455 = arith.addf %454, %401 : vector<64x32xf32>
    %456 = arith.truncf %8 : vector<8x64xf32> to vector<8x64xbf16>
    %457 = arith.truncf %455 : vector<64x32xf32> to vector<64x32xbf16>
    %cst_192 = arith.constant dense<0.000000e+00> : vector<8x32xf32>
    %458 = tpu.matmul %456, %457, %cst_192 {dimension_numbers = #tpu.dot_dimension_numbers<[1], [0], [0], [1], [0, 0, 1, 1], [], []>} : vector<8x64xbf16>, vector<64x32xbf16>, vector<8x32xf32> -> vector<8x32xf32>
    %c29 = arith.constant 29 : index
    %c0_193 = arith.constant 0 : index
    %459 = vector.load %arg3[%c29, %c0_193] : memref<40x128xf32, #tpu.memory_space<vmem>>, vector<1x32xf32>
    %c30 = arith.constant 30 : index
    %c0_194 = arith.constant 0 : index
    %460 = vector.load %arg3[%c30, %c0_194] : memref<40x128xf32, #tpu.memory_space<vmem>>, vector<1x32xf32>
    %cst_195 = arith.constant dense<0.000000e+00> : vector<8xf32>
    %461 = vector.multi_reduction <add>, %458, %cst_195 [1] : vector<8x32xf32> to vector<8xf32>
    %462 = vector.shape_cast %461 : vector<8xf32> to vector<8x1xf32>
    %cst_196 = arith.constant 3.200000e+01 : f32
    %463 = vector.broadcast %cst_196 : f32 to vector<8x1xf32>
    %464 = arith.divf %462, %463 : vector<8x1xf32>
    %465 = arith.mulf %458, %458 : vector<8x32xf32>
    %cst_197 = arith.constant dense<0.000000e+00> : vector<8xf32>
    %466 = vector.multi_reduction <add>, %465, %cst_197 [1] : vector<8x32xf32> to vector<8xf32>
    %467 = vector.shape_cast %466 : vector<8xf32> to vector<8x1xf32>
    %cst_198 = arith.constant 3.200000e+01 : f32
    %468 = vector.broadcast %cst_198 : f32 to vector<8x1xf32>
    %469 = arith.divf %467, %468 : vector<8x1xf32>
    %470 = arith.mulf %464, %464 : vector<8x1xf32>
    %471 = arith.subf %469, %470 : vector<8x1xf32>
    %472 = vector.broadcast %464 : vector<8x1xf32> to vector<8x32xf32>
    %473 = arith.subf %458, %472 : vector<8x32xf32>
    %cst_199 = arith.constant 9.99999974E-6 : f32
    %474 = vector.broadcast %cst_199 : f32 to vector<8x1xf32>
    %475 = arith.addf %471, %474 : vector<8x1xf32>
    %476 = math.rsqrt %475 : vector<8x1xf32>
    %477 = vector.broadcast %476 : vector<8x1xf32> to vector<8x32xf32>
    %478 = arith.mulf %473, %477 : vector<8x32xf32>
    %479 = vector.broadcast %459 : vector<1x32xf32> to vector<8x32xf32>
    %480 = arith.mulf %478, %479 : vector<8x32xf32>
    %481 = vector.broadcast %460 : vector<1x32xf32> to vector<8x32xf32>
    %482 = arith.addf %480, %481 : vector<8x32xf32>
    %c368_200 = arith.constant 368 : index
    %c64_201 = arith.constant 64 : index
    %483 = vector.load %arg2[%c368_200, %c64_201] : memref<400x128xbf16, #tpu.memory_space<vmem>>, vector<32x32xbf16>
    %c31 = arith.constant 31 : index
    %c0_202 = arith.constant 0 : index
    %484 = vector.load %arg3[%c31, %c0_202] : memref<40x128xf32, #tpu.memory_space<vmem>>, vector<1x32xf32>
    %485 = arith.truncf %482 : vector<8x32xf32> to vector<8x32xbf16>
    %cst_203 = arith.constant dense<0.000000e+00> : vector<8x32xf32>
    %486 = tpu.matmul %485, %483, %cst_203 {dimension_numbers = #tpu.dot_dimension_numbers<[1], [0], [0], [1], [0, 0, 1, 1], [], []>} : vector<8x32xbf16>, vector<32x32xbf16>, vector<8x32xf32> -> vector<8x32xf32>
    %487 = vector.broadcast %484 : vector<1x32xf32> to vector<8x32xf32>
    %488 = arith.addf %486, %487 : vector<8x32xf32>
    %cst_204 = arith.constant 5.000000e-01 : f32
    %489 = vector.broadcast %cst_204 : f32 to vector<8x32xf32>
    %490 = arith.mulf %489, %488 : vector<8x32xf32>
    %cst_205 = arith.constant 0.707106769 : f32
    %491 = vector.broadcast %cst_205 : f32 to vector<8x32xf32>
    %492 = arith.mulf %488, %491 : vector<8x32xf32>
    %493 = math.absf %492 : vector<8x32xf32>
    %cst_206 = arith.constant 0.327591091 : f32
    %494 = vector.broadcast %cst_206 : f32 to vector<8x32xf32>
    %495 = arith.mulf %494, %493 : vector<8x32xf32>
    %cst_207 = arith.constant 1.000000e+00 : f32
    %496 = vector.broadcast %cst_207 : f32 to vector<8x32xf32>
    %497 = arith.addf %496, %495 : vector<8x32xf32>
    %cst_208 = arith.constant 1.000000e+00 : f32
    %498 = vector.broadcast %cst_208 : f32 to vector<8x32xf32>
    %499 = arith.divf %498, %497 : vector<8x32xf32>
    %cst_209 = arith.constant 1.06140542 : f32
    %500 = vector.broadcast %cst_209 : f32 to vector<8x32xf32>
    %501 = arith.mulf %500, %499 : vector<8x32xf32>
    %cst_210 = arith.constant -1.45315206 : f32
    %502 = vector.broadcast %cst_210 : f32 to vector<8x32xf32>
    %503 = arith.addf %501, %502 : vector<8x32xf32>
    %504 = arith.mulf %503, %499 : vector<8x32xf32>
    %cst_211 = arith.constant 1.42141378 : f32
    %505 = vector.broadcast %cst_211 : f32 to vector<8x32xf32>
    %506 = arith.addf %504, %505 : vector<8x32xf32>
    %507 = arith.mulf %506, %499 : vector<8x32xf32>
    %cst_212 = arith.constant -0.284496725 : f32
    %508 = vector.broadcast %cst_212 : f32 to vector<8x32xf32>
    %509 = arith.addf %507, %508 : vector<8x32xf32>
    %510 = arith.mulf %509, %499 : vector<8x32xf32>
    %cst_213 = arith.constant 0.254829586 : f32
    %511 = vector.broadcast %cst_213 : f32 to vector<8x32xf32>
    %512 = arith.addf %510, %511 : vector<8x32xf32>
    %513 = arith.mulf %512, %499 : vector<8x32xf32>
    %cst_214 = arith.constant 0.000000e+00 : f32
    %514 = vector.broadcast %cst_214 : f32 to vector<8x32xf32>
    %515 = arith.subf %514, %493 : vector<8x32xf32>
    %516 = arith.mulf %515, %493 : vector<8x32xf32>
    %517 = math.exp %516 : vector<8x32xf32>
    %518 = arith.mulf %513, %517 : vector<8x32xf32>
    %cst_215 = arith.constant 1.000000e+00 : f32
    %519 = vector.broadcast %cst_215 : f32 to vector<8x32xf32>
    %520 = arith.subf %519, %518 : vector<8x32xf32>
    %cst_216 = arith.constant 0.000000e+00 : f32
    %521 = vector.broadcast %cst_216 : f32 to vector<8x32xf32>
    %522 = arith.cmpf oge, %492, %521 : vector<8x32xf32>
    %cst_217 = arith.constant 0.000000e+00 : f32
    %523 = vector.broadcast %cst_217 : f32 to vector<8x32xf32>
    %524 = arith.subf %523, %520 : vector<8x32xf32>
    %525 = arith.select %522, %520, %524 : vector<8x32xi1>, vector<8x32xf32>
    %cst_218 = arith.constant 1.000000e+00 : f32
    %526 = vector.broadcast %cst_218 : f32 to vector<8x32xf32>
    %527 = arith.addf %526, %525 : vector<8x32xf32>
    %528 = arith.mulf %490, %527 : vector<8x32xf32>
    %c368_219 = arith.constant 368 : index
    %c96_220 = arith.constant 96 : index
    %529 = vector.load %arg2[%c368_219, %c96_220] : memref<400x128xbf16, #tpu.memory_space<vmem>>, vector<32x16xbf16>
    %c32_221 = arith.constant 32 : index
    %c0_222 = arith.constant 0 : index
    %530 = vector.load %arg3[%c32_221, %c0_222] : memref<40x128xf32, #tpu.memory_space<vmem>>, vector<1x16xf32>
    %531 = arith.truncf %528 : vector<8x32xf32> to vector<8x32xbf16>
    %cst_223 = arith.constant dense<0.000000e+00> : vector<8x16xf32>
    %532 = tpu.matmul %531, %529, %cst_223 {dimension_numbers = #tpu.dot_dimension_numbers<[1], [0], [0], [1], [0, 0, 1, 1], [], []>} : vector<8x32xbf16>, vector<32x16xbf16>, vector<8x16xf32> -> vector<8x16xf32>
    %533 = vector.broadcast %530 : vector<1x16xf32> to vector<8x16xf32>
    %534 = arith.addf %532, %533 : vector<8x16xf32>
    %cst_224 = arith.constant 5.000000e-01 : f32
    %535 = vector.broadcast %cst_224 : f32 to vector<8x16xf32>
    %536 = arith.mulf %535, %534 : vector<8x16xf32>
    %cst_225 = arith.constant 0.707106769 : f32
    %537 = vector.broadcast %cst_225 : f32 to vector<8x16xf32>
    %538 = arith.mulf %534, %537 : vector<8x16xf32>
    %539 = math.absf %538 : vector<8x16xf32>
    %cst_226 = arith.constant 0.327591091 : f32
    %540 = vector.broadcast %cst_226 : f32 to vector<8x16xf32>
    %541 = arith.mulf %540, %539 : vector<8x16xf32>
    %cst_227 = arith.constant 1.000000e+00 : f32
    %542 = vector.broadcast %cst_227 : f32 to vector<8x16xf32>
    %543 = arith.addf %542, %541 : vector<8x16xf32>
    %cst_228 = arith.constant 1.000000e+00 : f32
    %544 = vector.broadcast %cst_228 : f32 to vector<8x16xf32>
    %545 = arith.divf %544, %543 : vector<8x16xf32>
    %cst_229 = arith.constant 1.06140542 : f32
    %546 = vector.broadcast %cst_229 : f32 to vector<8x16xf32>
    %547 = arith.mulf %546, %545 : vector<8x16xf32>
    %cst_230 = arith.constant -1.45315206 : f32
    %548 = vector.broadcast %cst_230 : f32 to vector<8x16xf32>
    %549 = arith.addf %547, %548 : vector<8x16xf32>
    %550 = arith.mulf %549, %545 : vector<8x16xf32>
    %cst_231 = arith.constant 1.42141378 : f32
    %551 = vector.broadcast %cst_231 : f32 to vector<8x16xf32>
    %552 = arith.addf %550, %551 : vector<8x16xf32>
    %553 = arith.mulf %552, %545 : vector<8x16xf32>
    %cst_232 = arith.constant -0.284496725 : f32
    %554 = vector.broadcast %cst_232 : f32 to vector<8x16xf32>
    %555 = arith.addf %553, %554 : vector<8x16xf32>
    %556 = arith.mulf %555, %545 : vector<8x16xf32>
    %cst_233 = arith.constant 0.254829586 : f32
    %557 = vector.broadcast %cst_233 : f32 to vector<8x16xf32>
    %558 = arith.addf %556, %557 : vector<8x16xf32>
    %559 = arith.mulf %558, %545 : vector<8x16xf32>
    %cst_234 = arith.constant 0.000000e+00 : f32
    %560 = vector.broadcast %cst_234 : f32 to vector<8x16xf32>
    %561 = arith.subf %560, %539 : vector<8x16xf32>
    %562 = arith.mulf %561, %539 : vector<8x16xf32>
    %563 = math.exp %562 : vector<8x16xf32>
    %564 = arith.mulf %559, %563 : vector<8x16xf32>
    %cst_235 = arith.constant 1.000000e+00 : f32
    %565 = vector.broadcast %cst_235 : f32 to vector<8x16xf32>
    %566 = arith.subf %565, %564 : vector<8x16xf32>
    %cst_236 = arith.constant 0.000000e+00 : f32
    %567 = vector.broadcast %cst_236 : f32 to vector<8x16xf32>
    %568 = arith.cmpf oge, %538, %567 : vector<8x16xf32>
    %cst_237 = arith.constant 0.000000e+00 : f32
    %569 = vector.broadcast %cst_237 : f32 to vector<8x16xf32>
    %570 = arith.subf %569, %566 : vector<8x16xf32>
    %571 = arith.select %568, %566, %570 : vector<8x16xi1>, vector<8x16xf32>
    %cst_238 = arith.constant 1.000000e+00 : f32
    %572 = vector.broadcast %cst_238 : f32 to vector<8x16xf32>
    %573 = arith.addf %572, %571 : vector<8x16xf32>
    %574 = arith.mulf %536, %573 : vector<8x16xf32>
    %c0_239 = arith.constant 0 : index
    %c32_240 = arith.constant 32 : index
    %575 = vector.load %arg2[%c0_239, %c32_240] : memref<400x128xbf16, #tpu.memory_space<vmem>>, vector<16x1xbf16>
    %c33 = arith.constant 33 : index
    %c0_241 = arith.constant 0 : index
    %576 = vector.load %arg3[%c33, %c0_241] : memref<40x128xf32, #tpu.memory_space<vmem>>, vector<1x1xf32>
    %577 = arith.truncf %574 : vector<8x16xf32> to vector<8x16xbf16>
    %cst_242 = arith.constant dense<0.000000e+00> : vector<8x1xf32>
    %578 = tpu.matmul %577, %575, %cst_242 {dimension_numbers = #tpu.dot_dimension_numbers<[1], [0], [0], [1], [0, 0, 1, 1], [], []>} : vector<8x16xbf16>, vector<16x1xbf16>, vector<8x1xf32> -> vector<8x1xf32>
    %579 = vector.broadcast %576 : vector<1x1xf32> to vector<8x1xf32>
    %580 = arith.addf %578, %579 : vector<8x1xf32>
    %c0_243 = arith.constant 0 : index
    %c0_244 = arith.constant 0 : index
    %581 = vector.load %arg8[%c0_243, %c0_244] : memref<8x1xf32, #tpu.memory_space<vmem>>, vector<8x1xf32>
    tpu.vector_store %arg8[%c0_243, %c0_244], %580 {strides = array<i32>} : memref<8x1xf32, #tpu.memory_space<vmem>>, vector<8x1xf32>,
    return
  }
  func.func @transform_0(%arg0: i32) -> (i32, i32) {
    %c0_i32 = arith.constant 0 : i32
    %c0_i32_0 = arith.constant 0 : i32
    return %arg0, %c0_i32 : i32, i32
  }
  func.func @transform_1(%arg0: i32) -> (i32, i32) {
    %c0_i32 = arith.constant 0 : i32
    %c0_i32_0 = arith.constant 0 : i32
    %c0_i32_1 = arith.constant 0 : i32
    return %c0_i32, %c0_i32_0 : i32, i32
  }
  func.func @transform_2(%arg0: i32) -> (i32, i32) {
    %c0_i32 = arith.constant 0 : i32
    %c0_i32_0 = arith.constant 0 : i32
    %c0_i32_1 = arith.constant 0 : i32
    return %c0_i32, %c0_i32_0 : i32, i32
  }
  func.func @transform_3(%arg0: i32) -> (i32, i32) {
    %c0_i32 = arith.constant 0 : i32
    %c0_i32_0 = arith.constant 0 : i32
    %c0_i32_1 = arith.constant 0 : i32
    return %c0_i32, %c0_i32_0 : i32, i32
  }
  func.func @transform_4(%arg0: i32) -> (i32, i32) {
    %c0_i32 = arith.constant 0 : i32
    %c0_i32_0 = arith.constant 0 : i32
    %c0_i32_1 = arith.constant 0 : i32
    return %c0_i32, %c0_i32_0 : i32, i32
  }
  func.func @transform_5(%arg0: i32) -> (i32, i32) {
    %c0_i32 = arith.constant 0 : i32
    %c0_i32_0 = arith.constant 0 : i32
    %c0_i32_1 = arith.constant 0 : i32
    return %c0_i32, %c0_i32_0 : i32, i32
  }
  func.func @transform_6(%arg0: i32) -> (i32, i32) {
    %c0_i32 = arith.constant 0 : i32
    %c0_i32_0 = arith.constant 0 : i32
    %c0_i32_1 = arith.constant 0 : i32
    return %c0_i32, %c0_i32_0 : i32, i32
  }
  func.func @transform_7(%arg0: i32) -> (i32, i32) {
    %c0_i32 = arith.constant 0 : i32
    %c0_i32_0 = arith.constant 0 : i32
    return %arg0, %c0_i32 : i32, i32
  }
}

</mosaic_0001>

<llo_original>
// kernel: forward.1
$region0: #{forward.1}
  #allocation0 [shape = 'u32[]', space=smem, size = 0x4, offset = 0x4, fixed_abs, tag = 'smem constant byte address 0x4 - core index']
  #allocation1 [shape = 'u32[144,128]{1,0:T(1,128)}', space=vmem, size = 0x12000, scoped, tag = 'internal scratch']
  %s0 = inlined_call_operand.vmem [shape: bf16[128,16], index: 0, kind: input, shape index: {}]
  %s1 = inlined_call_operand.vmem [shape: bf16[400,128], index: 1, kind: input, shape index: {}]
  %s2 = inlined_call_operand.vmem [shape: f32[40,128], index: 2, kind: input, shape index: {}]
  %s3 = inlined_call_operand.vmem [shape: bf16[512,64], index: 3, kind: input, shape index: {}]
  %s4 = inlined_call_operand.vmem [shape: f32[512,64], index: 4, kind: input, shape index: {}]
  %s5 = inlined_call_operand.vmem [shape: bf16[512,32], index: 5, kind: input, shape index: {}]
  %s6 = inlined_call_operand.vmem [shape: bf16[64,512], index: 6, kind: input, shape index: {}]
  %s7 = inlined_call_operand.vmem [shape: f32[16,1], index: 7, kind: output, shape index: {}]
  %s8 = sld [smem:[#allocation0]]
  $region61: #{forward.1} parent=0
    _
  %s10 = ssub.s32 1, %s8
  %s11 = scalar_select 0, %s10, %s8
  loop: start=0, step=1, limit=4
  $region2: #{forward.1} parent=0 // loop_pre_header
    _
  $region3: #{forward.1} parent=0 // loop_header
    %s13 = sphi 0, %s17
    %p14 = scmp.ge.s32.totalorder %s13, 4
    %s23 = sphi 0, %s25
    %s26 = sphi 0, %s23
    %s27 = sphi 0, %s26
    %s43 = sphi 0, %s27
    %s47 = sphi 0, %s47
    %s49 = sphi 0, %s47
    %s50 = sphi 0, %s49
    %s64 = sphi 0, %s50
    %s68 = sphi 0, %s68
    %s70 = sphi 0, %s68
    %s71 = sphi 0, %s70
    %s85 = sphi 0, %s71
    %s89 = sphi 0, %s89
    %s91 = sphi 0, %s89
    %s92 = sphi 0, %s91
    %s106 = sphi 0, %s92
    %s110 = sphi 0, %s110
    %s112 = sphi 0, %s110
    %s113 = sphi 0, %s112
    %s127 = sphi 0, %s113
    %s131 = sphi 0, %s131
    %s133 = sphi 0, %s131
    %s134 = sphi 0, %s133
    %s148 = sphi 0, %s134
    %s152 = sphi 0, %s152
    %s154 = sphi 0, %s152
    %s155 = sphi 0, %s154
    %s169 = sphi 0, %s155
    %s175 = sphi 0, %s177
    %s178 = sphi 0, %s175
    %s179 = sphi 0, %s178
    %s195 = sphi 0, %s179
  $region4: #{forward.1} parent=0 // loop_header_branch
    %16 = sbr.rel (%p14) target = $region8
  $region5: #{forward.1} parent=0 // loop_body
    %s18 = ssub.s32 %s13, 1
    %s19 = ssub.s32 %s13, 2
    %s20 = sadd.s32 %s13, 1
    %s21 = ssub.s32 %s13, %s20
    %p22 = scmp.eq.s32.totalorder %s21, 0
    %s24 = sadd.s32 %s23, 1
    %s25 = scalar_select %p22, %s23, %s24
    %p28 = pneg %p22
    %p29 = scmp.eq.s32.totalorder %s13, 1
    %p30 = por %p28, %p29
    %p31 = scmp.ne.s32.totalorder %s23, %s26
    %p32 = scmp.eq.s32.totalorder %s13, 0
    %p33 = por %p31, %p32
    %p34 = scmp.ne.s32.totalorder %s23, %s26
    %p35 = scmp.eq.s32.totalorder %s18, 1
    %p36 = por %p34, %p35
    %p37 = scmp.ne.s32.totalorder %s26, %s27
    %p38 = scmp.eq.s32.totalorder %s18, 0
    %p39 = por %p37, %p38
    %p40 = scmp.ne.s32.totalorder %s26, %s27
    %p41 = scmp.eq.s32.totalorder %s19, 1
    %p42 = por %p40, %p41
    %p44 = scmp.ne.s32.totalorder %s27, %s43
    %p45 = scmp.eq.s32.totalorder %s19, 0
    %p46 = por %p44, %p45
    %s48 = sadd.s32 %s47, 1
    %p51 = scmp.eq.s32.totalorder %s13, 1
    %p52 = scmp.ne.s32.totalorder %s47, %s49
    %p53 = scmp.eq.s32.totalorder %s13, 0
    %p54 = por %p52, %p53
    %p55 = scmp.ne.s32.totalorder %s47, %s49
    %p56 = scmp.eq.s32.totalorder %s18, 1
    %p57 = por %p55, %p56
    %p58 = scmp.ne.s32.totalorder %s49, %s50
    %p59 = scmp.eq.s32.totalorder %s18, 0
    %p60 = por %p58, %p59
    %p61 = scmp.ne.s32.totalorder %s49, %s50
    %p62 = scmp.eq.s32.totalorder %s19, 1
    %p63 = por %p61, %p62
    %p65 = scmp.ne.s32.totalorder %s50, %s64
    %p66 = scmp.eq.s32.totalorder %s19, 0
    %p67 = por %p65, %p66
    %s69 = sadd.s32 %s68, 1
    %p72 = scmp.eq.s32.totalorder %s13, 1
    %p73 = scmp.ne.s32.totalorder %s68, %s70
    %p74 = scmp.eq.s32.totalorder %s13, 0
    %p75 = por %p73, %p74
    %p76 = scmp.ne.s32.totalorder %s68, %s70
    %p77 = scmp.eq.s32.totalorder %s18, 1
    %p78 = por %p76, %p77
    %p79 = scmp.ne.s32.totalorder %s70, %s71
    %p80 = scmp.eq.s32.totalorder %s18, 0
    %p81 = por %p79, %p80
    %p82 = scmp.ne.s32.totalorder %s70, %s71
    %p83 = scmp.eq.s32.totalorder %s19, 1
    %p84 = por %p82, %p83
    %p86 = scmp.ne.s32.totalorder %s71, %s85
    %p87 = scmp.eq.s32.totalorder %s19, 0
    %p88 = por %p86, %p87
    %s90 = sadd.s32 %s89, 1
    %p93 = scmp.eq.s32.totalorder %s13, 1
    %p94 = scmp.ne.s32.totalorder %s89, %s91
    %p95 = scmp.eq.s32.totalorder %s13, 0
    %p96 = por %p94, %p95
    %p97 = scmp.ne.s32.totalorder %s89, %s91
    %p98 = scmp.eq.s32.totalorder %s18, 1
    %p99 = por %p97, %p98
    %p100 = scmp.ne.s32.totalorder %s91, %s92
    %p101 = scmp.eq.s32.totalorder %s18, 0
    %p102 = por %p100, %p101
    %p103 = scmp.ne.s32.totalorder %s91, %s92
    %p104 = scmp.eq.s32.totalorder %s19, 1
    %p105 = por %p103, %p104
    %p107 = scmp.ne.s32.totalorder %s92, %s106
    %p108 = scmp.eq.s32.totalorder %s19, 0
    %p109 = por %p107, %p108
    %s111 = sadd.s32 %s110, 1
    %p114 = scmp.eq.s32.totalorder %s13, 1
    %p115 = scmp.ne.s32.totalorder %s110, %s112
    %p116 = scmp.eq.s32.totalorder %s13, 0
    %p117 = por %p115, %p116
    %p118 = scmp.ne.s32.totalorder %s110, %s112
    %p119 = scmp.eq.s32.totalorder %s18, 1
    %p120 = por %p118, %p119
    %p121 = scmp.ne.s32.totalorder %s112, %s113
    %p122 = scmp.eq.s32.totalorder %s18, 0
    %p123 = por %p121, %p122
    %p124 = scmp.ne.s32.totalorder %s112, %s113
    %p125 = scmp.eq.s32.totalorder %s19, 1
    %p126 = por %p124, %p125
    %p128 = scmp.ne.s32.totalorder %s113, %s127
    %p129 = scmp.eq.s32.totalorder %s19, 0
    %p130 = por %p128, %p129
    %s132 = sadd.s32 %s131, 1
    %p135 = scmp.eq.s32.totalorder %s13, 1
    %p136 = scmp.ne.s32.totalorder %s131, %s133
    %p137 = scmp.eq.s32.totalorder %s13, 0
    %p138 = por %p136, %p137
    %p139 = scmp.ne.s32.totalorder %s131, %s133
    %p140 = scmp.eq.s32.totalorder %s18, 1
    %p141 = por %p139, %p140
    %p142 = scmp.ne.s32.totalorder %s133, %s134
    %p143 = scmp.eq.s32.totalorder %s18, 0
    %p144 = por %p142, %p143
    %p145 = scmp.ne.s32.totalorder %s133, %s134
    %p146 = scmp.eq.s32.totalorder %s19, 1
    %p147 = por %p145, %p146
    %p149 = scmp.ne.s32.totalorder %s134, %s148
    %p150 = scmp.eq.s32.totalorder %s19, 0
    %p151 = por %p149, %p150
    %s153 = sadd.s32 %s152, 1
    %p156 = scmp.eq.s32.totalorder %s13, 1
    %p157 = scmp.ne.s32.totalorder %s152, %s154
    %p158 = scmp.eq.s32.totalorder %s13, 0
    %p159 = por %p157, %p158
    %p160 = scmp.ne.s32.totalorder %s152, %s154
    %p161 = scmp.eq.s32.totalorder %s18, 1
    %p162 = por %p160, %p161
    %p163 = scmp.ne.s32.totalorder %s154, %s155
    %p164 = scmp.eq.s32.totalorder %s18, 0
    %p165 = por %p163, %p164
    %p166 = scmp.ne.s32.totalorder %s154, %s155
    %p167 = scmp.eq.s32.totalorder %s19, 1
    %p168 = por %p166, %p167
    %p170 = scmp.ne.s32.totalorder %s155, %s169
    %p171 = scmp.eq.s32.totalorder %s19, 0
    %p172 = por %p170, %p171
    %s173 = ssub.s32 %s13, %s20
    %p174 = scmp.eq.s32.totalorder %s173, 0
    %s176 = sadd.s32 %s175, 1
    %s177 = scalar_select %p174, %s175, %s176
    %p180 = pneg %p174
    %p181 = scmp.eq.s32.totalorder %s13, 1
    %p182 = por %p180, %p181
    %p183 = scmp.ne.s32.totalorder %s175, %s178
    %p184 = scmp.eq.s32.totalorder %s13, 0
    %p185 = por %p183, %p184
    %p186 = scmp.ne.s32.totalorder %s175, %s178
    %p187 = scmp.eq.s32.totalorder %s18, 1
    %p188 = por %p186, %p187
    %p189 = scmp.ne.s32.totalorder %s178, %s179
    %p190 = scmp.eq.s32.totalorder %s18, 0
    %p191 = por %p189, %p190
    %p192 = scmp.ne.s32.totalorder %s178, %s179
    %p193 = scmp.eq.s32.totalorder %s19, 1
    %p194 = por %p192, %p193
    %p196 = scmp.ne.s32.totalorder %s179, %s195
    %p197 = scmp.eq.s32.totalorder %s19, 0
    %p198 = por %p196, %p197
    %p199 = scmp.le.s32.totalorder 1, %s13
    %p200 = scmp.lt.s32.totalorder %s13, 3
    %p201 = pnand %p199, %p200
    %p202 = pneg %p201
    // Predicated region
    $region9: #{forward.1} parent=5 // pred_check
      _
    $region10: #{forward.1} parent=5 // pred_check_branch
      %204 = sbr.rel (%p201) target = $region12
    $region11: #{forward.1} parent=5 // pred_region
      %s205 = ssub.s32 %s13, 1
      // Predicated region
      $region13: #{forward.1} parent=11 // pred_check
        %p206 = pneg %p60
      $region14: #{forward.1} parent=11 // pred_check_branch
        %208 = sbr.rel (%p206) target = $region16
      $region15: #{forward.1} parent=11 // pred_region
        _
      $region16: #{forward.1} parent=11 // pred_fallthru
        _
      // Predicated region
      $region17: #{forward.1} parent=11 // pred_check
        %p209 = pneg %p81
      $region18: #{forward.1} parent=11 // pred_check_branch
        %211 = sbr.rel (%p209) target = $region20
      $region19: #{forward.1} parent=11 // pred_region
        _
      $region20: #{forward.1} parent=11 // pred_fallthru
        _
      // Predicated region
      $region21: #{forward.1} parent=11 // pred_check
        %p212 = pneg %p102
      $region22: #{forward.1} parent=11 // pred_check_branch
        %214 = sbr.rel (%p212) target = $region24
      $region23: #{forward.1} parent=11 // pred_region
        _
      $region24: #{forward.1} parent=11 // pred_fallthru
        _
      // Predicated region
      $region25: #{forward.1} parent=11 // pred_check
        %p215 = pneg %p123
      $region26: #{forward.1} parent=11 // pred_check_branch
        %217 = sbr.rel (%p215) target = $region28
      $region27: #{forward.1} parent=11 // pred_region
        _
      $region28: #{forward.1} parent=11 // pred_fallthru
        _
      // Predicated region
      $region29: #{forward.1} parent=11 // pred_check
        %p218 = pneg %p144
      $region30: #{forward.1} parent=11 // pred_check_branch
        %220 = sbr.rel (%p218) target = $region32
      $region31: #{forward.1} parent=11 // pred_region
        _
      $region32: #{forward.1} parent=11 // pred_fallthru
        _
      // Predicated region
      $region33: #{forward.1} parent=11 // pred_check
        %p221 = pneg %p165
      $region34: #{forward.1} parent=11 // pred_check_branch
        %223 = sbr.rel (%p221) target = $region36
      $region35: #{forward.1} parent=11 // pred_region
        _
      $region36: #{forward.1} parent=11 // pred_fallthru
        _
    $region12: #{forward.1} parent=5 // pred_fallthru
      _
    %p224 = scmp.lt.s32.totalorder %s13, 2
    // Predicated region
    $region37: #{forward.1} parent=5 // pred_check
      %p225 = pneg %p224
    $region38: #{forward.1} parent=5 // pred_check_branch
      %227 = sbr.rel (%p225) target = $region40
    $region39: #{forward.1} parent=5 // pred_region
      // Predicated region
      $region41: #{forward.1} parent=39 // pred_check
        %p228 = pneg %p33
      $region42: #{forward.1} parent=39 // pred_check_branch
        %230 = sbr.rel (%p228) target = $region44
      $region43: #{forward.1} parent=39 // pred_region
        %s231 = smul.u32 8, %s13
        %p232 = scmp.lt.s32.totalorder %s231, 15
        %s233 = scalar_select %p232, %s231, 15
        %s234 = smul.addr %s233, 4
        %s235 = scalar_lea.vmem %s0, %s234
        %s236 = smul.u32 8, %s13
      $region44: #{forward.1} parent=39 // pred_fallthru
        _
    $region40: #{forward.1} parent=5 // pred_fallthru
      _
    %p237 = scmp.le.s32.totalorder 1, %s13
    %p238 = scmp.lt.s32.totalorder %s13, 3
    %p239 = pnand %p237, %p238
    %p240 = pneg %p239
    // Predicated region
    $region45: #{forward.1} parent=5 // pred_check
      _
    $region46: #{forward.1} parent=5 // pred_check_branch
      %242 = sbr.rel (%p239) target = $region48
    $region47: #{forward.1} parent=5 // pred_region
      %s243 = ssub.s32 %s13, 1
      %s244 = smul.u32 8, %s18
      %p245 = scmp.lt.s32.totalorder %s244, 15
      %s246 = scalar_select %p245, %s244, 15
      %s247 = smul.addr %s246, 4
      %s248 = scalar_lea.vmem %s0, %s247
      %p249 = pneg %p39
      %p250 = pneg %p36
      %p251 = pneg %p60
      %p252 = pneg %p57
      %p253 = pneg %p81
      %p254 = pneg %p78
      %p255 = pneg %p102
      %p256 = pneg %p99
      %p257 = pneg %p123
      %p258 = pneg %p120
      %p259 = pneg %p144
      %p260 = pneg %p141
      %p261 = pneg %p165
      %p262 = pneg %p162
      %p263 = pneg %p191
      %p264 = pneg %p188
      %p265 = scmp.lt.s32.totalorder %s18, 1
      %s266 = scalar_select %p265, %s18, 1
      %s267 = smul.addr %s266, 8
      %s268 = scalar_lea.vmem %s7, %s267
      %s269 = smul.u32 8, %s18
      %p270 = scmp.lt.s32.totalorder %s269, 15
      %s271 = scalar_select %p270, %s269, 15
      %s272 = smul.addr %s271, 4
      %s273 = scalar_lea.vmem %s0, %s272
      %s274 = smul.u32 8, %s18
      %p275 = scmp.lt.s32.totalorder %s18, 1
      %s276 = scalar_select %p275, %s18, 1
      %s277 = smul.addr %s276, 8
      %s278 = scalar_lea.vmem %s7, %s277
      %v280 = vlaneseq
      %v281 = vshrl.u32 %v280, 7
      %v282 = vlaneseq
      %v283 = vand.u32 %v282, 127
      %v284 = vmul.u32 %v281, 8
      %v285 = vadd.s32 %v284, 7
      %vm286 = vcmp.eq.s32.totalorder %v283, %v285
      %v287 = vld [vmem:[%s273] sm:$0xf]
      %v288 = vld [vmem:[%s273 + $0x4] sm:$0xf]
      %v289 = vld [vmem:[%s273 + $0x8] sm:$0xf]
      %v290 = vld [vmem:[%s273 + $0xc] sm:$0xf]
      %v291 = vld [vmem:[%s273 + $0x10] sm:$0xf]
      %v292 = vld [vmem:[%s273 + $0x14] sm:$0xf]
      %v293 = vld [vmem:[%s273 + $0x18] sm:$0xf]
      %v294 = vld [vmem:[%s273 + $0x1c] sm:$0xf]
      %v295 = vld [vmem:[%s1] sm:$0xf]
      %v296 = vld [vmem:[%s1 + $0x4] sm:$0xf]
      %v297 = vld [vmem:[%s2] sm:$0x1]
      %v298 = vlaneseq
      %v299 = vshrl.u32 %v298, 7
      %v300 = vsub.s32 0, %v299
      %v301 = vrot.slane %v297, %v300
      %v310 = vunpack.c.l.b16 %v287
      %v311 = vunpack.c.l.b16 %v288
      %v312 = vunpack.c.l.b16 %v289
      %v313 = vunpack.c.l.b16 %v290
      %v314 = vunpack.c.l.b16 %v291
      %v315 = vunpack.c.l.b16 %v292
      %v316 = vunpack.c.l.b16 %v293
      %v317 = vunpack.c.l.b16 %v294
      %v318 = vpack.c.b16 %v311, %v310
      %v319 = vpack.c.b16 %v313, %v312
      %v320 = vpack.c.b16 %v315, %v314
      %v321 = vpack.c.b16 %v317, %v316
      %v324 = vunpack.c.l.b16 %v295
      %v325 = vunpack.c.l.b16 %v296
      %v326 = vpack.c.b16 %v325, %v324
      %vm328 = vcmask 130048
      %v330 = vsel %vm328, %v318, 0
      %v333 = vsel %vm328, %v319, 0
      %v336 = vsel %vm328, %v320, 0
      %v339 = vsel %vm328, %v321, 0
      %341 = vmatprep.subr.bf16.mxu0 0
      %342 = vmatpush1.bf16.msra.mxu0 0
      %343 = vmatprep.subr.bf16.mxu0 0
      %344 = vmatpush1.bf16.msra.mxu0 0
      %345 = vmatprep.subr.bf16.mxu0 0
      %346 = vmatpush1.bf16.msra.mxu0 0
      %347 = vmatprep.subr.bf16.mxu0 0
      %348 = vmatpush1.bf16.msra.mxu0 0
      %349 = vmatprep.subr.bf16.mxu0 0
      %350 = vmatpush1.bf16.msra.mxu0 0
      %351 = vmatprep.subr.bf16.mxu0 0
      %352 = vmatpush1.bf16.msra.mxu0 0
      %353 = vmatprep.subr.bf16.mxu0 0
      %354 = vmatpush1.bf16.msra.mxu0 0
      %355 = vmatprep.subr.bf16.mxu0 0
      %356 = vmatpush1.bf16.msra.mxu0 %v326
      %357 = vmatprep.subr.bf16.mxu0 0
      %358 = vmatpush2.bf16.msra.mxu0 0
      %359 = vmatprep.subr.bf16.mxu0 0
      %360 = vmatpush2.bf16.msra.mxu0 0
      %361 = vmatprep.subr.bf16.mxu0 0
      %362 = vmatpush2.bf16.msra.mxu0 0
      %363 = vmatprep.subr.bf16.mxu0 0
      %364 = vmatpush2.bf16.msra.mxu0 0
      %365 = vmatprep.subr.bf16.mxu0 0
      %366 = vmatpush2.bf16.msra.mxu0 0
      %367 = vmatprep.subr.bf16.mxu0 0
      %368 = vmatpush2.bf16.msra.mxu0 0
      %369 = vmatprep.subr.bf16.mxu0 0
      %370 = vmatpush2.bf16.msra.mxu0 0
      %371 = vmatprep.subr.bf16.mxu0 0
      %372 = vmatpush2.bf16.msra.mxu0 0
      %373 = vmatprep.mubr.bf16.mxu0 0
      %374 = vmatmul.mubr.bf16.gmra.mxu0 %v330
      %v375 = vpop.f32.mrf.mxu0
      %v376 = vadd.f32 %v301, %v375
      %v377 = vpop.f32.mrf.mxu0
      %v378 = vpop.f32.mrf.mxu0
      %v379 = vadd.f32 %v301, %v378
      %v380 = vpop.f32.mrf.mxu0
      %381 = vmatprep.mubr.bf16.mxu0 0
      %382 = vmatmul.mubr.bf16.gmra.mxu0 %v333
      %v383 = vpop.f32.mrf.mxu0
      %v384 = vadd.f32 %v301, %v383
      %v385 = vpop.f32.mrf.mxu0
      %v386 = vpop.f32.mrf.mxu0
      %v387 = vadd.f32 %v301, %v386
      %v388 = vpop.f32.mrf.mxu0
      %389 = vmatprep.mubr.bf16.mxu0 0
      %390 = vmatmul.mubr.bf16.gmra.mxu0 %v336
      %v391 = vpop.f32.mrf.mxu0
      %v392 = vadd.f32 %v301, %v391
      %v393 = vpop.f32.mrf.mxu0
      %v394 = vpop.f32.mrf.mxu0
      %v395 = vadd.f32 %v301, %v394
      %v396 = vpop.f32.mrf.mxu0
      %397 = vmatprep.mubr.bf16.mxu0 0
      %398 = vmatmul.mubr.bf16.gmra.mxu0 %v339
      %v399 = vpop.f32.mrf.mxu0
      %v400 = vadd.f32 %v301, %v399
      %v401 = vpop.f32.mrf.mxu0
      %v402 = vpop.f32.mrf.mxu0
      %v403 = vadd.f32 %v301, %v402
      %v404 = vpop.f32.mrf.mxu0
      %405 = vdwg.mxu0
      %v406 = vld [vmem:[%s1 + $0x8] sm:$0xf]
      %v407 = vld [vmem:[%s1 + $0xc] sm:$0xf]
      %v408 = vld [vmem:[%s1 + $0x10] sm:$0xf]
      %v409 = vld [vmem:[%s1 + $0x14] sm:$0xf]
      %v410 = vld [vmem:[%s2 + $0x1] sm:$0x1]
      %v411 = vpack.c.bf16 %v379, %v376
      %v412 = vpack.c.bf16 %v387, %v384
      %v413 = vpack.c.bf16 %v395, %v392
      %v414 = vpack.c.bf16 %v403, %v400
      %v415 = vlaneseq
      %v416 = vshrl.u32 %v415, 7
      %v417 = vsub.s32 0, %v416
      %v418 = vrot.slane %v410, %v417
      %v423 = vunpack.c.l.b16 %v406
      %v424 = vunpack.c.l.b16 %v407
      %v425 = vunpack.c.l.b16 %v408
      %v426 = vunpack.c.l.b16 %v409
      %v427 = vpack.c.b16 %v424, %v423
      %v428 = vpack.c.b16 %v426, %v425
      %vm431 = vcmask 261120
      %v433 = vsel %vm431, %v411, 0
      %v436 = vsel %vm431, %v412, 0
      %v439 = vsel %vm431, %v413, 0
      %v442 = vsel %vm431, %v414, 0
      %444 = vmatprep.subr.bf16.mxu0 0
      %445 = vmatpush1.bf16.msra.mxu0 0
      %446 = vmatprep.subr.bf16.mxu0 0
      %447 = vmatpush1.bf16.msra.mxu0 0
      %448 = vmatprep.subr.bf16.mxu0 0
      %449 = vmatpush1.bf16.msra.mxu0 0
      %450 = vmatprep.subr.bf16.mxu0 0
      %451 = vmatpush1.bf16.msra.mxu0 0
      %452 = vmatprep.subr.bf16.mxu0 0
      %453 = vmatpush1.bf16.msra.mxu0 0
      %454 = vmatprep.subr.bf16.mxu0 0
      %455 = vmatpush1.bf16.msra.mxu0 0
      %456 = vmatprep.subr.bf16.mxu0 0
      %457 = vmatpush1.bf16.msra.mxu0 %v428
      %458 = vmatprep.subr.bf16.mxu0 0
      %459 = vmatpush1.bf16.msra.mxu0 %v427
      %460 = vmatprep.subr.bf16.mxu0 0
      %461 = vmatpush2.bf16.msra.mxu0 0
      %462 = vmatprep.subr.bf16.mxu0 0
      %463 = vmatpush2.bf16.msra.mxu0 0
      %464 = vmatprep.subr.bf16.mxu0 0
      %465 = vmatpush2.bf16.msra.mxu0 0
      %466 = vmatprep.subr.bf16.mxu0 0
      %467 = vmatpush2.bf16.msra.mxu0 0
      %468 = vmatprep.subr.bf16.mxu0 0
      %469 = vmatpush2.bf16.msra.mxu0 0
      %470 = vmatprep.subr.bf16.mxu0 0
      %471 = vmatpush2.bf16.msra.mxu0 0
      %472 = vmatprep.subr.bf16.mxu0 0
      %473 = vmatpush2.bf16.msra.mxu0 0
      %474 = vmatprep.subr.bf16.mxu0 0
      %475 = vmatpush2.bf16.msra.mxu0 0
      %476 = vmatprep.mubr.bf16.mxu0 0
      %477 = vmatmul.mubr.bf16.gmra.mxu0 %v433
      %v478 = vpop.f32.mrf.mxu0
      %v479 = vadd.f32 %v418, %v478
      %v480 = vpop.f32.mrf.mxu0
      %v481 = vpop.f32.mrf.mxu0
      %v482 = vadd.f32 %v418, %v481
      %v483 = vpop.f32.mrf.mxu0
      %484 = vmatprep.mubr.bf16.mxu0 0
      %485 = vmatmul.mubr.bf16.gmra.mxu0 %v436
      %v486 = vpop.f32.mrf.mxu0
      %v487 = vadd.f32 %v418, %v486
      %v488 = vpop.f32.mrf.mxu0
      %v489 = vpop.f32.mrf.mxu0
      %v490 = vadd.f32 %v418, %v489
      %v491 = vpop.f32.mrf.mxu0
      %492 = vmatprep.mubr.bf16.mxu0 0
      %493 = vmatmul.mubr.bf16.gmra.mxu0 %v439
      %v494 = vpop.f32.mrf.mxu0
      %v495 = vadd.f32 %v418, %v494
      %v496 = vpop.f32.mrf.mxu0
      %v497 = vpop.f32.mrf.mxu0
      %v498 = vadd.f32 %v418, %v497
      %v499 = vpop.f32.mrf.mxu0
      %500 = vmatprep.mubr.bf16.mxu0 0
      %501 = vmatmul.mubr.bf16.gmra.mxu0 %v442
      %v502 = vpop.f32.mrf.mxu0
      %v503 = vadd.f32 %v418, %v502
      %v504 = vpop.f32.mrf.mxu0
      %v505 = vpop.f32.mrf.mxu0
      %v506 = vadd.f32 %v418, %v505
      %v507 = vpop.f32.mrf.mxu0
      %508 = vdwg.mxu0
      %v509 = vmul.f32 %v479, 0.5
      %v510 = vmul.f32 %v482, 0.5
      %v511 = vmul.f32 %v487, 0.5
      %v512 = vmul.f32 %v490, 0.5
      %v513 = vmul.f32 %v495, 0.5
      %v514 = vmul.f32 %v498, 0.5
      %v515 = vmul.f32 %v503, 0.5
      %v516 = vmul.f32 %v506, 0.5
      %v517 = vmul.f32 %v479, 0.70710677
      %v518 = vmul.f32 %v482, 0.70710677
      %v519 = vmul.f32 %v487, 0.70710677
      %v520 = vmul.f32 %v490, 0.70710677
      %v521 = vmul.f32 %v495, 0.70710677
      %v522 = vmul.f32 %v498, 0.70710677
      %v523 = vmul.f32 %v503, 0.70710677
      %v524 = vmul.f32 %v506, 0.70710677
      %v525 = vand.u32 2147483647, %v517
      %v526 = vand.u32 2147483647, %v518
      %v527 = vand.u32 2147483647, %v519
      %v528 = vand.u32 2147483647, %v520
      %v529 = vand.u32 2147483647, %v521
      %v530 = vand.u32 2147483647, %v522
      %v531 = vand.u32 2147483647, %v523
      %v532 = vand.u32 2147483647, %v524
      %v533 = vmul.f32 %v525, 0.3275911
      %v534 = vmul.f32 %v526, 0.3275911
      %v535 = vmul.f32 %v527, 0.3275911
      %v536 = vmul.f32 %v528, 0.3275911
      %v537 = vmul.f32 %v529, 0.3275911
      %v538 = vmul.f32 %v530, 0.3275911
      %v539 = vmul.f32 %v531, 0.3275911
      %v540 = vmul.f32 %v532, 0.3275911
      %v541 = vadd.f32 %v533, 1.0
      %v542 = vadd.f32 %v534, 1.0
      %v543 = vadd.f32 %v535, 1.0
      %v544 = vadd.f32 %v536, 1.0
      %v545 = vadd.f32 %v537, 1.0
      %v546 = vadd.f32 %v538, 1.0
      %v547 = vadd.f32 %v539, 1.0
      %v548 = vadd.f32 %v540, 1.0
      %v549 = vrcp.pop %v541
      %v550 = vmul.f32 1.0, %v549
      %v551 = vrcp.pop %v542
      %v552 = vmul.f32 1.0, %v551
      %v553 = vrcp.pop %v543
      %v554 = vmul.f32 1.0, %v553
      %v555 = vrcp.pop %v544
      %v556 = vmul.f32 1.0, %v555
      %v557 = vrcp.pop %v545
      %v558 = vmul.f32 1.0, %v557
      %v559 = vrcp.pop %v546
      %v560 = vmul.f32 1.0, %v559
      %v561 = vrcp.pop %v547
      %v562 = vmul.f32 1.0, %v561
      %v563 = vrcp.pop %v548
      %v564 = vmul.f32 1.0, %v563
      %v565 = vmul.f32 %v550, 1.0614054
      %v566 = vmul.f32 %v552, 1.0614054
      %v567 = vmul.f32 %v554, 1.0614054
      %v568 = vmul.f32 %v556, 1.0614054
      %v569 = vmul.f32 %v558, 1.0614054
      %v570 = vmul.f32 %v560, 1.0614054
      %v571 = vmul.f32 %v562, 1.0614054
      %v572 = vmul.f32 %v564, 1.0614054
      %v573 = vadd.f32 %v565, -1.4531521
      %v574 = vadd.f32 %v566, -1.4531521
      %v575 = vadd.f32 %v567, -1.4531521
      %v576 = vadd.f32 %v568, -1.4531521
      %v577 = vadd.f32 %v569, -1.4531521
      %v578 = vadd.f32 %v570, -1.4531521
      %v579 = vadd.f32 %v571, -1.4531521
      %v580 = vadd.f32 %v572, -1.4531521
      %v581 = vmul.f32 %v573, %v550
      %v582 = vmul.f32 %v574, %v552
      %v583 = vmul.f32 %v575, %v554
      %v584 = vmul.f32 %v576, %v556
      %v585 = vmul.f32 %v577, %v558
      %v586 = vmul.f32 %v578, %v560
      %v587 = vmul.f32 %v579, %v562
      %v588 = vmul.f32 %v580, %v564
      %v589 = vadd.f32 %v581, 1.4214138
      %v590 = vadd.f32 %v582, 1.4214138
      %v591 = vadd.f32 %v583, 1.4214138
      %v592 = vadd.f32 %v584, 1.4214138
      %v593 = vadd.f32 %v585, 1.4214138
      %v594 = vadd.f32 %v586, 1.4214138
      %v595 = vadd.f32 %v587, 1.4214138
      %v596 = vadd.f32 %v588, 1.4214138
      %v597 = vmul.f32 %v589, %v550
      %v598 = vmul.f32 %v590, %v552
      %v599 = vmul.f32 %v591, %v554
      %v600 = vmul.f32 %v592, %v556
      %v601 = vmul.f32 %v593, %v558
      %v602 = vmul.f32 %v594, %v560
      %v603 = vmul.f32 %v595, %v562
      %v604 = vmul.f32 %v596, %v564
      %v605 = vadd.f32 %v597, -0.28449672
      %v606 = vadd.f32 %v598, -0.28449672
      %v607 = vadd.f32 %v599, -0.28449672
      %v608 = vadd.f32 %v600, -0.28449672
      %v609 = vadd.f32 %v601, -0.28449672
      %v610 = vadd.f32 %v602, -0.28449672
      %v611 = vadd.f32 %v603, -0.28449672
      %v612 = vadd.f32 %v604, -0.28449672
      %v613 = vmul.f32 %v605, %v550
      %v614 = vmul.f32 %v606, %v552
      %v615 = vmul.f32 %v607, %v554
      %v616 = vmul.f32 %v608, %v556
      %v617 = vmul.f32 %v609, %v558
      %v618 = vmul.f32 %v610, %v560
      %v619 = vmul.f32 %v611, %v562
      %v620 = vmul.f32 %v612, %v564
      %v621 = vadd.f32 %v613, 0.2548296
      %v622 = vadd.f32 %v614, 0.2548296
      %v623 = vadd.f32 %v615, 0.2548296
      %v624 = vadd.f32 %v616, 0.2548296
      %v625 = vadd.f32 %v617, 0.2548296
      %v626 = vadd.f32 %v618, 0.2548296
      %v627 = vadd.f32 %v619, 0.2548296
      %v628 = vadd.f32 %v620, 0.2548296
      %v629 = vmul.f32 %v621, %v550
      %v630 = vmul.f32 %v622, %v552
      %v631 = vmul.f32 %v623, %v554
      %v632 = vmul.f32 %v624, %v556
      %v633 = vmul.f32 %v625, %v558
      %v634 = vmul.f32 %v626, %v560
      %v635 = vmul.f32 %v627, %v562
      %v636 = vmul.f32 %v628, %v564
      %v637 = vsub.f32 0.0, %v525
      %v638 = vsub.f32 0.0, %v526
      %v639 = vsub.f32 0.0, %v527
      %v640 = vsub.f32 0.0, %v528
      %v641 = vsub.f32 0.0, %v529
      %v642 = vsub.f32 0.0, %v530
      %v643 = vsub.f32 0.0, %v531
      %v644 = vsub.f32 0.0, %v532
      %v645 = vmul.f32 %v637, %v525
      %v646 = vmul.f32 %v638, %v526
      %v647 = vmul.f32 %v639, %v527
      %v648 = vmul.f32 %v640, %v528
      %v649 = vmul.f32 %v641, %v529
      %v650 = vmul.f32 %v642, %v530
      %v651 = vmul.f32 %v643, %v531
      %v652 = vmul.f32 %v644, %v532
      %v653 = vmul.f32 %v645, 1.442695
      %v654 = vpow.pop %v653
      %v655 = vmul.f32 %v646, 1.442695
      %v656 = vpow.pop %v655
      %v657 = vmul.f32 %v647, 1.442695
      %v658 = vpow.pop %v657
      %v659 = vmul.f32 %v648, 1.442695
      %v660 = vpow.pop %v659
      %v661 = vmul.f32 %v649, 1.442695
      %v662 = vpow.pop %v661
      %v663 = vmul.f32 %v650, 1.442695
      %v664 = vpow.pop %v663
      %v665 = vmul.f32 %v651, 1.442695
      %v666 = vpow.pop %v665
      %v667 = vmul.f32 %v652, 1.442695
      %v668 = vpow.pop %v667
      %v669 = vmul.f32 %v629, %v654
      %v670 = vmul.f32 %v630, %v656
      %v671 = vmul.f32 %v631, %v658
      %v672 = vmul.f32 %v632, %v660
      %v673 = vmul.f32 %v633, %v662
      %v674 = vmul.f32 %v634, %v664
      %v675 = vmul.f32 %v635, %v666
      %v676 = vmul.f32 %v636, %v668
      %v677 = vsub.f32 1.0, %v669
      %v678 = vsub.f32 1.0, %v670
      %v679 = vsub.f32 1.0, %v671
      %v680 = vsub.f32 1.0, %v672
      %v681 = vsub.f32 1.0, %v673
      %v682 = vsub.f32 1.0, %v674
      %v683 = vsub.f32 1.0, %v675
      %v684 = vsub.f32 1.0, %v676
      %vm685 = vcmp.ge.f32.partialorder %v517, 0.0
      %vm686 = vcmp.ge.f32.partialorder %v518, 0.0
      %vm687 = vcmp.ge.f32.partialorder %v519, 0.0
      %vm688 = vcmp.ge.f32.partialorder %v520, 0.0
      %vm689 = vcmp.ge.f32.partialorder %v521, 0.0
      %vm690 = vcmp.ge.f32.partialorder %v522, 0.0
      %vm691 = vcmp.ge.f32.partialorder %v523, 0.0
      %vm692 = vcmp.ge.f32.partialorder %v524, 0.0
      %v693 = vsub.f32 0.0, %v677
      %v694 = vsub.f32 0.0, %v678
      %v695 = vsub.f32 0.0, %v679
      %v696 = vsub.f32 0.0, %v680
      %v697 = vsub.f32 0.0, %v681
      %v698 = vsub.f32 0.0, %v682
      %v699 = vsub.f32 0.0, %v683
      %v700 = vsub.f32 0.0, %v684
      %v701 = vsel %vm685, %v677, %v693
      %v702 = vsel %vm686, %v678, %v694
      %v703 = vsel %vm687, %v679, %v695
      %v704 = vsel %vm688, %v680, %v696
      %v705 = vsel %vm689, %v681, %v697
      %v706 = vsel %vm690, %v682, %v698
      %v707 = vsel %vm691, %v683, %v699
      %v708 = vsel %vm692, %v684, %v700
      %v709 = vadd.f32 %v701, 1.0
      %v710 = vadd.f32 %v702, 1.0
      %v711 = vadd.f32 %v703, 1.0
      %v712 = vadd.f32 %v704, 1.0
      %v713 = vadd.f32 %v705, 1.0
      %v714 = vadd.f32 %v706, 1.0
      %v715 = vadd.f32 %v707, 1.0
      %v716 = vadd.f32 %v708, 1.0
      %v717 = vmul.f32 %v509, %v709
      %v718 = vmul.f32 %v510, %v710
      %v719 = vmul.f32 %v511, %v711
      %v720 = vmul.f32 %v512, %v712
      %v721 = vmul.f32 %v513, %v713
      %v722 = vmul.f32 %v514, %v714
      %v723 = vmul.f32 %v515, %v715
      %v724 = vmul.f32 %v516, %v716
      %v725 = vld [vmem:[%s1 + $0x18] sm:$0xf]
      %v726 = vld [vmem:[%s1 + $0x1c] sm:$0xf]
      %v727 = vld [vmem:[%s1 + $0x20] sm:$0xf]
      %v728 = vld [vmem:[%s1 + $0x24] sm:$0xf]
      %v729 = vld [vmem:[%s1 + $0x28] sm:$0xf]
      %v730 = vld [vmem:[%s1 + $0x2c] sm:$0xf]
      %v731 = vld [vmem:[%s1 + $0x30] sm:$0xf]
      %v732 = vld [vmem:[%s1 + $0x34] sm:$0xf]
      %v733 = vld [vmem:[%s2 + $0x2] sm:$0x1]
      %v734 = vpack.c.bf16 %v718, %v717
      %v735 = vpack.c.bf16 %v720, %v719
      %v736 = vpack.c.bf16 %v722, %v721
      %v737 = vpack.c.bf16 %v724, %v723
      %v738 = vlaneseq
      %v739 = vshrl.u32 %v738, 7
      %v740 = vsub.s32 0, %v739
      %v741 = vrot.slane %v733, %v740
      %v750 = vunpack.c.l.b16 %v725
      %v751 = vunpack.c.l.b16 %v726
      %v752 = vunpack.c.l.b16 %v727
      %v753 = vunpack.c.l.b16 %v728
      %v754 = vunpack.c.l.b16 %v729
      %v755 = vunpack.c.l.b16 %v730
      %v756 = vunpack.c.l.b16 %v731
      %v757 = vunpack.c.l.b16 %v732
      %v758 = vpack.c.b16 %v751, %v750
      %v759 = vpack.c.b16 %v753, %v752
      %v760 = vpack.c.b16 %v755, %v754
      %v761 = vpack.c.b16 %v757, %v756
      %vm766 = vcmask 523264
      %v768 = vsel %vm766, %v734, 0
      %v771 = vsel %vm766, %v735, 0
      %v774 = vsel %vm766, %v736, 0
      %v777 = vsel %vm766, %v737, 0
      %779 = vmatprep.subr.bf16.mxu0 0
      %780 = vmatpush1.bf16.msra.mxu0 0
      %781 = vmatprep.subr.bf16.mxu0 0
      %782 = vmatpush1.bf16.msra.mxu0 0
      %783 = vmatprep.subr.bf16.mxu0 0
      %784 = vmatpush1.bf16.msra.mxu0 0
      %785 = vmatprep.subr.bf16.mxu0 0
      %786 = vmatpush1.bf16.msra.mxu0 0
      %787 = vmatprep.subr.bf16.mxu0 0
      %788 = vmatpush1.bf16.msra.mxu0 %v761
      %789 = vmatprep.subr.bf16.mxu0 0
      %790 = vmatpush1.bf16.msra.mxu0 %v760
      %791 = vmatprep.subr.bf16.mxu0 0
      %792 = vmatpush1.bf16.msra.mxu0 %v759
      %793 = vmatprep.subr.bf16.mxu0 0
      %794 = vmatpush1.bf16.msra.mxu0 %v758
      %795 = vmatprep.subr.bf16.mxu0 0
      %796 = vmatpush2.bf16.msra.mxu0 0
      %797 = vmatprep.subr.bf16.mxu0 0
      %798 = vmatpush2.bf16.msra.mxu0 0
      %799 = vmatprep.subr.bf16.mxu0 0
      %800 = vmatpush2.bf16.msra.mxu0 0
      %801 = vmatprep.subr.bf16.mxu0 0
      %802 = vmatpush2.bf16.msra.mxu0 0
      %803 = vmatprep.subr.bf16.mxu0 0
      %804 = vmatpush2.bf16.msra.mxu0 0
      %805 = vmatprep.subr.bf16.mxu0 0
      %806 = vmatpush2.bf16.msra.mxu0 0
      %807 = vmatprep.subr.bf16.mxu0 0
      %808 = vmatpush2.bf16.msra.mxu0 0
      %809 = vmatprep.subr.bf16.mxu0 0
      %810 = vmatpush2.bf16.msra.mxu0 0
      %811 = vmatprep.mubr.bf16.mxu0 0
      %812 = vmatmul.mubr.bf16.gmra.mxu0 %v768
      %v813 = vpop.f32.mrf.mxu0
      %v814 = vadd.f32 %v741, %v813
      %v815 = vpop.f32.mrf.mxu0
      %v816 = vpop.f32.mrf.mxu0
      %v817 = vadd.f32 %v741, %v816
      %v818 = vpop.f32.mrf.mxu0
      %819 = vmatprep.mubr.bf16.mxu0 0
      %820 = vmatmul.mubr.bf16.gmra.mxu0 %v771
      %v821 = vpop.f32.mrf.mxu0
      %v822 = vadd.f32 %v741, %v821
      %v823 = vpop.f32.mrf.mxu0
      %v824 = vpop.f32.mrf.mxu0
      %v825 = vadd.f32 %v741, %v824
      %v826 = vpop.f32.mrf.mxu0
      %827 = vmatprep.mubr.bf16.mxu0 0
      %828 = vmatmul.mubr.bf16.gmra.mxu0 %v774
      %v829 = vpop.f32.mrf.mxu0
      %v830 = vadd.f32 %v741, %v829
      %v831 = vpop.f32.mrf.mxu0
      %v832 = vpop.f32.mrf.mxu0
      %v833 = vadd.f32 %v741, %v832
      %v834 = vpop.f32.mrf.mxu0
      %835 = vmatprep.mubr.bf16.mxu0 0
      %836 = vmatmul.mubr.bf16.gmra.mxu0 %v777
      %v837 = vpop.f32.mrf.mxu0
      %v838 = vadd.f32 %v741, %v837
      %v839 = vpop.f32.mrf.mxu0
      %v840 = vpop.f32.mrf.mxu0
      %v841 = vadd.f32 %v741, %v840
      %v842 = vpop.f32.mrf.mxu0
      %843 = vdwg.mxu0
      %v844 = vadd.f32 %v376, %v814
      %v845 = vadd.f32 %v379, %v817
      %v846 = vadd.f32 %v384, %v822
      %v847 = vadd.f32 %v387, %v825
      %v848 = vadd.f32 %v392, %v830
      %v849 = vadd.f32 %v395, %v833
      %v850 = vadd.f32 %v400, %v838
      %v851 = vadd.f32 %v403, %v841
      %v852 = vld [vmem:[%s2 + $0x3] sm:$0x1]
      %v853 = vld [vmem:[%s2 + $0x4] sm:$0x1]
      %v854 = vsel %vm431, %v844, 0.0
      %855 = vadd.xlane.f32.xlu0 %v854
      %v856 = vpop.xlane.xlu0 %855
      %v857 = vsel %vm431, %v845, 0.0
      %858 = vadd.xlane.f32.xlu0 %v857
      %v859 = vpop.xlane.xlu0 %858
      %v860 = vsel %vm431, %v846, 0.0
      %861 = vadd.xlane.f32.xlu0 %v860
      %v862 = vpop.xlane.xlu0 %861
      %v863 = vsel %vm431, %v847, 0.0
      %864 = vadd.xlane.f32.xlu0 %v863
      %v865 = vpop.xlane.xlu0 %864
      %v866 = vsel %vm431, %v848, 0.0
      %867 = vadd.xlane.f32.xlu0 %v866
      %v868 = vpop.xlane.xlu0 %867
      %v869 = vsel %vm431, %v849, 0.0
      %870 = vadd.xlane.f32.xlu0 %v869
      %v871 = vpop.xlane.xlu0 %870
      %v872 = vsel %vm431, %v850, 0.0
      %873 = vadd.xlane.f32.xlu0 %v872
      %v874 = vpop.xlane.xlu0 %873
      %v875 = vsel %vm431, %v851, 0.0
      %876 = vadd.xlane.f32.xlu0 %v875
      %v877 = vpop.xlane.xlu0 %876
      %v878 = vrcp.pop 32.0
      %v879 = vmul.f32 %v856, %v878
      %v880 = vmul.f32 %v859, %v878
      %v881 = vmul.f32 %v862, %v878
      %v882 = vmul.f32 %v865, %v878
      %v883 = vmul.f32 %v868, %v878
      %v884 = vmul.f32 %v871, %v878
      %v885 = vmul.f32 %v874, %v878
      %v886 = vmul.f32 %v877, %v878
      %v887 = vmul.f32 %v844, %v844
      %v888 = vmul.f32 %v845, %v845
      %v889 = vmul.f32 %v846, %v846
      %v890 = vmul.f32 %v847, %v847
      %v891 = vmul.f32 %v848, %v848
      %v892 = vmul.f32 %v849, %v849
      %v893 = vmul.f32 %v850, %v850
      %v894 = vmul.f32 %v851, %v851
      %v895 = vsel %vm431, %v887, 0.0
      %896 = vadd.xlane.f32.xlu0 %v895
      %v897 = vpop.xlane.xlu0 %896
      %v898 = vsel %vm431, %v888, 0.0
      %899 = vadd.xlane.f32.xlu0 %v898
      %v900 = vpop.xlane.xlu0 %899
      %v901 = vsel %vm431, %v889, 0.0
      %902 = vadd.xlane.f32.xlu0 %v901
      %v903 = vpop.xlane.xlu0 %902
      %v904 = vsel %vm431, %v890, 0.0
      %905 = vadd.xlane.f32.xlu0 %v904
      %v906 = vpop.xlane.xlu0 %905
      %v907 = vsel %vm431, %v891, 0.0
      %908 = vadd.xlane.f32.xlu0 %v907
      %v909 = vpop.xlane.xlu0 %908
      %v910 = vsel %vm431, %v892, 0.0
      %911 = vadd.xlane.f32.xlu0 %v910
      %v912 = vpop.xlane.xlu0 %911
      %v913 = vsel %vm431, %v893, 0.0
      %914 = vadd.xlane.f32.xlu0 %v913
      %v915 = vpop.xlane.xlu0 %914
      %v916 = vsel %vm431, %v894, 0.0
      %917 = vadd.xlane.f32.xlu0 %v916
      %v918 = vpop.xlane.xlu0 %917
      %v919 = vmul.f32 %v897, %v878
      %v920 = vmul.f32 %v900, %v878
      %v921 = vmul.f32 %v903, %v878
      %v922 = vmul.f32 %v906, %v878
      %v923 = vmul.f32 %v909, %v878
      %v924 = vmul.f32 %v912, %v878
      %v925 = vmul.f32 %v915, %v878
      %v926 = vmul.f32 %v918, %v878
      %v927 = vmul.f32 %v879, %v879
      %v928 = vmul.f32 %v880, %v880
      %v929 = vmul.f32 %v881, %v881
      %v930 = vmul.f32 %v882, %v882
      %v931 = vmul.f32 %v883, %v883
      %v932 = vmul.f32 %v884, %v884
      %v933 = vmul.f32 %v885, %v885
      %v934 = vmul.f32 %v886, %v886
      %v935 = vsub.f32 %v919, %v927
      %v936 = vsub.f32 %v920, %v928
      %v937 = vsub.f32 %v921, %v929
      %v938 = vsub.f32 %v922, %v930
      %v939 = vsub.f32 %v923, %v931
      %v940 = vsub.f32 %v924, %v932
      %v941 = vsub.f32 %v925, %v933
      %v942 = vsub.f32 %v926, %v934
      %v943 = vsub.f32 %v844, %v879
      %v944 = vsub.f32 %v845, %v880
      %v945 = vsub.f32 %v846, %v881
      %v946 = vsub.f32 %v847, %v882
      %v947 = vsub.f32 %v848, %v883
      %v948 = vsub.f32 %v849, %v884
      %v949 = vsub.f32 %v850, %v885
      %v950 = vsub.f32 %v851, %v886
      %v951 = vadd.f32 %v935, 1e-05
      %v952 = vadd.f32 %v936, 1e-05
      %v953 = vadd.f32 %v937, 1e-05
      %v954 = vadd.f32 %v938, 1e-05
      %v955 = vadd.f32 %v939, 1e-05
      %v956 = vadd.f32 %v940, 1e-05
      %v957 = vadd.f32 %v941, 1e-05
      %v958 = vadd.f32 %v942, 1e-05
      %v959 = vrsqrt.pop %v951
      %v960 = vrsqrt.pop %v952
      %v961 = vrsqrt.pop %v953
      %v962 = vrsqrt.pop %v954
      %v963 = vrsqrt.pop %v955
      %v964 = vrsqrt.pop %v956
      %v965 = vrsqrt.pop %v957
      %v966 = vrsqrt.pop %v958
      %v967 = vmul.f32 %v943, %v959
      %v968 = vmul.f32 %v944, %v960
      %v969 = vmul.f32 %v945, %v961
      %v970 = vmul.f32 %v946, %v962
      %v971 = vmul.f32 %v947, %v963
      %v972 = vmul.f32 %v948, %v964
      %v973 = vmul.f32 %v949, %v965
      %v974 = vmul.f32 %v950, %v966
      %v975 = vlaneseq
      %v976 = vshrl.u32 %v975, 7
      %v977 = vsub.s32 0, %v976
      %v978 = vrot.slane %v852, %v977
      %v979 = vmul.f32 %v967, %v978
      %v980 = vmul.f32 %v968, %v978
      %v981 = vmul.f32 %v969, %v978
      %v982 = vmul.f32 %v970, %v978
      %v983 = vmul.f32 %v971, %v978
      %v984 = vmul.f32 %v972, %v978
      %v985 = vmul.f32 %v973, %v978
      %v986 = vmul.f32 %v974, %v978
      %v987 = vlaneseq
      %v988 = vshrl.u32 %v987, 7
      %v989 = vsub.s32 0, %v988
      %v990 = vrot.slane %v853, %v989
      %v991 = vadd.f32 %v979, %v990
      %v992 = vadd.f32 %v980, %v990
      %v993 = vadd.f32 %v981, %v990
      %v994 = vadd.f32 %v982, %v990
      %v995 = vadd.f32 %v983, %v990
      %v996 = vadd.f32 %v984, %v990
      %v997 = vadd.f32 %v985, %v990
      %v998 = vadd.f32 %v986, %v990
      %v999 = vld [vmem:[%s2 + $0x5] sm:$0x1]
      %v1000 = vld [vmem:[%s2 + $0x6] sm:$0x1]
      %v1001 = vld [vmem:[%s1 + $0x38] sm:$0xf]
      %v1002 = vld [vmem:[%s1 + $0x3c] sm:$0xf]
      %v1003 = vld [vmem:[%s1 + $0x40] sm:$0xf]
      %v1004 = vld [vmem:[%s1 + $0x44] sm:$0xf]
      %v1005 = vld [vmem:[%s2 + $0x7] sm:$0x1]
      %v1006 = vpack.c.bf16 %v992, %v991
      %v1007 = vpack.c.bf16 %v994, %v993
      %v1008 = vpack.c.bf16 %v996, %v995
      %v1009 = vpack.c.bf16 %v998, %v997
      %v1010 = vlaneseq
      %v1011 = vshrl.u32 %v1010, 7
      %v1012 = vsub.s32 0, %v1011
      %v1013 = vrot.slane %v999, %v1012
      %1014 = vrot.lane.b32.xlu0 %v427, 64
      %v1015 = vpop.permute.xlu0 %1014
      %1016 = vrot.lane.b32.xlu0 %v428, 64
      %v1017 = vpop.permute.xlu0 %1016
      %v1021 = vsel %vm431, %v1006, 0
      %v1024 = vsel %vm431, %v1007, 0
      %v1027 = vsel %vm431, %v1008, 0
      %v1030 = vsel %vm431, %v1009, 0
      %1032 = vmatprep.subr.bf16.mxu0 0
      %1033 = vmatpush1.bf16.msra.mxu0 0
      %1034 = vmatprep.subr.bf16.mxu0 0
      %1035 = vmatpush1.bf16.msra.mxu0 0
      %1036 = vmatprep.subr.bf16.mxu0 0
      %1037 = vmatpush1.bf16.msra.mxu0 0
      %1038 = vmatprep.subr.bf16.mxu0 0
      %1039 = vmatpush1.bf16.msra.mxu0 0
      %1040 = vmatprep.subr.bf16.mxu0 0
      %1041 = vmatpush1.bf16.msra.mxu0 0
      %1042 = vmatprep.subr.bf16.mxu0 0
      %1043 = vmatpush1.bf16.msra.mxu0 0
      %1044 = vmatprep.subr.bf16.mxu0 0
      %1045 = vmatpush1.bf16.msra.mxu0 %v1017
      %1046 = vmatprep.subr.bf16.mxu0 0
      %1047 = vmatpush1.bf16.msra.mxu0 %v1015
      %1048 = vmatprep.subr.bf16.mxu0 0
      %1049 = vmatpush2.bf16.msra.mxu0 0
      %1050 = vmatprep.subr.bf16.mxu0 0
      %1051 = vmatpush2.bf16.msra.mxu0 0
      %1052 = vmatprep.subr.bf16.mxu0 0
      %1053 = vmatpush2.bf16.msra.mxu0 0
      %1054 = vmatprep.subr.bf16.mxu0 0
      %1055 = vmatpush2.bf16.msra.mxu0 0
      %1056 = vmatprep.subr.bf16.mxu0 0
      %1057 = vmatpush2.bf16.msra.mxu0 0
      %1058 = vmatprep.subr.bf16.mxu0 0
      %1059 = vmatpush2.bf16.msra.mxu0 0
      %1060 = vmatprep.subr.bf16.mxu0 0
      %1061 = vmatpush2.bf16.msra.mxu0 0
      %1062 = vmatprep.subr.bf16.mxu0 0
      %1063 = vmatpush2.bf16.msra.mxu0 0
      %1064 = vmatprep.mubr.bf16.mxu0 0
      %1065 = vmatmul.mubr.bf16.gmra.mxu0 %v1021
      %v1066 = vpop.f32.mrf.mxu0
      %v1067 = vadd.f32 %v1013, %v1066
      %v1068 = vpop.f32.mrf.mxu0
      %v1069 = vpop.f32.mrf.mxu0
      %v1070 = vadd.f32 %v1013, %v1069
      %v1071 = vpop.f32.mrf.mxu0
      %1072 = vmatprep.mubr.bf16.mxu0 0
      %1073 = vmatmul.mubr.bf16.gmra.mxu0 %v1024
      %v1074 = vpop.f32.mrf.mxu0
      %v1075 = vadd.f32 %v1013, %v1074
      %v1076 = vpop.f32.mrf.mxu0
      %v1077 = vpop.f32.mrf.mxu0
      %v1078 = vadd.f32 %v1013, %v1077
      %v1079 = vpop.f32.mrf.mxu0
      %1080 = vmatprep.mubr.bf16.mxu0 0
      %1081 = vmatmul.mubr.bf16.gmra.mxu0 %v1027
      %v1082 = vpop.f32.mrf.mxu0
      %v1083 = vadd.f32 %v1013, %v1082
      %v1084 = vpop.f32.mrf.mxu0
      %v1085 = vpop.f32.mrf.mxu0
      %v1086 = vadd.f32 %v1013, %v1085
      %v1087 = vpop.f32.mrf.mxu0
      %1088 = vmatprep.mubr.bf16.mxu0 0
      %1089 = vmatmul.mubr.bf16.gmra.mxu0 %v1030
      %v1090 = vpop.f32.mrf.mxu0
      %v1091 = vadd.f32 %v1013, %v1090
      %v1092 = vpop.f32.mrf.mxu0
      %v1093 = vpop.f32.mrf.mxu0
      %v1094 = vadd.f32 %v1013, %v1093
      %v1095 = vpop.f32.mrf.mxu0
      %1096 = vdwg.mxu0
      %v1097 = vmul.f32 %v1067, 0.5
      %v1098 = vmul.f32 %v1070, 0.5
      %v1099 = vmul.f32 %v1075, 0.5
      %v1100 = vmul.f32 %v1078, 0.5
      %v1101 = vmul.f32 %v1083, 0.5
      %v1102 = vmul.f32 %v1086, 0.5
      %v1103 = vmul.f32 %v1091, 0.5
      %v1104 = vmul.f32 %v1094, 0.5
      %v1105 = vlaneseq
      %v1106 = vshrl.u32 %v1105, 7
      %v1107 = vsub.s32 0, %v1106
      %v1108 = vrot.slane %v1000, %v1107
      %1109 = vrot.lane.b32.xlu0 %v427, 32
      %v1110 = vpop.permute.xlu0 %1109
      %1111 = vrot.lane.b32.xlu0 %v428, 32
      %v1112 = vpop.permute.xlu0 %1111
      %1115 = vmatprep.subr.bf16.mxu0 0
      %1116 = vmatpush1.bf16.msra.mxu0 0
      %1117 = vmatprep.subr.bf16.mxu0 0
      %1118 = vmatpush1.bf16.msra.mxu0 0
      %1119 = vmatprep.subr.bf16.mxu0 0
      %1120 = vmatpush1.bf16.msra.mxu0 0
      %1121 = vmatprep.subr.bf16.mxu0 0
      %1122 = vmatpush1.bf16.msra.mxu0 0
      %1123 = vmatprep.subr.bf16.mxu0 0
      %1124 = vmatpush1.bf16.msra.mxu0 0
      %1125 = vmatprep.subr.bf16.mxu0 0
      %1126 = vmatpush1.bf16.msra.mxu0 0
      %1127 = vmatprep.subr.bf16.mxu0 0
      %1128 = vmatpush1.bf16.msra.mxu0 %v1112
      %1129 = vmatprep.subr.bf16.mxu0 0
      %1130 = vmatpush1.bf16.msra.mxu0 %v1110
      %1131 = vmatprep.subr.bf16.mxu0 0
      %1132 = vmatpush2.bf16.msra.mxu0 0
      %1133 = vmatprep.subr.bf16.mxu0 0
      %1134 = vmatpush2.bf16.msra.mxu0 0
      %1135 = vmatprep.subr.bf16.mxu0 0
      %1136 = vmatpush2.bf16.msra.mxu0 0
      %1137 = vmatprep.subr.bf16.mxu0 0
      %1138 = vmatpush2.bf16.msra.mxu0 0
      %1139 = vmatprep.subr.bf16.mxu0 0
      %1140 = vmatpush2.bf16.msra.mxu0 0
      %1141 = vmatprep.subr.bf16.mxu0 0
      %1142 = vmatpush2.bf16.msra.mxu0 0
      %1143 = vmatprep.subr.bf16.mxu0 0
      %1144 = vmatpush2.bf16.msra.mxu0 0
      %1145 = vmatprep.subr.bf16.mxu0 0
      %1146 = vmatpush2.bf16.msra.mxu0 0
      %1147 = vmatprep.mubr.bf16.mxu0 0
      %1148 = vmatmul.mubr.bf16.gmra.mxu0 %v1021
      %v1149 = vpop.f32.mrf.mxu0
      %v1150 = vadd.f32 %v1108, %v1149
      %v1151 = vpop.f32.mrf.mxu0
      %v1152 = vpop.f32.mrf.mxu0
      %v1153 = vadd.f32 %v1108, %v1152
      %v1154 = vpop.f32.mrf.mxu0
      %1155 = vmatprep.mubr.bf16.mxu0 0
      %1156 = vmatmul.mubr.bf16.gmra.mxu0 %v1024
      %v1157 = vpop.f32.mrf.mxu0
      %v1158 = vadd.f32 %v1108, %v1157
      %v1159 = vpop.f32.mrf.mxu0
      %v1160 = vpop.f32.mrf.mxu0
      %v1161 = vadd.f32 %v1108, %v1160
      %v1162 = vpop.f32.mrf.mxu0
      %1163 = vmatprep.mubr.bf16.mxu0 0
      %1164 = vmatmul.mubr.bf16.gmra.mxu0 %v1027
      %v1165 = vpop.f32.mrf.mxu0
      %v1166 = vadd.f32 %v1108, %v1165
      %v1167 = vpop.f32.mrf.mxu0
      %v1168 = vpop.f32.mrf.mxu0
      %v1169 = vadd.f32 %v1108, %v1168
      %v1170 = vpop.f32.mrf.mxu0
      %1171 = vmatprep.mubr.bf16.mxu0 0
      %1172 = vmatmul.mubr.bf16.gmra.mxu0 %v1030
      %v1173 = vpop.f32.mrf.mxu0
      %v1174 = vadd.f32 %v1108, %v1173
      %v1175 = vpop.f32.mrf.mxu0
      %v1176 = vpop.f32.mrf.mxu0
      %v1177 = vadd.f32 %v1108, %v1176
      %v1178 = vpop.f32.mrf.mxu0
      %1179 = vdwg.mxu0
      %v1180 = vlaneseq
      %v1181 = vshrl.u32 %v1180, 7
      %v1182 = vsub.s32 0, %v1181
      %v1183 = vrot.slane %v1005, %v1182
      %v1188 = vunpack.c.l.b16 %v1001
      %v1189 = vunpack.c.l.b16 %v1002
      %v1190 = vunpack.c.l.b16 %v1003
      %v1191 = vunpack.c.l.b16 %v1004
      %v1192 = vpack.c.b16 %v1189, %v1188
      %v1193 = vpack.c.b16 %v1191, %v1190
      %1196 = vmatprep.subr.bf16.mxu0 0
      %1197 = vmatpush1.bf16.msra.mxu0 0
      %1198 = vmatprep.subr.bf16.mxu0 0
      %1199 = vmatpush1.bf16.msra.mxu0 0
      %1200 = vmatprep.subr.bf16.mxu0 0
      %1201 = vmatpush1.bf16.msra.mxu0 0
      %1202 = vmatprep.subr.bf16.mxu0 0
      %1203 = vmatpush1.bf16.msra.mxu0 0
      %1204 = vmatprep.subr.bf16.mxu0 0
      %1205 = vmatpush1.bf16.msra.mxu0 0
      %1206 = vmatprep.subr.bf16.mxu0 0
      %1207 = vmatpush1.bf16.msra.mxu0 0
      %1208 = vmatprep.subr.bf16.mxu0 0
      %1209 = vmatpush1.bf16.msra.mxu0 %v1193
      %1210 = vmatprep.subr.bf16.mxu0 0
      %1211 = vmatpush1.bf16.msra.mxu0 %v1192
      %1212 = vmatprep.subr.bf16.mxu0 0
      %1213 = vmatpush2.bf16.msra.mxu0 0
      %1214 = vmatprep.subr.bf16.mxu0 0
      %1215 = vmatpush2.bf16.msra.mxu0 0
      %1216 = vmatprep.subr.bf16.mxu0 0
      %1217 = vmatpush2.bf16.msra.mxu0 0
      %1218 = vmatprep.subr.bf16.mxu0 0
      %1219 = vmatpush2.bf16.msra.mxu0 0
      %1220 = vmatprep.subr.bf16.mxu0 0
      %1221 = vmatpush2.bf16.msra.mxu0 0
      %1222 = vmatprep.subr.bf16.mxu0 0
      %1223 = vmatpush2.bf16.msra.mxu0 0
      %1224 = vmatprep.subr.bf16.mxu0 0
      %1225 = vmatpush2.bf16.msra.mxu0 0
      %1226 = vmatprep.subr.bf16.mxu0 0
      %1227 = vmatpush2.bf16.msra.mxu0 0
      %1228 = vmatprep.mubr.bf16.mxu0 0
      %1229 = vmatmul.mubr.bf16.gmra.mxu0 %v1021
      %v1230 = vpop.f32.mrf.mxu0
      %v1231 = vadd.f32 %v1183, %v1230
      %v1232 = vpop.f32.mrf.mxu0
      %v1233 = vpop.f32.mrf.mxu0
      %v1234 = vadd.f32 %v1183, %v1233
      %v1235 = vpop.f32.mrf.mxu0
      %1236 = vmatprep.mubr.bf16.mxu0 0
      %1237 = vmatmul.mubr.bf16.gmra.mxu0 %v1024
      %v1238 = vpop.f32.mrf.mxu0
      %v1239 = vadd.f32 %v1183, %v1238
      %v1240 = vpop.f32.mrf.mxu0
      %v1241 = vpop.f32.mrf.mxu0
      %v1242 = vadd.f32 %v1183, %v1241
      %v1243 = vpop.f32.mrf.mxu0
      %1244 = vmatprep.mubr.bf16.mxu0 0
      %1245 = vmatmul.mubr.bf16.gmra.mxu0 %v1027
      %v1246 = vpop.f32.mrf.mxu0
      %v1247 = vadd.f32 %v1183, %v1246
      %v1248 = vpop.f32.mrf.mxu0
      %v1249 = vpop.f32.mrf.mxu0
      %v1250 = vadd.f32 %v1183, %v1249
      %v1251 = vpop.f32.mrf.mxu0
      %1252 = vmatprep.mubr.bf16.mxu0 0
      %1253 = vmatmul.mubr.bf16.gmra.mxu0 %v1030
      %v1254 = vpop.f32.mrf.mxu0
      %v1255 = vadd.f32 %v1183, %v1254
      %v1256 = vpop.f32.mrf.mxu0
      %v1257 = vpop.f32.mrf.mxu0
      %v1258 = vadd.f32 %v1183, %v1257
      %v1259 = vpop.f32.mrf.mxu0
      %1260 = vdwg.mxu0
      %v1261 = vld [vmem:[%s5] sm:$0xf]
      %v1262 = vld [vmem:[%s5 + $0x4] sm:$0xf]
      %v1263 = vld [vmem:[%s5 + $0x8] sm:$0xf]
      %v1264 = vld [vmem:[%s5 + $0xc] sm:$0xf]
      %v1265 = vld [vmem:[%s5 + $0x10] sm:$0xf]
      %v1266 = vld [vmem:[%s5 + $0x14] sm:$0xf]
      %v1267 = vld [vmem:[%s5 + $0x18] sm:$0xf]
      %v1268 = vld [vmem:[%s5 + $0x1c] sm:$0xf]
      %v1269 = vld [vmem:[%s5 + $0x20] sm:$0xf]
      %v1270 = vld [vmem:[%s5 + $0x24] sm:$0xf]
      %v1271 = vld [vmem:[%s5 + $0x28] sm:$0xf]
      %v1272 = vld [vmem:[%s5 + $0x2c] sm:$0xf]
      %v1273 = vld [vmem:[%s5 + $0x30] sm:$0xf]
      %v1274 = vld [vmem:[%s5 + $0x34] sm:$0xf]
      %v1275 = vld [vmem:[%s5 + $0x38] sm:$0xf]
      %v1276 = vld [vmem:[%s5 + $0x3c] sm:$0xf]
      %v1277 = vld [vmem:[%s5 + $0x40] sm:$0xf]
      %v1278 = vld [vmem:[%s5 + $0x44] sm:$0xf]
      %v1279 = vld [vmem:[%s5 + $0x48] sm:$0xf]
      %v1280 = vld [vmem:[%s5 + $0x4c] sm:$0xf]
      %v1281 = vld [vmem:[%s5 + $0x50] sm:$0xf]
      %v1282 = vld [vmem:[%s5 + $0x54] sm:$0xf]
      %v1283 = vld [vmem:[%s5 + $0x58] sm:$0xf]
      %v1284 = vld [vmem:[%s5 + $0x5c] sm:$0xf]
      %v1285 = vld [vmem:[%s5 + $0x60] sm:$0xf]
      %v1286 = vld [vmem:[%s5 + $0x64] sm:$0xf]
      %v1287 = vld [vmem:[%s5 + $0x68] sm:$0xf]
      %v1288 = vld [vmem:[%s5 + $0x6c] sm:$0xf]
      %v1289 = vld [vmem:[%s5 + $0x70] sm:$0xf]
      %v1290 = vld [vmem:[%s5 + $0x74] sm:$0xf]
      %v1291 = vld [vmem:[%s5 + $0x78] sm:$0xf]
      %v1292 = vld [vmem:[%s5 + $0x7c] sm:$0xf]
      %v1293 = vld [vmem:[%s5 + $0x80] sm:$0xf]
      %v1294 = vld [vmem:[%s5 + $0x84] sm:$0xf]
      %v1295 = vld [vmem:[%s5 + $0x88] sm:$0xf]
      %v1296 = vld [vmem:[%s5 + $0x8c] sm:$0xf]
      %v1297 = vld [vmem:[%s5 + $0x90] sm:$0xf]
      %v1298 = vld [vmem:[%s5 + $0x94] sm:$0xf]
      %v1299 = vld [vmem:[%s5 + $0x98] sm:$0xf]
      %v1300 = vld [vmem:[%s5 + $0x9c] sm:$0xf]
      %v1301 = vld [vmem:[%s5 + $0xa0] sm:$0xf]
      %v1302 = vld [vmem:[%s5 + $0xa4] sm:$0xf]
      %v1303 = vld [vmem:[%s5 + $0xa8] sm:$0xf]
      %v1304 = vld [vmem:[%s5 + $0xac] sm:$0xf]
      %v1305 = vld [vmem:[%s5 + $0xb0] sm:$0xf]
      %v1306 = vld [vmem:[%s5 + $0xb4] sm:$0xf]
      %v1307 = vld [vmem:[%s5 + $0xb8] sm:$0xf]
      %v1308 = vld [vmem:[%s5 + $0xbc] sm:$0xf]
      %v1309 = vld [vmem:[%s5 + $0xc0] sm:$0xf]
      %v1310 = vld [vmem:[%s5 + $0xc4] sm:$0xf]
      %v1311 = vld [vmem:[%s5 + $0xc8] sm:$0xf]
      %v1312 = vld [vmem:[%s5 + $0xcc] sm:$0xf]
      %v1313 = vld [vmem:[%s5 + $0xd0] sm:$0xf]
      %v1314 = vld [vmem:[%s5 + $0xd4] sm:$0xf]
      %v1315 = vld [vmem:[%s5 + $0xd8] sm:$0xf]
      %v1316 = vld [vmem:[%s5 + $0xdc] sm:$0xf]
      %v1317 = vld [vmem:[%s5 + $0xe0] sm:$0xf]
      %v1318 = vld [vmem:[%s5 + $0xe4] sm:$0xf]
      %v1319 = vld [vmem:[%s5 + $0xe8] sm:$0xf]
      %v1320 = vld [vmem:[%s5 + $0xec] sm:$0xf]
      %v1321 = vld [vmem:[%s5 + $0xf0] sm:$0xf]
      %v1322 = vld [vmem:[%s5 + $0xf4] sm:$0xf]
      %v1323 = vld [vmem:[%s5 + $0xf8] sm:$0xf]
      %v1324 = vld [vmem:[%s5 + $0xfc] sm:$0xf]
      %v1325 = vunpack.c.l.bf16 %v1261
      %v1326 = vunpack.c.l.bf16 %v1262
      %v1327 = vunpack.c.l.bf16 %v1263
      %v1328 = vunpack.c.l.bf16 %v1264
      %v1329 = vunpack.c.l.bf16 %v1265
      %v1330 = vunpack.c.l.bf16 %v1266
      %v1331 = vunpack.c.l.bf16 %v1267
      %v1332 = vunpack.c.l.bf16 %v1268
      %v1333 = vunpack.c.l.bf16 %v1269
      %v1334 = vunpack.c.l.bf16 %v1270
      %v1335 = vunpack.c.l.bf16 %v1271
      %v1336 = vunpack.c.l.bf16 %v1272
      %v1337 = vunpack.c.l.bf16 %v1273
      %v1338 = vunpack.c.l.bf16 %v1274
      %v1339 = vunpack.c.l.bf16 %v1275
      %v1340 = vunpack.c.l.bf16 %v1276
      %v1341 = vunpack.c.l.bf16 %v1277
      %v1342 = vunpack.c.l.bf16 %v1278
      %v1343 = vunpack.c.l.bf16 %v1279
      %v1344 = vunpack.c.l.bf16 %v1280
      %v1345 = vunpack.c.l.bf16 %v1281
      %v1346 = vunpack.c.l.bf16 %v1282
      %v1347 = vunpack.c.l.bf16 %v1283
      %v1348 = vunpack.c.l.bf16 %v1284
      %v1349 = vunpack.c.l.bf16 %v1285
      %v1350 = vunpack.c.l.bf16 %v1286
      %v1351 = vunpack.c.l.bf16 %v1287
      %v1352 = vunpack.c.l.bf16 %v1288
      %v1353 = vunpack.c.l.bf16 %v1289
      %v1354 = vunpack.c.l.bf16 %v1290
      %v1355 = vunpack.c.l.bf16 %v1291
      %v1356 = vunpack.c.l.bf16 %v1292
      %v1357 = vunpack.c.l.bf16 %v1293
      %v1358 = vunpack.c.l.bf16 %v1294
      %v1359 = vunpack.c.l.bf16 %v1295
      %v1360 = vunpack.c.l.bf16 %v1296
      %v1361 = vunpack.c.l.bf16 %v1297
      %v1362 = vunpack.c.l.bf16 %v1298
      %v1363 = vunpack.c.l.bf16 %v1299
      %v1364 = vunpack.c.l.bf16 %v1300
      %v1365 = vunpack.c.l.bf16 %v1301
      %v1366 = vunpack.c.l.bf16 %v1302
      %v1367 = vunpack.c.l.bf16 %v1303
      %v1368 = vunpack.c.l.bf16 %v1304
      %v1369 = vunpack.c.l.bf16 %v1305
      %v1370 = vunpack.c.l.bf16 %v1306
      %v1371 = vunpack.c.l.bf16 %v1307
      %v1372 = vunpack.c.l.bf16 %v1308
      %v1373 = vunpack.c.l.bf16 %v1309
      %v1374 = vunpack.c.l.bf16 %v1310
      %v1375 = vunpack.c.l.bf16 %v1311
      %v1376 = vunpack.c.l.bf16 %v1312
      %v1377 = vunpack.c.l.bf16 %v1313
      %v1378 = vunpack.c.l.bf16 %v1314
      %v1379 = vunpack.c.l.bf16 %v1315
      %v1380 = vunpack.c.l.bf16 %v1316
      %v1381 = vunpack.c.l.bf16 %v1317
      %v1382 = vunpack.c.l.bf16 %v1318
      %v1383 = vunpack.c.l.bf16 %v1319
      %v1384 = vunpack.c.l.bf16 %v1320
      %v1385 = vunpack.c.l.bf16 %v1321
      %v1386 = vunpack.c.l.bf16 %v1322
      %v1387 = vunpack.c.l.bf16 %v1323
      %v1388 = vunpack.c.l.bf16 %v1324
      %v1389 = vld [vmem:[%s3] sm:$0xf]
      %v1390 = vld [vmem:[%s3 + $0x4] sm:$0xf]
      %v1391 = vld [vmem:[%s3 + $0x8] sm:$0xf]
      %v1392 = vld [vmem:[%s3 + $0xc] sm:$0xf]
      %v1393 = vld [vmem:[%s3 + $0x10] sm:$0xf]
      %v1394 = vld [vmem:[%s3 + $0x14] sm:$0xf]
      %v1395 = vld [vmem:[%s3 + $0x18] sm:$0xf]
      %v1396 = vld [vmem:[%s3 + $0x1c] sm:$0xf]
      %v1397 = vld [vmem:[%s3 + $0x20] sm:$0xf]
      %v1398 = vld [vmem:[%s3 + $0x24] sm:$0xf]
      %v1399 = vld [vmem:[%s3 + $0x28] sm:$0xf]
      %v1400 = vld [vmem:[%s3 + $0x2c] sm:$0xf]
      %v1401 = vld [vmem:[%s3 + $0x30] sm:$0xf]
      %v1402 = vld [vmem:[%s3 + $0x34] sm:$0xf]
      %v1403 = vld [vmem:[%s3 + $0x38] sm:$0xf]
      %v1404 = vld [vmem:[%s3 + $0x3c] sm:$0xf]
      %v1405 = vld [vmem:[%s3 + $0x40] sm:$0xf]
      %v1406 = vld [vmem:[%s3 + $0x44] sm:$0xf]
      %v1407 = vld [vmem:[%s3 + $0x48] sm:$0xf]
      %v1408 = vld [vmem:[%s3 + $0x4c] sm:$0xf]
      %v1409 = vld [vmem:[%s3 + $0x50] sm:$0xf]
      %v1410 = vld [vmem:[%s3 + $0x54] sm:$0xf]
      %v1411 = vld [vmem:[%s3 + $0x58] sm:$0xf]
      %v1412 = vld [vmem:[%s3 + $0x5c] sm:$0xf]
      %v1413 = vld [vmem:[%s3 + $0x60] sm:$0xf]
      %v1414 = vld [vmem:[%s3 + $0x64] sm:$0xf]
      %v1415 = vld [vmem:[%s3 + $0x68] sm:$0xf]
      %v1416 = vld [vmem:[%s3 + $0x6c] sm:$0xf]
      %v1417 = vld [vmem:[%s3 + $0x70] sm:$0xf]
      %v1418 = vld [vmem:[%s3 + $0x74] sm:$0xf]
      %v1419 = vld [vmem:[%s3 + $0x78] sm:$0xf]
      %v1420 = vld [vmem:[%s3 + $0x7c] sm:$0xf]
      %v1421 = vld [vmem:[%s3 + $0x80] sm:$0xf]
      %v1422 = vld [vmem:[%s3 + $0x84] sm:$0xf]
      %v1423 = vld [vmem:[%s3 + $0x88] sm:$0xf]
      %v1424 = vld [vmem:[%s3 + $0x8c] sm:$0xf]
      %v1425 = vld [vmem:[%s3 + $0x90] sm:$0xf]
      %v1426 = vld [vmem:[%s3 + $0x94] sm:$0xf]
      %v1427 = vld [vmem:[%s3 + $0x98] sm:$0xf]
      %v1428 = vld [vmem:[%s3 + $0x9c] sm:$0xf]
      %v1429 = vld [vmem:[%s3 + $0xa0] sm:$0xf]
      %v1430 = vld [vmem:[%s3 + $0xa4] sm:$0xf]
      %v1431 = vld [vmem:[%s3 + $0xa8] sm:$0xf]
      %v1432 = vld [vmem:[%s3 + $0xac] sm:$0xf]
      %v1433 = vld [vmem:[%s3 + $0xb0] sm:$0xf]
      %v1434 = vld [vmem:[%s3 + $0xb4] sm:$0xf]
      %v1435 = vld [vmem:[%s3 + $0xb8] sm:$0xf]
      %v1436 = vld [vmem:[%s3 + $0xbc] sm:$0xf]
      %v1437 = vld [vmem:[%s3 + $0xc0] sm:$0xf]
      %v1438 = vld [vmem:[%s3 + $0xc4] sm:$0xf]
      %v1439 = vld [vmem:[%s3 + $0xc8] sm:$0xf]
      %v1440 = vld [vmem:[%s3 + $0xcc] sm:$0xf]
      %v1441 = vld [vmem:[%s3 + $0xd0] sm:$0xf]
      %v1442 = vld [vmem:[%s3 + $0xd4] sm:$0xf]
      %v1443 = vld [vmem:[%s3 + $0xd8] sm:$0xf]
      %v1444 = vld [vmem:[%s3 + $0xdc] sm:$0xf]
      %v1445 = vld [vmem:[%s3 + $0xe0] sm:$0xf]
      %v1446 = vld [vmem:[%s3 + $0xe4] sm:$0xf]
      %v1447 = vld [vmem:[%s3 + $0xe8] sm:$0xf]
      %v1448 = vld [vmem:[%s3 + $0xec] sm:$0xf]
      %v1449 = vld [vmem:[%s3 + $0xf0] sm:$0xf]
      %v1450 = vld [vmem:[%s3 + $0xf4] sm:$0xf]
      %v1451 = vld [vmem:[%s3 + $0xf8] sm:$0xf]
      %v1452 = vld [vmem:[%s3 + $0xfc] sm:$0xf]
      %v1453 = vpack.c.bf16 %v1098, %v1097
      %v1454 = vpack.c.bf16 %v1100, %v1099
      %v1455 = vpack.c.bf16 %v1102, %v1101
      %v1456 = vpack.c.bf16 %v1104, %v1103
      %v1521 = vunpack.c.l.b16 %v1389
      %v1522 = vunpack.c.l.b16 %v1390
      %v1523 = vunpack.c.l.b16 %v1391
      %v1524 = vunpack.c.l.b16 %v1392
      %v1525 = vunpack.c.l.b16 %v1393
      %v1526 = vunpack.c.l.b16 %v1394
      %v1527 = vunpack.c.l.b16 %v1395
      %v1528 = vunpack.c.l.b16 %v1396
      %v1529 = vunpack.c.l.b16 %v1397
      %v1530 = vunpack.c.l.b16 %v1398
      %v1531 = vunpack.c.l.b16 %v1399
      %v1532 = vunpack.c.l.b16 %v1400
      %v1533 = vunpack.c.l.b16 %v1401
      %v1534 = vunpack.c.l.b16 %v1402
      %v1535 = vunpack.c.l.b16 %v1403
      %v1536 = vunpack.c.l.b16 %v1404
      %v1537 = vunpack.c.l.b16 %v1405
      %v1538 = vunpack.c.l.b16 %v1406
      %v1539 = vunpack.c.l.b16 %v1407
      %v1540 = vunpack.c.l.b16 %v1408
      %v1541 = vunpack.c.l.b16 %v1409
      %v1542 = vunpack.c.l.b16 %v1410
      %v1543 = vunpack.c.l.b16 %v1411
      %v1544 = vunpack.c.l.b16 %v1412
      %v1545 = vunpack.c.l.b16 %v1413
      %v1546 = vunpack.c.l.b16 %v1414
      %v1547 = vunpack.c.l.b16 %v1415
      %v1548 = vunpack.c.l.b16 %v1416
      %v1549 = vunpack.c.l.b16 %v1417
      %v1550 = vunpack.c.l.b16 %v1418
      %v1551 = vunpack.c.l.b16 %v1419
      %v1552 = vunpack.c.l.b16 %v1420
      %v1553 = vunpack.c.l.b16 %v1421
      %v1554 = vunpack.c.l.b16 %v1422
      %v1555 = vunpack.c.l.b16 %v1423
      %v1556 = vunpack.c.l.b16 %v1424
      %v1557 = vunpack.c.l.b16 %v1425
      %v1558 = vunpack.c.l.b16 %v1426
      %v1559 = vunpack.c.l.b16 %v1427
      %v1560 = vunpack.c.l.b16 %v1428
      %v1561 = vunpack.c.l.b16 %v1429
      %v1562 = vunpack.c.l.b16 %v1430
      %v1563 = vunpack.c.l.b16 %v1431
      %v1564 = vunpack.c.l.b16 %v1432
      %v1565 = vunpack.c.l.b16 %v1433
      %v1566 = vunpack.c.l.b16 %v1434
      %v1567 = vunpack.c.l.b16 %v1435
      %v1568 = vunpack.c.l.b16 %v1436
      %v1569 = vunpack.c.l.b16 %v1437
      %v1570 = vunpack.c.l.b16 %v1438
      %v1571 = vunpack.c.l.b16 %v1439
      %v1572 = vunpack.c.l.b16 %v1440
      %v1573 = vunpack.c.l.b16 %v1441
      %v1574 = vunpack.c.l.b16 %v1442
      %v1575 = vunpack.c.l.b16 %v1443
      %v1576 = vunpack.c.l.b16 %v1444
      %v1577 = vunpack.c.l.b16 %v1445
      %v1578 = vunpack.c.l.b16 %v1446
      %v1579 = vunpack.c.l.b16 %v1447
      %v1580 = vunpack.c.l.b16 %v1448
      %v1581 = vunpack.c.l.b16 %v1449
      %v1582 = vunpack.c.l.b16 %v1450
      %v1583 = vunpack.c.l.b16 %v1451
      %v1584 = vunpack.c.l.b16 %v1452
      %v1585 = vpack.c.b16 %v1522, %v1521
      %v1586 = vpack.c.b16 %v1524, %v1523
      %v1587 = vpack.c.b16 %v1526, %v1525
      %v1588 = vpack.c.b16 %v1528, %v1527
      %v1589 = vpack.c.b16 %v1530, %v1529
      %v1590 = vpack.c.b16 %v1532, %v1531
      %v1591 = vpack.c.b16 %v1534, %v1533
      %v1592 = vpack.c.b16 %v1536, %v1535
      %v1593 = vpack.c.b16 %v1538, %v1537
      %v1594 = vpack.c.b16 %v1540, %v1539
      %v1595 = vpack.c.b16 %v1542, %v1541
      %v1596 = vpack.c.b16 %v1544, %v1543
      %v1597 = vpack.c.b16 %v1546, %v1545
      %v1598 = vpack.c.b16 %v1548, %v1547
      %v1599 = vpack.c.b16 %v1550, %v1549
      %v1600 = vpack.c.b16 %v1552, %v1551
      %v1601 = vpack.c.b16 %v1554, %v1553
      %v1602 = vpack.c.b16 %v1556, %v1555
      %v1603 = vpack.c.b16 %v1558, %v1557
      %v1604 = vpack.c.b16 %v1560, %v1559
      %v1605 = vpack.c.b16 %v1562, %v1561
      %v1606 = vpack.c.b16 %v1564, %v1563
      %v1607 = vpack.c.b16 %v1566, %v1565
      %v1608 = vpack.c.b16 %v1568, %v1567
      %v1609 = vpack.c.b16 %v1570, %v1569
      %v1610 = vpack.c.b16 %v1572, %v1571
      %v1611 = vpack.c.b16 %v1574, %v1573
      %v1612 = vpack.c.b16 %v1576, %v1575
      %v1613 = vpack.c.b16 %v1578, %v1577
      %v1614 = vpack.c.b16 %v1580, %v1579
      %v1615 = vpack.c.b16 %v1582, %v1581
      %v1616 = vpack.c.b16 %v1584, %v1583
      %v1618 = vsel %vm766, %v1585, 0
      %v1621 = vsel %vm766, %v1586, 0
      %v1624 = vsel %vm766, %v1587, 0
      %v1627 = vsel %vm766, %v1588, 0
      %v1630 = vsel %vm766, %v1589, 0
      %v1633 = vsel %vm766, %v1590, 0
      %v1636 = vsel %vm766, %v1591, 0
      %v1639 = vsel %vm766, %v1592, 0
      %v1642 = vsel %vm766, %v1593, 0
      %v1645 = vsel %vm766, %v1594, 0
      %v1648 = vsel %vm766, %v1595, 0
      %v1651 = vsel %vm766, %v1596, 0
      %v1654 = vsel %vm766, %v1597, 0
      %v1657 = vsel %vm766, %v1598, 0
      %v1660 = vsel %vm766, %v1599, 0
      %v1663 = vsel %vm766, %v1600, 0
      %v1666 = vsel %vm766, %v1601, 0
      %v1669 = vsel %vm766, %v1602, 0
      %v1672 = vsel %vm766, %v1603, 0
      %v1675 = vsel %vm766, %v1604, 0
      %v1678 = vsel %vm766, %v1605, 0
      %v1681 = vsel %vm766, %v1606, 0
      %v1684 = vsel %vm766, %v1607, 0
      %v1687 = vsel %vm766, %v1608, 0
      %v1690 = vsel %vm766, %v1609, 0
      %v1693 = vsel %vm766, %v1610, 0
      %v1696 = vsel %vm766, %v1611, 0
      %v1699 = vsel %vm766, %v1612, 0
      %v1702 = vsel %vm766, %v1613, 0
      %v1705 = vsel %vm766, %v1614, 0
      %v1708 = vsel %vm766, %v1615, 0
      %v1711 = vsel %vm766, %v1616, 0
      %1713 = vmatprep.subr.bf16.mxu0 0
      %1714 = vmatpush1.bf16.msra.mxu0 0
      %1715 = vmatprep.subr.bf16.mxu0 0
      %1716 = vmatpush1.bf16.msra.mxu0 0
      %1717 = vmatprep.subr.bf16.mxu0 0
      %1718 = vmatpush1.bf16.msra.mxu0 0
      %1719 = vmatprep.subr.bf16.mxu0 0
      %1720 = vmatpush1.bf16.msra.mxu0 0
      %1721 = vmatprep.subr.bf16.mxu0 0
      %1722 = vmatpush1.bf16.msra.mxu0 %v1456
      %1723 = vmatprep.subr.bf16.mxu0 0
      %1724 = vmatpush1.bf16.msra.mxu0 %v1455
      %1725 = vmatprep.subr.bf16.mxu0 0
      %1726 = vmatpush1.bf16.msra.mxu0 %v1454
      %1727 = vmatprep.subr.bf16.mxu0 0
      %1728 = vmatpush1.bf16.msra.mxu0 %v1453
      %1729 = vmatprep.subr.bf16.mxu0 0
      %1730 = vmatpush2.bf16.msra.mxu0 0
      %1731 = vmatprep.subr.bf16.mxu0 0
      %1732 = vmatpush2.bf16.msra.mxu0 0
      %1733 = vmatprep.subr.bf16.mxu0 0
      %1734 = vmatpush2.bf16.msra.mxu0 0
      %1735 = vmatprep.subr.bf16.mxu0 0
      %1736 = vmatpush2.bf16.msra.mxu0 0
      %1737 = vmatprep.subr.bf16.mxu0 0
      %1738 = vmatpush2.bf16.msra.mxu0 0
      %1739 = vmatprep.subr.bf16.mxu0 0
      %1740 = vmatpush2.bf16.msra.mxu0 0
      %1741 = vmatprep.subr.bf16.mxu0 0
      %1742 = vmatpush2.bf16.msra.mxu0 0
      %1743 = vmatprep.subr.bf16.mxu0 0
      %1744 = vmatpush2.bf16.msra.mxu0 0
      %1745 = vmatprep.mubr.bf16.mxu0 0
      %1746 = vmatmul.mubr.bf16.gmra.mxu0 %v1618
      %v1747 = vpop.f32.mrf.mxu0
      %v1748 = vadd.f32 0.0, %v1747
      %v1749 = vpop.f32.mrf.mxu0
      %v1750 = vpop.f32.mrf.mxu0
      %v1751 = vadd.f32 0.0, %v1750
      %v1752 = vpop.f32.mrf.mxu0
      %1753 = vmatprep.mubr.bf16.mxu0 0
      %1754 = vmatmul.mubr.bf16.gmra.mxu0 %v1621
      %v1755 = vpop.f32.mrf.mxu0
      %v1756 = vadd.f32 0.0, %v1755
      %v1757 = vpop.f32.mrf.mxu0
      %v1758 = vpop.f32.mrf.mxu0
      %v1759 = vadd.f32 0.0, %v1758
      %v1760 = vpop.f32.mrf.mxu0
      %1761 = vmatprep.mubr.bf16.mxu0 0
      %1762 = vmatmul.mubr.bf16.gmra.mxu0 %v1624
      %v1763 = vpop.f32.mrf.mxu0
      %v1764 = vadd.f32 0.0, %v1763
      %v1765 = vpop.f32.mrf.mxu0
      %v1766 = vpop.f32.mrf.mxu0
      %v1767 = vadd.f32 0.0, %v1766
      %v1768 = vpop.f32.mrf.mxu0
      %1769 = vmatprep.mubr.bf16.mxu0 0
      %1770 = vmatmul.mubr.bf16.gmra.mxu0 %v1627
      %v1771 = vpop.f32.mrf.mxu0
      %v1772 = vadd.f32 0.0, %v1771
      %v1773 = vpop.f32.mrf.mxu0
      %v1774 = vpop.f32.mrf.mxu0
      %v1775 = vadd.f32 0.0, %v1774
      %v1776 = vpop.f32.mrf.mxu0
      %1777 = vmatprep.mubr.bf16.mxu0 0
      %1778 = vmatmul.mubr.bf16.gmra.mxu0 %v1630
      %v1779 = vpop.f32.mrf.mxu0
      %v1780 = vadd.f32 0.0, %v1779
      %v1781 = vpop.f32.mrf.mxu0
      %v1782 = vpop.f32.mrf.mxu0
      %v1783 = vadd.f32 0.0, %v1782
      %v1784 = vpop.f32.mrf.mxu0
      %1785 = vmatprep.mubr.bf16.mxu0 0
      %1786 = vmatmul.mubr.bf16.gmra.mxu0 %v1633
      %v1787 = vpop.f32.mrf.mxu0
      %v1788 = vadd.f32 0.0, %v1787
      %v1789 = vpop.f32.mrf.mxu0
      %v1790 = vpop.f32.mrf.mxu0
      %v1791 = vadd.f32 0.0, %v1790
      %v1792 = vpop.f32.mrf.mxu0
      %1793 = vmatprep.mubr.bf16.mxu0 0
      %1794 = vmatmul.mubr.bf16.gmra.mxu0 %v1636
      %v1795 = vpop.f32.mrf.mxu0
      %v1796 = vadd.f32 0.0, %v1795
      %v1797 = vpop.f32.mrf.mxu0
      %v1798 = vpop.f32.mrf.mxu0
      %v1799 = vadd.f32 0.0, %v1798
      %v1800 = vpop.f32.mrf.mxu0
      %1801 = vmatprep.mubr.bf16.mxu0 0
      %1802 = vmatmul.mubr.bf16.gmra.mxu0 %v1639
      %v1803 = vpop.f32.mrf.mxu0
      %v1804 = vadd.f32 0.0, %v1803
      %v1805 = vpop.f32.mrf.mxu0
      %v1806 = vpop.f32.mrf.mxu0
      %v1807 = vadd.f32 0.0, %v1806
      %v1808 = vpop.f32.mrf.mxu0
      %1809 = vmatprep.mubr.bf16.mxu0 0
      %1810 = vmatmul.mubr.bf16.gmra.mxu0 %v1642
      %v1811 = vpop.f32.mrf.mxu0
      %v1812 = vadd.f32 0.0, %v1811
      %v1813 = vpop.f32.mrf.mxu0
      %v1814 = vpop.f32.mrf.mxu0
      %v1815 = vadd.f32 0.0, %v1814
      %v1816 = vpop.f32.mrf.mxu0
      %1817 = vmatprep.mubr.bf16.mxu0 0
      %1818 = vmatmul.mubr.bf16.gmra.mxu0 %v1645
      %v1819 = vpop.f32.mrf.mxu0
      %v1820 = vadd.f32 0.0, %v1819
      %v1821 = vpop.f32.mrf.mxu0
      %v1822 = vpop.f32.mrf.mxu0
      %v1823 = vadd.f32 0.0, %v1822
      %v1824 = vpop.f32.mrf.mxu0
      %1825 = vmatprep.mubr.bf16.mxu0 0
      %1826 = vmatmul.mubr.bf16.gmra.mxu0 %v1648
      %v1827 = vpop.f32.mrf.mxu0
      %v1828 = vadd.f32 0.0, %v1827
      %v1829 = vpop.f32.mrf.mxu0
      %v1830 = vpop.f32.mrf.mxu0
      %v1831 = vadd.f32 0.0, %v1830
      %v1832 = vpop.f32.mrf.mxu0
      %1833 = vmatprep.mubr.bf16.mxu0 0
      %1834 = vmatmul.mubr.bf16.gmra.mxu0 %v1651
      %v1835 = vpop.f32.mrf.mxu0
      %v1836 = vadd.f32 0.0, %v1835
      %v1837 = vpop.f32.mrf.mxu0
      %v1838 = vpop.f32.mrf.mxu0
      %v1839 = vadd.f32 0.0, %v1838
      %v1840 = vpop.f32.mrf.mxu0
      %1841 = vmatprep.mubr.bf16.mxu0 0
      %1842 = vmatmul.mubr.bf16.gmra.mxu0 %v1654
      %v1843 = vpop.f32.mrf.mxu0
      %v1844 = vadd.f32 0.0, %v1843
      %v1845 = vpop.f32.mrf.mxu0
      %v1846 = vpop.f32.mrf.mxu0
      %v1847 = vadd.f32 0.0, %v1846
      %v1848 = vpop.f32.mrf.mxu0
      %1849 = vmatprep.mubr.bf16.mxu0 0
      %1850 = vmatmul.mubr.bf16.gmra.mxu0 %v1657
      %v1851 = vpop.f32.mrf.mxu0
      %v1852 = vadd.f32 0.0, %v1851
      %v1853 = vpop.f32.mrf.mxu0
      %v1854 = vpop.f32.mrf.mxu0
      %v1855 = vadd.f32 0.0, %v1854
      %v1856 = vpop.f32.mrf.mxu0
      %1857 = vmatprep.mubr.bf16.mxu0 0
      %1858 = vmatmul.mubr.bf16.gmra.mxu0 %v1660
      %v1859 = vpop.f32.mrf.mxu0
      %v1860 = vadd.f32 0.0, %v1859
      %v1861 = vpop.f32.mrf.mxu0
      %v1862 = vpop.f32.mrf.mxu0
      %v1863 = vadd.f32 0.0, %v1862
      %v1864 = vpop.f32.mrf.mxu0
      %1865 = vmatprep.mubr.bf16.mxu0 0
      %1866 = vmatmul.mubr.bf16.gmra.mxu0 %v1663
      %v1867 = vpop.f32.mrf.mxu0
      %v1868 = vadd.f32 0.0, %v1867
      %v1869 = vpop.f32.mrf.mxu0
      %v1870 = vpop.f32.mrf.mxu0
      %v1871 = vadd.f32 0.0, %v1870
      %v1872 = vpop.f32.mrf.mxu0
      %1873 = vmatprep.mubr.bf16.mxu0 0
      %1874 = vmatmul.mubr.bf16.gmra.mxu0 %v1666
      %v1875 = vpop.f32.mrf.mxu0
      %v1876 = vadd.f32 0.0, %v1875
      %v1877 = vpop.f32.mrf.mxu0
      %v1878 = vpop.f32.mrf.mxu0
      %v1879 = vadd.f32 0.0, %v1878
      %v1880 = vpop.f32.mrf.mxu0
      %1881 = vmatprep.mubr.bf16.mxu0 0
      %1882 = vmatmul.mubr.bf16.gmra.mxu0 %v1669
      %v1883 = vpop.f32.mrf.mxu0
      %v1884 = vadd.f32 0.0, %v1883
      %v1885 = vpop.f32.mrf.mxu0
      %v1886 = vpop.f32.mrf.mxu0
      %v1887 = vadd.f32 0.0, %v1886
      %v1888 = vpop.f32.mrf.mxu0
      %1889 = vmatprep.mubr.bf16.mxu0 0
      %1890 = vmatmul.mubr.bf16.gmra.mxu0 %v1672
      %v1891 = vpop.f32.mrf.mxu0
      %v1892 = vadd.f32 0.0, %v1891
      %v1893 = vpop.f32.mrf.mxu0
      %v1894 = vpop.f32.mrf.mxu0
      %v1895 = vadd.f32 0.0, %v1894
      %v1896 = vpop.f32.mrf.mxu0
      %1897 = vmatprep.mubr.bf16.mxu0 0
      %1898 = vmatmul.mubr.bf16.gmra.mxu0 %v1675
      %v1899 = vpop.f32.mrf.mxu0
      %v1900 = vadd.f32 0.0, %v1899
      %v1901 = vpop.f32.mrf.mxu0
      %v1902 = vpop.f32.mrf.mxu0
      %v1903 = vadd.f32 0.0, %v1902
      %v1904 = vpop.f32.mrf.mxu0
      %1905 = vmatprep.mubr.bf16.mxu0 0
      %1906 = vmatmul.mubr.bf16.gmra.mxu0 %v1678
      %v1907 = vpop.f32.mrf.mxu0
      %v1908 = vadd.f32 0.0, %v1907
      %v1909 = vpop.f32.mrf.mxu0
      %v1910 = vpop.f32.mrf.mxu0
      %v1911 = vadd.f32 0.0, %v1910
      %v1912 = vpop.f32.mrf.mxu0
      %1913 = vmatprep.mubr.bf16.mxu0 0
      %1914 = vmatmul.mubr.bf16.gmra.mxu0 %v1681
      %v1915 = vpop.f32.mrf.mxu0
      %v1916 = vadd.f32 0.0, %v1915
      %v1917 = vpop.f32.mrf.mxu0
      %v1918 = vpop.f32.mrf.mxu0
      %v1919 = vadd.f32 0.0, %v1918
      %v1920 = vpop.f32.mrf.mxu0
      %1921 = vmatprep.mubr.bf16.mxu0 0
      %1922 = vmatmul.mubr.bf16.gmra.mxu0 %v1684
      %v1923 = vpop.f32.mrf.mxu0
      %v1924 = vadd.f32 0.0, %v1923
      %v1925 = vpop.f32.mrf.mxu0
      %v1926 = vpop.f32.mrf.mxu0
      %v1927 = vadd.f32 0.0, %v1926
      %v1928 = vpop.f32.mrf.mxu0
      %1929 = vmatprep.mubr.bf16.mxu0 0
      %1930 = vmatmul.mubr.bf16.gmra.mxu0 %v1687
      %v1931 = vpop.f32.mrf.mxu0
      %v1932 = vadd.f32 0.0, %v1931
      %v1933 = vpop.f32.mrf.mxu0
      %v1934 = vpop.f32.mrf.mxu0
      %v1935 = vadd.f32 0.0, %v1934
      %v1936 = vpop.f32.mrf.mxu0
      %1937 = vmatprep.mubr.bf16.mxu0 0
      %1938 = vmatmul.mubr.bf16.gmra.mxu0 %v1690
      %v1939 = vpop.f32.mrf.mxu0
      %v1940 = vadd.f32 0.0, %v1939
      %v1941 = vpop.f32.mrf.mxu0
      %v1942 = vpop.f32.mrf.mxu0
      %v1943 = vadd.f32 0.0, %v1942
      %v1944 = vpop.f32.mrf.mxu0
      %1945 = vmatprep.mubr.bf16.mxu0 0
      %1946 = vmatmul.mubr.bf16.gmra.mxu0 %v1693
      %v1947 = vpop.f32.mrf.mxu0
      %v1948 = vadd.f32 0.0, %v1947
      %v1949 = vpop.f32.mrf.mxu0
      %v1950 = vpop.f32.mrf.mxu0
      %v1951 = vadd.f32 0.0, %v1950
      %v1952 = vpop.f32.mrf.mxu0
      %1953 = vmatprep.mubr.bf16.mxu0 0
      %1954 = vmatmul.mubr.bf16.gmra.mxu0 %v1696
      %v1955 = vpop.f32.mrf.mxu0
      %v1956 = vadd.f32 0.0, %v1955
      %v1957 = vpop.f32.mrf.mxu0
      %v1958 = vpop.f32.mrf.mxu0
      %v1959 = vadd.f32 0.0, %v1958
      %v1960 = vpop.f32.mrf.mxu0
      %1961 = vmatprep.mubr.bf16.mxu0 0
      %1962 = vmatmul.mubr.bf16.gmra.mxu0 %v1699
      %v1963 = vpop.f32.mrf.mxu0
      %v1964 = vadd.f32 0.0, %v1963
      %v1965 = vpop.f32.mrf.mxu0
      %v1966 = vpop.f32.mrf.mxu0
      %v1967 = vadd.f32 0.0, %v1966
      %v1968 = vpop.f32.mrf.mxu0
      %1969 = vmatprep.mubr.bf16.mxu0 0
      %1970 = vmatmul.mubr.bf16.gmra.mxu0 %v1702
      %v1971 = vpop.f32.mrf.mxu0
      %v1972 = vadd.f32 0.0, %v1971
      %v1973 = vpop.f32.mrf.mxu0
      %v1974 = vpop.f32.mrf.mxu0
      %v1975 = vadd.f32 0.0, %v1974
      %v1976 = vpop.f32.mrf.mxu0
      %1977 = vmatprep.mubr.bf16.mxu0 0
      %1978 = vmatmul.mubr.bf16.gmra.mxu0 %v1705
      %v1979 = vpop.f32.mrf.mxu0
      %v1980 = vadd.f32 0.0, %v1979
      %v1981 = vpop.f32.mrf.mxu0
      %v1982 = vpop.f32.mrf.mxu0
      %v1983 = vadd.f32 0.0, %v1982
      %v1984 = vpop.f32.mrf.mxu0
      %1985 = vmatprep.mubr.bf16.mxu0 0
      %1986 = vmatmul.mubr.bf16.gmra.mxu0 %v1708
      %v1987 = vpop.f32.mrf.mxu0
      %v1988 = vadd.f32 0.0, %v1987
      %v1989 = vpop.f32.mrf.mxu0
      %v1990 = vpop.f32.mrf.mxu0
      %v1991 = vadd.f32 0.0, %v1990
      %v1992 = vpop.f32.mrf.mxu0
      %1993 = vmatprep.mubr.bf16.mxu0 0
      %1994 = vmatmul.mubr.bf16.gmra.mxu0 %v1711
      %v1995 = vpop.f32.mrf.mxu0
      %v1996 = vadd.f32 0.0, %v1995
      %v1997 = vpop.f32.mrf.mxu0
      %v1998 = vpop.f32.mrf.mxu0
      %v1999 = vadd.f32 0.0, %v1998
      %v2000 = vpop.f32.mrf.mxu0
      %2001 = vdwg.mxu0
      %v2002 = vmul.f32 %v1748, %v1325
      %v2003 = vmul.f32 %v1751, %v1326
      %v2004 = vmul.f32 %v1756, %v1327
      %v2005 = vmul.f32 %v1759, %v1328
      %v2006 = vmul.f32 %v1764, %v1329
      %v2007 = vmul.f32 %v1767, %v1330
      %v2008 = vmul.f32 %v1772, %v1331
      %v2009 = vmul.f32 %v1775, %v1332
      %v2010 = vmul.f32 %v1780, %v1333
      %v2011 = vmul.f32 %v1783, %v1334
      %v2012 = vmul.f32 %v1788, %v1335
      %v2013 = vmul.f32 %v1791, %v1336
      %v2014 = vmul.f32 %v1796, %v1337
      %v2015 = vmul.f32 %v1799, %v1338
      %v2016 = vmul.f32 %v1804, %v1339
      %v2017 = vmul.f32 %v1807, %v1340
      %v2018 = vmul.f32 %v1812, %v1341
      %v2019 = vmul.f32 %v1815, %v1342
      %v2020 = vmul.f32 %v1820, %v1343
      %v2021 = vmul.f32 %v1823, %v1344
      %v2022 = vmul.f32 %v1828, %v1345
      %v2023 = vmul.f32 %v1831, %v1346
      %v2024 = vmul.f32 %v1836, %v1347
      %v2025 = vmul.f32 %v1839, %v1348
      %v2026 = vmul.f32 %v1844, %v1349
      %v2027 = vmul.f32 %v1847, %v1350
      %v2028 = vmul.f32 %v1852, %v1351
      %v2029 = vmul.f32 %v1855, %v1352
      %v2030 = vmul.f32 %v1860, %v1353
      %v2031 = vmul.f32 %v1863, %v1354
      %v2032 = vmul.f32 %v1868, %v1355
      %v2033 = vmul.f32 %v1871, %v1356
      %v2034 = vmul.f32 %v1876, %v1357
      %v2035 = vmul.f32 %v1879, %v1358
      %v2036 = vmul.f32 %v1884, %v1359
      %v2037 = vmul.f32 %v1887, %v1360
      %v2038 = vmul.f32 %v1892, %v1361
      %v2039 = vmul.f32 %v1895, %v1362
      %v2040 = vmul.f32 %v1900, %v1363
      %v2041 = vmul.f32 %v1903, %v1364
      %v2042 = vmul.f32 %v1908, %v1365
      %v2043 = vmul.f32 %v1911, %v1366
      %v2044 = vmul.f32 %v1916, %v1367
      %v2045 = vmul.f32 %v1919, %v1368
      %v2046 = vmul.f32 %v1924, %v1369
      %v2047 = vmul.f32 %v1927, %v1370
      %v2048 = vmul.f32 %v1932, %v1371
      %v2049 = vmul.f32 %v1935, %v1372
      %v2050 = vmul.f32 %v1940, %v1373
      %v2051 = vmul.f32 %v1943, %v1374
      %v2052 = vmul.f32 %v1948, %v1375
      %v2053 = vmul.f32 %v1951, %v1376
      %v2054 = vmul.f32 %v1956, %v1377
      %v2055 = vmul.f32 %v1959, %v1378
      %v2056 = vmul.f32 %v1964, %v1379
      %v2057 = vmul.f32 %v1967, %v1380
      %v2058 = vmul.f32 %v1972, %v1381
      %v2059 = vmul.f32 %v1975, %v1382
      %v2060 = vmul.f32 %v1980, %v1383
      %v2061 = vmul.f32 %v1983, %v1384
      %v2062 = vmul.f32 %v1988, %v1385
      %v2063 = vmul.f32 %v1991, %v1386
      %v2064 = vmul.f32 %v1996, %v1387
      %v2065 = vmul.f32 %v1999, %v1388
      %v2066 = vpack.c.bf16 %v2003, %v2002
      %v2067 = vpack.c.bf16 %v2005, %v2004
      %v2068 = vpack.c.bf16 %v2007, %v2006
      %v2069 = vpack.c.bf16 %v2009, %v2008
      %v2070 = vpack.c.bf16 %v2011, %v2010
      %v2071 = vpack.c.bf16 %v2013, %v2012
      %v2072 = vpack.c.bf16 %v2015, %v2014
      %v2073 = vpack.c.bf16 %v2017, %v2016
      %v2074 = vpack.c.bf16 %v2019, %v2018
      %v2075 = vpack.c.bf16 %v2021, %v2020
      %v2076 = vpack.c.bf16 %v2023, %v2022
      %v2077 = vpack.c.bf16 %v2025, %v2024
      %v2078 = vpack.c.bf16 %v2027, %v2026
      %v2079 = vpack.c.bf16 %v2029, %v2028
      %v2080 = vpack.c.bf16 %v2031, %v2030
      %v2081 = vpack.c.bf16 %v2033, %v2032
      %v2082 = vpack.c.bf16 %v2035, %v2034
      %v2083 = vpack.c.bf16 %v2037, %v2036
      %v2084 = vpack.c.bf16 %v2039, %v2038
      %v2085 = vpack.c.bf16 %v2041, %v2040
      %v2086 = vpack.c.bf16 %v2043, %v2042
      %v2087 = vpack.c.bf16 %v2045, %v2044
      %v2088 = vpack.c.bf16 %v2047, %v2046
      %v2089 = vpack.c.bf16 %v2049, %v2048
      %v2090 = vpack.c.bf16 %v2051, %v2050
      %v2091 = vpack.c.bf16 %v2053, %v2052
      %v2092 = vpack.c.bf16 %v2055, %v2054
      %v2093 = vpack.c.bf16 %v2057, %v2056
      %v2094 = vpack.c.bf16 %v2059, %v2058
      %v2095 = vpack.c.bf16 %v2061, %v2060
      %v2096 = vpack.c.bf16 %v2063, %v2062
      %v2097 = vpack.c.bf16 %v2065, %v2064
      %v2098 = vpack.c.bf16 %v1153, %v1150
      %v2099 = vpack.c.bf16 %v1161, %v1158
      %v2100 = vpack.c.bf16 %v1169, %v1166
      %v2101 = vpack.c.bf16 %v1177, %v1174
      %v2102 = vld [vmem:[%s4] sm:$0xff]
      %v2103 = vld [vmem:[%s4 + $0x8] sm:$0xff]
      %v2104 = vld [vmem:[%s4 + $0x10] sm:$0xff]
      %v2105 = vld [vmem:[%s4 + $0x18] sm:$0xff]
      %v2106 = vld [vmem:[%s4 + $0x20] sm:$0xff]
      %v2107 = vld [vmem:[%s4 + $0x28] sm:$0xff]
      %v2108 = vld [vmem:[%s4 + $0x30] sm:$0xff]
      %v2109 = vld [vmem:[%s4 + $0x38] sm:$0xff]
      %v2110 = vld [vmem:[%s4 + $0x40] sm:$0xff]
      %v2111 = vld [vmem:[%s4 + $0x48] sm:$0xff]
      %v2112 = vld [vmem:[%s4 + $0x50] sm:$0xff]
      %v2113 = vld [vmem:[%s4 + $0x58] sm:$0xff]
      %v2114 = vld [vmem:[%s4 + $0x60] sm:$0xff]
      %v2115 = vld [vmem:[%s4 + $0x68] sm:$0xff]
      %v2116 = vld [vmem:[%s4 + $0x70] sm:$0xff]
      %v2117 = vld [vmem:[%s4 + $0x78] sm:$0xff]
      %v2118 = vld [vmem:[%s4 + $0x80] sm:$0xff]
      %v2119 = vld [vmem:[%s4 + $0x88] sm:$0xff]
      %v2120 = vld [vmem:[%s4 + $0x90] sm:$0xff]
      %v2121 = vld [vmem:[%s4 + $0x98] sm:$0xff]
      %v2122 = vld [vmem:[%s4 + $0xa0] sm:$0xff]
      %v2123 = vld [vmem:[%s4 + $0xa8] sm:$0xff]
      %v2124 = vld [vmem:[%s4 + $0xb0] sm:$0xff]
      %v2125 = vld [vmem:[%s4 + $0xb8] sm:$0xff]
      %v2126 = vld [vmem:[%s4 + $0xc0] sm:$0xff]
      %v2127 = vld [vmem:[%s4 + $0xc8] sm:$0xff]
      %v2128 = vld [vmem:[%s4 + $0xd0] sm:$0xff]
      %v2129 = vld [vmem:[%s4 + $0xd8] sm:$0xff]
      %v2130 = vld [vmem:[%s4 + $0xe0] sm:$0xff]
      %v2131 = vld [vmem:[%s4 + $0xe8] sm:$0xff]
      %v2132 = vld [vmem:[%s4 + $0xf0] sm:$0xff]
      %v2133 = vld [vmem:[%s4 + $0xf8] sm:$0xff]
      %v2134 = vld [vmem:[%s4 + $0x100] sm:$0xff]
      %v2135 = vld [vmem:[%s4 + $0x108] sm:$0xff]
      %v2136 = vld [vmem:[%s4 + $0x110] sm:$0xff]
      %v2137 = vld [vmem:[%s4 + $0x118] sm:$0xff]
      %v2138 = vld [vmem:[%s4 + $0x120] sm:$0xff]
      %v2139 = vld [vmem:[%s4 + $0x128] sm:$0xff]
      %v2140 = vld [vmem:[%s4 + $0x130] sm:$0xff]
      %v2141 = vld [vmem:[%s4 + $0x138] sm:$0xff]
      %v2142 = vld [vmem:[%s4 + $0x140] sm:$0xff]
      %v2143 = vld [vmem:[%s4 + $0x148] sm:$0xff]
      %v2144 = vld [vmem:[%s4 + $0x150] sm:$0xff]
      %v2145 = vld [vmem:[%s4 + $0x158] sm:$0xff]
      %v2146 = vld [vmem:[%s4 + $0x160] sm:$0xff]
      %v2147 = vld [vmem:[%s4 + $0x168] sm:$0xff]
      %v2148 = vld [vmem:[%s4 + $0x170] sm:$0xff]
      %v2149 = vld [vmem:[%s4 + $0x178] sm:$0xff]
      %v2150 = vld [vmem:[%s4 + $0x180] sm:$0xff]
      %v2151 = vld [vmem:[%s4 + $0x188] sm:$0xff]
      %v2152 = vld [vmem:[%s4 + $0x190] sm:$0xff]
      %v2153 = vld [vmem:[%s4 + $0x198] sm:$0xff]
      %v2154 = vld [vmem:[%s4 + $0x1a0] sm:$0xff]
      %v2155 = vld [vmem:[%s4 + $0x1a8] sm:$0xff]
      %v2156 = vld [vmem:[%s4 + $0x1b0] sm:$0xff]
      %v2157 = vld [vmem:[%s4 + $0x1b8] sm:$0xff]
      %v2158 = vld [vmem:[%s4 + $0x1c0] sm:$0xff]
      %v2159 = vld [vmem:[%s4 + $0x1c8] sm:$0xff]
      %v2160 = vld [vmem:[%s4 + $0x1d0] sm:$0xff]
      %v2161 = vld [vmem:[%s4 + $0x1d8] sm:$0xff]
      %v2162 = vld [vmem:[%s4 + $0x1e0] sm:$0xff]
      %v2163 = vld [vmem:[%s4 + $0x1e8] sm:$0xff]
      %v2164 = vld [vmem:[%s4 + $0x1f0] sm:$0xff]
      %v2165 = vld [vmem:[%s4 + $0x1f8] sm:$0xff]
      %v2167 = vsel %vm431, %v2066, 0
      %v2170 = vsel %vm431, %v2067, 0
      %v2173 = vsel %vm431, %v2068, 0
      %v2176 = vsel %vm431, %v2069, 0
      %v2179 = vsel %vm431, %v2070, 0
      %v2182 = vsel %vm431, %v2071, 0
      %v2185 = vsel %vm431, %v2072, 0
      %v2188 = vsel %vm431, %v2073, 0
      %v2191 = vsel %vm431, %v2074, 0
      %v2194 = vsel %vm431, %v2075, 0
      %v2197 = vsel %vm431, %v2076, 0
      %v2200 = vsel %vm431, %v2077, 0
      %v2203 = vsel %vm431, %v2078, 0
      %v2206 = vsel %vm431, %v2079, 0
      %v2209 = vsel %vm431, %v2080, 0
      %v2212 = vsel %vm431, %v2081, 0
      %v2215 = vsel %vm431, %v2082, 0
      %v2218 = vsel %vm431, %v2083, 0
      %v2221 = vsel %vm431, %v2084, 0
      %v2224 = vsel %vm431, %v2085, 0
      %v2227 = vsel %vm431, %v2086, 0
      %v2230 = vsel %vm431, %v2087, 0
      %v2233 = vsel %vm431, %v2088, 0
      %v2236 = vsel %vm431, %v2089, 0
      %v2239 = vsel %vm431, %v2090, 0
      %v2242 = vsel %vm431, %v2091, 0
      %v2245 = vsel %vm431, %v2092, 0
      %v2248 = vsel %vm431, %v2093, 0
      %v2251 = vsel %vm431, %v2094, 0
      %v2254 = vsel %vm431, %v2095, 0
      %v2257 = vsel %vm431, %v2096, 0
      %v2260 = vsel %vm431, %v2097, 0
      %v2263 = vsel %vm431, %v2098, 0
      %v2266 = vsel %vm431, %v2099, 0
      %v2269 = vsel %vm431, %v2100, 0
      %v2272 = vsel %vm431, %v2101, 0
      %2274 = vmatprep.subr.bf16.mxu0 0
      %2275 = vmatpush1.bf16.xpose.msra.mxu0 0
      %2276 = vmatprep.subr.bf16.mxu0 0
      %2277 = vmatpush1.bf16.xpose.msra.mxu0 0
      %2278 = vmatprep.subr.bf16.mxu0 0
      %2279 = vmatpush1.bf16.xpose.msra.mxu0 0
      %2280 = vmatprep.subr.bf16.mxu0 0
      %2281 = vmatpush1.bf16.xpose.msra.mxu0 0
      %2282 = vmatprep.subr.bf16.mxu0 0
      %2283 = vmatpush1.bf16.xpose.msra.mxu0 %v2272
      %2284 = vmatprep.subr.bf16.mxu0 0
      %2285 = vmatpush1.bf16.xpose.msra.mxu0 %v2269
      %2286 = vmatprep.subr.bf16.mxu0 0
      %2287 = vmatpush1.bf16.xpose.msra.mxu0 %v2266
      %2288 = vmatprep.subr.bf16.mxu0 0
      %2289 = vmatpush1.bf16.xpose.msra.mxu0 %v2263
      %2290 = vmatprep.subr.bf16.mxu0 0
      %2291 = vmatpush2.bf16.xpose.msra.mxu0 0
      %2292 = vmatprep.subr.bf16.mxu0 0
      %2293 = vmatpush2.bf16.xpose.msra.mxu0 0
      %2294 = vmatprep.subr.bf16.mxu0 0
      %2295 = vmatpush2.bf16.xpose.msra.mxu0 0
      %2296 = vmatprep.subr.bf16.mxu0 0
      %2297 = vmatpush2.bf16.xpose.msra.mxu0 0
      %2298 = vmatprep.subr.bf16.mxu0 0
      %2299 = vmatpush2.bf16.xpose.msra.mxu0 0
      %2300 = vmatprep.subr.bf16.mxu0 0
      %2301 = vmatpush2.bf16.xpose.msra.mxu0 0
      %2302 = vmatprep.subr.bf16.mxu0 0
      %2303 = vmatpush2.bf16.xpose.msra.mxu0 0
      %2304 = vmatprep.subr.bf16.mxu0 0
      %2305 = vmatpush2.bf16.xpose.msra.mxu0 0
      %2306 = vmatprep.mubr.bf16.mxu0 0
      %2307 = vmatmul.mubr.bf16.gmra.mxu0 %v2167
      %v2308 = vpop.f32.mrf.mxu0
      %v2309 = vadd.f32 %v2102, %v2308
      %v2310 = vpop.f32.mrf.mxu0
      %v2311 = vpop.f32.mrf.mxu0
      %v2312 = vadd.f32 %v2103, %v2311
      %v2313 = vpop.f32.mrf.mxu0
      %2314 = vmatprep.mubr.bf16.mxu0 0
      %2315 = vmatmul.mubr.bf16.gmra.mxu0 %v2170
      %v2316 = vpop.f32.mrf.mxu0
      %v2317 = vadd.f32 %v2104, %v2316
      %v2318 = vpop.f32.mrf.mxu0
      %v2319 = vpop.f32.mrf.mxu0
      %v2320 = vadd.f32 %v2105, %v2319
      %v2321 = vpop.f32.mrf.mxu0
      %2322 = vmatprep.mubr.bf16.mxu0 0
      %2323 = vmatmul.mubr.bf16.gmra.mxu0 %v2173
      %v2324 = vpop.f32.mrf.mxu0
      %v2325 = vadd.f32 %v2106, %v2324
      %v2326 = vpop.f32.mrf.mxu0
      %v2327 = vpop.f32.mrf.mxu0
      %v2328 = vadd.f32 %v2107, %v2327
      %v2329 = vpop.f32.mrf.mxu0
      %2330 = vmatprep.mubr.bf16.mxu0 0
      %2331 = vmatmul.mubr.bf16.gmra.mxu0 %v2176
      %v2332 = vpop.f32.mrf.mxu0
      %v2333 = vadd.f32 %v2108, %v2332
      %v2334 = vpop.f32.mrf.mxu0
      %v2335 = vpop.f32.mrf.mxu0
      %v2336 = vadd.f32 %v2109, %v2335
      %v2337 = vpop.f32.mrf.mxu0
      %2338 = vmatprep.mubr.bf16.mxu0 0
      %2339 = vmatmul.mubr.bf16.gmra.mxu0 %v2179
      %v2340 = vpop.f32.mrf.mxu0
      %v2341 = vadd.f32 %v2110, %v2340
      %v2342 = vpop.f32.mrf.mxu0
      %v2343 = vpop.f32.mrf.mxu0
      %v2344 = vadd.f32 %v2111, %v2343
      %v2345 = vpop.f32.mrf.mxu0
      %2346 = vmatprep.mubr.bf16.mxu0 0
      %2347 = vmatmul.mubr.bf16.gmra.mxu0 %v2182
      %v2348 = vpop.f32.mrf.mxu0
      %v2349 = vadd.f32 %v2112, %v2348
      %v2350 = vpop.f32.mrf.mxu0
      %v2351 = vpop.f32.mrf.mxu0
      %v2352 = vadd.f32 %v2113, %v2351
      %v2353 = vpop.f32.mrf.mxu0
      %2354 = vmatprep.mubr.bf16.mxu0 0
      %2355 = vmatmul.mubr.bf16.gmra.mxu0 %v2185
      %v2356 = vpop.f32.mrf.mxu0
      %v2357 = vadd.f32 %v2114, %v2356
      %v2358 = vpop.f32.mrf.mxu0
      %v2359 = vpop.f32.mrf.mxu0
      %v2360 = vadd.f32 %v2115, %v2359
      %v2361 = vpop.f32.mrf.mxu0
      %2362 = vmatprep.mubr.bf16.mxu0 0
      %2363 = vmatmul.mubr.bf16.gmra.mxu0 %v2188
      %v2364 = vpop.f32.mrf.mxu0
      %v2365 = vadd.f32 %v2116, %v2364
      %v2366 = vpop.f32.mrf.mxu0
      %v2367 = vpop.f32.mrf.mxu0
      %v2368 = vadd.f32 %v2117, %v2367
      %v2369 = vpop.f32.mrf.mxu0
      %2370 = vmatprep.mubr.bf16.mxu0 0
      %2371 = vmatmul.mubr.bf16.gmra.mxu0 %v2191
      %v2372 = vpop.f32.mrf.mxu0
      %v2373 = vadd.f32 %v2118, %v2372
      %v2374 = vpop.f32.mrf.mxu0
      %v2375 = vpop.f32.mrf.mxu0
      %v2376 = vadd.f32 %v2119, %v2375
      %v2377 = vpop.f32.mrf.mxu0
      %2378 = vmatprep.mubr.bf16.mxu0 0
      %2379 = vmatmul.mubr.bf16.gmra.mxu0 %v2194
      %v2380 = vpop.f32.mrf.mxu0
      %v2381 = vadd.f32 %v2120, %v2380
      %v2382 = vpop.f32.mrf.mxu0
      %v2383 = vpop.f32.mrf.mxu0
      %v2384 = vadd.f32 %v2121, %v2383
      %v2385 = vpop.f32.mrf.mxu0
      %2386 = vmatprep.mubr.bf16.mxu0 0
      %2387 = vmatmul.mubr.bf16.gmra.mxu0 %v2197
      %v2388 = vpop.f32.mrf.mxu0
      %v2389 = vadd.f32 %v2122, %v2388
      %v2390 = vpop.f32.mrf.mxu0
      %v2391 = vpop.f32.mrf.mxu0
      %v2392 = vadd.f32 %v2123, %v2391
      %v2393 = vpop.f32.mrf.mxu0
      %2394 = vmatprep.mubr.bf16.mxu0 0
      %2395 = vmatmul.mubr.bf16.gmra.mxu0 %v2200
      %v2396 = vpop.f32.mrf.mxu0
      %v2397 = vadd.f32 %v2124, %v2396
      %v2398 = vpop.f32.mrf.mxu0
      %v2399 = vpop.f32.mrf.mxu0
      %v2400 = vadd.f32 %v2125, %v2399
      %v2401 = vpop.f32.mrf.mxu0
      %2402 = vmatprep.mubr.bf16.mxu0 0
      %2403 = vmatmul.mubr.bf16.gmra.mxu0 %v2203
      %v2404 = vpop.f32.mrf.mxu0
      %v2405 = vadd.f32 %v2126, %v2404
      %v2406 = vpop.f32.mrf.mxu0
      %v2407 = vpop.f32.mrf.mxu0
      %v2408 = vadd.f32 %v2127, %v2407
      %v2409 = vpop.f32.mrf.mxu0
      %2410 = vmatprep.mubr.bf16.mxu0 0
      %2411 = vmatmul.mubr.bf16.gmra.mxu0 %v2206
      %v2412 = vpop.f32.mrf.mxu0
      %v2413 = vadd.f32 %v2128, %v2412
      %v2414 = vpop.f32.mrf.mxu0
      %v2415 = vpop.f32.mrf.mxu0
      %v2416 = vadd.f32 %v2129, %v2415
      %v2417 = vpop.f32.mrf.mxu0
      %2418 = vmatprep.mubr.bf16.mxu0 0
      %2419 = vmatmul.mubr.bf16.gmra.mxu0 %v2209
      %v2420 = vpop.f32.mrf.mxu0
      %v2421 = vadd.f32 %v2130, %v2420
      %v2422 = vpop.f32.mrf.mxu0
      %v2423 = vpop.f32.mrf.mxu0
      %v2424 = vadd.f32 %v2131, %v2423
      %v2425 = vpop.f32.mrf.mxu0
      %2426 = vmatprep.mubr.bf16.mxu0 0
      %2427 = vmatmul.mubr.bf16.gmra.mxu0 %v2212
      %v2428 = vpop.f32.mrf.mxu0
      %v2429 = vadd.f32 %v2132, %v2428
      %v2430 = vpop.f32.mrf.mxu0
      %v2431 = vpop.f32.mrf.mxu0
      %v2432 = vadd.f32 %v2133, %v2431
      %v2433 = vpop.f32.mrf.mxu0
      %2434 = vmatprep.mubr.bf16.mxu0 0
      %2435 = vmatmul.mubr.bf16.gmra.mxu0 %v2215
      %v2436 = vpop.f32.mrf.mxu0
      %v2437 = vadd.f32 %v2134, %v2436
      %v2438 = vpop.f32.mrf.mxu0
      %v2439 = vpop.f32.mrf.mxu0
      %v2440 = vadd.f32 %v2135, %v2439
      %v2441 = vpop.f32.mrf.mxu0
      %2442 = vmatprep.mubr.bf16.mxu0 0
      %2443 = vmatmul.mubr.bf16.gmra.mxu0 %v2218
      %v2444 = vpop.f32.mrf.mxu0
      %v2445 = vadd.f32 %v2136, %v2444
      %v2446 = vpop.f32.mrf.mxu0
      %v2447 = vpop.f32.mrf.mxu0
      %v2448 = vadd.f32 %v2137, %v2447
      %v2449 = vpop.f32.mrf.mxu0
      %2450 = vmatprep.mubr.bf16.mxu0 0
      %2451 = vmatmul.mubr.bf16.gmra.mxu0 %v2221
      %v2452 = vpop.f32.mrf.mxu0
      %v2453 = vadd.f32 %v2138, %v2452
      %v2454 = vpop.f32.mrf.mxu0
      %v2455 = vpop.f32.mrf.mxu0
      %v2456 = vadd.f32 %v2139, %v2455
      %v2457 = vpop.f32.mrf.mxu0
      %2458 = vmatprep.mubr.bf16.mxu0 0
      %2459 = vmatmul.mubr.bf16.gmra.mxu0 %v2224
      %v2460 = vpop.f32.mrf.mxu0
      %v2461 = vadd.f32 %v2140, %v2460
      %v2462 = vpop.f32.mrf.mxu0
      %v2463 = vpop.f32.mrf.mxu0
      %v2464 = vadd.f32 %v2141, %v2463
      %v2465 = vpop.f32.mrf.mxu0
      %2466 = vmatprep.mubr.bf16.mxu0 0
      %2467 = vmatmul.mubr.bf16.gmra.mxu0 %v2227
      %v2468 = vpop.f32.mrf.mxu0
      %v2469 = vadd.f32 %v2142, %v2468
      %v2470 = vpop.f32.mrf.mxu0
      %v2471 = vpop.f32.mrf.mxu0
      %v2472 = vadd.f32 %v2143, %v2471
      %v2473 = vpop.f32.mrf.mxu0
      %2474 = vmatprep.mubr.bf16.mxu0 0
      %2475 = vmatmul.mubr.bf16.gmra.mxu0 %v2230
      %v2476 = vpop.f32.mrf.mxu0
      %v2477 = vadd.f32 %v2144, %v2476
      %v2478 = vpop.f32.mrf.mxu0
      %v2479 = vpop.f32.mrf.mxu0
      %v2480 = vadd.f32 %v2145, %v2479
      %v2481 = vpop.f32.mrf.mxu0
      %2482 = vmatprep.mubr.bf16.mxu0 0
      %2483 = vmatmul.mubr.bf16.gmra.mxu0 %v2233
      %v2484 = vpop.f32.mrf.mxu0
      %v2485 = vadd.f32 %v2146, %v2484
      %v2486 = vpop.f32.mrf.mxu0
      %v2487 = vpop.f32.mrf.mxu0
      %v2488 = vadd.f32 %v2147, %v2487
      %v2489 = vpop.f32.mrf.mxu0
      %2490 = vmatprep.mubr.bf16.mxu0 0
      %2491 = vmatmul.mubr.bf16.gmra.mxu0 %v2236
      %v2492 = vpop.f32.mrf.mxu0
      %v2493 = vadd.f32 %v2148, %v2492
      %v2494 = vpop.f32.mrf.mxu0
      %v2495 = vpop.f32.mrf.mxu0
      %v2496 = vadd.f32 %v2149, %v2495
      %v2497 = vpop.f32.mrf.mxu0
      %2498 = vmatprep.mubr.bf16.mxu0 0
      %2499 = vmatmul.mubr.bf16.gmra.mxu0 %v2239
      %v2500 = vpop.f32.mrf.mxu0
      %v2501 = vadd.f32 %v2150, %v2500
      %v2502 = vpop.f32.mrf.mxu0
      %v2503 = vpop.f32.mrf.mxu0
      %v2504 = vadd.f32 %v2151, %v2503
      %v2505 = vpop.f32.mrf.mxu0
      %2506 = vmatprep.mubr.bf16.mxu0 0
      %2507 = vmatmul.mubr.bf16.gmra.mxu0 %v2242
      %v2508 = vpop.f32.mrf.mxu0
      %v2509 = vadd.f32 %v2152, %v2508
      %v2510 = vpop.f32.mrf.mxu0
      %v2511 = vpop.f32.mrf.mxu0
      %v2512 = vadd.f32 %v2153, %v2511
      %v2513 = vpop.f32.mrf.mxu0
      %2514 = vmatprep.mubr.bf16.mxu0 0
      %2515 = vmatmul.mubr.bf16.gmra.mxu0 %v2245
      %v2516 = vpop.f32.mrf.mxu0
      %v2517 = vadd.f32 %v2154, %v2516
      %v2518 = vpop.f32.mrf.mxu0
      %v2519 = vpop.f32.mrf.mxu0
      %v2520 = vadd.f32 %v2155, %v2519
      %v2521 = vpop.f32.mrf.mxu0
      %2522 = vmatprep.mubr.bf16.mxu0 0
      %2523 = vmatmul.mubr.bf16.gmra.mxu0 %v2248
      %v2524 = vpop.f32.mrf.mxu0
      %v2525 = vadd.f32 %v2156, %v2524
      %v2526 = vpop.f32.mrf.mxu0
      %v2527 = vpop.f32.mrf.mxu0
      %v2528 = vadd.f32 %v2157, %v2527
      %v2529 = vpop.f32.mrf.mxu0
      %2530 = vmatprep.mubr.bf16.mxu0 0
      %2531 = vmatmul.mubr.bf16.gmra.mxu0 %v2251
      %v2532 = vpop.f32.mrf.mxu0
      %v2533 = vadd.f32 %v2158, %v2532
      %v2534 = vpop.f32.mrf.mxu0
      %v2535 = vpop.f32.mrf.mxu0
      %v2536 = vadd.f32 %v2159, %v2535
      %v2537 = vpop.f32.mrf.mxu0
      %2538 = vmatprep.mubr.bf16.mxu0 0
      %2539 = vmatmul.mubr.bf16.gmra.mxu0 %v2254
      %v2540 = vpop.f32.mrf.mxu0
      %v2541 = vadd.f32 %v2160, %v2540
      %v2542 = vpop.f32.mrf.mxu0
      %v2543 = vpop.f32.mrf.mxu0
      %v2544 = vadd.f32 %v2161, %v2543
      %v2545 = vpop.f32.mrf.mxu0
      %2546 = vmatprep.mubr.bf16.mxu0 0
      %2547 = vmatmul.mubr.bf16.gmra.mxu0 %v2257
      %v2548 = vpop.f32.mrf.mxu0
      %v2549 = vadd.f32 %v2162, %v2548
      %v2550 = vpop.f32.mrf.mxu0
      %v2551 = vpop.f32.mrf.mxu0
      %v2552 = vadd.f32 %v2163, %v2551
      %v2553 = vpop.f32.mrf.mxu0
      %2554 = vmatprep.mubr.bf16.mxu0 0
      %2555 = vmatmul.mubr.bf16.gmra.mxu0 %v2260
      %v2556 = vpop.f32.mrf.mxu0
      %v2557 = vadd.f32 %v2164, %v2556
      %v2558 = vpop.f32.mrf.mxu0
      %v2559 = vpop.f32.mrf.mxu0
      %v2560 = vadd.f32 %v2165, %v2559
      %v2561 = vpop.f32.mrf.mxu0
      %2562 = vdwg.mxu0
      %v2563 = vsel %vm766, %v2309, -inf
      %2564 = vmax.xlane.f32.xlu0 %v2563
      %v2565 = vpop.xlane.xlu0 %2564
      %v2566 = vsel %vm766, %v2312, -inf
      %2567 = vmax.xlane.f32.xlu0 %v2566
      %v2568 = vpop.xlane.xlu0 %2567
      %v2569 = vsel %vm766, %v2317, -inf
      %2570 = vmax.xlane.f32.xlu0 %v2569
      %v2571 = vpop.xlane.xlu0 %2570
      %v2572 = vsel %vm766, %v2320, -inf
      %2573 = vmax.xlane.f32.xlu0 %v2572
      %v2574 = vpop.xlane.xlu0 %2573
      %v2575 = vsel %vm766, %v2325, -inf
      %2576 = vmax.xlane.f32.xlu0 %v2575
      %v2577 = vpop.xlane.xlu0 %2576
      %v2578 = vsel %vm766, %v2328, -inf
      %2579 = vmax.xlane.f32.xlu0 %v2578
      %v2580 = vpop.xlane.xlu0 %2579
      %v2581 = vsel %vm766, %v2333, -inf
      %2582 = vmax.xlane.f32.xlu0 %v2581
      %v2583 = vpop.xlane.xlu0 %2582
      %v2584 = vsel %vm766, %v2336, -inf
      %2585 = vmax.xlane.f32.xlu0 %v2584
      %v2586 = vpop.xlane.xlu0 %2585
      %v2587 = vsel %vm766, %v2341, -inf
      %2588 = vmax.xlane.f32.xlu0 %v2587
      %v2589 = vpop.xlane.xlu0 %2588
      %v2590 = vsel %vm766, %v2344, -inf
      %2591 = vmax.xlane.f32.xlu0 %v2590
      %v2592 = vpop.xlane.xlu0 %2591
      %v2593 = vsel %vm766, %v2349, -inf
      %2594 = vmax.xlane.f32.xlu0 %v2593
      %v2595 = vpop.xlane.xlu0 %2594
      %v2596 = vsel %vm766, %v2352, -inf
      %2597 = vmax.xlane.f32.xlu0 %v2596
      %v2598 = vpop.xlane.xlu0 %2597
      %v2599 = vsel %vm766, %v2357, -inf
      %2600 = vmax.xlane.f32.xlu0 %v2599
      %v2601 = vpop.xlane.xlu0 %2600
      %v2602 = vsel %vm766, %v2360, -inf
      %2603 = vmax.xlane.f32.xlu0 %v2602
      %v2604 = vpop.xlane.xlu0 %2603
      %v2605 = vsel %vm766, %v2365, -inf
      %2606 = vmax.xlane.f32.xlu0 %v2605
      %v2607 = vpop.xlane.xlu0 %2606
      %v2608 = vsel %vm766, %v2368, -inf
      %2609 = vmax.xlane.f32.xlu0 %v2608
      %v2610 = vpop.xlane.xlu0 %2609
      %v2611 = vsel %vm766, %v2373, -inf
      %2612 = vmax.xlane.f32.xlu0 %v2611
      %v2613 = vpop.xlane.xlu0 %2612
      %v2614 = vsel %vm766, %v2376, -inf
      %2615 = vmax.xlane.f32.xlu0 %v2614
      %v2616 = vpop.xlane.xlu0 %2615
      %v2617 = vsel %vm766, %v2381, -inf
      %2618 = vmax.xlane.f32.xlu0 %v2617
      %v2619 = vpop.xlane.xlu0 %2618
      %v2620 = vsel %vm766, %v2384, -inf
      %2621 = vmax.xlane.f32.xlu0 %v2620
      %v2622 = vpop.xlane.xlu0 %2621
      %v2623 = vsel %vm766, %v2389, -inf
      %2624 = vmax.xlane.f32.xlu0 %v2623
      %v2625 = vpop.xlane.xlu0 %2624
      %v2626 = vsel %vm766, %v2392, -inf
      %2627 = vmax.xlane.f32.xlu0 %v2626
      %v2628 = vpop.xlane.xlu0 %2627
      %v2629 = vsel %vm766, %v2397, -inf
      %2630 = vmax.xlane.f32.xlu0 %v2629
      %v2631 = vpop.xlane.xlu0 %2630
      %v2632 = vsel %vm766, %v2400, -inf
      %2633 = vmax.xlane.f32.xlu0 %v2632
      %v2634 = vpop.xlane.xlu0 %2633
      %v2635 = vsel %vm766, %v2405, -inf
      %2636 = vmax.xlane.f32.xlu0 %v2635
      %v2637 = vpop.xlane.xlu0 %2636
      %v2638 = vsel %vm766, %v2408, -inf
      %2639 = vmax.xlane.f32.xlu0 %v2638
      %v2640 = vpop.xlane.xlu0 %2639
      %v2641 = vsel %vm766, %v2413, -inf
      %2642 = vmax.xlane.f32.xlu0 %v2641
      %v2643 = vpop.xlane.xlu0 %2642
      %v2644 = vsel %vm766, %v2416, -inf
      %2645 = vmax.xlane.f32.xlu0 %v2644
      %v2646 = vpop.xlane.xlu0 %2645
      %v2647 = vsel %vm766, %v2421, -inf
      %2648 = vmax.xlane.f32.xlu0 %v2647
      %v2649 = vpop.xlane.xlu0 %2648
      %v2650 = vsel %vm766, %v2424, -inf
      %2651 = vmax.xlane.f32.xlu0 %v2650
      %v2652 = vpop.xlane.xlu0 %2651
      %v2653 = vsel %vm766, %v2429, -inf
      %2654 = vmax.xlane.f32.xlu0 %v2653
      %v2655 = vpop.xlane.xlu0 %2654
      %v2656 = vsel %vm766, %v2432, -inf
      %2657 = vmax.xlane.f32.xlu0 %v2656
      %v2658 = vpop.xlane.xlu0 %2657
      %v2659 = vsel %vm766, %v2437, -inf
      %2660 = vmax.xlane.f32.xlu0 %v2659
      %v2661 = vpop.xlane.xlu0 %2660
      %v2662 = vsel %vm766, %v2440, -inf
      %2663 = vmax.xlane.f32.xlu0 %v2662
      %v2664 = vpop.xlane.xlu0 %2663
      %v2665 = vsel %vm766, %v2445, -inf
      %2666 = vmax.xlane.f32.xlu0 %v2665
      %v2667 = vpop.xlane.xlu0 %2666
      %v2668 = vsel %vm766, %v2448, -inf
      %2669 = vmax.xlane.f32.xlu0 %v2668
      %v2670 = vpop.xlane.xlu0 %2669
      %v2671 = vsel %vm766, %v2453, -inf
      %2672 = vmax.xlane.f32.xlu0 %v2671
      %v2673 = vpop.xlane.xlu0 %2672
      %v2674 = vsel %vm766, %v2456, -inf
      %2675 = vmax.xlane.f32.xlu0 %v2674
      %v2676 = vpop.xlane.xlu0 %2675
      %v2677 = vsel %vm766, %v2461, -inf
      %2678 = vmax.xlane.f32.xlu0 %v2677
      %v2679 = vpop.xlane.xlu0 %2678
      %v2680 = vsel %vm766, %v2464, -inf
      %2681 = vmax.xlane.f32.xlu0 %v2680
      %v2682 = vpop.xlane.xlu0 %2681
      %v2683 = vsel %vm766, %v2469, -inf
      %2684 = vmax.xlane.f32.xlu0 %v2683
      %v2685 = vpop.xlane.xlu0 %2684
      %v2686 = vsel %vm766, %v2472, -inf
      %2687 = vmax.xlane.f32.xlu0 %v2686
      %v2688 = vpop.xlane.xlu0 %2687
      %v2689 = vsel %vm766, %v2477, -inf
      %2690 = vmax.xlane.f32.xlu0 %v2689
      %v2691 = vpop.xlane.xlu0 %2690
      %v2692 = vsel %vm766, %v2480, -inf
      %2693 = vmax.xlane.f32.xlu0 %v2692
      %v2694 = vpop.xlane.xlu0 %2693
      %v2695 = vsel %vm766, %v2485, -inf
      %2696 = vmax.xlane.f32.xlu0 %v2695
      %v2697 = vpop.xlane.xlu0 %2696
      %v2698 = vsel %vm766, %v2488, -inf
      %2699 = vmax.xlane.f32.xlu0 %v2698
      %v2700 = vpop.xlane.xlu0 %2699
      %v2701 = vsel %vm766, %v2493, -inf
      %2702 = vmax.xlane.f32.xlu0 %v2701
      %v2703 = vpop.xlane.xlu0 %2702
      %v2704 = vsel %vm766, %v2496, -inf
      %2705 = vmax.xlane.f32.xlu0 %v2704
      %v2706 = vpop.xlane.xlu0 %2705
      %v2707 = vsel %vm766, %v2501, -inf
      %2708 = vmax.xlane.f32.xlu0 %v2707
      %v2709 = vpop.xlane.xlu0 %2708
      %v2710 = vsel %vm766, %v2504, -inf
      %2711 = vmax.xlane.f32.xlu0 %v2710
      %v2712 = vpop.xlane.xlu0 %2711
      %v2713 = vsel %vm766, %v2509, -inf
      %2714 = vmax.xlane.f32.xlu0 %v2713
      %v2715 = vpop.xlane.xlu0 %2714
      %v2716 = vsel %vm766, %v2512, -inf
      %2717 = vmax.xlane.f32.xlu0 %v2716
      %v2718 = vpop.xlane.xlu0 %2717
      %v2719 = vsel %vm766, %v2517, -inf
      %2720 = vmax.xlane.f32.xlu0 %v2719
      %v2721 = vpop.xlane.xlu0 %2720
      %v2722 = vsel %vm766, %v2520, -inf
      %2723 = vmax.xlane.f32.xlu0 %v2722
      %v2724 = vpop.xlane.xlu0 %2723
      %v2725 = vsel %vm766, %v2525, -inf
      %2726 = vmax.xlane.f32.xlu0 %v2725
      %v2727 = vpop.xlane.xlu0 %2726
      %v2728 = vsel %vm766, %v2528, -inf
      %2729 = vmax.xlane.f32.xlu0 %v2728
      %v2730 = vpop.xlane.xlu0 %2729
      %v2731 = vsel %vm766, %v2533, -inf
      %2732 = vmax.xlane.f32.xlu0 %v2731
      %v2733 = vpop.xlane.xlu0 %2732
      %v2734 = vsel %vm766, %v2536, -inf
      %2735 = vmax.xlane.f32.xlu0 %v2734
      %v2736 = vpop.xlane.xlu0 %2735
      %v2737 = vsel %vm766, %v2541, -inf
      %2738 = vmax.xlane.f32.xlu0 %v2737
      %v2739 = vpop.xlane.xlu0 %2738
      %v2740 = vsel %vm766, %v2544, -inf
      %2741 = vmax.xlane.f32.xlu0 %v2740
      %v2742 = vpop.xlane.xlu0 %2741
      %v2743 = vsel %vm766, %v2549, -inf
      %2744 = vmax.xlane.f32.xlu0 %v2743
      %v2745 = vpop.xlane.xlu0 %2744
      %v2746 = vsel %vm766, %v2552, -inf
      %2747 = vmax.xlane.f32.xlu0 %v2746
      %v2748 = vpop.xlane.xlu0 %2747
      %v2749 = vsel %vm766, %v2557, -inf
      %2750 = vmax.xlane.f32.xlu0 %v2749
      %v2751 = vpop.xlane.xlu0 %2750
      %v2752 = vsel %vm766, %v2560, -inf
      %2753 = vmax.xlane.f32.xlu0 %v2752
      %v2754 = vpop.xlane.xlu0 %2753
      %v2755 = vsub.f32 %v2309, %v2565
      %v2756 = vsub.f32 %v2312, %v2568
      %v2757 = vsub.f32 %v2317, %v2571
      %v2758 = vsub.f32 %v2320, %v2574
      %v2759 = vsub.f32 %v2325, %v2577
      %v2760 = vsub.f32 %v2328, %v2580
      %v2761 = vsub.f32 %v2333, %v2583
      %v2762 = vsub.f32 %v2336, %v2586
      %v2763 = vsub.f32 %v2341, %v2589
      %v2764 = vsub.f32 %v2344, %v2592
      %v2765 = vsub.f32 %v2349, %v2595
      %v2766 = vsub.f32 %v2352, %v2598
      %v2767 = vsub.f32 %v2357, %v2601
      %v2768 = vsub.f32 %v2360, %v2604
      %v2769 = vsub.f32 %v2365, %v2607
      %v2770 = vsub.f32 %v2368, %v2610
      %v2771 = vsub.f32 %v2373, %v2613
      %v2772 = vsub.f32 %v2376, %v2616
      %v2773 = vsub.f32 %v2381, %v2619
      %v2774 = vsub.f32 %v2384, %v2622
      %v2775 = vsub.f32 %v2389, %v2625
      %v2776 = vsub.f32 %v2392, %v2628
      %v2777 = vsub.f32 %v2397, %v2631
      %v2778 = vsub.f32 %v2400, %v2634
      %v2779 = vsub.f32 %v2405, %v2637
      %v2780 = vsub.f32 %v2408, %v2640
      %v2781 = vsub.f32 %v2413, %v2643
      %v2782 = vsub.f32 %v2416, %v2646
      %v2783 = vsub.f32 %v2421, %v2649
      %v2784 = vsub.f32 %v2424, %v2652
      %v2785 = vsub.f32 %v2429, %v2655
      %v2786 = vsub.f32 %v2432, %v2658
      %v2787 = vsub.f32 %v2437, %v2661
      %v2788 = vsub.f32 %v2440, %v2664
      %v2789 = vsub.f32 %v2445, %v2667
      %v2790 = vsub.f32 %v2448, %v2670
      %v2791 = vsub.f32 %v2453, %v2673
      %v2792 = vsub.f32 %v2456, %v2676
      %v2793 = vsub.f32 %v2461, %v2679
      %v2794 = vsub.f32 %v2464, %v2682
      %v2795 = vsub.f32 %v2469, %v2685
      %v2796 = vsub.f32 %v2472, %v2688
      %v2797 = vsub.f32 %v2477, %v2691
      %v2798 = vsub.f32 %v2480, %v2694
      %v2799 = vsub.f32 %v2485, %v2697
      %v2800 = vsub.f32 %v2488, %v2700
      %v2801 = vsub.f32 %v2493, %v2703
      %v2802 = vsub.f32 %v2496, %v2706
      %v2803 = vsub.f32 %v2501, %v2709
      %v2804 = vsub.f32 %v2504, %v2712
      %v2805 = vsub.f32 %v2509, %v2715
      %v2806 = vsub.f32 %v2512, %v2718
      %v2807 = vsub.f32 %v2517, %v2721
      %v2808 = vsub.f32 %v2520, %v2724
      %v2809 = vsub.f32 %v2525, %v2727
      %v2810 = vsub.f32 %v2528, %v2730
      %v2811 = vsub.f32 %v2533, %v2733
      %v2812 = vsub.f32 %v2536, %v2736
      %v2813 = vsub.f32 %v2541, %v2739
      %v2814 = vsub.f32 %v2544, %v2742
      %v2815 = vsub.f32 %v2549, %v2745
      %v2816 = vsub.f32 %v2552, %v2748
      %v2817 = vsub.f32 %v2557, %v2751
      %v2818 = vsub.f32 %v2560, %v2754
      %v2819 = vmul.f32 %v2755, 1.442695
      %v2820 = vpow.pop %v2819
      %v2821 = vmul.f32 %v2756, 1.442695
      %v2822 = vpow.pop %v2821
      %v2823 = vmul.f32 %v2757, 1.442695
      %v2824 = vpow.pop %v2823
      %v2825 = vmul.f32 %v2758, 1.442695
      %v2826 = vpow.pop %v2825
      %v2827 = vmul.f32 %v2759, 1.442695
      %v2828 = vpow.pop %v2827
      %v2829 = vmul.f32 %v2760, 1.442695
      %v2830 = vpow.pop %v2829
      %v2831 = vmul.f32 %v2761, 1.442695
      %v2832 = vpow.pop %v2831
      %v2833 = vmul.f32 %v2762, 1.442695
      %v2834 = vpow.pop %v2833
      %v2835 = vmul.f32 %v2763, 1.442695
      %v2836 = vpow.pop %v2835
      %v2837 = vmul.f32 %v2764, 1.442695
      %v2838 = vpow.pop %v2837
      %v2839 = vmul.f32 %v2765, 1.442695
      %v2840 = vpow.pop %v2839
      %v2841 = vmul.f32 %v2766, 1.442695
      %v2842 = vpow.pop %v2841
      %v2843 = vmul.f32 %v2767, 1.442695
      %v2844 = vpow.pop %v2843
      %v2845 = vmul.f32 %v2768, 1.442695
      %v2846 = vpow.pop %v2845
      %v2847 = vmul.f32 %v2769, 1.442695
      %v2848 = vpow.pop %v2847
      %v2849 = vmul.f32 %v2770, 1.442695
      %v2850 = vpow.pop %v2849
      %v2851 = vmul.f32 %v2771, 1.442695
      %v2852 = vpow.pop %v2851
      %v2853 = vmul.f32 %v2772, 1.442695
      %v2854 = vpow.pop %v2853
      %v2855 = vmul.f32 %v2773, 1.442695
      %v2856 = vpow.pop %v2855
      %v2857 = vmul.f32 %v2774, 1.442695
      %v2858 = vpow.pop %v2857
      %v2859 = vmul.f32 %v2775, 1.442695
      %v2860 = vpow.pop %v2859
      %v2861 = vmul.f32 %v2776, 1.442695
      %v2862 = vpow.pop %v2861
      %v2863 = vmul.f32 %v2777, 1.442695
      %v2864 = vpow.pop %v2863
      %v2865 = vmul.f32 %v2778, 1.442695
      %v2866 = vpow.pop %v2865
      %v2867 = vmul.f32 %v2779, 1.442695
      %v2868 = vpow.pop %v2867
      %v2869 = vmul.f32 %v2780, 1.442695
      %v2870 = vpow.pop %v2869
      %v2871 = vmul.f32 %v2781, 1.442695
      %v2872 = vpow.pop %v2871
      %v2873 = vmul.f32 %v2782, 1.442695
      %v2874 = vpow.pop %v2873
      %v2875 = vmul.f32 %v2783, 1.442695
      %v2876 = vpow.pop %v2875
      %v2877 = vmul.f32 %v2784, 1.442695
      %v2878 = vpow.pop %v2877
      %v2879 = vmul.f32 %v2785, 1.442695
      %v2880 = vpow.pop %v2879
      %v2881 = vmul.f32 %v2786, 1.442695
      %v2882 = vpow.pop %v2881
      %v2883 = vmul.f32 %v2787, 1.442695
      %v2884 = vpow.pop %v2883
      %v2885 = vmul.f32 %v2788, 1.442695
      %v2886 = vpow.pop %v2885
      %v2887 = vmul.f32 %v2789, 1.442695
      %v2888 = vpow.pop %v2887
      %v2889 = vmul.f32 %v2790, 1.442695
      %v2890 = vpow.pop %v2889
      %v2891 = vmul.f32 %v2791, 1.442695
      %v2892 = vpow.pop %v2891
      %v2893 = vmul.f32 %v2792, 1.442695
      %v2894 = vpow.pop %v2893
      %v2895 = vmul.f32 %v2793, 1.442695
      %v2896 = vpow.pop %v2895
      %v2897 = vmul.f32 %v2794, 1.442695
      %v2898 = vpow.pop %v2897
      %v2899 = vmul.f32 %v2795, 1.442695
      %v2900 = vpow.pop %v2899
      %v2901 = vmul.f32 %v2796, 1.442695
      %v2902 = vpow.pop %v2901
      %v2903 = vmul.f32 %v2797, 1.442695
      %v2904 = vpow.pop %v2903
      %v2905 = vmul.f32 %v2798, 1.442695
      %v2906 = vpow.pop %v2905
      %v2907 = vmul.f32 %v2799, 1.442695
      %v2908 = vpow.pop %v2907
      %v2909 = vmul.f32 %v2800, 1.442695
      %v2910 = vpow.pop %v2909
      %v2911 = vmul.f32 %v2801, 1.442695
      %v2912 = vpow.pop %v2911
      %v2913 = vmul.f32 %v2802, 1.442695
      %v2914 = vpow.pop %v2913
      %v2915 = vmul.f32 %v2803, 1.442695
      %v2916 = vpow.pop %v2915
      %v2917 = vmul.f32 %v2804, 1.442695
      %v2918 = vpow.pop %v2917
      %v2919 = vmul.f32 %v2805, 1.442695
      %v2920 = vpow.pop %v2919
      %v2921 = vmul.f32 %v2806, 1.442695
      %v2922 = vpow.pop %v2921
      %v2923 = vmul.f32 %v2807, 1.442695
      %v2924 = vpow.pop %v2923
      %v2925 = vmul.f32 %v2808, 1.442695
      %v2926 = vpow.pop %v2925
      %v2927 = vmul.f32 %v2809, 1.442695
      %v2928 = vpow.pop %v2927
      %v2929 = vmul.f32 %v2810, 1.442695
      %v2930 = vpow.pop %v2929
      %v2931 = vmul.f32 %v2811, 1.442695
      %v2932 = vpow.pop %v2931
      %v2933 = vmul.f32 %v2812, 1.442695
      %v2934 = vpow.pop %v2933
      %v2935 = vmul.f32 %v2813, 1.442695
      %v2936 = vpow.pop %v2935
      %v2937 = vmul.f32 %v2814, 1.442695
      %v2938 = vpow.pop %v2937
      %v2939 = vmul.f32 %v2815, 1.442695
      %v2940 = vpow.pop %v2939
      %v2941 = vmul.f32 %v2816, 1.442695
      %v2942 = vpow.pop %v2941
      %v2943 = vmul.f32 %v2817, 1.442695
      %v2944 = vpow.pop %v2943
      %v2945 = vmul.f32 %v2818, 1.442695
      %v2946 = vpow.pop %v2945
      %v2947 = vsel %vm766, %v2820, 0.0
      %2948 = vadd.xlane.f32.xlu0 %v2947
      %v2949 = vpop.xlane.xlu0 %2948
      %v2950 = vsel %vm766, %v2822, 0.0
      %2951 = vadd.xlane.f32.xlu0 %v2950
      %v2952 = vpop.xlane.xlu0 %2951
      %v2953 = vsel %vm766, %v2824, 0.0
      %2954 = vadd.xlane.f32.xlu0 %v2953
      %v2955 = vpop.xlane.xlu0 %2954
      %v2956 = vsel %vm766, %v2826, 0.0
      %2957 = vadd.xlane.f32.xlu0 %v2956
      %v2958 = vpop.xlane.xlu0 %2957
      %v2959 = vsel %vm766, %v2828, 0.0
      %2960 = vadd.xlane.f32.xlu0 %v2959
      %v2961 = vpop.xlane.xlu0 %2960
      %v2962 = vsel %vm766, %v2830, 0.0
      %2963 = vadd.xlane.f32.xlu0 %v2962
      %v2964 = vpop.xlane.xlu0 %2963
      %v2965 = vsel %vm766, %v2832, 0.0
      %2966 = vadd.xlane.f32.xlu0 %v2965
      %v2967 = vpop.xlane.xlu0 %2966
      %v2968 = vsel %vm766, %v2834, 0.0
      %2969 = vadd.xlane.f32.xlu0 %v2968
      %v2970 = vpop.xlane.xlu0 %2969
      %v2971 = vsel %vm766, %v2836, 0.0
      %2972 = vadd.xlane.f32.xlu0 %v2971
      %v2973 = vpop.xlane.xlu0 %2972
      %v2974 = vsel %vm766, %v2838, 0.0
      %2975 = vadd.xlane.f32.xlu0 %v2974
      %v2976 = vpop.xlane.xlu0 %2975
      %v2977 = vsel %vm766, %v2840, 0.0
      %2978 = vadd.xlane.f32.xlu0 %v2977
      %v2979 = vpop.xlane.xlu0 %2978
      %v2980 = vsel %vm766, %v2842, 0.0
      %2981 = vadd.xlane.f32.xlu0 %v2980
      %v2982 = vpop.xlane.xlu0 %2981
      %v2983 = vsel %vm766, %v2844, 0.0
      %2984 = vadd.xlane.f32.xlu0 %v2983
      %v2985 = vpop.xlane.xlu0 %2984
      %v2986 = vsel %vm766, %v2846, 0.0
      %2987 = vadd.xlane.f32.xlu0 %v2986
      %v2988 = vpop.xlane.xlu0 %2987
      %v2989 = vsel %vm766, %v2848, 0.0
      %2990 = vadd.xlane.f32.xlu0 %v2989
      %v2991 = vpop.xlane.xlu0 %2990
      %v2992 = vsel %vm766, %v2850, 0.0
      %2993 = vadd.xlane.f32.xlu0 %v2992
      %v2994 = vpop.xlane.xlu0 %2993
      %v2995 = vsel %vm766, %v2852, 0.0
      %2996 = vadd.xlane.f32.xlu0 %v2995
      %v2997 = vpop.xlane.xlu0 %2996
      %v2998 = vsel %vm766, %v2854, 0.0
      %2999 = vadd.xlane.f32.xlu0 %v2998
      %v3000 = vpop.xlane.xlu0 %2999
      %v3001 = vsel %vm766, %v2856, 0.0
      %3002 = vadd.xlane.f32.xlu0 %v3001
      %v3003 = vpop.xlane.xlu0 %3002
      %v3004 = vsel %vm766, %v2858, 0.0
      %3005 = vadd.xlane.f32.xlu0 %v3004
      %v3006 = vpop.xlane.xlu0 %3005
      %v3007 = vsel %vm766, %v2860, 0.0
      %3008 = vadd.xlane.f32.xlu0 %v3007
      %v3009 = vpop.xlane.xlu0 %3008
      %v3010 = vsel %vm766, %v2862, 0.0
      %3011 = vadd.xlane.f32.xlu0 %v3010
      %v3012 = vpop.xlane.xlu0 %3011
      %v3013 = vsel %vm766, %v2864, 0.0
      %3014 = vadd.xlane.f32.xlu0 %v3013
      %v3015 = vpop.xlane.xlu0 %3014
      %v3016 = vsel %vm766, %v2866, 0.0
      %3017 = vadd.xlane.f32.xlu0 %v3016
      %v3018 = vpop.xlane.xlu0 %3017
      %v3019 = vsel %vm766, %v2868, 0.0
      %3020 = vadd.xlane.f32.xlu0 %v3019
      %v3021 = vpop.xlane.xlu0 %3020
      %v3022 = vsel %vm766, %v2870, 0.0
      %3023 = vadd.xlane.f32.xlu0 %v3022
      %v3024 = vpop.xlane.xlu0 %3023
      %v3025 = vsel %vm766, %v2872, 0.0
      %3026 = vadd.xlane.f32.xlu0 %v3025
      %v3027 = vpop.xlane.xlu0 %3026
      %v3028 = vsel %vm766, %v2874, 0.0
      %3029 = vadd.xlane.f32.xlu0 %v3028
      %v3030 = vpop.xlane.xlu0 %3029
      %v3031 = vsel %vm766, %v2876, 0.0
      %3032 = vadd.xlane.f32.xlu0 %v3031
      %v3033 = vpop.xlane.xlu0 %3032
      %v3034 = vsel %vm766, %v2878, 0.0
      %3035 = vadd.xlane.f32.xlu0 %v3034
      %v3036 = vpop.xlane.xlu0 %3035
      %v3037 = vsel %vm766, %v2880, 0.0
      %3038 = vadd.xlane.f32.xlu0 %v3037
      %v3039 = vpop.xlane.xlu0 %3038
      %v3040 = vsel %vm766, %v2882, 0.0
      %3041 = vadd.xlane.f32.xlu0 %v3040
      %v3042 = vpop.xlane.xlu0 %3041
      %v3043 = vsel %vm766, %v2884, 0.0
      %3044 = vadd.xlane.f32.xlu0 %v3043
      %v3045 = vpop.xlane.xlu0 %3044
      %v3046 = vsel %vm766, %v2886, 0.0
      %3047 = vadd.xlane.f32.xlu0 %v3046
      %v3048 = vpop.xlane.xlu0 %3047
      %v3049 = vsel %vm766, %v2888, 0.0
      %3050 = vadd.xlane.f32.xlu0 %v3049
      %v3051 = vpop.xlane.xlu0 %3050
      %v3052 = vsel %vm766, %v2890, 0.0
      %3053 = vadd.xlane.f32.xlu0 %v3052
      %v3054 = vpop.xlane.xlu0 %3053
      %v3055 = vsel %vm766, %v2892, 0.0
      %3056 = vadd.xlane.f32.xlu0 %v3055
      %v3057 = vpop.xlane.xlu0 %3056
      %v3058 = vsel %vm766, %v2894, 0.0
      %3059 = vadd.xlane.f32.xlu0 %v3058
      %v3060 = vpop.xlane.xlu0 %3059
      %v3061 = vsel %vm766, %v2896, 0.0
      %3062 = vadd.xlane.f32.xlu0 %v3061
      %v3063 = vpop.xlane.xlu0 %3062
      %v3064 = vsel %vm766, %v2898, 0.0
      %3065 = vadd.xlane.f32.xlu0 %v3064
      %v3066 = vpop.xlane.xlu0 %3065
      %v3067 = vsel %vm766, %v2900, 0.0
      %3068 = vadd.xlane.f32.xlu0 %v3067
      %v3069 = vpop.xlane.xlu0 %3068
      %v3070 = vsel %vm766, %v2902, 0.0
      %3071 = vadd.xlane.f32.xlu0 %v3070
      %v3072 = vpop.xlane.xlu0 %3071
      %v3073 = vsel %vm766, %v2904, 0.0
      %3074 = vadd.xlane.f32.xlu0 %v3073
      %v3075 = vpop.xlane.xlu0 %3074
      %v3076 = vsel %vm766, %v2906, 0.0
      %3077 = vadd.xlane.f32.xlu0 %v3076
      %v3078 = vpop.xlane.xlu0 %3077
      %v3079 = vsel %vm766, %v2908, 0.0
      %3080 = vadd.xlane.f32.xlu0 %v3079
      %v3081 = vpop.xlane.xlu0 %3080
      %v3082 = vsel %vm766, %v2910, 0.0
      %3083 = vadd.xlane.f32.xlu0 %v3082
      %v3084 = vpop.xlane.xlu0 %3083
      %v3085 = vsel %vm766, %v2912, 0.0
      %3086 = vadd.xlane.f32.xlu0 %v3085
      %v3087 = vpop.xlane.xlu0 %3086
      %v3088 = vsel %vm766, %v2914, 0.0
      %3089 = vadd.xlane.f32.xlu0 %v3088
      %v3090 = vpop.xlane.xlu0 %3089
      %v3091 = vsel %vm766, %v2916, 0.0
      %3092 = vadd.xlane.f32.xlu0 %v3091
      %v3093 = vpop.xlane.xlu0 %3092
      %v3094 = vsel %vm766, %v2918, 0.0
      %3095 = vadd.xlane.f32.xlu0 %v3094
      %v3096 = vpop.xlane.xlu0 %3095
      %v3097 = vsel %vm766, %v2920, 0.0
      %3098 = vadd.xlane.f32.xlu0 %v3097
      %v3099 = vpop.xlane.xlu0 %3098
      %v3100 = vsel %vm766, %v2922, 0.0
      %3101 = vadd.xlane.f32.xlu0 %v3100
      %v3102 = vpop.xlane.xlu0 %3101
      %v3103 = vsel %vm766, %v2924, 0.0
      %3104 = vadd.xlane.f32.xlu0 %v3103
      %v3105 = vpop.xlane.xlu0 %3104
      %v3106 = vsel %vm766, %v2926, 0.0
      %3107 = vadd.xlane.f32.xlu0 %v3106
      %v3108 = vpop.xlane.xlu0 %3107
      %v3109 = vsel %vm766, %v2928, 0.0
      %3110 = vadd.xlane.f32.xlu0 %v3109
      %v3111 = vpop.xlane.xlu0 %3110
      %v3112 = vsel %vm766, %v2930, 0.0
      %3113 = vadd.xlane.f32.xlu0 %v3112
      %v3114 = vpop.xlane.xlu0 %3113
      %v3115 = vsel %vm766, %v2932, 0.0
      %3116 = vadd.xlane.f32.xlu0 %v3115
      %v3117 = vpop.xlane.xlu0 %3116
      %v3118 = vsel %vm766, %v2934, 0.0
      %3119 = vadd.xlane.f32.xlu0 %v3118
      %v3120 = vpop.xlane.xlu0 %3119
      %v3121 = vsel %vm766, %v2936, 0.0
      %3122 = vadd.xlane.f32.xlu0 %v3121
      %v3123 = vpop.xlane.xlu0 %3122
      %v3124 = vsel %vm766, %v2938, 0.0
      %3125 = vadd.xlane.f32.xlu0 %v3124
      %v3126 = vpop.xlane.xlu0 %3125
      %v3127 = vsel %vm766, %v2940, 0.0
      %3128 = vadd.xlane.f32.xlu0 %v3127
      %v3129 = vpop.xlane.xlu0 %3128
      %v3130 = vsel %vm766, %v2942, 0.0
      %3131 = vadd.xlane.f32.xlu0 %v3130
      %v3132 = vpop.xlane.xlu0 %3131
      %v3133 = vsel %vm766, %v2944, 0.0
      %3134 = vadd.xlane.f32.xlu0 %v3133
      %v3135 = vpop.xlane.xlu0 %3134
      %v3136 = vsel %vm766, %v2946, 0.0
      %3137 = vadd.xlane.f32.xlu0 %v3136
      %v3138 = vpop.xlane.xlu0 %3137
      %v3139 = vrcp.pop %v2949
      %v3140 = vmul.f32 %v2820, %v3139
      %v3141 = vrcp.pop %v2952
      %v3142 = vmul.f32 %v2822, %v3141
      %v3143 = vrcp.pop %v2955
      %v3144 = vmul.f32 %v2824, %v3143
      %v3145 = vrcp.pop %v2958
      %v3146 = vmul.f32 %v2826, %v3145
      %v3147 = vrcp.pop %v2961
      %v3148 = vmul.f32 %v2828, %v3147
      %v3149 = vrcp.pop %v2964
      %v3150 = vmul.f32 %v2830, %v3149
      %v3151 = vrcp.pop %v2967
      %v3152 = vmul.f32 %v2832, %v3151
      %v3153 = vrcp.pop %v2970
      %v3154 = vmul.f32 %v2834, %v3153
      %v3155 = vrcp.pop %v2973
      %v3156 = vmul.f32 %v2836, %v3155
      %v3157 = vrcp.pop %v2976
      %v3158 = vmul.f32 %v2838, %v3157
      %v3159 = vrcp.pop %v2979
      %v3160 = vmul.f32 %v2840, %v3159
      %v3161 = vrcp.pop %v2982
      %v3162 = vmul.f32 %v2842, %v3161
      %v3163 = vrcp.pop %v2985
      %v3164 = vmul.f32 %v2844, %v3163
      %v3165 = vrcp.pop %v2988
      %v3166 = vmul.f32 %v2846, %v3165
      %v3167 = vrcp.pop %v2991
      %v3168 = vmul.f32 %v2848, %v3167
      %v3169 = vrcp.pop %v2994
      %v3170 = vmul.f32 %v2850, %v3169
      %v3171 = vrcp.pop %v2997
      %v3172 = vmul.f32 %v2852, %v3171
      %v3173 = vrcp.pop %v3000
      %v3174 = vmul.f32 %v2854, %v3173
      %v3175 = vrcp.pop %v3003
      %v3176 = vmul.f32 %v2856, %v3175
      %v3177 = vrcp.pop %v3006
      %v3178 = vmul.f32 %v2858, %v3177
      %v3179 = vrcp.pop %v3009
      %v3180 = vmul.f32 %v2860, %v3179
      %v3181 = vrcp.pop %v3012
      %v3182 = vmul.f32 %v2862, %v3181
      %v3183 = vrcp.pop %v3015
      %v3184 = vmul.f32 %v2864, %v3183
      %v3185 = vrcp.pop %v3018
      %v3186 = vmul.f32 %v2866, %v3185
      %v3187 = vrcp.pop %v3021
      %v3188 = vmul.f32 %v2868, %v3187
      %v3189 = vrcp.pop %v3024
      %v3190 = vmul.f32 %v2870, %v3189
      %v3191 = vrcp.pop %v3027
      %v3192 = vmul.f32 %v2872, %v3191
      %v3193 = vrcp.pop %v3030
      %v3194 = vmul.f32 %v2874, %v3193
      %v3195 = vrcp.pop %v3033
      %v3196 = vmul.f32 %v2876, %v3195
      %v3197 = vrcp.pop %v3036
      %v3198 = vmul.f32 %v2878, %v3197
      %v3199 = vrcp.pop %v3039
      %v3200 = vmul.f32 %v2880, %v3199
      %v3201 = vrcp.pop %v3042
      %v3202 = vmul.f32 %v2882, %v3201
      %v3203 = vrcp.pop %v3045
      %v3204 = vmul.f32 %v2884, %v3203
      %v3205 = vrcp.pop %v3048
      %v3206 = vmul.f32 %v2886, %v3205
      %v3207 = vrcp.pop %v3051
      %v3208 = vmul.f32 %v2888, %v3207
      %v3209 = vrcp.pop %v3054
      %v3210 = vmul.f32 %v2890, %v3209
      %v3211 = vrcp.pop %v3057
      %v3212 = vmul.f32 %v2892, %v3211
      %v3213 = vrcp.pop %v3060
      %v3214 = vmul.f32 %v2894, %v3213
      %v3215 = vrcp.pop %v3063
      %v3216 = vmul.f32 %v2896, %v3215
      %v3217 = vrcp.pop %v3066
      %v3218 = vmul.f32 %v2898, %v3217
      %v3219 = vrcp.pop %v3069
      %v3220 = vmul.f32 %v2900, %v3219
      %v3221 = vrcp.pop %v3072
      %v3222 = vmul.f32 %v2902, %v3221
      %v3223 = vrcp.pop %v3075
      %v3224 = vmul.f32 %v2904, %v3223
      %v3225 = vrcp.pop %v3078
      %v3226 = vmul.f32 %v2906, %v3225
      %v3227 = vrcp.pop %v3081
      %v3228 = vmul.f32 %v2908, %v3227
      %v3229 = vrcp.pop %v3084
      %v3230 = vmul.f32 %v2910, %v3229
      %v3231 = vrcp.pop %v3087
      %v3232 = vmul.f32 %v2912, %v3231
      %v3233 = vrcp.pop %v3090
      %v3234 = vmul.f32 %v2914, %v3233
      %v3235 = vrcp.pop %v3093
      %v3236 = vmul.f32 %v2916, %v3235
      %v3237 = vrcp.pop %v3096
      %v3238 = vmul.f32 %v2918, %v3237
      %v3239 = vrcp.pop %v3099
      %v3240 = vmul.f32 %v2920, %v3239
      %v3241 = vrcp.pop %v3102
      %v3242 = vmul.f32 %v2922, %v3241
      %v3243 = vrcp.pop %v3105
      %v3244 = vmul.f32 %v2924, %v3243
      %v3245 = vrcp.pop %v3108
      %v3246 = vmul.f32 %v2926, %v3245
      %v3247 = vrcp.pop %v3111
      %v3248 = vmul.f32 %v2928, %v3247
      %v3249 = vrcp.pop %v3114
      %v3250 = vmul.f32 %v2930, %v3249
      %v3251 = vrcp.pop %v3117
      %v3252 = vmul.f32 %v2932, %v3251
      %v3253 = vrcp.pop %v3120
      %v3254 = vmul.f32 %v2934, %v3253
      %v3255 = vrcp.pop %v3123
      %v3256 = vmul.f32 %v2936, %v3255
      %v3257 = vrcp.pop %v3126
      %v3258 = vmul.f32 %v2938, %v3257
      %v3259 = vrcp.pop %v3129
      %v3260 = vmul.f32 %v2940, %v3259
      %v3261 = vrcp.pop %v3132
      %v3262 = vmul.f32 %v2942, %v3261
      %v3263 = vrcp.pop %v3135
      %v3264 = vmul.f32 %v2944, %v3263
      %v3265 = vrcp.pop %v3138
      %v3266 = vmul.f32 %v2946, %v3265
      %v3267 = vpack.c.bf16 %v3142, %v3140
      %v3268 = vpack.c.bf16 %v3146, %v3144
      %v3269 = vpack.c.bf16 %v3150, %v3148
      %v3270 = vpack.c.bf16 %v3154, %v3152
      %v3271 = vpack.c.bf16 %v3158, %v3156
      %v3272 = vpack.c.bf16 %v3162, %v3160
      %v3273 = vpack.c.bf16 %v3166, %v3164
      %v3274 = vpack.c.bf16 %v3170, %v3168
      %v3275 = vpack.c.bf16 %v3174, %v3172
      %v3276 = vpack.c.bf16 %v3178, %v3176
      %v3277 = vpack.c.bf16 %v3182, %v3180
      %v3278 = vpack.c.bf16 %v3186, %v3184
      %v3279 = vpack.c.bf16 %v3190, %v3188
      %v3280 = vpack.c.bf16 %v3194, %v3192
      %v3281 = vpack.c.bf16 %v3198, %v3196
      %v3282 = vpack.c.bf16 %v3202, %v3200
      %v3283 = vpack.c.bf16 %v3206, %v3204
      %v3284 = vpack.c.bf16 %v3210, %v3208
      %v3285 = vpack.c.bf16 %v3214, %v3212
      %v3286 = vpack.c.bf16 %v3218, %v3216
      %v3287 = vpack.c.bf16 %v3222, %v3220
      %v3288 = vpack.c.bf16 %v3226, %v3224
      %v3289 = vpack.c.bf16 %v3230, %v3228
      %v3290 = vpack.c.bf16 %v3234, %v3232
      %v3291 = vpack.c.bf16 %v3238, %v3236
      %v3292 = vpack.c.bf16 %v3242, %v3240
      %v3293 = vpack.c.bf16 %v3246, %v3244
      %v3294 = vpack.c.bf16 %v3250, %v3248
      %v3295 = vpack.c.bf16 %v3254, %v3252
      %v3296 = vpack.c.bf16 %v3258, %v3256
      %v3297 = vpack.c.bf16 %v3262, %v3260
      %v3298 = vpack.c.bf16 %v3266, %v3264
      %v3299 = vpack.c.bf16 %v1234, %v1231
      %v3300 = vpack.c.bf16 %v1242, %v1239
      %v3301 = vpack.c.bf16 %v1250, %v1247
      %v3302 = vpack.c.bf16 %v1258, %v1255
      %v3304 = vsel %vm766, %v3267, 0
      %v3307 = vsel %vm766, %v3268, 0
      %v3310 = vsel %vm766, %v3269, 0
      %v3313 = vsel %vm766, %v3270, 0
      %v3316 = vsel %vm766, %v3271, 0
      %v3319 = vsel %vm766, %v3272, 0
      %v3322 = vsel %vm766, %v3273, 0
      %v3325 = vsel %vm766, %v3274, 0
      %v3328 = vsel %vm766, %v3275, 0
      %v3331 = vsel %vm766, %v3276, 0
      %v3334 = vsel %vm766, %v3277, 0
      %v3337 = vsel %vm766, %v3278, 0
      %v3340 = vsel %vm766, %v3279, 0
      %v3343 = vsel %vm766, %v3280, 0
      %v3346 = vsel %vm766, %v3281, 0
      %v3349 = vsel %vm766, %v3282, 0
      %v3352 = vsel %vm766, %v3283, 0
      %v3355 = vsel %vm766, %v3284, 0
      %v3358 = vsel %vm766, %v3285, 0
      %v3361 = vsel %vm766, %v3286, 0
      %v3364 = vsel %vm766, %v3287, 0
      %v3367 = vsel %vm766, %v3288, 0
      %v3370 = vsel %vm766, %v3289, 0
      %v3373 = vsel %vm766, %v3290, 0
      %v3376 = vsel %vm766, %v3291, 0
      %v3379 = vsel %vm766, %v3292, 0
      %v3382 = vsel %vm766, %v3293, 0
      %v3385 = vsel %vm766, %v3294, 0
      %v3388 = vsel %vm766, %v3295, 0
      %v3391 = vsel %vm766, %v3296, 0
      %v3394 = vsel %vm766, %v3297, 0
      %v3397 = vsel %vm766, %v3298, 0
      %3399 = vmatprep.subr.bf16.mxu0 0
      %3400 = vmatpush1.bf16.msra.mxu0 0
      %3401 = vmatprep.subr.bf16.mxu0 0
      %3402 = vmatpush1.bf16.msra.mxu0 0
      %3403 = vmatprep.subr.bf16.mxu0 0
      %3404 = vmatpush1.bf16.msra.mxu0 0
      %3405 = vmatprep.subr.bf16.mxu0 0
      %3406 = vmatpush1.bf16.msra.mxu0 0
      %3407 = vmatprep.subr.bf16.mxu0 0
      %3408 = vmatpush1.bf16.msra.mxu0 %v3302
      %3409 = vmatprep.subr.bf16.mxu0 0
      %3410 = vmatpush1.bf16.msra.mxu0 %v3301
      %3411 = vmatprep.subr.bf16.mxu0 0
      %3412 = vmatpush1.bf16.msra.mxu0 %v3300
      %3413 = vmatprep.subr.bf16.mxu0 0
      %3414 = vmatpush1.bf16.msra.mxu0 %v3299
      %3415 = vmatprep.subr.bf16.mxu0 0
      %3416 = vmatpush2.bf16.msra.mxu0 0
      %3417 = vmatprep.subr.bf16.mxu0 0
      %3418 = vmatpush2.bf16.msra.mxu0 0
      %3419 = vmatprep.subr.bf16.mxu0 0
      %3420 = vmatpush2.bf16.msra.mxu0 0
      %3421 = vmatprep.subr.bf16.mxu0 0
      %3422 = vmatpush2.bf16.msra.mxu0 0
      %3423 = vmatprep.subr.bf16.mxu0 0
      %3424 = vmatpush2.bf16.msra.mxu0 0
      %3425 = vmatprep.subr.bf16.mxu0 0
      %3426 = vmatpush2.bf16.msra.mxu0 0
      %3427 = vmatprep.subr.bf16.mxu0 0
      %3428 = vmatpush2.bf16.msra.mxu0 0
      %3429 = vmatprep.subr.bf16.mxu0 0
      %3430 = vmatpush2.bf16.msra.mxu0 0
      %3431 = vmatprep.mubr.bf16.mxu0 0
      %3432 = vmatmul.mubr.bf16.gmra.mxu0 %v3304
      %v3433 = vpop.f32.mrf.mxu0
      %v3434 = vadd.f32 0.0, %v3433
      %v3435 = vpop.f32.mrf.mxu0
      %v3436 = vpop.f32.mrf.mxu0
      %v3437 = vadd.f32 0.0, %v3436
      %v3438 = vpop.f32.mrf.mxu0
      %3439 = vmatprep.mubr.bf16.mxu0 0
      %3440 = vmatmul.mubr.bf16.gmra.mxu0 %v3307
      %v3441 = vpop.f32.mrf.mxu0
      %v3442 = vadd.f32 0.0, %v3441
      %v3443 = vpop.f32.mrf.mxu0
      %v3444 = vpop.f32.mrf.mxu0
      %v3445 = vadd.f32 0.0, %v3444
      %v3446 = vpop.f32.mrf.mxu0
      %3447 = vmatprep.mubr.bf16.mxu0 0
      %3448 = vmatmul.mubr.bf16.gmra.mxu0 %v3310
      %v3449 = vpop.f32.mrf.mxu0
      %v3450 = vadd.f32 0.0, %v3449
      %v3451 = vpop.f32.mrf.mxu0
      %v3452 = vpop.f32.mrf.mxu0
      %v3453 = vadd.f32 0.0, %v3452
      %v3454 = vpop.f32.mrf.mxu0
      %3455 = vmatprep.mubr.bf16.mxu0 0
      %3456 = vmatmul.mubr.bf16.gmra.mxu0 %v3313
      %v3457 = vpop.f32.mrf.mxu0
      %v3458 = vadd.f32 0.0, %v3457
      %v3459 = vpop.f32.mrf.mxu0
      %v3460 = vpop.f32.mrf.mxu0
      %v3461 = vadd.f32 0.0, %v3460
      %v3462 = vpop.f32.mrf.mxu0
      %3463 = vmatprep.mubr.bf16.mxu0 0
      %3464 = vmatmul.mubr.bf16.gmra.mxu0 %v3316
      %v3465 = vpop.f32.mrf.mxu0
      %v3466 = vadd.f32 0.0, %v3465
      %v3467 = vpop.f32.mrf.mxu0
      %v3468 = vpop.f32.mrf.mxu0
      %v3469 = vadd.f32 0.0, %v3468
      %v3470 = vpop.f32.mrf.mxu0
      %3471 = vmatprep.mubr.bf16.mxu0 0
      %3472 = vmatmul.mubr.bf16.gmra.mxu0 %v3319
      %v3473 = vpop.f32.mrf.mxu0
      %v3474 = vadd.f32 0.0, %v3473
      %v3475 = vpop.f32.mrf.mxu0
      %v3476 = vpop.f32.mrf.mxu0
      %v3477 = vadd.f32 0.0, %v3476
      %v3478 = vpop.f32.mrf.mxu0
      %3479 = vmatprep.mubr.bf16.mxu0 0
      %3480 = vmatmul.mubr.bf16.gmra.mxu0 %v3322
      %v3481 = vpop.f32.mrf.mxu0
      %v3482 = vadd.f32 0.0, %v3481
      %v3483 = vpop.f32.mrf.mxu0
      %v3484 = vpop.f32.mrf.mxu0
      %v3485 = vadd.f32 0.0, %v3484
      %v3486 = vpop.f32.mrf.mxu0
      %3487 = vmatprep.mubr.bf16.mxu0 0
      %3488 = vmatmul.mubr.bf16.gmra.mxu0 %v3325
      %v3489 = vpop.f32.mrf.mxu0
      %v3490 = vadd.f32 0.0, %v3489
      %v3491 = vpop.f32.mrf.mxu0
      %v3492 = vpop.f32.mrf.mxu0
      %v3493 = vadd.f32 0.0, %v3492
      %v3494 = vpop.f32.mrf.mxu0
      %3495 = vmatprep.mubr.bf16.mxu0 0
      %3496 = vmatmul.mubr.bf16.gmra.mxu0 %v3328
      %v3497 = vpop.f32.mrf.mxu0
      %v3498 = vadd.f32 0.0, %v3497
      %v3499 = vpop.f32.mrf.mxu0
      %v3500 = vpop.f32.mrf.mxu0
      %v3501 = vadd.f32 0.0, %v3500
      %v3502 = vpop.f32.mrf.mxu0
      %3503 = vmatprep.mubr.bf16.mxu0 0
      %3504 = vmatmul.mubr.bf16.gmra.mxu0 %v3331
      %v3505 = vpop.f32.mrf.mxu0
      %v3506 = vadd.f32 0.0, %v3505
      %v3507 = vpop.f32.mrf.mxu0
      %v3508 = vpop.f32.mrf.mxu0
      %v3509 = vadd.f32 0.0, %v3508
      %v3510 = vpop.f32.mrf.mxu0
      %3511 = vmatprep.mubr.bf16.mxu0 0
      %3512 = vmatmul.mubr.bf16.gmra.mxu0 %v3334
      %v3513 = vpop.f32.mrf.mxu0
      %v3514 = vadd.f32 0.0, %v3513
      %v3515 = vpop.f32.mrf.mxu0
      %v3516 = vpop.f32.mrf.mxu0
      %v3517 = vadd.f32 0.0, %v3516
      %v3518 = vpop.f32.mrf.mxu0
      %3519 = vmatprep.mubr.bf16.mxu0 0
      %3520 = vmatmul.mubr.bf16.gmra.mxu0 %v3337
      %v3521 = vpop.f32.mrf.mxu0
      %v3522 = vadd.f32 0.0, %v3521
      %v3523 = vpop.f32.mrf.mxu0
      %v3524 = vpop.f32.mrf.mxu0
      %v3525 = vadd.f32 0.0, %v3524
      %v3526 = vpop.f32.mrf.mxu0
      %3527 = vmatprep.mubr.bf16.mxu0 0
      %3528 = vmatmul.mubr.bf16.gmra.mxu0 %v3340
      %v3529 = vpop.f32.mrf.mxu0
      %v3530 = vadd.f32 0.0, %v3529
      %v3531 = vpop.f32.mrf.mxu0
      %v3532 = vpop.f32.mrf.mxu0
      %v3533 = vadd.f32 0.0, %v3532
      %v3534 = vpop.f32.mrf.mxu0
      %3535 = vmatprep.mubr.bf16.mxu0 0
      %3536 = vmatmul.mubr.bf16.gmra.mxu0 %v3343
      %v3537 = vpop.f32.mrf.mxu0
      %v3538 = vadd.f32 0.0, %v3537
      %v3539 = vpop.f32.mrf.mxu0
      %v3540 = vpop.f32.mrf.mxu0
      %v3541 = vadd.f32 0.0, %v3540
      %v3542 = vpop.f32.mrf.mxu0
      %3543 = vmatprep.mubr.bf16.mxu0 0
      %3544 = vmatmul.mubr.bf16.gmra.mxu0 %v3346
      %v3545 = vpop.f32.mrf.mxu0
      %v3546 = vadd.f32 0.0, %v3545
      %v3547 = vpop.f32.mrf.mxu0
      %v3548 = vpop.f32.mrf.mxu0
      %v3549 = vadd.f32 0.0, %v3548
      %v3550 = vpop.f32.mrf.mxu0
      %3551 = vmatprep.mubr.bf16.mxu0 0
      %3552 = vmatmul.mubr.bf16.gmra.mxu0 %v3349
      %v3553 = vpop.f32.mrf.mxu0
      %v3554 = vadd.f32 0.0, %v3553
      %v3555 = vpop.f32.mrf.mxu0
      %v3556 = vpop.f32.mrf.mxu0
      %v3557 = vadd.f32 0.0, %v3556
      %v3558 = vpop.f32.mrf.mxu0
      %3559 = vmatprep.mubr.bf16.mxu0 0
      %3560 = vmatmul.mubr.bf16.gmra.mxu0 %v3352
      %v3561 = vpop.f32.mrf.mxu0
      %v3562 = vadd.f32 0.0, %v3561
      %v3563 = vpop.f32.mrf.mxu0
      %v3564 = vpop.f32.mrf.mxu0
      %v3565 = vadd.f32 0.0, %v3564
      %v3566 = vpop.f32.mrf.mxu0
      %3567 = vmatprep.mubr.bf16.mxu0 0
      %3568 = vmatmul.mubr.bf16.gmra.mxu0 %v3355
      %v3569 = vpop.f32.mrf.mxu0
      %v3570 = vadd.f32 0.0, %v3569
      %v3571 = vpop.f32.mrf.mxu0
      %v3572 = vpop.f32.mrf.mxu0
      %v3573 = vadd.f32 0.0, %v3572
      %v3574 = vpop.f32.mrf.mxu0
      %3575 = vmatprep.mubr.bf16.mxu0 0
      %3576 = vmatmul.mubr.bf16.gmra.mxu0 %v3358
      %v3577 = vpop.f32.mrf.mxu0
      %v3578 = vadd.f32 0.0, %v3577
      %v3579 = vpop.f32.mrf.mxu0
      %v3580 = vpop.f32.mrf.mxu0
      %v3581 = vadd.f32 0.0, %v3580
      %v3582 = vpop.f32.mrf.mxu0
      %3583 = vmatprep.mubr.bf16.mxu0 0
      %3584 = vmatmul.mubr.bf16.gmra.mxu0 %v3361
      %v3585 = vpop.f32.mrf.mxu0
      %v3586 = vadd.f32 0.0, %v3585
      %v3587 = vpop.f32.mrf.mxu0
      %v3588 = vpop.f32.mrf.mxu0
      %v3589 = vadd.f32 0.0, %v3588
      %v3590 = vpop.f32.mrf.mxu0
      %3591 = vmatprep.mubr.bf16.mxu0 0
      %3592 = vmatmul.mubr.bf16.gmra.mxu0 %v3364
      %v3593 = vpop.f32.mrf.mxu0
      %v3594 = vadd.f32 0.0, %v3593
      %v3595 = vpop.f32.mrf.mxu0
      %v3596 = vpop.f32.mrf.mxu0
      %v3597 = vadd.f32 0.0, %v3596
      %v3598 = vpop.f32.mrf.mxu0
      %3599 = vmatprep.mubr.bf16.mxu0 0
      %3600 = vmatmul.mubr.bf16.gmra.mxu0 %v3367
      %v3601 = vpop.f32.mrf.mxu0
      %v3602 = vadd.f32 0.0, %v3601
      %v3603 = vpop.f32.mrf.mxu0
      %v3604 = vpop.f32.mrf.mxu0
      %v3605 = vadd.f32 0.0, %v3604
      %v3606 = vpop.f32.mrf.mxu0
      %3607 = vmatprep.mubr.bf16.mxu0 0
      %3608 = vmatmul.mubr.bf16.gmra.mxu0 %v3370
      %v3609 = vpop.f32.mrf.mxu0
      %v3610 = vadd.f32 0.0, %v3609
      %v3611 = vpop.f32.mrf.mxu0
      %v3612 = vpop.f32.mrf.mxu0
      %v3613 = vadd.f32 0.0, %v3612
      %v3614 = vpop.f32.mrf.mxu0
      %3615 = vmatprep.mubr.bf16.mxu0 0
      %3616 = vmatmul.mubr.bf16.gmra.mxu0 %v3373
      %v3617 = vpop.f32.mrf.mxu0
      %v3618 = vadd.f32 0.0, %v3617
      %v3619 = vpop.f32.mrf.mxu0
      %v3620 = vpop.f32.mrf.mxu0
      %v3621 = vadd.f32 0.0, %v3620
      %v3622 = vpop.f32.mrf.mxu0
      %3623 = vmatprep.mubr.bf16.mxu0 0
      %3624 = vmatmul.mubr.bf16.gmra.mxu0 %v3376
      %v3625 = vpop.f32.mrf.mxu0
      %v3626 = vadd.f32 0.0, %v3625
      %v3627 = vpop.f32.mrf.mxu0
      %v3628 = vpop.f32.mrf.mxu0
      %v3629 = vadd.f32 0.0, %v3628
      %v3630 = vpop.f32.mrf.mxu0
      %3631 = vmatprep.mubr.bf16.mxu0 0
      %3632 = vmatmul.mubr.bf16.gmra.mxu0 %v3379
      %v3633 = vpop.f32.mrf.mxu0
      %v3634 = vadd.f32 0.0, %v3633
      %v3635 = vpop.f32.mrf.mxu0
      %v3636 = vpop.f32.mrf.mxu0
      %v3637 = vadd.f32 0.0, %v3636
      %v3638 = vpop.f32.mrf.mxu0
      %3639 = vmatprep.mubr.bf16.mxu0 0
      %3640 = vmatmul.mubr.bf16.gmra.mxu0 %v3382
      %v3641 = vpop.f32.mrf.mxu0
      %v3642 = vadd.f32 0.0, %v3641
      %v3643 = vpop.f32.mrf.mxu0
      %v3644 = vpop.f32.mrf.mxu0
      %v3645 = vadd.f32 0.0, %v3644
      %v3646 = vpop.f32.mrf.mxu0
      %3647 = vmatprep.mubr.bf16.mxu0 0
      %3648 = vmatmul.mubr.bf16.gmra.mxu0 %v3385
      %v3649 = vpop.f32.mrf.mxu0
      %v3650 = vadd.f32 0.0, %v3649
      %v3651 = vpop.f32.mrf.mxu0
      %v3652 = vpop.f32.mrf.mxu0
      %v3653 = vadd.f32 0.0, %v3652
      %v3654 = vpop.f32.mrf.mxu0
      %3655 = vmatprep.mubr.bf16.mxu0 0
      %3656 = vmatmul.mubr.bf16.gmra.mxu0 %v3388
      %v3657 = vpop.f32.mrf.mxu0
      %v3658 = vadd.f32 0.0, %v3657
      %v3659 = vpop.f32.mrf.mxu0
      %v3660 = vpop.f32.mrf.mxu0
      %v3661 = vadd.f32 0.0, %v3660
      %v3662 = vpop.f32.mrf.mxu0
      %3663 = vmatprep.mubr.bf16.mxu0 0
      %3664 = vmatmul.mubr.bf16.gmra.mxu0 %v3391
      %v3665 = vpop.f32.mrf.mxu0
      %v3666 = vadd.f32 0.0, %v3665
      %v3667 = vpop.f32.mrf.mxu0
      %v3668 = vpop.f32.mrf.mxu0
      %v3669 = vadd.f32 0.0, %v3668
      %v3670 = vpop.f32.mrf.mxu0
      %3671 = vmatprep.mubr.bf16.mxu0 0
      %3672 = vmatmul.mubr.bf16.gmra.mxu0 %v3394
      %v3673 = vpop.f32.mrf.mxu0
      %v3674 = vadd.f32 0.0, %v3673
      %v3675 = vpop.f32.mrf.mxu0
      %v3676 = vpop.f32.mrf.mxu0
      %v3677 = vadd.f32 0.0, %v3676
      %v3678 = vpop.f32.mrf.mxu0
      %3679 = vmatprep.mubr.bf16.mxu0 0
      %3680 = vmatmul.mubr.bf16.gmra.mxu0 %v3397
      %v3681 = vpop.f32.mrf.mxu0
      %v3682 = vadd.f32 0.0, %v3681
      %v3683 = vpop.f32.mrf.mxu0
      %v3684 = vpop.f32.mrf.mxu0
      %v3685 = vadd.f32 0.0, %v3684
      %v3686 = vpop.f32.mrf.mxu0
      %3687 = vdwg.mxu0
      %v3688 = vmul.f32 %v3434, %v1325
      %v3689 = vmul.f32 %v3437, %v1326
      %v3690 = vmul.f32 %v3442, %v1327
      %v3691 = vmul.f32 %v3445, %v1328
      %v3692 = vmul.f32 %v3450, %v1329
      %v3693 = vmul.f32 %v3453, %v1330
      %v3694 = vmul.f32 %v3458, %v1331
      %v3695 = vmul.f32 %v3461, %v1332
      %v3696 = vmul.f32 %v3466, %v1333
      %v3697 = vmul.f32 %v3469, %v1334
      %v3698 = vmul.f32 %v3474, %v1335
      %v3699 = vmul.f32 %v3477, %v1336
      %v3700 = vmul.f32 %v3482, %v1337
      %v3701 = vmul.f32 %v3485, %v1338
      %v3702 = vmul.f32 %v3490, %v1339
      %v3703 = vmul.f32 %v3493, %v1340
      %v3704 = vmul.f32 %v3498, %v1341
      %v3705 = vmul.f32 %v3501, %v1342
      %v3706 = vmul.f32 %v3506, %v1343
      %v3707 = vmul.f32 %v3509, %v1344
      %v3708 = vmul.f32 %v3514, %v1345
      %v3709 = vmul.f32 %v3517, %v1346
      %v3710 = vmul.f32 %v3522, %v1347
      %v3711 = vmul.f32 %v3525, %v1348
      %v3712 = vmul.f32 %v3530, %v1349
      %v3713 = vmul.f32 %v3533, %v1350
      %v3714 = vmul.f32 %v3538, %v1351
      %v3715 = vmul.f32 %v3541, %v1352
      %v3716 = vmul.f32 %v3546, %v1353
      %v3717 = vmul.f32 %v3549, %v1354
      %v3718 = vmul.f32 %v3554, %v1355
      %v3719 = vmul.f32 %v3557, %v1356
      %v3720 = vmul.f32 %v3562, %v1357
      %v3721 = vmul.f32 %v3565, %v1358
      %v3722 = vmul.f32 %v3570, %v1359
      %v3723 = vmul.f32 %v3573, %v1360
      %v3724 = vmul.f32 %v3578, %v1361
      %v3725 = vmul.f32 %v3581, %v1362
      %v3726 = vmul.f32 %v3586, %v1363
      %v3727 = vmul.f32 %v3589, %v1364
      %v3728 = vmul.f32 %v3594, %v1365
      %v3729 = vmul.f32 %v3597, %v1366
      %v3730 = vmul.f32 %v3602, %v1367
      %v3731 = vmul.f32 %v3605, %v1368
      %v3732 = vmul.f32 %v3610, %v1369
      %v3733 = vmul.f32 %v3613, %v1370
      %v3734 = vmul.f32 %v3618, %v1371
      %v3735 = vmul.f32 %v3621, %v1372
      %v3736 = vmul.f32 %v3626, %v1373
      %v3737 = vmul.f32 %v3629, %v1374
      %v3738 = vmul.f32 %v3634, %v1375
      %v3739 = vmul.f32 %v3637, %v1376
      %v3740 = vmul.f32 %v3642, %v1377
      %v3741 = vmul.f32 %v3645, %v1378
      %v3742 = vmul.f32 %v3650, %v1379
      %v3743 = vmul.f32 %v3653, %v1380
      %v3744 = vmul.f32 %v3658, %v1381
      %v3745 = vmul.f32 %v3661, %v1382
      %v3746 = vmul.f32 %v3666, %v1383
      %v3747 = vmul.f32 %v3669, %v1384
      %v3748 = vmul.f32 %v3674, %v1385
      %v3749 = vmul.f32 %v3677, %v1386
      %v3750 = vmul.f32 %v3682, %v1387
      %v3751 = vmul.f32 %v3685, %v1388
      %v3752 = vld [vmem:[%s6] sm:$0xff]
      %v3753 = vld [vmem:[%s6 + $0x8] sm:$0xff]
      %v3754 = vld [vmem:[%s6 + $0x10] sm:$0xff]
      %v3755 = vld [vmem:[%s6 + $0x18] sm:$0xff]
      %v3756 = vld [vmem:[%s6 + $0x20] sm:$0xff]
      %v3757 = vld [vmem:[%s6 + $0x28] sm:$0xff]
      %v3758 = vld [vmem:[%s6 + $0x30] sm:$0xff]
      %v3759 = vld [vmem:[%s6 + $0x38] sm:$0xff]
      %v3760 = vld [vmem:[%s6 + $0x40] sm:$0xff]
      %v3761 = vld [vmem:[%s6 + $0x48] sm:$0xff]
      %v3762 = vld [vmem:[%s6 + $0x50] sm:$0xff]
      %v3763 = vld [vmem:[%s6 + $0x58] sm:$0xff]
      %v3764 = vld [vmem:[%s6 + $0x60] sm:$0xff]
      %v3765 = vld [vmem:[%s6 + $0x68] sm:$0xff]
      %v3766 = vld [vmem:[%s6 + $0x70] sm:$0xff]
      %v3767 = vld [vmem:[%s6 + $0x78] sm:$0xff]
      %v3768 = vpack.c.bf16 %v3689, %v3688
      %v3769 = vpack.c.bf16 %v3691, %v3690
      %v3770 = vpack.c.bf16 %v3693, %v3692
      %v3771 = vpack.c.bf16 %v3695, %v3694
      %v3772 = vpack.c.bf16 %v3697, %v3696
      %v3773 = vpack.c.bf16 %v3699, %v3698
      %v3774 = vpack.c.bf16 %v3701, %v3700
      %v3775 = vpack.c.bf16 %v3703, %v3702
      %v3776 = vpack.c.bf16 %v3705, %v3704
      %v3777 = vpack.c.bf16 %v3707, %v3706
      %v3778 = vpack.c.bf16 %v3709, %v3708
      %v3779 = vpack.c.bf16 %v3711, %v3710
      %v3780 = vpack.c.bf16 %v3713, %v3712
      %v3781 = vpack.c.bf16 %v3715, %v3714
      %v3782 = vpack.c.bf16 %v3717, %v3716
      %v3783 = vpack.c.bf16 %v3719, %v3718
      %v3784 = vpack.c.bf16 %v3721, %v3720
      %v3785 = vpack.c.bf16 %v3723, %v3722
      %v3786 = vpack.c.bf16 %v3725, %v3724
      %v3787 = vpack.c.bf16 %v3727, %v3726
      %v3788 = vpack.c.bf16 %v3729, %v3728
      %v3789 = vpack.c.bf16 %v3731, %v3730
      %v3790 = vpack.c.bf16 %v3733, %v3732
      %v3791 = vpack.c.bf16 %v3735, %v3734
      %v3792 = vpack.c.bf16 %v3737, %v3736
      %v3793 = vpack.c.bf16 %v3739, %v3738
      %v3794 = vpack.c.bf16 %v3741, %v3740
      %v3795 = vpack.c.bf16 %v3743, %v3742
      %v3796 = vpack.c.bf16 %v3745, %v3744
      %v3797 = vpack.c.bf16 %v3747, %v3746
      %v3798 = vpack.c.bf16 %v3749, %v3748
      %v3799 = vpack.c.bf16 %v3751, %v3750
      %v3816 = vunpack.c.l.b16 %v3752
      %v3817 = vunpack.c.h.b16 %v3752
      %v3818 = vunpack.c.l.b16 %v3753
      %v3819 = vunpack.c.h.b16 %v3753
      %v3820 = vunpack.c.l.b16 %v3754
      %v3821 = vunpack.c.h.b16 %v3754
      %v3822 = vunpack.c.l.b16 %v3755
      %v3823 = vunpack.c.h.b16 %v3755
      %v3824 = vunpack.c.l.b16 %v3756
      %v3825 = vunpack.c.h.b16 %v3756
      %v3826 = vunpack.c.l.b16 %v3757
      %v3827 = vunpack.c.h.b16 %v3757
      %v3828 = vunpack.c.l.b16 %v3758
      %v3829 = vunpack.c.h.b16 %v3758
      %v3830 = vunpack.c.l.b16 %v3759
      %v3831 = vunpack.c.h.b16 %v3759
      %v3832 = vunpack.c.l.b16 %v3760
      %v3833 = vunpack.c.h.b16 %v3760
      %v3834 = vunpack.c.l.b16 %v3761
      %v3835 = vunpack.c.h.b16 %v3761
      %v3836 = vunpack.c.l.b16 %v3762
      %v3837 = vunpack.c.h.b16 %v3762
      %v3838 = vunpack.c.l.b16 %v3763
      %v3839 = vunpack.c.h.b16 %v3763
      %v3840 = vunpack.c.l.b16 %v3764
      %v3841 = vunpack.c.h.b16 %v3764
      %v3842 = vunpack.c.l.b16 %v3765
      %v3843 = vunpack.c.h.b16 %v3765
      %v3844 = vunpack.c.l.b16 %v3766
      %v3845 = vunpack.c.h.b16 %v3766
      %v3846 = vunpack.c.l.b16 %v3767
      %v3847 = vunpack.c.h.b16 %v3767
      %v3848 = vpack.c.b16 %v3820, %v3816
      %v3849 = vpack.c.b16 %v3821, %v3817
      %v3850 = vpack.c.b16 %v3822, %v3818
      %v3851 = vpack.c.b16 %v3823, %v3819
      %v3852 = vpack.c.b16 %v3828, %v3824
      %v3853 = vpack.c.b16 %v3829, %v3825
      %v3854 = vpack.c.b16 %v3830, %v3826
      %v3855 = vpack.c.b16 %v3831, %v3827
      %v3856 = vpack.c.b16 %v3836, %v3832
      %v3857 = vpack.c.b16 %v3837, %v3833
      %v3858 = vpack.c.b16 %v3838, %v3834
      %v3859 = vpack.c.b16 %v3839, %v3835
      %v3860 = vpack.c.b16 %v3844, %v3840
      %v3861 = vpack.c.b16 %v3845, %v3841
      %v3862 = vpack.c.b16 %v3846, %v3842
      %v3863 = vpack.c.b16 %v3847, %v3843
      %3880 = vmatprep.subr.bf16.mxu0 0
      %3881 = vmatpush1.bf16.msra.mxu0 %v3775
      %3882 = vmatprep.subr.bf16.mxu0 0
      %3883 = vmatpush1.bf16.msra.mxu0 %v3774
      %3884 = vmatprep.subr.bf16.mxu0 0
      %3885 = vmatpush1.bf16.msra.mxu0 %v3773
      %3886 = vmatprep.subr.bf16.mxu0 0
      %3887 = vmatpush1.bf16.msra.mxu0 %v3772
      %3888 = vmatprep.subr.bf16.mxu0 0
      %3889 = vmatpush1.bf16.msra.mxu0 %v3771
      %3890 = vmatprep.subr.bf16.mxu0 0
      %3891 = vmatpush1.bf16.msra.mxu0 %v3770
      %3892 = vmatprep.subr.bf16.mxu0 0
      %3893 = vmatpush1.bf16.msra.mxu0 %v3769
      %3894 = vmatprep.subr.bf16.mxu0 0
      %3895 = vmatpush1.bf16.msra.mxu0 %v3768
      %3896 = vmatprep.subr.bf16.mxu0 0
      %3897 = vmatpush2.bf16.msra.mxu0 %v3783
      %3898 = vmatprep.subr.bf16.mxu0 0
      %3899 = vmatpush2.bf16.msra.mxu0 %v3782
      %3900 = vmatprep.subr.bf16.mxu0 0
      %3901 = vmatpush2.bf16.msra.mxu0 %v3781
      %3902 = vmatprep.subr.bf16.mxu0 0
      %3903 = vmatpush2.bf16.msra.mxu0 %v3780
      %3904 = vmatprep.subr.bf16.mxu0 0
      %3905 = vmatpush2.bf16.msra.mxu0 %v3779
      %3906 = vmatprep.subr.bf16.mxu0 0
      %3907 = vmatpush2.bf16.msra.mxu0 %v3778
      %3908 = vmatprep.subr.bf16.mxu0 0
      %3909 = vmatpush2.bf16.msra.mxu0 %v3777
      %3910 = vmatprep.subr.bf16.mxu0 0
      %3911 = vmatpush2.bf16.msra.mxu0 %v3776
      %3912 = vmatprep.mubr.bf16.mxu0 %v3849
      %3913 = vmatmul.mubr.bf16.gmra.mxu0 %v3848
      %v3914 = vpop.f32.mrf.mxu0
      %v3915 = vadd.f32 0.0, %v3914
      %v3916 = vpop.f32.mrf.mxu0
      %v3917 = vpop.f32.mrf.mxu0
      %v3918 = vadd.f32 0.0, %v3917
      %v3919 = vpop.f32.mrf.mxu0
      %3920 = vmatprep.mubr.bf16.mxu0 %v3853
      %3921 = vmatmul.mubr.bf16.gmra.mxu0 %v3852
      %v3922 = vpop.f32.mrf.mxu0
      %v3923 = vadd.f32 0.0, %v3922
      %v3924 = vpop.f32.mrf.mxu0
      %v3925 = vpop.f32.mrf.mxu0
      %v3926 = vadd.f32 0.0, %v3925
      %v3927 = vpop.f32.mrf.mxu0
      %3928 = vmatprep.mubr.bf16.mxu0 %v3857
      %3929 = vmatmul.mubr.bf16.gmra.mxu0 %v3856
      %v3930 = vpop.f32.mrf.mxu0
      %v3931 = vadd.f32 0.0, %v3930
      %v3932 = vpop.f32.mrf.mxu0
      %v3933 = vpop.f32.mrf.mxu0
      %v3934 = vadd.f32 0.0, %v3933
      %v3935 = vpop.f32.mrf.mxu0
      %3936 = vmatprep.mubr.bf16.mxu0 %v3861
      %3937 = vmatmul.mubr.bf16.gmra.mxu0 %v3860
      %v3938 = vpop.f32.mrf.mxu0
      %v3939 = vadd.f32 0.0, %v3938
      %v3940 = vpop.f32.mrf.mxu0
      %v3941 = vpop.f32.mrf.mxu0
      %v3942 = vadd.f32 0.0, %v3941
      %v3943 = vpop.f32.mrf.mxu0
      %3944 = vdwg.mxu0
      %3945 = vmatprep.subr.bf16.mxu0 0
      %3946 = vmatpush1.bf16.msra.mxu0 %v3791
      %3947 = vmatprep.subr.bf16.mxu0 0
      %3948 = vmatpush1.bf16.msra.mxu0 %v3790
      %3949 = vmatprep.subr.bf16.mxu0 0
      %3950 = vmatpush1.bf16.msra.mxu0 %v3789
      %3951 = vmatprep.subr.bf16.mxu0 0
      %3952 = vmatpush1.bf16.msra.mxu0 %v3788
      %3953 = vmatprep.subr.bf16.mxu0 0
      %3954 = vmatpush1.bf16.msra.mxu0 %v3787
      %3955 = vmatprep.subr.bf16.mxu0 0
      %3956 = vmatpush1.bf16.msra.mxu0 %v3786
      %3957 = vmatprep.subr.bf16.mxu0 0
      %3958 = vmatpush1.bf16.msra.mxu0 %v3785
      %3959 = vmatprep.subr.bf16.mxu0 0
      %3960 = vmatpush1.bf16.msra.mxu0 %v3784
      %3961 = vmatprep.subr.bf16.mxu0 0
      %3962 = vmatpush2.bf16.msra.mxu0 %v3799
      %3963 = vmatprep.subr.bf16.mxu0 0
      %3964 = vmatpush2.bf16.msra.mxu0 %v3798
      %3965 = vmatprep.subr.bf16.mxu0 0
      %3966 = vmatpush2.bf16.msra.mxu0 %v3797
      %3967 = vmatprep.subr.bf16.mxu0 0
      %3968 = vmatpush2.bf16.msra.mxu0 %v3796
      %3969 = vmatprep.subr.bf16.mxu0 0
      %3970 = vmatpush2.bf16.msra.mxu0 %v3795
      %3971 = vmatprep.subr.bf16.mxu0 0
      %3972 = vmatpush2.bf16.msra.mxu0 %v3794
      %3973 = vmatprep.subr.bf16.mxu0 0
      %3974 = vmatpush2.bf16.msra.mxu0 %v3793
      %3975 = vmatprep.subr.bf16.mxu0 0
      %3976 = vmatpush2.bf16.msra.mxu0 %v3792
      %3977 = vmatprep.mubr.bf16.mxu0 %v3851
      %3978 = vmatmul.mubr.bf16.gmra.mxu0 %v3850
      %v3979 = vpop.f32.mrf.mxu0
      %v3980 = vadd.f32 %v3915, %v3979
      %v3981 = vpop.f32.mrf.mxu0
      %v3982 = vpop.f32.mrf.mxu0
      %v3983 = vadd.f32 %v3918, %v3982
      %v3984 = vpop.f32.mrf.mxu0
      %3985 = vmatprep.mubr.bf16.mxu0 %v3855
      %3986 = vmatmul.mubr.bf16.gmra.mxu0 %v3854
      %v3987 = vpop.f32.mrf.mxu0
      %v3988 = vadd.f32 %v3923, %v3987
      %v3989 = vpop.f32.mrf.mxu0
      %v3990 = vpop.f32.mrf.mxu0
      %v3991 = vadd.f32 %v3926, %v3990
      %v3992 = vpop.f32.mrf.mxu0
      %3993 = vmatprep.mubr.bf16.mxu0 %v3859
      %3994 = vmatmul.mubr.bf16.gmra.mxu0 %v3858
      %v3995 = vpop.f32.mrf.mxu0
      %v3996 = vadd.f32 %v3931, %v3995
      %v3997 = vpop.f32.mrf.mxu0
      %v3998 = vpop.f32.mrf.mxu0
      %v3999 = vadd.f32 %v3934, %v3998
      %v4000 = vpop.f32.mrf.mxu0
      %4001 = vmatprep.mubr.bf16.mxu0 %v3863
      %4002 = vmatmul.mubr.bf16.gmra.mxu0 %v3862
      %v4003 = vpop.f32.mrf.mxu0
      %v4004 = vadd.f32 %v3939, %v4003
      %v4005 = vpop.f32.mrf.mxu0
      %v4006 = vpop.f32.mrf.mxu0
      %v4007 = vadd.f32 %v3942, %v4006
      %v4008 = vpop.f32.mrf.mxu0
      %4009 = vdwg.mxu0
      %v4010 = vld [vmem:[%s2 + $0x8] sm:$0x1]
      %v4011 = vpack.c.bf16 %v3983, %v3980
      %v4012 = vpack.c.bf16 %v3991, %v3988
      %v4013 = vpack.c.bf16 %v3999, %v3996
      %v4014 = vpack.c.bf16 %v4007, %v4004
      %v4015 = vlaneseq
      %v4016 = vshrl.u32 %v4015, 7
      %v4017 = vsub.s32 0, %v4016
      %v4018 = vrot.slane %v4010, %v4017
      %4019 = vrot.lane.b32.xlu0 %v1192, 96
      %v4020 = vpop.permute.xlu0 %4019
      %4021 = vrot.lane.b32.xlu0 %v1193, 96
      %v4022 = vpop.permute.xlu0 %4021
      %v4026 = vsel %vm431, %v4011, 0
      %v4029 = vsel %vm431, %v4012, 0
      %v4032 = vsel %vm431, %v4013, 0
      %v4035 = vsel %vm431, %v4014, 0
      %4037 = vmatprep.subr.bf16.mxu0 0
      %4038 = vmatpush1.bf16.msra.mxu0 0
      %4039 = vmatprep.subr.bf16.mxu0 0
      %4040 = vmatpush1.bf16.msra.mxu0 0
      %4041 = vmatprep.subr.bf16.mxu0 0
      %4042 = vmatpush1.bf16.msra.mxu0 0
      %4043 = vmatprep.subr.bf16.mxu0 0
      %4044 = vmatpush1.bf16.msra.mxu0 0
      %4045 = vmatprep.subr.bf16.mxu0 0
      %4046 = vmatpush1.bf16.msra.mxu0 0
      %4047 = vmatprep.subr.bf16.mxu0 0
      %4048 = vmatpush1.bf16.msra.mxu0 0
      %4049 = vmatprep.subr.bf16.mxu0 0
      %4050 = vmatpush1.bf16.msra.mxu0 %v4022
      %4051 = vmatprep.subr.bf16.mxu0 0
      %4052 = vmatpush1.bf16.msra.mxu0 %v4020
      %4053 = vmatprep.subr.bf16.mxu0 0
      %4054 = vmatpush2.bf16.msra.mxu0 0
      %4055 = vmatprep.subr.bf16.mxu0 0
      %4056 = vmatpush2.bf16.msra.mxu0 0
      %4057 = vmatprep.subr.bf16.mxu0 0
      %4058 = vmatpush2.bf16.msra.mxu0 0
      %4059 = vmatprep.subr.bf16.mxu0 0
      %4060 = vmatpush2.bf16.msra.mxu0 0
      %4061 = vmatprep.subr.bf16.mxu0 0
      %4062 = vmatpush2.bf16.msra.mxu0 0
      %4063 = vmatprep.subr.bf16.mxu0 0
      %4064 = vmatpush2.bf16.msra.mxu0 0
      %4065 = vmatprep.subr.bf16.mxu0 0
      %4066 = vmatpush2.bf16.msra.mxu0 0
      %4067 = vmatprep.subr.bf16.mxu0 0
      %4068 = vmatpush2.bf16.msra.mxu0 0
      %4069 = vmatprep.mubr.bf16.mxu0 0
      %4070 = vmatmul.mubr.bf16.gmra.mxu0 %v4026
      %v4071 = vpop.f32.mrf.mxu0
      %v4072 = vadd.f32 %v4018, %v4071
      %v4073 = vpop.f32.mrf.mxu0
      %v4074 = vpop.f32.mrf.mxu0
      %v4075 = vadd.f32 %v4018, %v4074
      %v4076 = vpop.f32.mrf.mxu0
      %4077 = vmatprep.mubr.bf16.mxu0 0
      %4078 = vmatmul.mubr.bf16.gmra.mxu0 %v4029
      %v4079 = vpop.f32.mrf.mxu0
      %v4080 = vadd.f32 %v4018, %v4079
      %v4081 = vpop.f32.mrf.mxu0
      %v4082 = vpop.f32.mrf.mxu0
      %v4083 = vadd.f32 %v4018, %v4082
      %v4084 = vpop.f32.mrf.mxu0
      %4085 = vmatprep.mubr.bf16.mxu0 0
      %4086 = vmatmul.mubr.bf16.gmra.mxu0 %v4032
      %v4087 = vpop.f32.mrf.mxu0
      %v4088 = vadd.f32 %v4018, %v4087
      %v4089 = vpop.f32.mrf.mxu0
      %v4090 = vpop.f32.mrf.mxu0
      %v4091 = vadd.f32 %v4018, %v4090
      %v4092 = vpop.f32.mrf.mxu0
      %4093 = vmatprep.mubr.bf16.mxu0 0
      %4094 = vmatmul.mubr.bf16.gmra.mxu0 %v4035
      %v4095 = vpop.f32.mrf.mxu0
      %v4096 = vadd.f32 %v4018, %v4095
      %v4097 = vpop.f32.mrf.mxu0
      %v4098 = vpop.f32.mrf.mxu0
      %v4099 = vadd.f32 %v4018, %v4098
      %v4100 = vpop.f32.mrf.mxu0
      %4101 = vdwg.mxu0
      %v4102 = vadd.f32 %v991, %v4072
      %v4103 = vadd.f32 %v992, %v4075
      %v4104 = vadd.f32 %v993, %v4080
      %v4105 = vadd.f32 %v994, %v4083
      %v4106 = vadd.f32 %v995, %v4088
      %v4107 = vadd.f32 %v996, %v4091
      %v4108 = vadd.f32 %v997, %v4096
      %v4109 = vadd.f32 %v998, %v4099
      %v4110 = vld [vmem:[%s2 + $0x9] sm:$0x1]
      %v4111 = vld [vmem:[%s2 + $0xa] sm:$0x1]
      %v4112 = vsel %vm431, %v4102, 0.0
      %4113 = vadd.xlane.f32.xlu0 %v4112
      %v4114 = vpop.xlane.xlu0 %4113
      %v4115 = vsel %vm431, %v4103, 0.0
      %4116 = vadd.xlane.f32.xlu0 %v4115
      %v4117 = vpop.xlane.xlu0 %4116
      %v4118 = vsel %vm431, %v4104, 0.0
      %4119 = vadd.xlane.f32.xlu0 %v4118
      %v4120 = vpop.xlane.xlu0 %4119
      %v4121 = vsel %vm431, %v4105, 0.0
      %4122 = vadd.xlane.f32.xlu0 %v4121
      %v4123 = vpop.xlane.xlu0 %4122
      %v4124 = vsel %vm431, %v4106, 0.0
      %4125 = vadd.xlane.f32.xlu0 %v4124
      %v4126 = vpop.xlane.xlu0 %4125
      %v4127 = vsel %vm431, %v4107, 0.0
      %4128 = vadd.xlane.f32.xlu0 %v4127
      %v4129 = vpop.xlane.xlu0 %4128
      %v4130 = vsel %vm431, %v4108, 0.0
      %4131 = vadd.xlane.f32.xlu0 %v4130
      %v4132 = vpop.xlane.xlu0 %4131
      %v4133 = vsel %vm431, %v4109, 0.0
      %4134 = vadd.xlane.f32.xlu0 %v4133
      %v4135 = vpop.xlane.xlu0 %4134
      %v4136 = vmul.f32 %v4114, %v878
      %v4137 = vmul.f32 %v4117, %v878
      %v4138 = vmul.f32 %v4120, %v878
      %v4139 = vmul.f32 %v4123, %v878
      %v4140 = vmul.f32 %v4126, %v878
      %v4141 = vmul.f32 %v4129, %v878
      %v4142 = vmul.f32 %v4132, %v878
      %v4143 = vmul.f32 %v4135, %v878
      %v4144 = vmul.f32 %v4102, %v4102
      %v4145 = vmul.f32 %v4103, %v4103
      %v4146 = vmul.f32 %v4104, %v4104
      %v4147 = vmul.f32 %v4105, %v4105
      %v4148 = vmul.f32 %v4106, %v4106
      %v4149 = vmul.f32 %v4107, %v4107
      %v4150 = vmul.f32 %v4108, %v4108
      %v4151 = vmul.f32 %v4109, %v4109
      %v4152 = vsel %vm431, %v4144, 0.0
      %4153 = vadd.xlane.f32.xlu0 %v4152
      %v4154 = vpop.xlane.xlu0 %4153
      %v4155 = vsel %vm431, %v4145, 0.0
      %4156 = vadd.xlane.f32.xlu0 %v4155
      %v4157 = vpop.xlane.xlu0 %4156
      %v4158 = vsel %vm431, %v4146, 0.0
      %4159 = vadd.xlane.f32.xlu0 %v4158
      %v4160 = vpop.xlane.xlu0 %4159
      %v4161 = vsel %vm431, %v4147, 0.0
      %4162 = vadd.xlane.f32.xlu0 %v4161
      %v4163 = vpop.xlane.xlu0 %4162
      %v4164 = vsel %vm431, %v4148, 0.0
      %4165 = vadd.xlane.f32.xlu0 %v4164
      %v4166 = vpop.xlane.xlu0 %4165
      %v4167 = vsel %vm431, %v4149, 0.0
      %4168 = vadd.xlane.f32.xlu0 %v4167
      %v4169 = vpop.xlane.xlu0 %4168
      %v4170 = vsel %vm431, %v4150, 0.0
      %4171 = vadd.xlane.f32.xlu0 %v4170
      %v4172 = vpop.xlane.xlu0 %4171
      %v4173 = vsel %vm431, %v4151, 0.0
      %4174 = vadd.xlane.f32.xlu0 %v4173
      %v4175 = vpop.xlane.xlu0 %4174
      %v4176 = vmul.f32 %v4154, %v878
      %v4177 = vmul.f32 %v4157, %v878
      %v4178 = vmul.f32 %v4160, %v878
      %v4179 = vmul.f32 %v4163, %v878
      %v4180 = vmul.f32 %v4166, %v878
      %v4181 = vmul.f32 %v4169, %v878
      %v4182 = vmul.f32 %v4172, %v878
      %v4183 = vmul.f32 %v4175, %v878
      %v4184 = vmul.f32 %v4136, %v4136
      %v4185 = vmul.f32 %v4137, %v4137
      %v4186 = vmul.f32 %v4138, %v4138
      %v4187 = vmul.f32 %v4139, %v4139
      %v4188 = vmul.f32 %v4140, %v4140
      %v4189 = vmul.f32 %v4141, %v4141
      %v4190 = vmul.f32 %v4142, %v4142
      %v4191 = vmul.f32 %v4143, %v4143
      %v4192 = vsub.f32 %v4176, %v4184
      %v4193 = vsub.f32 %v4177, %v4185
      %v4194 = vsub.f32 %v4178, %v4186
      %v4195 = vsub.f32 %v4179, %v4187
      %v4196 = vsub.f32 %v4180, %v4188
      %v4197 = vsub.f32 %v4181, %v4189
      %v4198 = vsub.f32 %v4182, %v4190
      %v4199 = vsub.f32 %v4183, %v4191
      %v4200 = vsub.f32 %v4102, %v4136
      %v4201 = vsub.f32 %v4103, %v4137
      %v4202 = vsub.f32 %v4104, %v4138
      %v4203 = vsub.f32 %v4105, %v4139
      %v4204 = vsub.f32 %v4106, %v4140
      %v4205 = vsub.f32 %v4107, %v4141
      %v4206 = vsub.f32 %v4108, %v4142
      %v4207 = vsub.f32 %v4109, %v4143
      %v4208 = vadd.f32 %v4192, 1e-05
      %v4209 = vadd.f32 %v4193, 1e-05
      %v4210 = vadd.f32 %v4194, 1e-05
      %v4211 = vadd.f32 %v4195, 1e-05
      %v4212 = vadd.f32 %v4196, 1e-05
      %v4213 = vadd.f32 %v4197, 1e-05
      %v4214 = vadd.f32 %v4198, 1e-05
      %v4215 = vadd.f32 %v4199, 1e-05
      %v4216 = vrsqrt.pop %v4208
      %v4217 = vrsqrt.pop %v4209
      %v4218 = vrsqrt.pop %v4210
      %v4219 = vrsqrt.pop %v4211
      %v4220 = vrsqrt.pop %v4212
      %v4221 = vrsqrt.pop %v4213
      %v4222 = vrsqrt.pop %v4214
      %v4223 = vrsqrt.pop %v4215
      %v4224 = vmul.f32 %v4200, %v4216
      %v4225 = vmul.f32 %v4201, %v4217
      %v4226 = vmul.f32 %v4202, %v4218
      %v4227 = vmul.f32 %v4203, %v4219
      %v4228 = vmul.f32 %v4204, %v4220
      %v4229 = vmul.f32 %v4205, %v4221
      %v4230 = vmul.f32 %v4206, %v4222
      %v4231 = vmul.f32 %v4207, %v4223
      %v4232 = vlaneseq
      %v4233 = vshrl.u32 %v4232, 7
      %v4234 = vsub.s32 0, %v4233
      %v4235 = vrot.slane %v4110, %v4234
      %v4236 = vmul.f32 %v4224, %v4235
      %v4237 = vmul.f32 %v4225, %v4235
      %v4238 = vmul.f32 %v4226, %v4235
      %v4239 = vmul.f32 %v4227, %v4235
      %v4240 = vmul.f32 %v4228, %v4235
      %v4241 = vmul.f32 %v4229, %v4235
      %v4242 = vmul.f32 %v4230, %v4235
      %v4243 = vmul.f32 %v4231, %v4235
      %v4244 = vlaneseq
      %v4245 = vshrl.u32 %v4244, 7
      %v4246 = vsub.s32 0, %v4245
      %v4247 = vrot.slane %v4111, %v4246
      %v4248 = vadd.f32 %v4236, %v4247
      %v4249 = vadd.f32 %v4237, %v4247
      %v4250 = vadd.f32 %v4238, %v4247
      %v4251 = vadd.f32 %v4239, %v4247
      %v4252 = vadd.f32 %v4240, %v4247
      %v4253 = vadd.f32 %v4241, %v4247
      %v4254 = vadd.f32 %v4242, %v4247
      %v4255 = vadd.f32 %v4243, %v4247
      %v4256 = vld [vmem:[%s1 + $0x48] sm:$0xf]
      %v4257 = vld [vmem:[%s1 + $0x4c] sm:$0xf]
      %v4258 = vld [vmem:[%s1 + $0x50] sm:$0xf]
      %v4259 = vld [vmem:[%s1 + $0x54] sm:$0xf]
      %v4260 = vld [vmem:[%s2 + $0xb] sm:$0x1]
      %v4261 = vpack.c.bf16 %v4249, %v4248
      %v4262 = vpack.c.bf16 %v4251, %v4250
      %v4263 = vpack.c.bf16 %v4253, %v4252
      %v4264 = vpack.c.bf16 %v4255, %v4254
      %v4265 = vlaneseq
      %v4266 = vshrl.u32 %v4265, 7
      %v4267 = vsub.s32 0, %v4266
      %v4268 = vrot.slane %v4260, %v4267
      %v4273 = vunpack.c.l.b16 %v4256
      %v4274 = vunpack.c.l.b16 %v4257
      %v4275 = vunpack.c.l.b16 %v4258
      %v4276 = vunpack.c.l.b16 %v4259
      %v4277 = vpack.c.b16 %v4274, %v4273
      %v4278 = vpack.c.b16 %v4276, %v4275
      %v4282 = vsel %vm431, %v4261, 0
      %v4285 = vsel %vm431, %v4262, 0
      %v4288 = vsel %vm431, %v4263, 0
      %v4291 = vsel %vm431, %v4264, 0
      %4293 = vmatprep.subr.bf16.mxu0 0
      %4294 = vmatpush1.bf16.msra.mxu0 0
      %4295 = vmatprep.subr.bf16.mxu0 0
      %4296 = vmatpush1.bf16.msra.mxu0 0
      %4297 = vmatprep.subr.bf16.mxu0 0
      %4298 = vmatpush1.bf16.msra.mxu0 0
      %4299 = vmatprep.subr.bf16.mxu0 0
      %4300 = vmatpush1.bf16.msra.mxu0 0
      %4301 = vmatprep.subr.bf16.mxu0 0
      %4302 = vmatpush1.bf16.msra.mxu0 0
      %4303 = vmatprep.subr.bf16.mxu0 0
      %4304 = vmatpush1.bf16.msra.mxu0 0
      %4305 = vmatprep.subr.bf16.mxu0 0
      %4306 = vmatpush1.bf16.msra.mxu0 %v4278
      %4307 = vmatprep.subr.bf16.mxu0 0
      %4308 = vmatpush1.bf16.msra.mxu0 %v4277
      %4309 = vmatprep.subr.bf16.mxu0 0
      %4310 = vmatpush2.bf16.msra.mxu0 0
      %4311 = vmatprep.subr.bf16.mxu0 0
      %4312 = vmatpush2.bf16.msra.mxu0 0
      %4313 = vmatprep.subr.bf16.mxu0 0
      %4314 = vmatpush2.bf16.msra.mxu0 0
      %4315 = vmatprep.subr.bf16.mxu0 0
      %4316 = vmatpush2.bf16.msra.mxu0 0
      %4317 = vmatprep.subr.bf16.mxu0 0
      %4318 = vmatpush2.bf16.msra.mxu0 0
      %4319 = vmatprep.subr.bf16.mxu0 0
      %4320 = vmatpush2.bf16.msra.mxu0 0
      %4321 = vmatprep.subr.bf16.mxu0 0
      %4322 = vmatpush2.bf16.msra.mxu0 0
      %4323 = vmatprep.subr.bf16.mxu0 0
      %4324 = vmatpush2.bf16.msra.mxu0 0
      %4325 = vmatprep.mubr.bf16.mxu0 0
      %4326 = vmatmul.mubr.bf16.gmra.mxu0 %v4282
      %v4327 = vpop.f32.mrf.mxu0
      %v4328 = vadd.f32 %v4268, %v4327
      %v4329 = vpop.f32.mrf.mxu0
      %v4330 = vpop.f32.mrf.mxu0
      %v4331 = vadd.f32 %v4268, %v4330
      %v4332 = vpop.f32.mrf.mxu0
      %4333 = vmatprep.mubr.bf16.mxu0 0
      %4334 = vmatmul.mubr.bf16.gmra.mxu0 %v4285
      %v4335 = vpop.f32.mrf.mxu0
      %v4336 = vadd.f32 %v4268, %v4335
      %v4337 = vpop.f32.mrf.mxu0
      %v4338 = vpop.f32.mrf.mxu0
      %v4339 = vadd.f32 %v4268, %v4338
      %v4340 = vpop.f32.mrf.mxu0
      %4341 = vmatprep.mubr.bf16.mxu0 0
      %4342 = vmatmul.mubr.bf16.gmra.mxu0 %v4288
      %v4343 = vpop.f32.mrf.mxu0
      %v4344 = vadd.f32 %v4268, %v4343
      %v4345 = vpop.f32.mrf.mxu0
      %v4346 = vpop.f32.mrf.mxu0
      %v4347 = vadd.f32 %v4268, %v4346
      %v4348 = vpop.f32.mrf.mxu0
      %4349 = vmatprep.mubr.bf16.mxu0 0
      %4350 = vmatmul.mubr.bf16.gmra.mxu0 %v4291
      %v4351 = vpop.f32.mrf.mxu0
      %v4352 = vadd.f32 %v4268, %v4351
      %v4353 = vpop.f32.mrf.mxu0
      %v4354 = vpop.f32.mrf.mxu0
      %v4355 = vadd.f32 %v4268, %v4354
      %v4356 = vpop.f32.mrf.mxu0
      %4357 = vdwg.mxu0
      %v4358 = vmul.f32 %v4328, 0.5
      %v4359 = vmul.f32 %v4331, 0.5
      %v4360 = vmul.f32 %v4336, 0.5
      %v4361 = vmul.f32 %v4339, 0.5
      %v4362 = vmul.f32 %v4344, 0.5
      %v4363 = vmul.f32 %v4347, 0.5
      %v4364 = vmul.f32 %v4352, 0.5
      %v4365 = vmul.f32 %v4355, 0.5
      %v4366 = vmul.f32 %v4328, 0.70710677
      %v4367 = vmul.f32 %v4331, 0.70710677
      %v4368 = vmul.f32 %v4336, 0.70710677
      %v4369 = vmul.f32 %v4339, 0.70710677
      %v4370 = vmul.f32 %v4344, 0.70710677
      %v4371 = vmul.f32 %v4347, 0.70710677
      %v4372 = vmul.f32 %v4352, 0.70710677
      %v4373 = vmul.f32 %v4355, 0.70710677
      %v4374 = vand.u32 2147483647, %v4366
      %v4375 = vand.u32 2147483647, %v4367
      %v4376 = vand.u32 2147483647, %v4368
      %v4377 = vand.u32 2147483647, %v4369
      %v4378 = vand.u32 2147483647, %v4370
      %v4379 = vand.u32 2147483647, %v4371
      %v4380 = vand.u32 2147483647, %v4372
      %v4381 = vand.u32 2147483647, %v4373
      %v4382 = vmul.f32 %v4374, 0.3275911
      %v4383 = vmul.f32 %v4375, 0.3275911
      %v4384 = vmul.f32 %v4376, 0.3275911
      %v4385 = vmul.f32 %v4377, 0.3275911
      %v4386 = vmul.f32 %v4378, 0.3275911
      %v4387 = vmul.f32 %v4379, 0.3275911
      %v4388 = vmul.f32 %v4380, 0.3275911
      %v4389 = vmul.f32 %v4381, 0.3275911
      %v4390 = vadd.f32 %v4382, 1.0
      %v4391 = vadd.f32 %v4383, 1.0
      %v4392 = vadd.f32 %v4384, 1.0
      %v4393 = vadd.f32 %v4385, 1.0
      %v4394 = vadd.f32 %v4386, 1.0
      %v4395 = vadd.f32 %v4387, 1.0
      %v4396 = vadd.f32 %v4388, 1.0
      %v4397 = vadd.f32 %v4389, 1.0
      %v4398 = vrcp.pop %v4390
      %v4399 = vmul.f32 1.0, %v4398
      %v4400 = vrcp.pop %v4391
      %v4401 = vmul.f32 1.0, %v4400
      %v4402 = vrcp.pop %v4392
      %v4403 = vmul.f32 1.0, %v4402
      %v4404 = vrcp.pop %v4393
      %v4405 = vmul.f32 1.0, %v4404
      %v4406 = vrcp.pop %v4394
      %v4407 = vmul.f32 1.0, %v4406
      %v4408 = vrcp.pop %v4395
      %v4409 = vmul.f32 1.0, %v4408
      %v4410 = vrcp.pop %v4396
      %v4411 = vmul.f32 1.0, %v4410
      %v4412 = vrcp.pop %v4397
      %v4413 = vmul.f32 1.0, %v4412
      %v4414 = vmul.f32 %v4399, 1.0614054
      %v4415 = vmul.f32 %v4401, 1.0614054
      %v4416 = vmul.f32 %v4403, 1.0614054
      %v4417 = vmul.f32 %v4405, 1.0614054
      %v4418 = vmul.f32 %v4407, 1.0614054
      %v4419 = vmul.f32 %v4409, 1.0614054
      %v4420 = vmul.f32 %v4411, 1.0614054
      %v4421 = vmul.f32 %v4413, 1.0614054
      %v4422 = vadd.f32 %v4414, -1.4531521
      %v4423 = vadd.f32 %v4415, -1.4531521
      %v4424 = vadd.f32 %v4416, -1.4531521
      %v4425 = vadd.f32 %v4417, -1.4531521
      %v4426 = vadd.f32 %v4418, -1.4531521
      %v4427 = vadd.f32 %v4419, -1.4531521
      %v4428 = vadd.f32 %v4420, -1.4531521
      %v4429 = vadd.f32 %v4421, -1.4531521
      %v4430 = vmul.f32 %v4422, %v4399
      %v4431 = vmul.f32 %v4423, %v4401
      %v4432 = vmul.f32 %v4424, %v4403
      %v4433 = vmul.f32 %v4425, %v4405
      %v4434 = vmul.f32 %v4426, %v4407
      %v4435 = vmul.f32 %v4427, %v4409
      %v4436 = vmul.f32 %v4428, %v4411
      %v4437 = vmul.f32 %v4429, %v4413
      %v4438 = vadd.f32 %v4430, 1.4214138
      %v4439 = vadd.f32 %v4431, 1.4214138
      %v4440 = vadd.f32 %v4432, 1.4214138
      %v4441 = vadd.f32 %v4433, 1.4214138
      %v4442 = vadd.f32 %v4434, 1.4214138
      %v4443 = vadd.f32 %v4435, 1.4214138
      %v4444 = vadd.f32 %v4436, 1.4214138
      %v4445 = vadd.f32 %v4437, 1.4214138
      %v4446 = vmul.f32 %v4438, %v4399
      %v4447 = vmul.f32 %v4439, %v4401
      %v4448 = vmul.f32 %v4440, %v4403
      %v4449 = vmul.f32 %v4441, %v4405
      %v4450 = vmul.f32 %v4442, %v4407
      %v4451 = vmul.f32 %v4443, %v4409
      %v4452 = vmul.f32 %v4444, %v4411
      %v4453 = vmul.f32 %v4445, %v4413
      %v4454 = vadd.f32 %v4446, -0.28449672
      %v4455 = vadd.f32 %v4447, -0.28449672
      %v4456 = vadd.f32 %v4448, -0.28449672
      %v4457 = vadd.f32 %v4449, -0.28449672
      %v4458 = vadd.f32 %v4450, -0.28449672
      %v4459 = vadd.f32 %v4451, -0.28449672
      %v4460 = vadd.f32 %v4452, -0.28449672
      %v4461 = vadd.f32 %v4453, -0.28449672
      %v4462 = vmul.f32 %v4454, %v4399
      %v4463 = vmul.f32 %v4455, %v4401
      %v4464 = vmul.f32 %v4456, %v4403
      %v4465 = vmul.f32 %v4457, %v4405
      %v4466 = vmul.f32 %v4458, %v4407
      %v4467 = vmul.f32 %v4459, %v4409
      %v4468 = vmul.f32 %v4460, %v4411
      %v4469 = vmul.f32 %v4461, %v4413
      %v4470 = vadd.f32 %v4462, 0.2548296
      %v4471 = vadd.f32 %v4463, 0.2548296
      %v4472 = vadd.f32 %v4464, 0.2548296
      %v4473 = vadd.f32 %v4465, 0.2548296
      %v4474 = vadd.f32 %v4466, 0.2548296
      %v4475 = vadd.f32 %v4467, 0.2548296
      %v4476 = vadd.f32 %v4468, 0.2548296
      %v4477 = vadd.f32 %v4469, 0.2548296
      %v4478 = vmul.f32 %v4470, %v4399
      %v4479 = vmul.f32 %v4471, %v4401
      %v4480 = vmul.f32 %v4472, %v4403
      %v4481 = vmul.f32 %v4473, %v4405
      %v4482 = vmul.f32 %v4474, %v4407
      %v4483 = vmul.f32 %v4475, %v4409
      %v4484 = vmul.f32 %v4476, %v4411
      %v4485 = vmul.f32 %v4477, %v4413
      %v4486 = vsub.f32 0.0, %v4374
      %v4487 = vsub.f32 0.0, %v4375
      %v4488 = vsub.f32 0.0, %v4376
      %v4489 = vsub.f32 0.0, %v4377
      %v4490 = vsub.f32 0.0, %v4378
      %v4491 = vsub.f32 0.0, %v4379
      %v4492 = vsub.f32 0.0, %v4380
      %v4493 = vsub.f32 0.0, %v4381
      %v4494 = vmul.f32 %v4486, %v4374
      %v4495 = vmul.f32 %v4487, %v4375
      %v4496 = vmul.f32 %v4488, %v4376
      %v4497 = vmul.f32 %v4489, %v4377
      %v4498 = vmul.f32 %v4490, %v4378
      %v4499 = vmul.f32 %v4491, %v4379
      %v4500 = vmul.f32 %v4492, %v4380
      %v4501 = vmul.f32 %v4493, %v4381
      %v4502 = vmul.f32 %v4494, 1.442695
      %v4503 = vpow.pop %v4502
      %v4504 = vmul.f32 %v4495, 1.442695
      %v4505 = vpow.pop %v4504
      %v4506 = vmul.f32 %v4496, 1.442695
      %v4507 = vpow.pop %v4506
      %v4508 = vmul.f32 %v4497, 1.442695
      %v4509 = vpow.pop %v4508
      %v4510 = vmul.f32 %v4498, 1.442695
      %v4511 = vpow.pop %v4510
      %v4512 = vmul.f32 %v4499, 1.442695
      %v4513 = vpow.pop %v4512
      %v4514 = vmul.f32 %v4500, 1.442695
      %v4515 = vpow.pop %v4514
      %v4516 = vmul.f32 %v4501, 1.442695
      %v4517 = vpow.pop %v4516
      %v4518 = vmul.f32 %v4478, %v4503
      %v4519 = vmul.f32 %v4479, %v4505
      %v4520 = vmul.f32 %v4480, %v4507
      %v4521 = vmul.f32 %v4481, %v4509
      %v4522 = vmul.f32 %v4482, %v4511
      %v4523 = vmul.f32 %v4483, %v4513
      %v4524 = vmul.f32 %v4484, %v4515
      %v4525 = vmul.f32 %v4485, %v4517
      %v4526 = vsub.f32 1.0, %v4518
      %v4527 = vsub.f32 1.0, %v4519
      %v4528 = vsub.f32 1.0, %v4520
      %v4529 = vsub.f32 1.0, %v4521
      %v4530 = vsub.f32 1.0, %v4522
      %v4531 = vsub.f32 1.0, %v4523
      %v4532 = vsub.f32 1.0, %v4524
      %v4533 = vsub.f32 1.0, %v4525
      %vm4534 = vcmp.ge.f32.partialorder %v4366, 0.0
      %vm4535 = vcmp.ge.f32.partialorder %v4367, 0.0
      %vm4536 = vcmp.ge.f32.partialorder %v4368, 0.0
      %vm4537 = vcmp.ge.f32.partialorder %v4369, 0.0
      %vm4538 = vcmp.ge.f32.partialorder %v4370, 0.0
      %vm4539 = vcmp.ge.f32.partialorder %v4371, 0.0
      %vm4540 = vcmp.ge.f32.partialorder %v4372, 0.0
      %vm4541 = vcmp.ge.f32.partialorder %v4373, 0.0
      %v4542 = vsub.f32 0.0, %v4526
      %v4543 = vsub.f32 0.0, %v4527
      %v4544 = vsub.f32 0.0, %v4528
      %v4545 = vsub.f32 0.0, %v4529
      %v4546 = vsub.f32 0.0, %v4530
      %v4547 = vsub.f32 0.0, %v4531
      %v4548 = vsub.f32 0.0, %v4532
      %v4549 = vsub.f32 0.0, %v4533
      %v4550 = vsel %vm4534, %v4526, %v4542
      %v4551 = vsel %vm4535, %v4527, %v4543
      %v4552 = vsel %vm4536, %v4528, %v4544
      %v4553 = vsel %vm4537, %v4529, %v4545
      %v4554 = vsel %vm4538, %v4530, %v4546
      %v4555 = vsel %vm4539, %v4531, %v4547
      %v4556 = vsel %vm4540, %v4532, %v4548
      %v4557 = vsel %vm4541, %v4533, %v4549
      %v4558 = vadd.f32 %v4550, 1.0
      %v4559 = vadd.f32 %v4551, 1.0
      %v4560 = vadd.f32 %v4552, 1.0
      %v4561 = vadd.f32 %v4553, 1.0
      %v4562 = vadd.f32 %v4554, 1.0
      %v4563 = vadd.f32 %v4555, 1.0
      %v4564 = vadd.f32 %v4556, 1.0
      %v4565 = vadd.f32 %v4557, 1.0
      %v4566 = vmul.f32 %v4358, %v4558
      %v4567 = vmul.f32 %v4359, %v4559
      %v4568 = vmul.f32 %v4360, %v4560
      %v4569 = vmul.f32 %v4361, %v4561
      %v4570 = vmul.f32 %v4362, %v4562
      %v4571 = vmul.f32 %v4363, %v4563
      %v4572 = vmul.f32 %v4364, %v4564
      %v4573 = vmul.f32 %v4365, %v4565
      %v4574 = vld [vmem:[%s1 + $0x58] sm:$0xf]
      %v4575 = vld [vmem:[%s1 + $0x5c] sm:$0xf]
      %v4576 = vld [vmem:[%s1 + $0x60] sm:$0xf]
      %v4577 = vld [vmem:[%s1 + $0x64] sm:$0xf]
      %v4578 = vld [vmem:[%s1 + $0x68] sm:$0xf]
      %v4579 = vld [vmem:[%s1 + $0x6c] sm:$0xf]
      %v4580 = vld [vmem:[%s1 + $0x70] sm:$0xf]
      %v4581 = vld [vmem:[%s1 + $0x74] sm:$0xf]
      %v4582 = vld [vmem:[%s1 + $0x78] sm:$0xf]
      %v4583 = vld [vmem:[%s1 + $0x7c] sm:$0xf]
      %v4584 = vld [vmem:[%s1 + $0x80] sm:$0xf]
      %v4585 = vld [vmem:[%s1 + $0x84] sm:$0xf]
      %v4586 = vld [vmem:[%s1 + $0x88] sm:$0xf]
      %v4587 = vld [vmem:[%s1 + $0x8c] sm:$0xf]
      %v4588 = vld [vmem:[%s1 + $0x90] sm:$0xf]
      %v4589 = vld [vmem:[%s1 + $0x94] sm:$0xf]
      %v4590 = vld [vmem:[%s2 + $0xc] sm:$0x1]
      %v4591 = vpack.c.bf16 %v4567, %v4566
      %v4592 = vpack.c.bf16 %v4569, %v4568
      %v4593 = vpack.c.bf16 %v4571, %v4570
      %v4594 = vpack.c.bf16 %v4573, %v4572
      %v4595 = vlaneseq
      %v4596 = vshrl.u32 %v4595, 7
      %v4597 = vsub.s32 0, %v4596
      %v4598 = vrot.slane %v4590, %v4597
      %v4615 = vunpack.c.l.b16 %v4574
      %v4616 = vunpack.c.l.b16 %v4575
      %v4617 = vunpack.c.l.b16 %v4576
      %v4618 = vunpack.c.l.b16 %v4577
      %v4619 = vunpack.c.l.b16 %v4578
      %v4620 = vunpack.c.l.b16 %v4579
      %v4621 = vunpack.c.l.b16 %v4580
      %v4622 = vunpack.c.l.b16 %v4581
      %v4623 = vunpack.c.l.b16 %v4582
      %v4624 = vunpack.c.l.b16 %v4583
      %v4625 = vunpack.c.l.b16 %v4584
      %v4626 = vunpack.c.l.b16 %v4585
      %v4627 = vunpack.c.l.b16 %v4586
      %v4628 = vunpack.c.l.b16 %v4587
      %v4629 = vunpack.c.l.b16 %v4588
      %v4630 = vunpack.c.l.b16 %v4589
      %v4631 = vpack.c.b16 %v4616, %v4615
      %v4632 = vpack.c.b16 %v4618, %v4617
      %v4633 = vpack.c.b16 %v4620, %v4619
      %v4634 = vpack.c.b16 %v4622, %v4621
      %v4635 = vpack.c.b16 %v4624, %v4623
      %v4636 = vpack.c.b16 %v4626, %v4625
      %v4637 = vpack.c.b16 %v4628, %v4627
      %v4638 = vpack.c.b16 %v4630, %v4629
      %4647 = vmatprep.subr.bf16.mxu0 0
      %4648 = vmatpush1.bf16.msra.mxu0 %v4638
      %4649 = vmatprep.subr.bf16.mxu0 0
      %4650 = vmatpush1.bf16.msra.mxu0 %v4637
      %4651 = vmatprep.subr.bf16.mxu0 0
      %4652 = vmatpush1.bf16.msra.mxu0 %v4636
      %4653 = vmatprep.subr.bf16.mxu0 0
      %4654 = vmatpush1.bf16.msra.mxu0 %v4635
      %4655 = vmatprep.subr.bf16.mxu0 0
      %4656 = vmatpush1.bf16.msra.mxu0 %v4634
      %4657 = vmatprep.subr.bf16.mxu0 0
      %4658 = vmatpush1.bf16.msra.mxu0 %v4633
      %4659 = vmatprep.subr.bf16.mxu0 0
      %4660 = vmatpush1.bf16.msra.mxu0 %v4632
      %4661 = vmatprep.subr.bf16.mxu0 0
      %4662 = vmatpush1.bf16.msra.mxu0 %v4631
      %4663 = vmatprep.subr.bf16.mxu0 0
      %4664 = vmatpush2.bf16.msra.mxu0 0
      %4665 = vmatprep.subr.bf16.mxu0 0
      %4666 = vmatpush2.bf16.msra.mxu0 0
      %4667 = vmatprep.subr.bf16.mxu0 0
      %4668 = vmatpush2.bf16.msra.mxu0 0
      %4669 = vmatprep.subr.bf16.mxu0 0
      %4670 = vmatpush2.bf16.msra.mxu0 0
      %4671 = vmatprep.subr.bf16.mxu0 0
      %4672 = vmatpush2.bf16.msra.mxu0 0
      %4673 = vmatprep.subr.bf16.mxu0 0
      %4674 = vmatpush2.bf16.msra.mxu0 0
      %4675 = vmatprep.subr.bf16.mxu0 0
      %4676 = vmatpush2.bf16.msra.mxu0 0
      %4677 = vmatprep.subr.bf16.mxu0 0
      %4678 = vmatpush2.bf16.msra.mxu0 0
      %4679 = vmatprep.mubr.bf16.mxu0 0
      %4680 = vmatmul.mubr.bf16.gmra.mxu0 %v4591
      %v4681 = vpop.f32.mrf.mxu0
      %v4682 = vadd.f32 %v4598, %v4681
      %v4683 = vpop.f32.mrf.mxu0
      %v4684 = vpop.f32.mrf.mxu0
      %v4685 = vadd.f32 %v4598, %v4684
      %v4686 = vpop.f32.mrf.mxu0
      %4687 = vmatprep.mubr.bf16.mxu0 0
      %4688 = vmatmul.mubr.bf16.gmra.mxu0 %v4592
      %v4689 = vpop.f32.mrf.mxu0
      %v4690 = vadd.f32 %v4598, %v4689
      %v4691 = vpop.f32.mrf.mxu0
      %v4692 = vpop.f32.mrf.mxu0
      %v4693 = vadd.f32 %v4598, %v4692
      %v4694 = vpop.f32.mrf.mxu0
      %4695 = vmatprep.mubr.bf16.mxu0 0
      %4696 = vmatmul.mubr.bf16.gmra.mxu0 %v4593
      %v4697 = vpop.f32.mrf.mxu0
      %v4698 = vadd.f32 %v4598, %v4697
      %v4699 = vpop.f32.mrf.mxu0
      %v4700 = vpop.f32.mrf.mxu0
      %v4701 = vadd.f32 %v4598, %v4700
      %v4702 = vpop.f32.mrf.mxu0
      %4703 = vmatprep.mubr.bf16.mxu0 0
      %4704 = vmatmul.mubr.bf16.gmra.mxu0 %v4594
      %v4705 = vpop.f32.mrf.mxu0
      %v4706 = vadd.f32 %v4598, %v4705
      %v4707 = vpop.f32.mrf.mxu0
      %v4708 = vpop.f32.mrf.mxu0
      %v4709 = vadd.f32 %v4598, %v4708
      %v4710 = vpop.f32.mrf.mxu0
      %4711 = vdwg.mxu0
      %v4712 = vadd.f32 %v4248, %v4682
      %v4713 = vadd.f32 %v4249, %v4685
      %v4714 = vadd.f32 %v4250, %v4690
      %v4715 = vadd.f32 %v4251, %v4693
      %v4716 = vadd.f32 %v4252, %v4698
      %v4717 = vadd.f32 %v4253, %v4701
      %v4718 = vadd.f32 %v4254, %v4706
      %v4719 = vadd.f32 %v4255, %v4709
      %v4720 = vld [vmem:[%s2 + $0xd] sm:$0x1]
      %v4721 = vld [vmem:[%s2 + $0xe] sm:$0x1]
      %v4722 = vsel %vm431, %v4712, 0.0
      %4723 = vadd.xlane.f32.xlu0 %v4722
      %v4724 = vpop.xlane.xlu0 %4723
      %v4725 = vsel %vm431, %v4713, 0.0
      %4726 = vadd.xlane.f32.xlu0 %v4725
      %v4727 = vpop.xlane.xlu0 %4726
      %v4728 = vsel %vm431, %v4714, 0.0
      %4729 = vadd.xlane.f32.xlu0 %v4728
      %v4730 = vpop.xlane.xlu0 %4729
      %v4731 = vsel %vm431, %v4715, 0.0
      %4732 = vadd.xlane.f32.xlu0 %v4731
      %v4733 = vpop.xlane.xlu0 %4732
      %v4734 = vsel %vm431, %v4716, 0.0
      %4735 = vadd.xlane.f32.xlu0 %v4734
      %v4736 = vpop.xlane.xlu0 %4735
      %v4737 = vsel %vm431, %v4717, 0.0
      %4738 = vadd.xlane.f32.xlu0 %v4737
      %v4739 = vpop.xlane.xlu0 %4738
      %v4740 = vsel %vm431, %v4718, 0.0
      %4741 = vadd.xlane.f32.xlu0 %v4740
      %v4742 = vpop.xlane.xlu0 %4741
      %v4743 = vsel %vm431, %v4719, 0.0
      %4744 = vadd.xlane.f32.xlu0 %v4743
      %v4745 = vpop.xlane.xlu0 %4744
      %v4746 = vmul.f32 %v4724, %v878
      %v4747 = vmul.f32 %v4727, %v878
      %v4748 = vmul.f32 %v4730, %v878
      %v4749 = vmul.f32 %v4733, %v878
      %v4750 = vmul.f32 %v4736, %v878
      %v4751 = vmul.f32 %v4739, %v878
      %v4752 = vmul.f32 %v4742, %v878
      %v4753 = vmul.f32 %v4745, %v878
      %v4754 = vmul.f32 %v4712, %v4712
      %v4755 = vmul.f32 %v4713, %v4713
      %v4756 = vmul.f32 %v4714, %v4714
      %v4757 = vmul.f32 %v4715, %v4715
      %v4758 = vmul.f32 %v4716, %v4716
      %v4759 = vmul.f32 %v4717, %v4717
      %v4760 = vmul.f32 %v4718, %v4718
      %v4761 = vmul.f32 %v4719, %v4719
      %v4762 = vsel %vm431, %v4754, 0.0
      %4763 = vadd.xlane.f32.xlu0 %v4762
      %v4764 = vpop.xlane.xlu0 %4763
      %v4765 = vsel %vm431, %v4755, 0.0
      %4766 = vadd.xlane.f32.xlu0 %v4765
      %v4767 = vpop.xlane.xlu0 %4766
      %v4768 = vsel %vm431, %v4756, 0.0
      %4769 = vadd.xlane.f32.xlu0 %v4768
      %v4770 = vpop.xlane.xlu0 %4769
      %v4771 = vsel %vm431, %v4757, 0.0
      %4772 = vadd.xlane.f32.xlu0 %v4771
      %v4773 = vpop.xlane.xlu0 %4772
      %v4774 = vsel %vm431, %v4758, 0.0
      %4775 = vadd.xlane.f32.xlu0 %v4774
      %v4776 = vpop.xlane.xlu0 %4775
      %v4777 = vsel %vm431, %v4759, 0.0
      %4778 = vadd.xlane.f32.xlu0 %v4777
      %v4779 = vpop.xlane.xlu0 %4778
      %v4780 = vsel %vm431, %v4760, 0.0
      %4781 = vadd.xlane.f32.xlu0 %v4780
      %v4782 = vpop.xlane.xlu0 %4781
      %v4783 = vsel %vm431, %v4761, 0.0
      %4784 = vadd.xlane.f32.xlu0 %v4783
      %v4785 = vpop.xlane.xlu0 %4784
      %v4786 = vmul.f32 %v4764, %v878
      %v4787 = vmul.f32 %v4767, %v878
      %v4788 = vmul.f32 %v4770, %v878
      %v4789 = vmul.f32 %v4773, %v878
      %v4790 = vmul.f32 %v4776, %v878
      %v4791 = vmul.f32 %v4779, %v878
      %v4792 = vmul.f32 %v4782, %v878
      %v4793 = vmul.f32 %v4785, %v878
      %v4794 = vmul.f32 %v4746, %v4746
      %v4795 = vmul.f32 %v4747, %v4747
      %v4796 = vmul.f32 %v4748, %v4748
      %v4797 = vmul.f32 %v4749, %v4749
      %v4798 = vmul.f32 %v4750, %v4750
      %v4799 = vmul.f32 %v4751, %v4751
      %v4800 = vmul.f32 %v4752, %v4752
      %v4801 = vmul.f32 %v4753, %v4753
      %v4802 = vsub.f32 %v4786, %v4794
      %v4803 = vsub.f32 %v4787, %v4795
      %v4804 = vsub.f32 %v4788, %v4796
      %v4805 = vsub.f32 %v4789, %v4797
      %v4806 = vsub.f32 %v4790, %v4798
      %v4807 = vsub.f32 %v4791, %v4799
      %v4808 = vsub.f32 %v4792, %v4800
      %v4809 = vsub.f32 %v4793, %v4801
      %v4810 = vsub.f32 %v4712, %v4746
      %v4811 = vsub.f32 %v4713, %v4747
      %v4812 = vsub.f32 %v4714, %v4748
      %v4813 = vsub.f32 %v4715, %v4749
      %v4814 = vsub.f32 %v4716, %v4750
      %v4815 = vsub.f32 %v4717, %v4751
      %v4816 = vsub.f32 %v4718, %v4752
      %v4817 = vsub.f32 %v4719, %v4753
      %v4818 = vadd.f32 %v4802, 1e-05
      %v4819 = vadd.f32 %v4803, 1e-05
      %v4820 = vadd.f32 %v4804, 1e-05
      %v4821 = vadd.f32 %v4805, 1e-05
      %v4822 = vadd.f32 %v4806, 1e-05
      %v4823 = vadd.f32 %v4807, 1e-05
      %v4824 = vadd.f32 %v4808, 1e-05
      %v4825 = vadd.f32 %v4809, 1e-05
      %v4826 = vrsqrt.pop %v4818
      %v4827 = vrsqrt.pop %v4819
      %v4828 = vrsqrt.pop %v4820
      %v4829 = vrsqrt.pop %v4821
      %v4830 = vrsqrt.pop %v4822
      %v4831 = vrsqrt.pop %v4823
      %v4832 = vrsqrt.pop %v4824
      %v4833 = vrsqrt.pop %v4825
      %v4834 = vmul.f32 %v4810, %v4826
      %v4835 = vmul.f32 %v4811, %v4827
      %v4836 = vmul.f32 %v4812, %v4828
      %v4837 = vmul.f32 %v4813, %v4829
      %v4838 = vmul.f32 %v4814, %v4830
      %v4839 = vmul.f32 %v4815, %v4831
      %v4840 = vmul.f32 %v4816, %v4832
      %v4841 = vmul.f32 %v4817, %v4833
      %v4842 = vlaneseq
      %v4843 = vshrl.u32 %v4842, 7
      %v4844 = vsub.s32 0, %v4843
      %v4845 = vrot.slane %v4720, %v4844
      %v4846 = vmul.f32 %v4834, %v4845
      %v4847 = vmul.f32 %v4835, %v4845
      %v4848 = vmul.f32 %v4836, %v4845
      %v4849 = vmul.f32 %v4837, %v4845
      %v4850 = vmul.f32 %v4838, %v4845
      %v4851 = vmul.f32 %v4839, %v4845
      %v4852 = vmul.f32 %v4840, %v4845
      %v4853 = vmul.f32 %v4841, %v4845
      %v4854 = vlaneseq
      %v4855 = vshrl.u32 %v4854, 7
      %v4856 = vsub.s32 0, %v4855
      %v4857 = vrot.slane %v4721, %v4856
      %v4858 = vadd.f32 %v4846, %v4857
      %v4859 = vadd.f32 %v4847, %v4857
      %v4860 = vadd.f32 %v4848, %v4857
      %v4861 = vadd.f32 %v4849, %v4857
      %v4862 = vadd.f32 %v4850, %v4857
      %v4863 = vadd.f32 %v4851, %v4857
      %v4864 = vadd.f32 %v4852, %v4857
      %v4865 = vadd.f32 %v4853, %v4857
      %v4866 = vld [vmem:[%s2 + $0xf] sm:$0x1]
      %v4867 = vld [vmem:[%s2 + $0x10] sm:$0x1]
      %v4868 = vld [vmem:[%s1 + $0x98] sm:$0xf]
      %v4869 = vld [vmem:[%s1 + $0x9c] sm:$0xf]
      %v4870 = vld [vmem:[%s1 + $0xa0] sm:$0xf]
      %v4871 = vld [vmem:[%s1 + $0xa4] sm:$0xf]
      %v4872 = vld [vmem:[%s2 + $0x11] sm:$0x1]
      %v4873 = vpack.c.bf16 %v4859, %v4858
      %v4874 = vpack.c.bf16 %v4861, %v4860
      %v4875 = vpack.c.bf16 %v4863, %v4862
      %v4876 = vpack.c.bf16 %v4865, %v4864
      %v4877 = vlaneseq
      %v4878 = vshrl.u32 %v4877, 7
      %v4879 = vsub.s32 0, %v4878
      %v4880 = vrot.slane %v4866, %v4879
      %4881 = vrot.lane.b32.xlu0 %v1192, 64
      %v4882 = vpop.permute.xlu0 %4881
      %4883 = vrot.lane.b32.xlu0 %v1193, 64
      %v4884 = vpop.permute.xlu0 %4883
      %v4888 = vsel %vm431, %v4873, 0
      %v4891 = vsel %vm431, %v4874, 0
      %v4894 = vsel %vm431, %v4875, 0
      %v4897 = vsel %vm431, %v4876, 0
      %4899 = vmatprep.subr.bf16.mxu0 0
      %4900 = vmatpush1.bf16.msra.mxu0 0
      %4901 = vmatprep.subr.bf16.mxu0 0
      %4902 = vmatpush1.bf16.msra.mxu0 0
      %4903 = vmatprep.subr.bf16.mxu0 0
      %4904 = vmatpush1.bf16.msra.mxu0 0
      %4905 = vmatprep.subr.bf16.mxu0 0
      %4906 = vmatpush1.bf16.msra.mxu0 0
      %4907 = vmatprep.subr.bf16.mxu0 0
      %4908 = vmatpush1.bf16.msra.mxu0 0
      %4909 = vmatprep.subr.bf16.mxu0 0
      %4910 = vmatpush1.bf16.msra.mxu0 0
      %4911 = vmatprep.subr.bf16.mxu0 0
      %4912 = vmatpush1.bf16.msra.mxu0 %v4884
      %4913 = vmatprep.subr.bf16.mxu0 0
      %4914 = vmatpush1.bf16.msra.mxu0 %v4882
      %4915 = vmatprep.subr.bf16.mxu0 0
      %4916 = vmatpush2.bf16.msra.mxu0 0
      %4917 = vmatprep.subr.bf16.mxu0 0
      %4918 = vmatpush2.bf16.msra.mxu0 0
      %4919 = vmatprep.subr.bf16.mxu0 0
      %4920 = vmatpush2.bf16.msra.mxu0 0
      %4921 = vmatprep.subr.bf16.mxu0 0
      %4922 = vmatpush2.bf16.msra.mxu0 0
      %4923 = vmatprep.subr.bf16.mxu0 0
      %4924 = vmatpush2.bf16.msra.mxu0 0
      %4925 = vmatprep.subr.bf16.mxu0 0
      %4926 = vmatpush2.bf16.msra.mxu0 0
      %4927 = vmatprep.subr.bf16.mxu0 0
      %4928 = vmatpush2.bf16.msra.mxu0 0
      %4929 = vmatprep.subr.bf16.mxu0 0
      %4930 = vmatpush2.bf16.msra.mxu0 0
      %4931 = vmatprep.mubr.bf16.mxu0 0
      %4932 = vmatmul.mubr.bf16.gmra.mxu0 %v4888
      %v4933 = vpop.f32.mrf.mxu0
      %v4934 = vadd.f32 %v4880, %v4933
      %v4935 = vpop.f32.mrf.mxu0
      %v4936 = vpop.f32.mrf.mxu0
      %v4937 = vadd.f32 %v4880, %v4936
      %v4938 = vpop.f32.mrf.mxu0
      %4939 = vmatprep.mubr.bf16.mxu0 0
      %4940 = vmatmul.mubr.bf16.gmra.mxu0 %v4891
      %v4941 = vpop.f32.mrf.mxu0
      %v4942 = vadd.f32 %v4880, %v4941
      %v4943 = vpop.f32.mrf.mxu0
      %v4944 = vpop.f32.mrf.mxu0
      %v4945 = vadd.f32 %v4880, %v4944
      %v4946 = vpop.f32.mrf.mxu0
      %4947 = vmatprep.mubr.bf16.mxu0 0
      %4948 = vmatmul.mubr.bf16.gmra.mxu0 %v4894
      %v4949 = vpop.f32.mrf.mxu0
      %v4950 = vadd.f32 %v4880, %v4949
      %v4951 = vpop.f32.mrf.mxu0
      %v4952 = vpop.f32.mrf.mxu0
      %v4953 = vadd.f32 %v4880, %v4952
      %v4954 = vpop.f32.mrf.mxu0
      %4955 = vmatprep.mubr.bf16.mxu0 0
      %4956 = vmatmul.mubr.bf16.gmra.mxu0 %v4897
      %v4957 = vpop.f32.mrf.mxu0
      %v4958 = vadd.f32 %v4880, %v4957
      %v4959 = vpop.f32.mrf.mxu0
      %v4960 = vpop.f32.mrf.mxu0
      %v4961 = vadd.f32 %v4880, %v4960
      %v4962 = vpop.f32.mrf.mxu0
      %4963 = vdwg.mxu0
      %v4964 = vmul.f32 %v4934, 0.5
      %v4965 = vmul.f32 %v4937, 0.5
      %v4966 = vmul.f32 %v4942, 0.5
      %v4967 = vmul.f32 %v4945, 0.5
      %v4968 = vmul.f32 %v4950, 0.5
      %v4969 = vmul.f32 %v4953, 0.5
      %v4970 = vmul.f32 %v4958, 0.5
      %v4971 = vmul.f32 %v4961, 0.5
      %v4972 = vlaneseq
      %v4973 = vshrl.u32 %v4972, 7
      %v4974 = vsub.s32 0, %v4973
      %v4975 = vrot.slane %v4867, %v4974
      %4976 = vrot.lane.b32.xlu0 %v1192, 32
      %v4977 = vpop.permute.xlu0 %4976
      %4978 = vrot.lane.b32.xlu0 %v1193, 32
      %v4979 = vpop.permute.xlu0 %4978
      %4982 = vmatprep.subr.bf16.mxu0 0
      %4983 = vmatpush1.bf16.msra.mxu0 0
      %4984 = vmatprep.subr.bf16.mxu0 0
      %4985 = vmatpush1.bf16.msra.mxu0 0
      %4986 = vmatprep.subr.bf16.mxu0 0
      %4987 = vmatpush1.bf16.msra.mxu0 0
      %4988 = vmatprep.subr.bf16.mxu0 0
      %4989 = vmatpush1.bf16.msra.mxu0 0
      %4990 = vmatprep.subr.bf16.mxu0 0
      %4991 = vmatpush1.bf16.msra.mxu0 0
      %4992 = vmatprep.subr.bf16.mxu0 0
      %4993 = vmatpush1.bf16.msra.mxu0 0
      %4994 = vmatprep.subr.bf16.mxu0 0
      %4995 = vmatpush1.bf16.msra.mxu0 %v4979
      %4996 = vmatprep.subr.bf16.mxu0 0
      %4997 = vmatpush1.bf16.msra.mxu0 %v4977
      %4998 = vmatprep.subr.bf16.mxu0 0
      %4999 = vmatpush2.bf16.msra.mxu0 0
      %5000 = vmatprep.subr.bf16.mxu0 0
      %5001 = vmatpush2.bf16.msra.mxu0 0
      %5002 = vmatprep.subr.bf16.mxu0 0
      %5003 = vmatpush2.bf16.msra.mxu0 0
      %5004 = vmatprep.subr.bf16.mxu0 0
      %5005 = vmatpush2.bf16.msra.mxu0 0
      %5006 = vmatprep.subr.bf16.mxu0 0
      %5007 = vmatpush2.bf16.msra.mxu0 0
      %5008 = vmatprep.subr.bf16.mxu0 0
      %5009 = vmatpush2.bf16.msra.mxu0 0
      %5010 = vmatprep.subr.bf16.mxu0 0
      %5011 = vmatpush2.bf16.msra.mxu0 0
      %5012 = vmatprep.subr.bf16.mxu0 0
      %5013 = vmatpush2.bf16.msra.mxu0 0
      %5014 = vmatprep.mubr.bf16.mxu0 0
      %5015 = vmatmul.mubr.bf16.gmra.mxu0 %v4888
      %v5016 = vpop.f32.mrf.mxu0
      %v5017 = vadd.f32 %v4975, %v5016
      %v5018 = vpop.f32.mrf.mxu0
      %v5019 = vpop.f32.mrf.mxu0
      %v5020 = vadd.f32 %v4975, %v5019
      %v5021 = vpop.f32.mrf.mxu0
      %5022 = vmatprep.mubr.bf16.mxu0 0
      %5023 = vmatmul.mubr.bf16.gmra.mxu0 %v4891
      %v5024 = vpop.f32.mrf.mxu0
      %v5025 = vadd.f32 %v4975, %v5024
      %v5026 = vpop.f32.mrf.mxu0
      %v5027 = vpop.f32.mrf.mxu0
      %v5028 = vadd.f32 %v4975, %v5027
      %v5029 = vpop.f32.mrf.mxu0
      %5030 = vmatprep.mubr.bf16.mxu0 0
      %5031 = vmatmul.mubr.bf16.gmra.mxu0 %v4894
      %v5032 = vpop.f32.mrf.mxu0
      %v5033 = vadd.f32 %v4975, %v5032
      %v5034 = vpop.f32.mrf.mxu0
      %v5035 = vpop.f32.mrf.mxu0
      %v5036 = vadd.f32 %v4975, %v5035
      %v5037 = vpop.f32.mrf.mxu0
      %5038 = vmatprep.mubr.bf16.mxu0 0
      %5039 = vmatmul.mubr.bf16.gmra.mxu0 %v4897
      %v5040 = vpop.f32.mrf.mxu0
      %v5041 = vadd.f32 %v4975, %v5040
      %v5042 = vpop.f32.mrf.mxu0
      %v5043 = vpop.f32.mrf.mxu0
      %v5044 = vadd.f32 %v4975, %v5043
      %v5045 = vpop.f32.mrf.mxu0
      %5046 = vdwg.mxu0
      %v5047 = vlaneseq
      %v5048 = vshrl.u32 %v5047, 7
      %v5049 = vsub.s32 0, %v5048
      %v5050 = vrot.slane %v4872, %v5049
      %v5055 = vunpack.c.l.b16 %v4868
      %v5056 = vunpack.c.l.b16 %v4869
      %v5057 = vunpack.c.l.b16 %v4870
      %v5058 = vunpack.c.l.b16 %v4871
      %v5059 = vpack.c.b16 %v5056, %v5055
      %v5060 = vpack.c.b16 %v5058, %v5057
      %5063 = vmatprep.subr.bf16.mxu0 0
      %5064 = vmatpush1.bf16.msra.mxu0 0
      %5065 = vmatprep.subr.bf16.mxu0 0
      %5066 = vmatpush1.bf16.msra.mxu0 0
      %5067 = vmatprep.subr.bf16.mxu0 0
      %5068 = vmatpush1.bf16.msra.mxu0 0
      %5069 = vmatprep.subr.bf16.mxu0 0
      %5070 = vmatpush1.bf16.msra.mxu0 0
      %5071 = vmatprep.subr.bf16.mxu0 0
      %5072 = vmatpush1.bf16.msra.mxu0 0
      %5073 = vmatprep.subr.bf16.mxu0 0
      %5074 = vmatpush1.bf16.msra.mxu0 0
      %5075 = vmatprep.subr.bf16.mxu0 0
      %5076 = vmatpush1.bf16.msra.mxu0 %v5060
      %5077 = vmatprep.subr.bf16.mxu0 0
      %5078 = vmatpush1.bf16.msra.mxu0 %v5059
      %5079 = vmatprep.subr.bf16.mxu0 0
      %5080 = vmatpush2.bf16.msra.mxu0 0
      %5081 = vmatprep.subr.bf16.mxu0 0
      %5082 = vmatpush2.bf16.msra.mxu0 0
      %5083 = vmatprep.subr.bf16.mxu0 0
      %5084 = vmatpush2.bf16.msra.mxu0 0
      %5085 = vmatprep.subr.bf16.mxu0 0
      %5086 = vmatpush2.bf16.msra.mxu0 0
      %5087 = vmatprep.subr.bf16.mxu0 0
      %5088 = vmatpush2.bf16.msra.mxu0 0
      %5089 = vmatprep.subr.bf16.mxu0 0
      %5090 = vmatpush2.bf16.msra.mxu0 0
      %5091 = vmatprep.subr.bf16.mxu0 0
      %5092 = vmatpush2.bf16.msra.mxu0 0
      %5093 = vmatprep.subr.bf16.mxu0 0
      %5094 = vmatpush2.bf16.msra.mxu0 0
      %5095 = vmatprep.mubr.bf16.mxu0 0
      %5096 = vmatmul.mubr.bf16.gmra.mxu0 %v4888
      %v5097 = vpop.f32.mrf.mxu0
      %v5098 = vadd.f32 %v5050, %v5097
      %v5099 = vpop.f32.mrf.mxu0
      %v5100 = vpop.f32.mrf.mxu0
      %v5101 = vadd.f32 %v5050, %v5100
      %v5102 = vpop.f32.mrf.mxu0
      %5103 = vmatprep.mubr.bf16.mxu0 0
      %5104 = vmatmul.mubr.bf16.gmra.mxu0 %v4891
      %v5105 = vpop.f32.mrf.mxu0
      %v5106 = vadd.f32 %v5050, %v5105
      %v5107 = vpop.f32.mrf.mxu0
      %v5108 = vpop.f32.mrf.mxu0
      %v5109 = vadd.f32 %v5050, %v5108
      %v5110 = vpop.f32.mrf.mxu0
      %5111 = vmatprep.mubr.bf16.mxu0 0
      %5112 = vmatmul.mubr.bf16.gmra.mxu0 %v4894
      %v5113 = vpop.f32.mrf.mxu0
      %v5114 = vadd.f32 %v5050, %v5113
      %v5115 = vpop.f32.mrf.mxu0
      %v5116 = vpop.f32.mrf.mxu0
      %v5117 = vadd.f32 %v5050, %v5116
      %v5118 = vpop.f32.mrf.mxu0
      %5119 = vmatprep.mubr.bf16.mxu0 0
      %5120 = vmatmul.mubr.bf16.gmra.mxu0 %v4897
      %v5121 = vpop.f32.mrf.mxu0
      %v5122 = vadd.f32 %v5050, %v5121
      %v5123 = vpop.f32.mrf.mxu0
      %v5124 = vpop.f32.mrf.mxu0
      %v5125 = vadd.f32 %v5050, %v5124
      %v5126 = vpop.f32.mrf.mxu0
      %5127 = vdwg.mxu0
      %v5128 = vpack.c.bf16 %v4965, %v4964
      %v5129 = vpack.c.bf16 %v4967, %v4966
      %v5130 = vpack.c.bf16 %v4969, %v4968
      %v5131 = vpack.c.bf16 %v4971, %v4970
      %5132 = vmatprep.subr.bf16.mxu0 0
      %5133 = vmatpush1.bf16.msra.mxu0 0
      %5134 = vmatprep.subr.bf16.mxu0 0
      %5135 = vmatpush1.bf16.msra.mxu0 0
      %5136 = vmatprep.subr.bf16.mxu0 0
      %5137 = vmatpush1.bf16.msra.mxu0 0
      %5138 = vmatprep.subr.bf16.mxu0 0
      %5139 = vmatpush1.bf16.msra.mxu0 0
      %5140 = vmatprep.subr.bf16.mxu0 0
      %5141 = vmatpush1.bf16.msra.mxu0 %v5131
      %5142 = vmatprep.subr.bf16.mxu0 0
      %5143 = vmatpush1.bf16.msra.mxu0 %v5130
      %5144 = vmatprep.subr.bf16.mxu0 0
      %5145 = vmatpush1.bf16.msra.mxu0 %v5129
      %5146 = vmatprep.subr.bf16.mxu0 0
      %5147 = vmatpush1.bf16.msra.mxu0 %v5128
      %5148 = vmatprep.subr.bf16.mxu0 0
      %5149 = vmatpush2.bf16.msra.mxu0 0
      %5150 = vmatprep.subr.bf16.mxu0 0
      %5151 = vmatpush2.bf16.msra.mxu0 0
      %5152 = vmatprep.subr.bf16.mxu0 0
      %5153 = vmatpush2.bf16.msra.mxu0 0
      %5154 = vmatprep.subr.bf16.mxu0 0
      %5155 = vmatpush2.bf16.msra.mxu0 0
      %5156 = vmatprep.subr.bf16.mxu0 0
      %5157 = vmatpush2.bf16.msra.mxu0 0
      %5158 = vmatprep.subr.bf16.mxu0 0
      %5159 = vmatpush2.bf16.msra.mxu0 0
      %5160 = vmatprep.subr.bf16.mxu0 0
      %5161 = vmatpush2.bf16.msra.mxu0 0
      %5162 = vmatprep.subr.bf16.mxu0 0
      %5163 = vmatpush2.bf16.msra.mxu0 0
      %5164 = vmatprep.mubr.bf16.mxu0 0
      %5165 = vmatmul.mubr.bf16.gmra.mxu0 %v1618
      %v5166 = vpop.f32.mrf.mxu0
      %v5167 = vadd.f32 0.0, %v5166
      %v5168 = vpop.f32.mrf.mxu0
      %v5169 = vpop.f32.mrf.mxu0
      %v5170 = vadd.f32 0.0, %v5169
      %v5171 = vpop.f32.mrf.mxu0
      %5172 = vmatprep.mubr.bf16.mxu0 0
      %5173 = vmatmul.mubr.bf16.gmra.mxu0 %v1621
      %v5174 = vpop.f32.mrf.mxu0
      %v5175 = vadd.f32 0.0, %v5174
      %v5176 = vpop.f32.mrf.mxu0
      %v5177 = vpop.f32.mrf.mxu0
      %v5178 = vadd.f32 0.0, %v5177
      %v5179 = vpop.f32.mrf.mxu0
      %5180 = vmatprep.mubr.bf16.mxu0 0
      %5181 = vmatmul.mubr.bf16.gmra.mxu0 %v1624
      %v5182 = vpop.f32.mrf.mxu0
      %v5183 = vadd.f32 0.0, %v5182
      %v5184 = vpop.f32.mrf.mxu0
      %v5185 = vpop.f32.mrf.mxu0
      %v5186 = vadd.f32 0.0, %v5185
      %v5187 = vpop.f32.mrf.mxu0
      %5188 = vmatprep.mubr.bf16.mxu0 0
      %5189 = vmatmul.mubr.bf16.gmra.mxu0 %v1627
      %v5190 = vpop.f32.mrf.mxu0
      %v5191 = vadd.f32 0.0, %v5190
      %v5192 = vpop.f32.mrf.mxu0
      %v5193 = vpop.f32.mrf.mxu0
      %v5194 = vadd.f32 0.0, %v5193
      %v5195 = vpop.f32.mrf.mxu0
      %5196 = vmatprep.mubr.bf16.mxu0 0
      %5197 = vmatmul.mubr.bf16.gmra.mxu0 %v1630
      %v5198 = vpop.f32.mrf.mxu0
      %v5199 = vadd.f32 0.0, %v5198
      %v5200 = vpop.f32.mrf.mxu0
      %v5201 = vpop.f32.mrf.mxu0
      %v5202 = vadd.f32 0.0, %v5201
      %v5203 = vpop.f32.mrf.mxu0
      %5204 = vmatprep.mubr.bf16.mxu0 0
      %5205 = vmatmul.mubr.bf16.gmra.mxu0 %v1633
      %v5206 = vpop.f32.mrf.mxu0
      %v5207 = vadd.f32 0.0, %v5206
      %v5208 = vpop.f32.mrf.mxu0
      %v5209 = vpop.f32.mrf.mxu0
      %v5210 = vadd.f32 0.0, %v5209
      %v5211 = vpop.f32.mrf.mxu0
      %5212 = vmatprep.mubr.bf16.mxu0 0
      %5213 = vmatmul.mubr.bf16.gmra.mxu0 %v1636
      %v5214 = vpop.f32.mrf.mxu0
      %v5215 = vadd.f32 0.0, %v5214
      %v5216 = vpop.f32.mrf.mxu0
      %v5217 = vpop.f32.mrf.mxu0
      %v5218 = vadd.f32 0.0, %v5217
      %v5219 = vpop.f32.mrf.mxu0
      %5220 = vmatprep.mubr.bf16.mxu0 0
      %5221 = vmatmul.mubr.bf16.gmra.mxu0 %v1639
      %v5222 = vpop.f32.mrf.mxu0
      %v5223 = vadd.f32 0.0, %v5222
      %v5224 = vpop.f32.mrf.mxu0
      %v5225 = vpop.f32.mrf.mxu0
      %v5226 = vadd.f32 0.0, %v5225
      %v5227 = vpop.f32.mrf.mxu0
      %5228 = vmatprep.mubr.bf16.mxu0 0
      %5229 = vmatmul.mubr.bf16.gmra.mxu0 %v1642
      %v5230 = vpop.f32.mrf.mxu0
      %v5231 = vadd.f32 0.0, %v5230
      %v5232 = vpop.f32.mrf.mxu0
      %v5233 = vpop.f32.mrf.mxu0
      %v5234 = vadd.f32 0.0, %v5233
      %v5235 = vpop.f32.mrf.mxu0
      %5236 = vmatprep.mubr.bf16.mxu0 0
      %5237 = vmatmul.mubr.bf16.gmra.mxu0 %v1645
      %v5238 = vpop.f32.mrf.mxu0
      %v5239 = vadd.f32 0.0, %v5238
      %v5240 = vpop.f32.mrf.mxu0
      %v5241 = vpop.f32.mrf.mxu0
      %v5242 = vadd.f32 0.0, %v5241
      %v5243 = vpop.f32.mrf.mxu0
      %5244 = vmatprep.mubr.bf16.mxu0 0
      %5245 = vmatmul.mubr.bf16.gmra.mxu0 %v1648
      %v5246 = vpop.f32.mrf.mxu0
      %v5247 = vadd.f32 0.0, %v5246
      %v5248 = vpop.f32.mrf.mxu0
      %v5249 = vpop.f32.mrf.mxu0
      %v5250 = vadd.f32 0.0, %v5249
      %v5251 = vpop.f32.mrf.mxu0
      %5252 = vmatprep.mubr.bf16.mxu0 0
      %5253 = vmatmul.mubr.bf16.gmra.mxu0 %v1651
      %v5254 = vpop.f32.mrf.mxu0
      %v5255 = vadd.f32 0.0, %v5254
      %v5256 = vpop.f32.mrf.mxu0
      %v5257 = vpop.f32.mrf.mxu0
      %v5258 = vadd.f32 0.0, %v5257
      %v5259 = vpop.f32.mrf.mxu0
      %5260 = vmatprep.mubr.bf16.mxu0 0
      %5261 = vmatmul.mubr.bf16.gmra.mxu0 %v1654
      %v5262 = vpop.f32.mrf.mxu0
      %v5263 = vadd.f32 0.0, %v5262
      %v5264 = vpop.f32.mrf.mxu0
      %v5265 = vpop.f32.mrf.mxu0
      %v5266 = vadd.f32 0.0, %v5265
      %v5267 = vpop.f32.mrf.mxu0
      %5268 = vmatprep.mubr.bf16.mxu0 0
      %5269 = vmatmul.mubr.bf16.gmra.mxu0 %v1657
      %v5270 = vpop.f32.mrf.mxu0
      %v5271 = vadd.f32 0.0, %v5270
      %v5272 = vpop.f32.mrf.mxu0
      %v5273 = vpop.f32.mrf.mxu0
      %v5274 = vadd.f32 0.0, %v5273
      %v5275 = vpop.f32.mrf.mxu0
      %5276 = vmatprep.mubr.bf16.mxu0 0
      %5277 = vmatmul.mubr.bf16.gmra.mxu0 %v1660
      %v5278 = vpop.f32.mrf.mxu0
      %v5279 = vadd.f32 0.0, %v5278
      %v5280 = vpop.f32.mrf.mxu0
      %v5281 = vpop.f32.mrf.mxu0
      %v5282 = vadd.f32 0.0, %v5281
      %v5283 = vpop.f32.mrf.mxu0
      %5284 = vmatprep.mubr.bf16.mxu0 0
      %5285 = vmatmul.mubr.bf16.gmra.mxu0 %v1663
      %v5286 = vpop.f32.mrf.mxu0
      %v5287 = vadd.f32 0.0, %v5286
      %v5288 = vpop.f32.mrf.mxu0
      %v5289 = vpop.f32.mrf.mxu0
      %v5290 = vadd.f32 0.0, %v5289
      %v5291 = vpop.f32.mrf.mxu0
      %5292 = vmatprep.mubr.bf16.mxu0 0
      %5293 = vmatmul.mubr.bf16.gmra.mxu0 %v1666
      %v5294 = vpop.f32.mrf.mxu0
      %v5295 = vadd.f32 0.0, %v5294
      %v5296 = vpop.f32.mrf.mxu0
      %v5297 = vpop.f32.mrf.mxu0
      %v5298 = vadd.f32 0.0, %v5297
      %v5299 = vpop.f32.mrf.mxu0
      %5300 = vmatprep.mubr.bf16.mxu0 0
      %5301 = vmatmul.mubr.bf16.gmra.mxu0 %v1669
      %v5302 = vpop.f32.mrf.mxu0
      %v5303 = vadd.f32 0.0, %v5302
      %v5304 = vpop.f32.mrf.mxu0
      %v5305 = vpop.f32.mrf.mxu0
      %v5306 = vadd.f32 0.0, %v5305
      %v5307 = vpop.f32.mrf.mxu0
      %5308 = vmatprep.mubr.bf16.mxu0 0
      %5309 = vmatmul.mubr.bf16.gmra.mxu0 %v1672
      %v5310 = vpop.f32.mrf.mxu0
      %v5311 = vadd.f32 0.0, %v5310
      %v5312 = vpop.f32.mrf.mxu0
      %v5313 = vpop.f32.mrf.mxu0
      %v5314 = vadd.f32 0.0, %v5313
      %v5315 = vpop.f32.mrf.mxu0
      %5316 = vmatprep.mubr.bf16.mxu0 0
      %5317 = vmatmul.mubr.bf16.gmra.mxu0 %v1675
      %v5318 = vpop.f32.mrf.mxu0
      %v5319 = vadd.f32 0.0, %v5318
      %v5320 = vpop.f32.mrf.mxu0
      %v5321 = vpop.f32.mrf.mxu0
      %v5322 = vadd.f32 0.0, %v5321
      %v5323 = vpop.f32.mrf.mxu0
      %5324 = vmatprep.mubr.bf16.mxu0 0
      %5325 = vmatmul.mubr.bf16.gmra.mxu0 %v1678
      %v5326 = vpop.f32.mrf.mxu0
      %v5327 = vadd.f32 0.0, %v5326
      %v5328 = vpop.f32.mrf.mxu0
      %v5329 = vpop.f32.mrf.mxu0
      %v5330 = vadd.f32 0.0, %v5329
      %v5331 = vpop.f32.mrf.mxu0
      %5332 = vmatprep.mubr.bf16.mxu0 0
      %5333 = vmatmul.mubr.bf16.gmra.mxu0 %v1681
      %v5334 = vpop.f32.mrf.mxu0
      %v5335 = vadd.f32 0.0, %v5334
      %v5336 = vpop.f32.mrf.mxu0
      %v5337 = vpop.f32.mrf.mxu0
      %v5338 = vadd.f32 0.0, %v5337
      %v5339 = vpop.f32.mrf.mxu0
      %5340 = vmatprep.mubr.bf16.mxu0 0
      %5341 = vmatmul.mubr.bf16.gmra.mxu0 %v1684
      %v5342 = vpop.f32.mrf.mxu0
      %v5343 = vadd.f32 0.0, %v5342
      %v5344 = vpop.f32.mrf.mxu0
      %v5345 = vpop.f32.mrf.mxu0
      %v5346 = vadd.f32 0.0, %v5345
      %v5347 = vpop.f32.mrf.mxu0
      %5348 = vmatprep.mubr.bf16.mxu0 0
      %5349 = vmatmul.mubr.bf16.gmra.mxu0 %v1687
      %v5350 = vpop.f32.mrf.mxu0
      %v5351 = vadd.f32 0.0, %v5350
      %v5352 = vpop.f32.mrf.mxu0
      %v5353 = vpop.f32.mrf.mxu0
      %v5354 = vadd.f32 0.0, %v5353
      %v5355 = vpop.f32.mrf.mxu0
      %5356 = vmatprep.mubr.bf16.mxu0 0
      %5357 = vmatmul.mubr.bf16.gmra.mxu0 %v1690
      %v5358 = vpop.f32.mrf.mxu0
      %v5359 = vadd.f32 0.0, %v5358
      %v5360 = vpop.f32.mrf.mxu0
      %v5361 = vpop.f32.mrf.mxu0
      %v5362 = vadd.f32 0.0, %v5361
      %v5363 = vpop.f32.mrf.mxu0
      %5364 = vmatprep.mubr.bf16.mxu0 0
      %5365 = vmatmul.mubr.bf16.gmra.mxu0 %v1693
      %v5366 = vpop.f32.mrf.mxu0
      %v5367 = vadd.f32 0.0, %v5366
      %v5368 = vpop.f32.mrf.mxu0
      %v5369 = vpop.f32.mrf.mxu0
      %v5370 = vadd.f32 0.0, %v5369
      %v5371 = vpop.f32.mrf.mxu0
      %5372 = vmatprep.mubr.bf16.mxu0 0
      %5373 = vmatmul.mubr.bf16.gmra.mxu0 %v1696
      %v5374 = vpop.f32.mrf.mxu0
      %v5375 = vadd.f32 0.0, %v5374
      %v5376 = vpop.f32.mrf.mxu0
      %v5377 = vpop.f32.mrf.mxu0
      %v5378 = vadd.f32 0.0, %v5377
      %v5379 = vpop.f32.mrf.mxu0
      %5380 = vmatprep.mubr.bf16.mxu0 0
      %5381 = vmatmul.mubr.bf16.gmra.mxu0 %v1699
      %v5382 = vpop.f32.mrf.mxu0
      %v5383 = vadd.f32 0.0, %v5382
      %v5384 = vpop.f32.mrf.mxu0
      %v5385 = vpop.f32.mrf.mxu0
      %v5386 = vadd.f32 0.0, %v5385
      %v5387 = vpop.f32.mrf.mxu0
      %5388 = vmatprep.mubr.bf16.mxu0 0
      %5389 = vmatmul.mubr.bf16.gmra.mxu0 %v1702
      %v5390 = vpop.f32.mrf.mxu0
      %v5391 = vadd.f32 0.0, %v5390
      %v5392 = vpop.f32.mrf.mxu0
      %v5393 = vpop.f32.mrf.mxu0
      %v5394 = vadd.f32 0.0, %v5393
      %v5395 = vpop.f32.mrf.mxu0
      %5396 = vmatprep.mubr.bf16.mxu0 0
      %5397 = vmatmul.mubr.bf16.gmra.mxu0 %v1705
      %v5398 = vpop.f32.mrf.mxu0
      %v5399 = vadd.f32 0.0, %v5398
      %v5400 = vpop.f32.mrf.mxu0
      %v5401 = vpop.f32.mrf.mxu0
      %v5402 = vadd.f32 0.0, %v5401
      %v5403 = vpop.f32.mrf.mxu0
      %5404 = vmatprep.mubr.bf16.mxu0 0
      %5405 = vmatmul.mubr.bf16.gmra.mxu0 %v1708
      %v5406 = vpop.f32.mrf.mxu0
      %v5407 = vadd.f32 0.0, %v5406
      %v5408 = vpop.f32.mrf.mxu0
      %v5409 = vpop.f32.mrf.mxu0
      %v5410 = vadd.f32 0.0, %v5409
      %v5411 = vpop.f32.mrf.mxu0
      %5412 = vmatprep.mubr.bf16.mxu0 0
      %5413 = vmatmul.mubr.bf16.gmra.mxu0 %v1711
      %v5414 = vpop.f32.mrf.mxu0
      %v5415 = vadd.f32 0.0, %v5414
      %v5416 = vpop.f32.mrf.mxu0
      %v5417 = vpop.f32.mrf.mxu0
      %v5418 = vadd.f32 0.0, %v5417
      %v5419 = vpop.f32.mrf.mxu0
      %5420 = vdwg.mxu0
      %v5421 = vmul.f32 %v5167, %v1325
      %v5422 = vmul.f32 %v5170, %v1326
      %v5423 = vmul.f32 %v5175, %v1327
      %v5424 = vmul.f32 %v5178, %v1328
      %v5425 = vmul.f32 %v5183, %v1329
      %v5426 = vmul.f32 %v5186, %v1330
      %v5427 = vmul.f32 %v5191, %v1331
      %v5428 = vmul.f32 %v5194, %v1332
      %v5429 = vmul.f32 %v5199, %v1333
      %v5430 = vmul.f32 %v5202, %v1334
      %v5431 = vmul.f32 %v5207, %v1335
      %v5432 = vmul.f32 %v5210, %v1336
      %v5433 = vmul.f32 %v5215, %v1337
      %v5434 = vmul.f32 %v5218, %v1338
      %v5435 = vmul.f32 %v5223, %v1339
      %v5436 = vmul.f32 %v5226, %v1340
      %v5437 = vmul.f32 %v5231, %v1341
      %v5438 = vmul.f32 %v5234, %v1342
      %v5439 = vmul.f32 %v5239, %v1343
      %v5440 = vmul.f32 %v5242, %v1344
      %v5441 = vmul.f32 %v5247, %v1345
      %v5442 = vmul.f32 %v5250, %v1346
      %v5443 = vmul.f32 %v5255, %v1347
      %v5444 = vmul.f32 %v5258, %v1348
      %v5445 = vmul.f32 %v5263, %v1349
      %v5446 = vmul.f32 %v5266, %v1350
      %v5447 = vmul.f32 %v5271, %v1351
      %v5448 = vmul.f32 %v5274, %v1352
      %v5449 = vmul.f32 %v5279, %v1353
      %v5450 = vmul.f32 %v5282, %v1354
      %v5451 = vmul.f32 %v5287, %v1355
      %v5452 = vmul.f32 %v5290, %v1356
      %v5453 = vmul.f32 %v5295, %v1357
      %v5454 = vmul.f32 %v5298, %v1358
      %v5455 = vmul.f32 %v5303, %v1359
      %v5456 = vmul.f32 %v5306, %v1360
      %v5457 = vmul.f32 %v5311, %v1361
      %v5458 = vmul.f32 %v5314, %v1362
      %v5459 = vmul.f32 %v5319, %v1363
      %v5460 = vmul.f32 %v5322, %v1364
      %v5461 = vmul.f32 %v5327, %v1365
      %v5462 = vmul.f32 %v5330, %v1366
      %v5463 = vmul.f32 %v5335, %v1367
      %v5464 = vmul.f32 %v5338, %v1368
      %v5465 = vmul.f32 %v5343, %v1369
      %v5466 = vmul.f32 %v5346, %v1370
      %v5467 = vmul.f32 %v5351, %v1371
      %v5468 = vmul.f32 %v5354, %v1372
      %v5469 = vmul.f32 %v5359, %v1373
      %v5470 = vmul.f32 %v5362, %v1374
      %v5471 = vmul.f32 %v5367, %v1375
      %v5472 = vmul.f32 %v5370, %v1376
      %v5473 = vmul.f32 %v5375, %v1377
      %v5474 = vmul.f32 %v5378, %v1378
      %v5475 = vmul.f32 %v5383, %v1379
      %v5476 = vmul.f32 %v5386, %v1380
      %v5477 = vmul.f32 %v5391, %v1381
      %v5478 = vmul.f32 %v5394, %v1382
      %v5479 = vmul.f32 %v5399, %v1383
      %v5480 = vmul.f32 %v5402, %v1384
      %v5481 = vmul.f32 %v5407, %v1385
      %v5482 = vmul.f32 %v5410, %v1386
      %v5483 = vmul.f32 %v5415, %v1387
      %v5484 = vmul.f32 %v5418, %v1388
      %v5485 = vpack.c.bf16 %v5422, %v5421
      %v5486 = vpack.c.bf16 %v5424, %v5423
      %v5487 = vpack.c.bf16 %v5426, %v5425
      %v5488 = vpack.c.bf16 %v5428, %v5427
      %v5489 = vpack.c.bf16 %v5430, %v5429
      %v5490 = vpack.c.bf16 %v5432, %v5431
      %v5491 = vpack.c.bf16 %v5434, %v5433
      %v5492 = vpack.c.bf16 %v5436, %v5435
      %v5493 = vpack.c.bf16 %v5438, %v5437
      %v5494 = vpack.c.bf16 %v5440, %v5439
      %v5495 = vpack.c.bf16 %v5442, %v5441
      %v5496 = vpack.c.bf16 %v5444, %v5443
      %v5497 = vpack.c.bf16 %v5446, %v5445
      %v5498 = vpack.c.bf16 %v5448, %v5447
      %v5499 = vpack.c.bf16 %v5450, %v5449
      %v5500 = vpack.c.bf16 %v5452, %v5451
      %v5501 = vpack.c.bf16 %v5454, %v5453
      %v5502 = vpack.c.bf16 %v5456, %v5455
      %v5503 = vpack.c.bf16 %v5458, %v5457
      %v5504 = vpack.c.bf16 %v5460, %v5459
      %v5505 = vpack.c.bf16 %v5462, %v5461
      %v5506 = vpack.c.bf16 %v5464, %v5463
      %v5507 = vpack.c.bf16 %v5466, %v5465
      %v5508 = vpack.c.bf16 %v5468, %v5467
      %v5509 = vpack.c.bf16 %v5470, %v5469
      %v5510 = vpack.c.bf16 %v5472, %v5471
      %v5511 = vpack.c.bf16 %v5474, %v5473
      %v5512 = vpack.c.bf16 %v5476, %v5475
      %v5513 = vpack.c.bf16 %v5478, %v5477
      %v5514 = vpack.c.bf16 %v5480, %v5479
      %v5515 = vpack.c.bf16 %v5482, %v5481
      %v5516 = vpack.c.bf16 %v5484, %v5483
      %v5517 = vpack.c.bf16 %v5020, %v5017
      %v5518 = vpack.c.bf16 %v5028, %v5025
      %v5519 = vpack.c.bf16 %v5036, %v5033
      %v5520 = vpack.c.bf16 %v5044, %v5041
      %v5522 = vsel %vm431, %v5485, 0
      %v5525 = vsel %vm431, %v5486, 0
      %v5528 = vsel %vm431, %v5487, 0
      %v5531 = vsel %vm431, %v5488, 0
      %v5534 = vsel %vm431, %v5489, 0
      %v5537 = vsel %vm431, %v5490, 0
      %v5540 = vsel %vm431, %v5491, 0
      %v5543 = vsel %vm431, %v5492, 0
      %v5546 = vsel %vm431, %v5493, 0
      %v5549 = vsel %vm431, %v5494, 0
      %v5552 = vsel %vm431, %v5495, 0
      %v5555 = vsel %vm431, %v5496, 0
      %v5558 = vsel %vm431, %v5497, 0
      %v5561 = vsel %vm431, %v5498, 0
      %v5564 = vsel %vm431, %v5499, 0
      %v5567 = vsel %vm431, %v5500, 0
      %v5570 = vsel %vm431, %v5501, 0
      %v5573 = vsel %vm431, %v5502, 0
      %v5576 = vsel %vm431, %v5503, 0
      %v5579 = vsel %vm431, %v5504, 0
      %v5582 = vsel %vm431, %v5505, 0
      %v5585 = vsel %vm431, %v5506, 0
      %v5588 = vsel %vm431, %v5507, 0
      %v5591 = vsel %vm431, %v5508, 0
      %v5594 = vsel %vm431, %v5509, 0
      %v5597 = vsel %vm431, %v5510, 0
      %v5600 = vsel %vm431, %v5511, 0
      %v5603 = vsel %vm431, %v5512, 0
      %v5606 = vsel %vm431, %v5513, 0
      %v5609 = vsel %vm431, %v5514, 0
      %v5612 = vsel %vm431, %v5515, 0
      %v5615 = vsel %vm431, %v5516, 0
      %v5618 = vsel %vm431, %v5517, 0
      %v5621 = vsel %vm431, %v5518, 0
      %v5624 = vsel %vm431, %v5519, 0
      %v5627 = vsel %vm431, %v5520, 0
      %5629 = vmatprep.subr.bf16.mxu0 0
      %5630 = vmatpush1.bf16.xpose.msra.mxu0 0
      %5631 = vmatprep.subr.bf16.mxu0 0
      %5632 = vmatpush1.bf16.xpose.msra.mxu0 0
      %5633 = vmatprep.subr.bf16.mxu0 0
      %5634 = vmatpush1.bf16.xpose.msra.mxu0 0
      %5635 = vmatprep.subr.bf16.mxu0 0
      %5636 = vmatpush1.bf16.xpose.msra.mxu0 0
      %5637 = vmatprep.subr.bf16.mxu0 0
      %5638 = vmatpush1.bf16.xpose.msra.mxu0 %v5627
      %5639 = vmatprep.subr.bf16.mxu0 0
      %5640 = vmatpush1.bf16.xpose.msra.mxu0 %v5624
      %5641 = vmatprep.subr.bf16.mxu0 0
      %5642 = vmatpush1.bf16.xpose.msra.mxu0 %v5621
      %5643 = vmatprep.subr.bf16.mxu0 0
      %5644 = vmatpush1.bf16.xpose.msra.mxu0 %v5618
      %5645 = vmatprep.subr.bf16.mxu0 0
      %5646 = vmatpush2.bf16.xpose.msra.mxu0 0
      %5647 = vmatprep.subr.bf16.mxu0 0
      %5648 = vmatpush2.bf16.xpose.msra.mxu0 0
      %5649 = vmatprep.subr.bf16.mxu0 0
      %5650 = vmatpush2.bf16.xpose.msra.mxu0 0
      %5651 = vmatprep.subr.bf16.mxu0 0
      %5652 = vmatpush2.bf16.xpose.msra.mxu0 0
      %5653 = vmatprep.subr.bf16.mxu0 0
      %5654 = vmatpush2.bf16.xpose.msra.mxu0 0
      %5655 = vmatprep.subr.bf16.mxu0 0
      %5656 = vmatpush2.bf16.xpose.msra.mxu0 0
      %5657 = vmatprep.subr.bf16.mxu0 0
      %5658 = vmatpush2.bf16.xpose.msra.mxu0 0
      %5659 = vmatprep.subr.bf16.mxu0 0
      %5660 = vmatpush2.bf16.xpose.msra.mxu0 0
      %5661 = vmatprep.mubr.bf16.mxu0 0
      %5662 = vmatmul.mubr.bf16.gmra.mxu0 %v5522
      %v5663 = vpop.f32.mrf.mxu0
      %v5664 = vadd.f32 %v2102, %v5663
      %v5665 = vpop.f32.mrf.mxu0
      %v5666 = vpop.f32.mrf.mxu0
      %v5667 = vadd.f32 %v2103, %v5666
      %v5668 = vpop.f32.mrf.mxu0
      %5669 = vmatprep.mubr.bf16.mxu0 0
      %5670 = vmatmul.mubr.bf16.gmra.mxu0 %v5525
      %v5671 = vpop.f32.mrf.mxu0
      %v5672 = vadd.f32 %v2104, %v5671
      %v5673 = vpop.f32.mrf.mxu0
      %v5674 = vpop.f32.mrf.mxu0
      %v5675 = vadd.f32 %v2105, %v5674
      %v5676 = vpop.f32.mrf.mxu0
      %5677 = vmatprep.mubr.bf16.mxu0 0
      %5678 = vmatmul.mubr.bf16.gmra.mxu0 %v5528
      %v5679 = vpop.f32.mrf.mxu0
      %v5680 = vadd.f32 %v2106, %v5679
      %v5681 = vpop.f32.mrf.mxu0
      %v5682 = vpop.f32.mrf.mxu0
      %v5683 = vadd.f32 %v2107, %v5682
      %v5684 = vpop.f32.mrf.mxu0
      %5685 = vmatprep.mubr.bf16.mxu0 0
      %5686 = vmatmul.mubr.bf16.gmra.mxu0 %v5531
      %v5687 = vpop.f32.mrf.mxu0
      %v5688 = vadd.f32 %v2108, %v5687
      %v5689 = vpop.f32.mrf.mxu0
      %v5690 = vpop.f32.mrf.mxu0
      %v5691 = vadd.f32 %v2109, %v5690
      %v5692 = vpop.f32.mrf.mxu0
      %5693 = vmatprep.mubr.bf16.mxu0 0
      %5694 = vmatmul.mubr.bf16.gmra.mxu0 %v5534
      %v5695 = vpop.f32.mrf.mxu0
      %v5696 = vadd.f32 %v2110, %v5695
      %v5697 = vpop.f32.mrf.mxu0
      %v5698 = vpop.f32.mrf.mxu0
      %v5699 = vadd.f32 %v2111, %v5698
      %v5700 = vpop.f32.mrf.mxu0
      %5701 = vmatprep.mubr.bf16.mxu0 0
      %5702 = vmatmul.mubr.bf16.gmra.mxu0 %v5537
      %v5703 = vpop.f32.mrf.mxu0
      %v5704 = vadd.f32 %v2112, %v5703
      %v5705 = vpop.f32.mrf.mxu0
      %v5706 = vpop.f32.mrf.mxu0
      %v5707 = vadd.f32 %v2113, %v5706
      %v5708 = vpop.f32.mrf.mxu0
      %5709 = vmatprep.mubr.bf16.mxu0 0
      %5710 = vmatmul.mubr.bf16.gmra.mxu0 %v5540
      %v5711 = vpop.f32.mrf.mxu0
      %v5712 = vadd.f32 %v2114, %v5711
      %v5713 = vpop.f32.mrf.mxu0
      %v5714 = vpop.f32.mrf.mxu0
      %v5715 = vadd.f32 %v2115, %v5714
      %v5716 = vpop.f32.mrf.mxu0
      %5717 = vmatprep.mubr.bf16.mxu0 0
      %5718 = vmatmul.mubr.bf16.gmra.mxu0 %v5543
      %v5719 = vpop.f32.mrf.mxu0
      %v5720 = vadd.f32 %v2116, %v5719
      %v5721 = vpop.f32.mrf.mxu0
      %v5722 = vpop.f32.mrf.mxu0
      %v5723 = vadd.f32 %v2117, %v5722
      %v5724 = vpop.f32.mrf.mxu0
      %5725 = vmatprep.mubr.bf16.mxu0 0
      %5726 = vmatmul.mubr.bf16.gmra.mxu0 %v5546
      %v5727 = vpop.f32.mrf.mxu0
      %v5728 = vadd.f32 %v2118, %v5727
      %v5729 = vpop.f32.mrf.mxu0
      %v5730 = vpop.f32.mrf.mxu0
      %v5731 = vadd.f32 %v2119, %v5730
      %v5732 = vpop.f32.mrf.mxu0
      %5733 = vmatprep.mubr.bf16.mxu0 0
      %5734 = vmatmul.mubr.bf16.gmra.mxu0 %v5549
      %v5735 = vpop.f32.mrf.mxu0
      %v5736 = vadd.f32 %v2120, %v5735
      %v5737 = vpop.f32.mrf.mxu0
      %v5738 = vpop.f32.mrf.mxu0
      %v5739 = vadd.f32 %v2121, %v5738
      %v5740 = vpop.f32.mrf.mxu0
      %5741 = vmatprep.mubr.bf16.mxu0 0
      %5742 = vmatmul.mubr.bf16.gmra.mxu0 %v5552
      %v5743 = vpop.f32.mrf.mxu0
      %v5744 = vadd.f32 %v2122, %v5743
      %v5745 = vpop.f32.mrf.mxu0
      %v5746 = vpop.f32.mrf.mxu0
      %v5747 = vadd.f32 %v2123, %v5746
      %v5748 = vpop.f32.mrf.mxu0
      %5749 = vmatprep.mubr.bf16.mxu0 0
      %5750 = vmatmul.mubr.bf16.gmra.mxu0 %v5555
      %v5751 = vpop.f32.mrf.mxu0
      %v5752 = vadd.f32 %v2124, %v5751
      %v5753 = vpop.f32.mrf.mxu0
      %v5754 = vpop.f32.mrf.mxu0
      %v5755 = vadd.f32 %v2125, %v5754
      %v5756 = vpop.f32.mrf.mxu0
      %5757 = vmatprep.mubr.bf16.mxu0 0
      %5758 = vmatmul.mubr.bf16.gmra.mxu0 %v5558
      %v5759 = vpop.f32.mrf.mxu0
      %v5760 = vadd.f32 %v2126, %v5759
      %v5761 = vpop.f32.mrf.mxu0
      %v5762 = vpop.f32.mrf.mxu0
      %v5763 = vadd.f32 %v2127, %v5762
      %v5764 = vpop.f32.mrf.mxu0
      %5765 = vmatprep.mubr.bf16.mxu0 0
      %5766 = vmatmul.mubr.bf16.gmra.mxu0 %v5561
      %v5767 = vpop.f32.mrf.mxu0
      %v5768 = vadd.f32 %v2128, %v5767
      %v5769 = vpop.f32.mrf.mxu0
      %v5770 = vpop.f32.mrf.mxu0
      %v5771 = vadd.f32 %v2129, %v5770
      %v5772 = vpop.f32.mrf.mxu0
      %5773 = vmatprep.mubr.bf16.mxu0 0
      %5774 = vmatmul.mubr.bf16.gmra.mxu0 %v5564
      %v5775 = vpop.f32.mrf.mxu0
      %v5776 = vadd.f32 %v2130, %v5775
      %v5777 = vpop.f32.mrf.mxu0
      %v5778 = vpop.f32.mrf.mxu0
      %v5779 = vadd.f32 %v2131, %v5778
      %v5780 = vpop.f32.mrf.mxu0
      %5781 = vmatprep.mubr.bf16.mxu0 0
      %5782 = vmatmul.mubr.bf16.gmra.mxu0 %v5567
      %v5783 = vpop.f32.mrf.mxu0
      %v5784 = vadd.f32 %v2132, %v5783
      %v5785 = vpop.f32.mrf.mxu0
      %v5786 = vpop.f32.mrf.mxu0
      %v5787 = vadd.f32 %v2133, %v5786
      %v5788 = vpop.f32.mrf.mxu0
      %5789 = vmatprep.mubr.bf16.mxu0 0
      %5790 = vmatmul.mubr.bf16.gmra.mxu0 %v5570
      %v5791 = vpop.f32.mrf.mxu0
      %v5792 = vadd.f32 %v2134, %v5791
      %v5793 = vpop.f32.mrf.mxu0
      %v5794 = vpop.f32.mrf.mxu0
      %v5795 = vadd.f32 %v2135, %v5794
      %v5796 = vpop.f32.mrf.mxu0
      %5797 = vmatprep.mubr.bf16.mxu0 0
      %5798 = vmatmul.mubr.bf16.gmra.mxu0 %v5573
      %v5799 = vpop.f32.mrf.mxu0
      %v5800 = vadd.f32 %v2136, %v5799
      %v5801 = vpop.f32.mrf.mxu0
      %v5802 = vpop.f32.mrf.mxu0
      %v5803 = vadd.f32 %v2137, %v5802
      %v5804 = vpop.f32.mrf.mxu0
      %5805 = vmatprep.mubr.bf16.mxu0 0
      %5806 = vmatmul.mubr.bf16.gmra.mxu0 %v5576
      %v5807 = vpop.f32.mrf.mxu0
      %v5808 = vadd.f32 %v2138, %v5807
      %v5809 = vpop.f32.mrf.mxu0
      %v5810 = vpop.f32.mrf.mxu0
      %v5811 = vadd.f32 %v2139, %v5810
      %v5812 = vpop.f32.mrf.mxu0
      %5813 = vmatprep.mubr.bf16.mxu0 0
      %5814 = vmatmul.mubr.bf16.gmra.mxu0 %v5579
      %v5815 = vpop.f32.mrf.mxu0
      %v5816 = vadd.f32 %v2140, %v5815
      %v5817 = vpop.f32.mrf.mxu0
      %v5818 = vpop.f32.mrf.mxu0
      %v5819 = vadd.f32 %v2141, %v5818
      %v5820 = vpop.f32.mrf.mxu0
      %5821 = vmatprep.mubr.bf16.mxu0 0
      %5822 = vmatmul.mubr.bf16.gmra.mxu0 %v5582
      %v5823 = vpop.f32.mrf.mxu0
      %v5824 = vadd.f32 %v2142, %v5823
      %v5825 = vpop.f32.mrf.mxu0
      %v5826 = vpop.f32.mrf.mxu0
      %v5827 = vadd.f32 %v2143, %v5826
      %v5828 = vpop.f32.mrf.mxu0
      %5829 = vmatprep.mubr.bf16.mxu0 0
      %5830 = vmatmul.mubr.bf16.gmra.mxu0 %v5585
      %v5831 = vpop.f32.mrf.mxu0
      %v5832 = vadd.f32 %v2144, %v5831
      %v5833 = vpop.f32.mrf.mxu0
      %v5834 = vpop.f32.mrf.mxu0
      %v5835 = vadd.f32 %v2145, %v5834
      %v5836 = vpop.f32.mrf.mxu0
      %5837 = vmatprep.mubr.bf16.mxu0 0
      %5838 = vmatmul.mubr.bf16.gmra.mxu0 %v5588
      %v5839 = vpop.f32.mrf.mxu0
      %v5840 = vadd.f32 %v2146, %v5839
      %v5841 = vpop.f32.mrf.mxu0
      %v5842 = vpop.f32.mrf.mxu0
      %v5843 = vadd.f32 %v2147, %v5842
      %v5844 = vpop.f32.mrf.mxu0
      %5845 = vmatprep.mubr.bf16.mxu0 0
      %5846 = vmatmul.mubr.bf16.gmra.mxu0 %v5591
      %v5847 = vpop.f32.mrf.mxu0
      %v5848 = vadd.f32 %v2148, %v5847
      %v5849 = vpop.f32.mrf.mxu0
      %v5850 = vpop.f32.mrf.mxu0
      %v5851 = vadd.f32 %v2149, %v5850
      %v5852 = vpop.f32.mrf.mxu0
      %5853 = vmatprep.mubr.bf16.mxu0 0
      %5854 = vmatmul.mubr.bf16.gmra.mxu0 %v5594
      %v5855 = vpop.f32.mrf.mxu0
      %v5856 = vadd.f32 %v2150, %v5855
      %v5857 = vpop.f32.mrf.mxu0
      %v5858 = vpop.f32.mrf.mxu0
      %v5859 = vadd.f32 %v2151, %v5858
      %v5860 = vpop.f32.mrf.mxu0
      %5861 = vmatprep.mubr.bf16.mxu0 0
      %5862 = vmatmul.mubr.bf16.gmra.mxu0 %v5597
      %v5863 = vpop.f32.mrf.mxu0
      %v5864 = vadd.f32 %v2152, %v5863
      %v5865 = vpop.f32.mrf.mxu0
      %v5866 = vpop.f32.mrf.mxu0
      %v5867 = vadd.f32 %v2153, %v5866
      %v5868 = vpop.f32.mrf.mxu0
      %5869 = vmatprep.mubr.bf16.mxu0 0
      %5870 = vmatmul.mubr.bf16.gmra.mxu0 %v5600
      %v5871 = vpop.f32.mrf.mxu0
      %v5872 = vadd.f32 %v2154, %v5871
      %v5873 = vpop.f32.mrf.mxu0
      %v5874 = vpop.f32.mrf.mxu0
      %v5875 = vadd.f32 %v2155, %v5874
      %v5876 = vpop.f32.mrf.mxu0
      %5877 = vmatprep.mubr.bf16.mxu0 0
      %5878 = vmatmul.mubr.bf16.gmra.mxu0 %v5603
      %v5879 = vpop.f32.mrf.mxu0
      %v5880 = vadd.f32 %v2156, %v5879
      %v5881 = vpop.f32.mrf.mxu0
      %v5882 = vpop.f32.mrf.mxu0
      %v5883 = vadd.f32 %v2157, %v5882
      %v5884 = vpop.f32.mrf.mxu0
      %5885 = vmatprep.mubr.bf16.mxu0 0
      %5886 = vmatmul.mubr.bf16.gmra.mxu0 %v5606
      %v5887 = vpop.f32.mrf.mxu0
      %v5888 = vadd.f32 %v2158, %v5887
      %v5889 = vpop.f32.mrf.mxu0
      %v5890 = vpop.f32.mrf.mxu0
      %v5891 = vadd.f32 %v2159, %v5890
      %v5892 = vpop.f32.mrf.mxu0
      %5893 = vmatprep.mubr.bf16.mxu0 0
      %5894 = vmatmul.mubr.bf16.gmra.mxu0 %v5609
      %v5895 = vpop.f32.mrf.mxu0
      %v5896 = vadd.f32 %v2160, %v5895
      %v5897 = vpop.f32.mrf.mxu0
      %v5898 = vpop.f32.mrf.mxu0
      %v5899 = vadd.f32 %v2161, %v5898
      %v5900 = vpop.f32.mrf.mxu0
      %5901 = vmatprep.mubr.bf16.mxu0 0
      %5902 = vmatmul.mubr.bf16.gmra.mxu0 %v5612
      %v5903 = vpop.f32.mrf.mxu0
      %v5904 = vadd.f32 %v2162, %v5903
      %v5905 = vpop.f32.mrf.mxu0
      %v5906 = vpop.f32.mrf.mxu0
      %v5907 = vadd.f32 %v2163, %v5906
      %v5908 = vpop.f32.mrf.mxu0
      %5909 = vmatprep.mubr.bf16.mxu0 0
      %5910 = vmatmul.mubr.bf16.gmra.mxu0 %v5615
      %v5911 = vpop.f32.mrf.mxu0
      %v5912 = vadd.f32 %v2164, %v5911
      %v5913 = vpop.f32.mrf.mxu0
      %v5914 = vpop.f32.mrf.mxu0
      %v5915 = vadd.f32 %v2165, %v5914
      %v5916 = vpop.f32.mrf.mxu0
      %5917 = vdwg.mxu0
      %v5918 = vsel %vm766, %v5664, -inf
      %5919 = vmax.xlane.f32.xlu0 %v5918
      %v5920 = vpop.xlane.xlu0 %5919
      %v5921 = vsel %vm766, %v5667, -inf
      %5922 = vmax.xlane.f32.xlu0 %v5921
      %v5923 = vpop.xlane.xlu0 %5922
      %v5924 = vsel %vm766, %v5672, -inf
      %5925 = vmax.xlane.f32.xlu0 %v5924
      %v5926 = vpop.xlane.xlu0 %5925
      %v5927 = vsel %vm766, %v5675, -inf
      %5928 = vmax.xlane.f32.xlu0 %v5927
      %v5929 = vpop.xlane.xlu0 %5928
      %v5930 = vsel %vm766, %v5680, -inf
      %5931 = vmax.xlane.f32.xlu0 %v5930
      %v5932 = vpop.xlane.xlu0 %5931
      %v5933 = vsel %vm766, %v5683, -inf
      %5934 = vmax.xlane.f32.xlu0 %v5933
      %v5935 = vpop.xlane.xlu0 %5934
      %v5936 = vsel %vm766, %v5688, -inf
      %5937 = vmax.xlane.f32.xlu0 %v5936
      %v5938 = vpop.xlane.xlu0 %5937
      %v5939 = vsel %vm766, %v5691, -inf
      %5940 = vmax.xlane.f32.xlu0 %v5939
      %v5941 = vpop.xlane.xlu0 %5940
      %v5942 = vsel %vm766, %v5696, -inf
      %5943 = vmax.xlane.f32.xlu0 %v5942
      %v5944 = vpop.xlane.xlu0 %5943
      %v5945 = vsel %vm766, %v5699, -inf
      %5946 = vmax.xlane.f32.xlu0 %v5945
      %v5947 = vpop.xlane.xlu0 %5946
      %v5948 = vsel %vm766, %v5704, -inf
      %5949 = vmax.xlane.f32.xlu0 %v5948
      %v5950 = vpop.xlane.xlu0 %5949
      %v5951 = vsel %vm766, %v5707, -inf
      %5952 = vmax.xlane.f32.xlu0 %v5951
      %v5953 = vpop.xlane.xlu0 %5952
      %v5954 = vsel %vm766, %v5712, -inf
      %5955 = vmax.xlane.f32.xlu0 %v5954
      %v5956 = vpop.xlane.xlu0 %5955
      %v5957 = vsel %vm766, %v5715, -inf
      %5958 = vmax.xlane.f32.xlu0 %v5957
      %v5959 = vpop.xlane.xlu0 %5958
      %v5960 = vsel %vm766, %v5720, -inf
      %5961 = vmax.xlane.f32.xlu0 %v5960
      %v5962 = vpop.xlane.xlu0 %5961
      %v5963 = vsel %vm766, %v5723, -inf
      %5964 = vmax.xlane.f32.xlu0 %v5963
      %v5965 = vpop.xlane.xlu0 %5964
      %v5966 = vsel %vm766, %v5728, -inf
      %5967 = vmax.xlane.f32.xlu0 %v5966
      %v5968 = vpop.xlane.xlu0 %5967
      %v5969 = vsel %vm766, %v5731, -inf
      %5970 = vmax.xlane.f32.xlu0 %v5969
      %v5971 = vpop.xlane.xlu0 %5970
      %v5972 = vsel %vm766, %v5736, -inf
      %5973 = vmax.xlane.f32.xlu0 %v5972
      %v5974 = vpop.xlane.xlu0 %5973
      %v5975 = vsel %vm766, %v5739, -inf
      %5976 = vmax.xlane.f32.xlu0 %v5975
      %v5977 = vpop.xlane.xlu0 %5976
      %v5978 = vsel %vm766, %v5744, -inf
      %5979 = vmax.xlane.f32.xlu0 %v5978
      %v5980 = vpop.xlane.xlu0 %5979
      %v5981 = vsel %vm766, %v5747, -inf
      %5982 = vmax.xlane.f32.xlu0 %v5981
      %v5983 = vpop.xlane.xlu0 %5982
      %v5984 = vsel %vm766, %v5752, -inf
      %5985 = vmax.xlane.f32.xlu0 %v5984
      %v5986 = vpop.xlane.xlu0 %5985
      %v5987 = vsel %vm766, %v5755, -inf
      %5988 = vmax.xlane.f32.xlu0 %v5987
      %v5989 = vpop.xlane.xlu0 %5988
      %v5990 = vsel %vm766, %v5760, -inf
      %5991 = vmax.xlane.f32.xlu0 %v5990
      %v5992 = vpop.xlane.xlu0 %5991
      %v5993 = vsel %vm766, %v5763, -inf
      %5994 = vmax.xlane.f32.xlu0 %v5993
      %v5995 = vpop.xlane.xlu0 %5994
      %v5996 = vsel %vm766, %v5768, -inf
      %5997 = vmax.xlane.f32.xlu0 %v5996
      %v5998 = vpop.xlane.xlu0 %5997
      %v5999 = vsel %vm766, %v5771, -inf
      %6000 = vmax.xlane.f32.xlu0 %v5999
      %v6001 = vpop.xlane.xlu0 %6000
      %v6002 = vsel %vm766, %v5776, -inf
      %6003 = vmax.xlane.f32.xlu0 %v6002
      %v6004 = vpop.xlane.xlu0 %6003
      %v6005 = vsel %vm766, %v5779, -inf
      %6006 = vmax.xlane.f32.xlu0 %v6005
      %v6007 = vpop.xlane.xlu0 %6006
      %v6008 = vsel %vm766, %v5784, -inf
      %6009 = vmax.xlane.f32.xlu0 %v6008
      %v6010 = vpop.xlane.xlu0 %6009
      %v6011 = vsel %vm766, %v5787, -inf
      %6012 = vmax.xlane.f32.xlu0 %v6011
      %v6013 = vpop.xlane.xlu0 %6012
      %v6014 = vsel %vm766, %v5792, -inf
      %6015 = vmax.xlane.f32.xlu0 %v6014
      %v6016 = vpop.xlane.xlu0 %6015
      %v6017 = vsel %vm766, %v5795, -inf
      %6018 = vmax.xlane.f32.xlu0 %v6017
      %v6019 = vpop.xlane.xlu0 %6018
      %v6020 = vsel %vm766, %v5800, -inf
      %6021 = vmax.xlane.f32.xlu0 %v6020
      %v6022 = vpop.xlane.xlu0 %6021
      %v6023 = vsel %vm766, %v5803, -inf
      %6024 = vmax.xlane.f32.xlu0 %v6023
      %v6025 = vpop.xlane.xlu0 %6024
      %v6026 = vsel %vm766, %v5808, -inf
      %6027 = vmax.xlane.f32.xlu0 %v6026
      %v6028 = vpop.xlane.xlu0 %6027
      %v6029 = vsel %vm766, %v5811, -inf
      %6030 = vmax.xlane.f32.xlu0 %v6029
      %v6031 = vpop.xlane.xlu0 %6030
      %v6032 = vsel %vm766, %v5816, -inf
      %6033 = vmax.xlane.f32.xlu0 %v6032
      %v6034 = vpop.xlane.xlu0 %6033
      %v6035 = vsel %vm766, %v5819, -inf
      %6036 = vmax.xlane.f32.xlu0 %v6035
      %v6037 = vpop.xlane.xlu0 %6036
      %v6038 = vsel %vm766, %v5824, -inf
      %6039 = vmax.xlane.f32.xlu0 %v6038
      %v6040 = vpop.xlane.xlu0 %6039
      %v6041 = vsel %vm766, %v5827, -inf
      %6042 = vmax.xlane.f32.xlu0 %v6041
      %v6043 = vpop.xlane.xlu0 %6042
      %v6044 = vsel %vm766, %v5832, -inf
      %6045 = vmax.xlane.f32.xlu0 %v6044
      %v6046 = vpop.xlane.xlu0 %6045
      %v6047 = vsel %vm766, %v5835, -inf
      %6048 = vmax.xlane.f32.xlu0 %v6047
      %v6049 = vpop.xlane.xlu0 %6048
      %v6050 = vsel %vm766, %v5840, -inf
      %6051 = vmax.xlane.f32.xlu0 %v6050
      %v6052 = vpop.xlane.xlu0 %6051
      %v6053 = vsel %vm766, %v5843, -inf
      %6054 = vmax.xlane.f32.xlu0 %v6053
      %v6055 = vpop.xlane.xlu0 %6054
      %v6056 = vsel %vm766, %v5848, -inf
      %6057 = vmax.xlane.f32.xlu0 %v6056
      %v6058 = vpop.xlane.xlu0 %6057
      %v6059 = vsel %vm766, %v5851, -inf
      %6060 = vmax.xlane.f32.xlu0 %v6059
      %v6061 = vpop.xlane.xlu0 %6060
      %v6062 = vsel %vm766, %v5856, -inf
      %6063 = vmax.xlane.f32.xlu0 %v6062
      %v6064 = vpop.xlane.xlu0 %6063
      %v6065 = vsel %vm766, %v5859, -inf
      %6066 = vmax.xlane.f32.xlu0 %v6065
      %v6067 = vpop.xlane.xlu0 %6066
      %v6068 = vsel %vm766, %v5864, -inf
      %6069 = vmax.xlane.f32.xlu0 %v6068
      %v6070 = vpop.xlane.xlu0 %6069
      %v6071 = vsel %vm766, %v5867, -inf
      %6072 = vmax.xlane.f32.xlu0 %v6071
      %v6073 = vpop.xlane.xlu0 %6072
      %v6074 = vsel %vm766, %v5872, -inf
      %6075 = vmax.xlane.f32.xlu0 %v6074
      %v6076 = vpop.xlane.xlu0 %6075
      %v6077 = vsel %vm766, %v5875, -inf
      %6078 = vmax.xlane.f32.xlu0 %v6077
      %v6079 = vpop.xlane.xlu0 %6078
      %v6080 = vsel %vm766, %v5880, -inf
      %6081 = vmax.xlane.f32.xlu0 %v6080
      %v6082 = vpop.xlane.xlu0 %6081
      %v6083 = vsel %vm766, %v5883, -inf
      %6084 = vmax.xlane.f32.xlu0 %v6083
      %v6085 = vpop.xlane.xlu0 %6084
      %v6086 = vsel %vm766, %v5888, -inf
      %6087 = vmax.xlane.f32.xlu0 %v6086
      %v6088 = vpop.xlane.xlu0 %6087
      %v6089 = vsel %vm766, %v5891, -inf
      %6090 = vmax.xlane.f32.xlu0 %v6089
      %v6091 = vpop.xlane.xlu0 %6090
      %v6092 = vsel %vm766, %v5896, -inf
      %6093 = vmax.xlane.f32.xlu0 %v6092
      %v6094 = vpop.xlane.xlu0 %6093
      %v6095 = vsel %vm766, %v5899, -inf
      %6096 = vmax.xlane.f32.xlu0 %v6095
      %v6097 = vpop.xlane.xlu0 %6096
      %v6098 = vsel %vm766, %v5904, -inf
      %6099 = vmax.xlane.f32.xlu0 %v6098
      %v6100 = vpop.xlane.xlu0 %6099
      %v6101 = vsel %vm766, %v5907, -inf
      %6102 = vmax.xlane.f32.xlu0 %v6101
      %v6103 = vpop.xlane.xlu0 %6102
      %v6104 = vsel %vm766, %v5912, -inf
      %6105 = vmax.xlane.f32.xlu0 %v6104
      %v6106 = vpop.xlane.xlu0 %6105
      %v6107 = vsel %vm766, %v5915, -inf
      %6108 = vmax.xlane.f32.xlu0 %v6107
      %v6109 = vpop.xlane.xlu0 %6108
      %v6110 = vsub.f32 %v5664, %v5920
      %v6111 = vsub.f32 %v5667, %v5923
      %v6112 = vsub.f32 %v5672, %v5926
      %v6113 = vsub.f32 %v5675, %v5929
      %v6114 = vsub.f32 %v5680, %v5932
      %v6115 = vsub.f32 %v5683, %v5935
      %v6116 = vsub.f32 %v5688, %v5938
      %v6117 = vsub.f32 %v5691, %v5941
      %v6118 = vsub.f32 %v5696, %v5944
      %v6119 = vsub.f32 %v5699, %v5947
      %v6120 = vsub.f32 %v5704, %v5950
      %v6121 = vsub.f32 %v5707, %v5953
      %v6122 = vsub.f32 %v5712, %v5956
      %v6123 = vsub.f32 %v5715, %v5959
      %v6124 = vsub.f32 %v5720, %v5962
      %v6125 = vsub.f32 %v5723, %v5965
      %v6126 = vsub.f32 %v5728, %v5968
      %v6127 = vsub.f32 %v5731, %v5971
      %v6128 = vsub.f32 %v5736, %v5974
      %v6129 = vsub.f32 %v5739, %v5977
      %v6130 = vsub.f32 %v5744, %v5980
      %v6131 = vsub.f32 %v5747, %v5983
      %v6132 = vsub.f32 %v5752, %v5986
      %v6133 = vsub.f32 %v5755, %v5989
      %v6134 = vsub.f32 %v5760, %v5992
      %v6135 = vsub.f32 %v5763, %v5995
      %v6136 = vsub.f32 %v5768, %v5998
      %v6137 = vsub.f32 %v5771, %v6001
      %v6138 = vsub.f32 %v5776, %v6004
      %v6139 = vsub.f32 %v5779, %v6007
      %v6140 = vsub.f32 %v5784, %v6010
      %v6141 = vsub.f32 %v5787, %v6013
      %v6142 = vsub.f32 %v5792, %v6016
      %v6143 = vsub.f32 %v5795, %v6019
      %v6144 = vsub.f32 %v5800, %v6022
      %v6145 = vsub.f32 %v5803, %v6025
      %v6146 = vsub.f32 %v5808, %v6028
      %v6147 = vsub.f32 %v5811, %v6031
      %v6148 = vsub.f32 %v5816, %v6034
      %v6149 = vsub.f32 %v5819, %v6037
      %v6150 = vsub.f32 %v5824, %v6040
      %v6151 = vsub.f32 %v5827, %v6043
      %v6152 = vsub.f32 %v5832, %v6046
      %v6153 = vsub.f32 %v5835, %v6049
      %v6154 = vsub.f32 %v5840, %v6052
      %v6155 = vsub.f32 %v5843, %v6055
      %v6156 = vsub.f32 %v5848, %v6058
      %v6157 = vsub.f32 %v5851, %v6061
      %v6158 = vsub.f32 %v5856, %v6064
      %v6159 = vsub.f32 %v5859, %v6067
      %v6160 = vsub.f32 %v5864, %v6070
      %v6161 = vsub.f32 %v5867, %v6073
      %v6162 = vsub.f32 %v5872, %v6076
      %v6163 = vsub.f32 %v5875, %v6079
      %v6164 = vsub.f32 %v5880, %v6082
      %v6165 = vsub.f32 %v5883, %v6085
      %v6166 = vsub.f32 %v5888, %v6088
      %v6167 = vsub.f32 %v5891, %v6091
      %v6168 = vsub.f32 %v5896, %v6094
      %v6169 = vsub.f32 %v5899, %v6097
      %v6170 = vsub.f32 %v5904, %v6100
      %v6171 = vsub.f32 %v5907, %v6103
      %v6172 = vsub.f32 %v5912, %v6106
      %v6173 = vsub.f32 %v5915, %v6109
      %v6174 = vmul.f32 %v6110, 1.442695
      %v6175 = vpow.pop %v6174
      %v6176 = vmul.f32 %v6111, 1.442695
      %v6177 = vpow.pop %v6176
      %v6178 = vmul.f32 %v6112, 1.442695
      %v6179 = vpow.pop %v6178
      %v6180 = vmul.f32 %v6113, 1.442695
      %v6181 = vpow.pop %v6180
      %v6182 = vmul.f32 %v6114, 1.442695
      %v6183 = vpow.pop %v6182
      %v6184 = vmul.f32 %v6115, 1.442695
      %v6185 = vpow.pop %v6184
      %v6186 = vmul.f32 %v6116, 1.442695
      %v6187 = vpow.pop %v6186
      %v6188 = vmul.f32 %v6117, 1.442695
      %v6189 = vpow.pop %v6188
      %v6190 = vmul.f32 %v6118, 1.442695
      %v6191 = vpow.pop %v6190
      %v6192 = vmul.f32 %v6119, 1.442695
      %v6193 = vpow.pop %v6192
      %v6194 = vmul.f32 %v6120, 1.442695
      %v6195 = vpow.pop %v6194
      %v6196 = vmul.f32 %v6121, 1.442695
      %v6197 = vpow.pop %v6196
      %v6198 = vmul.f32 %v6122, 1.442695
      %v6199 = vpow.pop %v6198
      %v6200 = vmul.f32 %v6123, 1.442695
      %v6201 = vpow.pop %v6200
      %v6202 = vmul.f32 %v6124, 1.442695
      %v6203 = vpow.pop %v6202
      %v6204 = vmul.f32 %v6125, 1.442695
      %v6205 = vpow.pop %v6204
      %v6206 = vmul.f32 %v6126, 1.442695
      %v6207 = vpow.pop %v6206
      %v6208 = vmul.f32 %v6127, 1.442695
      %v6209 = vpow.pop %v6208
      %v6210 = vmul.f32 %v6128, 1.442695
      %v6211 = vpow.pop %v6210
      %v6212 = vmul.f32 %v6129, 1.442695
      %v6213 = vpow.pop %v6212
      %v6214 = vmul.f32 %v6130, 1.442695
      %v6215 = vpow.pop %v6214
      %v6216 = vmul.f32 %v6131, 1.442695
      %v6217 = vpow.pop %v6216
      %v6218 = vmul.f32 %v6132, 1.442695
      %v6219 = vpow.pop %v6218
      %v6220 = vmul.f32 %v6133, 1.442695
      %v6221 = vpow.pop %v6220
      %v6222 = vmul.f32 %v6134, 1.442695
      %v6223 = vpow.pop %v6222
      %v6224 = vmul.f32 %v6135, 1.442695
      %v6225 = vpow.pop %v6224
      %v6226 = vmul.f32 %v6136, 1.442695
      %v6227 = vpow.pop %v6226
      %v6228 = vmul.f32 %v6137, 1.442695
      %v6229 = vpow.pop %v6228
      %v6230 = vmul.f32 %v6138, 1.442695
      %v6231 = vpow.pop %v6230
      %v6232 = vmul.f32 %v6139, 1.442695
      %v6233 = vpow.pop %v6232
      %v6234 = vmul.f32 %v6140, 1.442695
      %v6235 = vpow.pop %v6234
      %v6236 = vmul.f32 %v6141, 1.442695
      %v6237 = vpow.pop %v6236
      %v6238 = vmul.f32 %v6142, 1.442695
      %v6239 = vpow.pop %v6238
      %v6240 = vmul.f32 %v6143, 1.442695
      %v6241 = vpow.pop %v6240
      %v6242 = vmul.f32 %v6144, 1.442695
      %v6243 = vpow.pop %v6242
      %v6244 = vmul.f32 %v6145, 1.442695
      %v6245 = vpow.pop %v6244
      %v6246 = vmul.f32 %v6146, 1.442695
      %v6247 = vpow.pop %v6246
      %v6248 = vmul.f32 %v6147, 1.442695
      %v6249 = vpow.pop %v6248
      %v6250 = vmul.f32 %v6148, 1.442695
      %v6251 = vpow.pop %v6250
      %v6252 = vmul.f32 %v6149, 1.442695
      %v6253 = vpow.pop %v6252
      %v6254 = vmul.f32 %v6150, 1.442695
      %v6255 = vpow.pop %v6254
      %v6256 = vmul.f32 %v6151, 1.442695
      %v6257 = vpow.pop %v6256
      %v6258 = vmul.f32 %v6152, 1.442695
      %v6259 = vpow.pop %v6258
      %v6260 = vmul.f32 %v6153, 1.442695
      %v6261 = vpow.pop %v6260
      %v6262 = vmul.f32 %v6154, 1.442695
      %v6263 = vpow.pop %v6262
      %v6264 = vmul.f32 %v6155, 1.442695
      %v6265 = vpow.pop %v6264
      %v6266 = vmul.f32 %v6156, 1.442695
      %v6267 = vpow.pop %v6266
      %v6268 = vmul.f32 %v6157, 1.442695
      %v6269 = vpow.pop %v6268
      %v6270 = vmul.f32 %v6158, 1.442695
      %v6271 = vpow.pop %v6270
      %v6272 = vmul.f32 %v6159, 1.442695
      %v6273 = vpow.pop %v6272
      %v6274 = vmul.f32 %v6160, 1.442695
      %v6275 = vpow.pop %v6274
      %v6276 = vmul.f32 %v6161, 1.442695
      %v6277 = vpow.pop %v6276
      %v6278 = vmul.f32 %v6162, 1.442695
      %v6279 = vpow.pop %v6278
      %v6280 = vmul.f32 %v6163, 1.442695
      %v6281 = vpow.pop %v6280
      %v6282 = vmul.f32 %v6164, 1.442695
      %v6283 = vpow.pop %v6282
      %v6284 = vmul.f32 %v6165, 1.442695
      %v6285 = vpow.pop %v6284
      %v6286 = vmul.f32 %v6166, 1.442695
      %v6287 = vpow.pop %v6286
      %v6288 = vmul.f32 %v6167, 1.442695
      %v6289 = vpow.pop %v6288
      %v6290 = vmul.f32 %v6168, 1.442695
      %v6291 = vpow.pop %v6290
      %v6292 = vmul.f32 %v6169, 1.442695
      %v6293 = vpow.pop %v6292
      %v6294 = vmul.f32 %v6170, 1.442695
      %v6295 = vpow.pop %v6294
      %v6296 = vmul.f32 %v6171, 1.442695
      %v6297 = vpow.pop %v6296
      %v6298 = vmul.f32 %v6172, 1.442695
      %v6299 = vpow.pop %v6298
      %v6300 = vmul.f32 %v6173, 1.442695
      %v6301 = vpow.pop %v6300
      %v6302 = vsel %vm766, %v6175, 0.0
      %6303 = vadd.xlane.f32.xlu0 %v6302
      %v6304 = vpop.xlane.xlu0 %6303
      %v6305 = vsel %vm766, %v6177, 0.0
      %6306 = vadd.xlane.f32.xlu0 %v6305
      %v6307 = vpop.xlane.xlu0 %6306
      %v6308 = vsel %vm766, %v6179, 0.0
      %6309 = vadd.xlane.f32.xlu0 %v6308
      %v6310 = vpop.xlane.xlu0 %6309
      %v6311 = vsel %vm766, %v6181, 0.0
      %6312 = vadd.xlane.f32.xlu0 %v6311
      %v6313 = vpop.xlane.xlu0 %6312
      %v6314 = vsel %vm766, %v6183, 0.0
      %6315 = vadd.xlane.f32.xlu0 %v6314
      %v6316 = vpop.xlane.xlu0 %6315
      %v6317 = vsel %vm766, %v6185, 0.0
      %6318 = vadd.xlane.f32.xlu0 %v6317
      %v6319 = vpop.xlane.xlu0 %6318
      %v6320 = vsel %vm766, %v6187, 0.0
      %6321 = vadd.xlane.f32.xlu0 %v6320
      %v6322 = vpop.xlane.xlu0 %6321
      %v6323 = vsel %vm766, %v6189, 0.0
      %6324 = vadd.xlane.f32.xlu0 %v6323
      %v6325 = vpop.xlane.xlu0 %6324
      %v6326 = vsel %vm766, %v6191, 0.0
      %6327 = vadd.xlane.f32.xlu0 %v6326
      %v6328 = vpop.xlane.xlu0 %6327
      %v6329 = vsel %vm766, %v6193, 0.0
      %6330 = vadd.xlane.f32.xlu0 %v6329
      %v6331 = vpop.xlane.xlu0 %6330
      %v6332 = vsel %vm766, %v6195, 0.0
      %6333 = vadd.xlane.f32.xlu0 %v6332
      %v6334 = vpop.xlane.xlu0 %6333
      %v6335 = vsel %vm766, %v6197, 0.0
      %6336 = vadd.xlane.f32.xlu0 %v6335
      %v6337 = vpop.xlane.xlu0 %6336
      %v6338 = vsel %vm766, %v6199, 0.0
      %6339 = vadd.xlane.f32.xlu0 %v6338
      %v6340 = vpop.xlane.xlu0 %6339
      %v6341 = vsel %vm766, %v6201, 0.0
      %6342 = vadd.xlane.f32.xlu0 %v6341
      %v6343 = vpop.xlane.xlu0 %6342
      %v6344 = vsel %vm766, %v6203, 0.0
      %6345 = vadd.xlane.f32.xlu0 %v6344
      %v6346 = vpop.xlane.xlu0 %6345
      %v6347 = vsel %vm766, %v6205, 0.0
      %6348 = vadd.xlane.f32.xlu0 %v6347
      %v6349 = vpop.xlane.xlu0 %6348
      %v6350 = vsel %vm766, %v6207, 0.0
      %6351 = vadd.xlane.f32.xlu0 %v6350
      %v6352 = vpop.xlane.xlu0 %6351
      %v6353 = vsel %vm766, %v6209, 0.0
      %6354 = vadd.xlane.f32.xlu0 %v6353
      %v6355 = vpop.xlane.xlu0 %6354
      %v6356 = vsel %vm766, %v6211, 0.0
      %6357 = vadd.xlane.f32.xlu0 %v6356
      %v6358 = vpop.xlane.xlu0 %6357
      %v6359 = vsel %vm766, %v6213, 0.0
      %6360 = vadd.xlane.f32.xlu0 %v6359
      %v6361 = vpop.xlane.xlu0 %6360
      %v6362 = vsel %vm766, %v6215, 0.0
      %6363 = vadd.xlane.f32.xlu0 %v6362
      %v6364 = vpop.xlane.xlu0 %6363
      %v6365 = vsel %vm766, %v6217, 0.0
      %6366 = vadd.xlane.f32.xlu0 %v6365
      %v6367 = vpop.xlane.xlu0 %6366
      %v6368 = vsel %vm766, %v6219, 0.0
      %6369 = vadd.xlane.f32.xlu0 %v6368
      %v6370 = vpop.xlane.xlu0 %6369
      %v6371 = vsel %vm766, %v6221, 0.0
      %6372 = vadd.xlane.f32.xlu0 %v6371
      %v6373 = vpop.xlane.xlu0 %6372
      %v6374 = vsel %vm766, %v6223, 0.0
      %6375 = vadd.xlane.f32.xlu0 %v6374
      %v6376 = vpop.xlane.xlu0 %6375
      %v6377 = vsel %vm766, %v6225, 0.0
      %6378 = vadd.xlane.f32.xlu0 %v6377
      %v6379 = vpop.xlane.xlu0 %6378
      %v6380 = vsel %vm766, %v6227, 0.0
      %6381 = vadd.xlane.f32.xlu0 %v6380
      %v6382 = vpop.xlane.xlu0 %6381
      %v6383 = vsel %vm766, %v6229, 0.0
      %6384 = vadd.xlane.f32.xlu0 %v6383
      %v6385 = vpop.xlane.xlu0 %6384
      %v6386 = vsel %vm766, %v6231, 0.0
      %6387 = vadd.xlane.f32.xlu0 %v6386
      %v6388 = vpop.xlane.xlu0 %6387
      %v6389 = vsel %vm766, %v6233, 0.0
      %6390 = vadd.xlane.f32.xlu0 %v6389
      %v6391 = vpop.xlane.xlu0 %6390
      %v6392 = vsel %vm766, %v6235, 0.0
      %6393 = vadd.xlane.f32.xlu0 %v6392
      %v6394 = vpop.xlane.xlu0 %6393
      %v6395 = vsel %vm766, %v6237, 0.0
      %6396 = vadd.xlane.f32.xlu0 %v6395
      %v6397 = vpop.xlane.xlu0 %6396
      %v6398 = vsel %vm766, %v6239, 0.0
      %6399 = vadd.xlane.f32.xlu0 %v6398
      %v6400 = vpop.xlane.xlu0 %6399
      %v6401 = vsel %vm766, %v6241, 0.0
      %6402 = vadd.xlane.f32.xlu0 %v6401
      %v6403 = vpop.xlane.xlu0 %6402
      %v6404 = vsel %vm766, %v6243, 0.0
      %6405 = vadd.xlane.f32.xlu0 %v6404
      %v6406 = vpop.xlane.xlu0 %6405
      %v6407 = vsel %vm766, %v6245, 0.0
      %6408 = vadd.xlane.f32.xlu0 %v6407
      %v6409 = vpop.xlane.xlu0 %6408
      %v6410 = vsel %vm766, %v6247, 0.0
      %6411 = vadd.xlane.f32.xlu0 %v6410
      %v6412 = vpop.xlane.xlu0 %6411
      %v6413 = vsel %vm766, %v6249, 0.0
      %6414 = vadd.xlane.f32.xlu0 %v6413
      %v6415 = vpop.xlane.xlu0 %6414
      %v6416 = vsel %vm766, %v6251, 0.0
      %6417 = vadd.xlane.f32.xlu0 %v6416
      %v6418 = vpop.xlane.xlu0 %6417
      %v6419 = vsel %vm766, %v6253, 0.0
      %6420 = vadd.xlane.f32.xlu0 %v6419
      %v6421 = vpop.xlane.xlu0 %6420
      %v6422 = vsel %vm766, %v6255, 0.0
      %6423 = vadd.xlane.f32.xlu0 %v6422
      %v6424 = vpop.xlane.xlu0 %6423
      %v6425 = vsel %vm766, %v6257, 0.0
      %6426 = vadd.xlane.f32.xlu0 %v6425
      %v6427 = vpop.xlane.xlu0 %6426
      %v6428 = vsel %vm766, %v6259, 0.0
      %6429 = vadd.xlane.f32.xlu0 %v6428
      %v6430 = vpop.xlane.xlu0 %6429
      %v6431 = vsel %vm766, %v6261, 0.0
      %6432 = vadd.xlane.f32.xlu0 %v6431
      %v6433 = vpop.xlane.xlu0 %6432
      %v6434 = vsel %vm766, %v6263, 0.0
      %6435 = vadd.xlane.f32.xlu0 %v6434
      %v6436 = vpop.xlane.xlu0 %6435
      %v6437 = vsel %vm766, %v6265, 0.0
      %6438 = vadd.xlane.f32.xlu0 %v6437
      %v6439 = vpop.xlane.xlu0 %6438
      %v6440 = vsel %vm766, %v6267, 0.0
      %6441 = vadd.xlane.f32.xlu0 %v6440
      %v6442 = vpop.xlane.xlu0 %6441
      %v6443 = vsel %vm766, %v6269, 0.0
      %6444 = vadd.xlane.f32.xlu0 %v6443
      %v6445 = vpop.xlane.xlu0 %6444
      %v6446 = vsel %vm766, %v6271, 0.0
      %6447 = vadd.xlane.f32.xlu0 %v6446
      %v6448 = vpop.xlane.xlu0 %6447
      %v6449 = vsel %vm766, %v6273, 0.0
      %6450 = vadd.xlane.f32.xlu0 %v6449
      %v6451 = vpop.xlane.xlu0 %6450
      %v6452 = vsel %vm766, %v6275, 0.0
      %6453 = vadd.xlane.f32.xlu0 %v6452
      %v6454 = vpop.xlane.xlu0 %6453
      %v6455 = vsel %vm766, %v6277, 0.0
      %6456 = vadd.xlane.f32.xlu0 %v6455
      %v6457 = vpop.xlane.xlu0 %6456
      %v6458 = vsel %vm766, %v6279, 0.0
      %6459 = vadd.xlane.f32.xlu0 %v6458
      %v6460 = vpop.xlane.xlu0 %6459
      %v6461 = vsel %vm766, %v6281, 0.0
      %6462 = vadd.xlane.f32.xlu0 %v6461
      %v6463 = vpop.xlane.xlu0 %6462
      %v6464 = vsel %vm766, %v6283, 0.0
      %6465 = vadd.xlane.f32.xlu0 %v6464
      %v6466 = vpop.xlane.xlu0 %6465
      %v6467 = vsel %vm766, %v6285, 0.0
      %6468 = vadd.xlane.f32.xlu0 %v6467
      %v6469 = vpop.xlane.xlu0 %6468
      %v6470 = vsel %vm766, %v6287, 0.0
      %6471 = vadd.xlane.f32.xlu0 %v6470
      %v6472 = vpop.xlane.xlu0 %6471
      %v6473 = vsel %vm766, %v6289, 0.0
      %6474 = vadd.xlane.f32.xlu0 %v6473
      %v6475 = vpop.xlane.xlu0 %6474
      %v6476 = vsel %vm766, %v6291, 0.0
      %6477 = vadd.xlane.f32.xlu0 %v6476
      %v6478 = vpop.xlane.xlu0 %6477
      %v6479 = vsel %vm766, %v6293, 0.0
      %6480 = vadd.xlane.f32.xlu0 %v6479
      %v6481 = vpop.xlane.xlu0 %6480
      %v6482 = vsel %vm766, %v6295, 0.0
      %6483 = vadd.xlane.f32.xlu0 %v6482
      %v6484 = vpop.xlane.xlu0 %6483
      %v6485 = vsel %vm766, %v6297, 0.0
      %6486 = vadd.xlane.f32.xlu0 %v6485
      %v6487 = vpop.xlane.xlu0 %6486
      %v6488 = vsel %vm766, %v6299, 0.0
      %6489 = vadd.xlane.f32.xlu0 %v6488
      %v6490 = vpop.xlane.xlu0 %6489
      %v6491 = vsel %vm766, %v6301, 0.0
      %6492 = vadd.xlane.f32.xlu0 %v6491
      %v6493 = vpop.xlane.xlu0 %6492
      %v6494 = vrcp.pop %v6304
      %v6495 = vmul.f32 %v6175, %v6494
      %v6496 = vrcp.pop %v6307
      %v6497 = vmul.f32 %v6177, %v6496
      %v6498 = vrcp.pop %v6310
      %v6499 = vmul.f32 %v6179, %v6498
      %v6500 = vrcp.pop %v6313
      %v6501 = vmul.f32 %v6181, %v6500
      %v6502 = vrcp.pop %v6316
      %v6503 = vmul.f32 %v6183, %v6502
      %v6504 = vrcp.pop %v6319
      %v6505 = vmul.f32 %v6185, %v6504
      %v6506 = vrcp.pop %v6322
      %v6507 = vmul.f32 %v6187, %v6506
      %v6508 = vrcp.pop %v6325
      %v6509 = vmul.f32 %v6189, %v6508
      %v6510 = vrcp.pop %v6328
      %v6511 = vmul.f32 %v6191, %v6510
      %v6512 = vrcp.pop %v6331
      %v6513 = vmul.f32 %v6193, %v6512
      %v6514 = vrcp.pop %v6334
      %v6515 = vmul.f32 %v6195, %v6514
      %v6516 = vrcp.pop %v6337
      %v6517 = vmul.f32 %v6197, %v6516
      %v6518 = vrcp.pop %v6340
      %v6519 = vmul.f32 %v6199, %v6518
      %v6520 = vrcp.pop %v6343
      %v6521 = vmul.f32 %v6201, %v6520
      %v6522 = vrcp.pop %v6346
      %v6523 = vmul.f32 %v6203, %v6522
      %v6524 = vrcp.pop %v6349
      %v6525 = vmul.f32 %v6205, %v6524
      %v6526 = vrcp.pop %v6352
      %v6527 = vmul.f32 %v6207, %v6526
      %v6528 = vrcp.pop %v6355
      %v6529 = vmul.f32 %v6209, %v6528
      %v6530 = vrcp.pop %v6358
      %v6531 = vmul.f32 %v6211, %v6530
      %v6532 = vrcp.pop %v6361
      %v6533 = vmul.f32 %v6213, %v6532
      %v6534 = vrcp.pop %v6364
      %v6535 = vmul.f32 %v6215, %v6534
      %v6536 = vrcp.pop %v6367
      %v6537 = vmul.f32 %v6217, %v6536
      %v6538 = vrcp.pop %v6370
      %v6539 = vmul.f32 %v6219, %v6538
      %v6540 = vrcp.pop %v6373
      %v6541 = vmul.f32 %v6221, %v6540
      %v6542 = vrcp.pop %v6376
      %v6543 = vmul.f32 %v6223, %v6542
      %v6544 = vrcp.pop %v6379
      %v6545 = vmul.f32 %v6225, %v6544
      %v6546 = vrcp.pop %v6382
      %v6547 = vmul.f32 %v6227, %v6546
      %v6548 = vrcp.pop %v6385
      %v6549 = vmul.f32 %v6229, %v6548
      %v6550 = vrcp.pop %v6388
      %v6551 = vmul.f32 %v6231, %v6550
      %v6552 = vrcp.pop %v6391
      %v6553 = vmul.f32 %v6233, %v6552
      %v6554 = vrcp.pop %v6394
      %v6555 = vmul.f32 %v6235, %v6554
      %v6556 = vrcp.pop %v6397
      %v6557 = vmul.f32 %v6237, %v6556
      %v6558 = vrcp.pop %v6400
      %v6559 = vmul.f32 %v6239, %v6558
      %v6560 = vrcp.pop %v6403
      %v6561 = vmul.f32 %v6241, %v6560
      %v6562 = vrcp.pop %v6406
      %v6563 = vmul.f32 %v6243, %v6562
      %v6564 = vrcp.pop %v6409
      %v6565 = vmul.f32 %v6245, %v6564
      %v6566 = vrcp.pop %v6412
      %v6567 = vmul.f32 %v6247, %v6566
      %v6568 = vrcp.pop %v6415
      %v6569 = vmul.f32 %v6249, %v6568
      %v6570 = vrcp.pop %v6418
      %v6571 = vmul.f32 %v6251, %v6570
      %v6572 = vrcp.pop %v6421
      %v6573 = vmul.f32 %v6253, %v6572
      %v6574 = vrcp.pop %v6424
      %v6575 = vmul.f32 %v6255, %v6574
      %v6576 = vrcp.pop %v6427
      %v6577 = vmul.f32 %v6257, %v6576
      %v6578 = vrcp.pop %v6430
      %v6579 = vmul.f32 %v6259, %v6578
      %v6580 = vrcp.pop %v6433
      %v6581 = vmul.f32 %v6261, %v6580
      %v6582 = vrcp.pop %v6436
      %v6583 = vmul.f32 %v6263, %v6582
      %v6584 = vrcp.pop %v6439
      %v6585 = vmul.f32 %v6265, %v6584
      %v6586 = vrcp.pop %v6442
      %v6587 = vmul.f32 %v6267, %v6586
      %v6588 = vrcp.pop %v6445
      %v6589 = vmul.f32 %v6269, %v6588
      %v6590 = vrcp.pop %v6448
      %v6591 = vmul.f32 %v6271, %v6590
      %v6592 = vrcp.pop %v6451
      %v6593 = vmul.f32 %v6273, %v6592
      %v6594 = vrcp.pop %v6454
      %v6595 = vmul.f32 %v6275, %v6594
      %v6596 = vrcp.pop %v6457
      %v6597 = vmul.f32 %v6277, %v6596
      %v6598 = vrcp.pop %v6460
      %v6599 = vmul.f32 %v6279, %v6598
      %v6600 = vrcp.pop %v6463
      %v6601 = vmul.f32 %v6281, %v6600
      %v6602 = vrcp.pop %v6466
      %v6603 = vmul.f32 %v6283, %v6602
      %v6604 = vrcp.pop %v6469
      %v6605 = vmul.f32 %v6285, %v6604
      %v6606 = vrcp.pop %v6472
      %v6607 = vmul.f32 %v6287, %v6606
      %v6608 = vrcp.pop %v6475
      %v6609 = vmul.f32 %v6289, %v6608
      %v6610 = vrcp.pop %v6478
      %v6611 = vmul.f32 %v6291, %v6610
      %v6612 = vrcp.pop %v6481
      %v6613 = vmul.f32 %v6293, %v6612
      %v6614 = vrcp.pop %v6484
      %v6615 = vmul.f32 %v6295, %v6614
      %v6616 = vrcp.pop %v6487
      %v6617 = vmul.f32 %v6297, %v6616
      %v6618 = vrcp.pop %v6490
      %v6619 = vmul.f32 %v6299, %v6618
      %v6620 = vrcp.pop %v6493
      %v6621 = vmul.f32 %v6301, %v6620
      %v6622 = vpack.c.bf16 %v6497, %v6495
      %v6623 = vpack.c.bf16 %v6501, %v6499
      %v6624 = vpack.c.bf16 %v6505, %v6503
      %v6625 = vpack.c.bf16 %v6509, %v6507
      %v6626 = vpack.c.bf16 %v6513, %v6511
      %v6627 = vpack.c.bf16 %v6517, %v6515
      %v6628 = vpack.c.bf16 %v6521, %v6519
      %v6629 = vpack.c.bf16 %v6525, %v6523
      %v6630 = vpack.c.bf16 %v6529, %v6527
      %v6631 = vpack.c.bf16 %v6533, %v6531
      %v6632 = vpack.c.bf16 %v6537, %v6535
      %v6633 = vpack.c.bf16 %v6541, %v6539
      %v6634 = vpack.c.bf16 %v6545, %v6543
      %v6635 = vpack.c.bf16 %v6549, %v6547
      %v6636 = vpack.c.bf16 %v6553, %v6551
      %v6637 = vpack.c.bf16 %v6557, %v6555
      %v6638 = vpack.c.bf16 %v6561, %v6559
      %v6639 = vpack.c.bf16 %v6565, %v6563
      %v6640 = vpack.c.bf16 %v6569, %v6567
      %v6641 = vpack.c.bf16 %v6573, %v6571
      %v6642 = vpack.c.bf16 %v6577, %v6575
      %v6643 = vpack.c.bf16 %v6581, %v6579
      %v6644 = vpack.c.bf16 %v6585, %v6583
      %v6645 = vpack.c.bf16 %v6589, %v6587
      %v6646 = vpack.c.bf16 %v6593, %v6591
      %v6647 = vpack.c.bf16 %v6597, %v6595
      %v6648 = vpack.c.bf16 %v6601, %v6599
      %v6649 = vpack.c.bf16 %v6605, %v6603
      %v6650 = vpack.c.bf16 %v6609, %v6607
      %v6651 = vpack.c.bf16 %v6613, %v6611
      %v6652 = vpack.c.bf16 %v6617, %v6615
      %v6653 = vpack.c.bf16 %v6621, %v6619
      %v6654 = vpack.c.bf16 %v5101, %v5098
      %v6655 = vpack.c.bf16 %v5109, %v5106
      %v6656 = vpack.c.bf16 %v5117, %v5114
      %v6657 = vpack.c.bf16 %v5125, %v5122
      %v6659 = vsel %vm766, %v6622, 0
      %v6662 = vsel %vm766, %v6623, 0
      %v6665 = vsel %vm766, %v6624, 0
      %v6668 = vsel %vm766, %v6625, 0
      %v6671 = vsel %vm766, %v6626, 0
      %v6674 = vsel %vm766, %v6627, 0
      %v6677 = vsel %vm766, %v6628, 0
      %v6680 = vsel %vm766, %v6629, 0
      %v6683 = vsel %vm766, %v6630, 0
      %v6686 = vsel %vm766, %v6631, 0
      %v6689 = vsel %vm766, %v6632, 0
      %v6692 = vsel %vm766, %v6633, 0
      %v6695 = vsel %vm766, %v6634, 0
      %v6698 = vsel %vm766, %v6635, 0
      %v6701 = vsel %vm766, %v6636, 0
      %v6704 = vsel %vm766, %v6637, 0
      %v6707 = vsel %vm766, %v6638, 0
      %v6710 = vsel %vm766, %v6639, 0
      %v6713 = vsel %vm766, %v6640, 0
      %v6716 = vsel %vm766, %v6641, 0
      %v6719 = vsel %vm766, %v6642, 0
      %v6722 = vsel %vm766, %v6643, 0
      %v6725 = vsel %vm766, %v6644, 0
      %v6728 = vsel %vm766, %v6645, 0
      %v6731 = vsel %vm766, %v6646, 0
      %v6734 = vsel %vm766, %v6647, 0
      %v6737 = vsel %vm766, %v6648, 0
      %v6740 = vsel %vm766, %v6649, 0
      %v6743 = vsel %vm766, %v6650, 0
      %v6746 = vsel %vm766, %v6651, 0
      %v6749 = vsel %vm766, %v6652, 0
      %v6752 = vsel %vm766, %v6653, 0
      %6754 = vmatprep.subr.bf16.mxu0 0
      %6755 = vmatpush1.bf16.msra.mxu0 0
      %6756 = vmatprep.subr.bf16.mxu0 0
      %6757 = vmatpush1.bf16.msra.mxu0 0
      %6758 = vmatprep.subr.bf16.mxu0 0
      %6759 = vmatpush1.bf16.msra.mxu0 0
      %6760 = vmatprep.subr.bf16.mxu0 0
      %6761 = vmatpush1.bf16.msra.mxu0 0
      %6762 = vmatprep.subr.bf16.mxu0 0
      %6763 = vmatpush1.bf16.msra.mxu0 %v6657
      %6764 = vmatprep.subr.bf16.mxu0 0
      %6765 = vmatpush1.bf16.msra.mxu0 %v6656
      %6766 = vmatprep.subr.bf16.mxu0 0
      %6767 = vmatpush1.bf16.msra.mxu0 %v6655
      %6768 = vmatprep.subr.bf16.mxu0 0
      %6769 = vmatpush1.bf16.msra.mxu0 %v6654
      %6770 = vmatprep.subr.bf16.mxu0 0
      %6771 = vmatpush2.bf16.msra.mxu0 0
      %6772 = vmatprep.subr.bf16.mxu0 0
      %6773 = vmatpush2.bf16.msra.mxu0 0
      %6774 = vmatprep.subr.bf16.mxu0 0
      %6775 = vmatpush2.bf16.msra.mxu0 0
      %6776 = vmatprep.subr.bf16.mxu0 0
      %6777 = vmatpush2.bf16.msra.mxu0 0
      %6778 = vmatprep.subr.bf16.mxu0 0
      %6779 = vmatpush2.bf16.msra.mxu0 0
      %6780 = vmatprep.subr.bf16.mxu0 0
      %6781 = vmatpush2.bf16.msra.mxu0 0
      %6782 = vmatprep.subr.bf16.mxu0 0
      %6783 = vmatpush2.bf16.msra.mxu0 0
      %6784 = vmatprep.subr.bf16.mxu0 0
      %6785 = vmatpush2.bf16.msra.mxu0 0
      %6786 = vmatprep.mubr.bf16.mxu0 0
      %6787 = vmatmul.mubr.bf16.gmra.mxu0 %v6659
      %v6788 = vpop.f32.mrf.mxu0
      %v6789 = vadd.f32 0.0, %v6788
      %v6790 = vpop.f32.mrf.mxu0
      %v6791 = vpop.f32.mrf.mxu0
      %v6792 = vadd.f32 0.0, %v6791
      %v6793 = vpop.f32.mrf.mxu0
      %6794 = vmatprep.mubr.bf16.mxu0 0
      %6795 = vmatmul.mubr.bf16.gmra.mxu0 %v6662
      %v6796 = vpop.f32.mrf.mxu0
      %v6797 = vadd.f32 0.0, %v6796
      %v6798 = vpop.f32.mrf.mxu0
      %v6799 = vpop.f32.mrf.mxu0
      %v6800 = vadd.f32 0.0, %v6799
      %v6801 = vpop.f32.mrf.mxu0
      %6802 = vmatprep.mubr.bf16.mxu0 0
      %6803 = vmatmul.mubr.bf16.gmra.mxu0 %v6665
      %v6804 = vpop.f32.mrf.mxu0
      %v6805 = vadd.f32 0.0, %v6804
      %v6806 = vpop.f32.mrf.mxu0
      %v6807 = vpop.f32.mrf.mxu0
      %v6808 = vadd.f32 0.0, %v6807
      %v6809 = vpop.f32.mrf.mxu0
      %6810 = vmatprep.mubr.bf16.mxu0 0
      %6811 = vmatmul.mubr.bf16.gmra.mxu0 %v6668
      %v6812 = vpop.f32.mrf.mxu0
      %v6813 = vadd.f32 0.0, %v6812
      %v6814 = vpop.f32.mrf.mxu0
      %v6815 = vpop.f32.mrf.mxu0
      %v6816 = vadd.f32 0.0, %v6815
      %v6817 = vpop.f32.mrf.mxu0
      %6818 = vmatprep.mubr.bf16.mxu0 0
      %6819 = vmatmul.mubr.bf16.gmra.mxu0 %v6671
      %v6820 = vpop.f32.mrf.mxu0
      %v6821 = vadd.f32 0.0, %v6820
      %v6822 = vpop.f32.mrf.mxu0
      %v6823 = vpop.f32.mrf.mxu0
      %v6824 = vadd.f32 0.0, %v6823
      %v6825 = vpop.f32.mrf.mxu0
      %6826 = vmatprep.mubr.bf16.mxu0 0
      %6827 = vmatmul.mubr.bf16.gmra.mxu0 %v6674
      %v6828 = vpop.f32.mrf.mxu0
      %v6829 = vadd.f32 0.0, %v6828
      %v6830 = vpop.f32.mrf.mxu0
      %v6831 = vpop.f32.mrf.mxu0
      %v6832 = vadd.f32 0.0, %v6831
      %v6833 = vpop.f32.mrf.mxu0
      %6834 = vmatprep.mubr.bf16.mxu0 0
      %6835 = vmatmul.mubr.bf16.gmra.mxu0 %v6677
      %v6836 = vpop.f32.mrf.mxu0
      %v6837 = vadd.f32 0.0, %v6836
      %v6838 = vpop.f32.mrf.mxu0
      %v6839 = vpop.f32.mrf.mxu0
      %v6840 = vadd.f32 0.0, %v6839
      %v6841 = vpop.f32.mrf.mxu0
      %6842 = vmatprep.mubr.bf16.mxu0 0
      %6843 = vmatmul.mubr.bf16.gmra.mxu0 %v6680
      %v6844 = vpop.f32.mrf.mxu0
      %v6845 = vadd.f32 0.0, %v6844
      %v6846 = vpop.f32.mrf.mxu0
      %v6847 = vpop.f32.mrf.mxu0
      %v6848 = vadd.f32 0.0, %v6847
      %v6849 = vpop.f32.mrf.mxu0
      %6850 = vmatprep.mubr.bf16.mxu0 0
      %6851 = vmatmul.mubr.bf16.gmra.mxu0 %v6683
      %v6852 = vpop.f32.mrf.mxu0
      %v6853 = vadd.f32 0.0, %v6852
      %v6854 = vpop.f32.mrf.mxu0
      %v6855 = vpop.f32.mrf.mxu0
      %v6856 = vadd.f32 0.0, %v6855
      %v6857 = vpop.f32.mrf.mxu0
      %6858 = vmatprep.mubr.bf16.mxu0 0
      %6859 = vmatmul.mubr.bf16.gmra.mxu0 %v6686
      %v6860 = vpop.f32.mrf.mxu0
      %v6861 = vadd.f32 0.0, %v6860
      %v6862 = vpop.f32.mrf.mxu0
      %v6863 = vpop.f32.mrf.mxu0
      %v6864 = vadd.f32 0.0, %v6863
      %v6865 = vpop.f32.mrf.mxu0
      %6866 = vmatprep.mubr.bf16.mxu0 0
      %6867 = vmatmul.mubr.bf16.gmra.mxu0 %v6689
      %v6868 = vpop.f32.mrf.mxu0
      %v6869 = vadd.f32 0.0, %v6868
      %v6870 = vpop.f32.mrf.mxu0
      %v6871 = vpop.f32.mrf.mxu0
      %v6872 = vadd.f32 0.0, %v6871
      %v6873 = vpop.f32.mrf.mxu0
      %6874 = vmatprep.mubr.bf16.mxu0 0
      %6875 = vmatmul.mubr.bf16.gmra.mxu0 %v6692
      %v6876 = vpop.f32.mrf.mxu0
      %v6877 = vadd.f32 0.0, %v6876
      %v6878 = vpop.f32.mrf.mxu0
      %v6879 = vpop.f32.mrf.mxu0
      %v6880 = vadd.f32 0.0, %v6879
      %v6881 = vpop.f32.mrf.mxu0
      %6882 = vmatprep.mubr.bf16.mxu0 0
      %6883 = vmatmul.mubr.bf16.gmra.mxu0 %v6695
      %v6884 = vpop.f32.mrf.mxu0
      %v6885 = vadd.f32 0.0, %v6884
      %v6886 = vpop.f32.mrf.mxu0
      %v6887 = vpop.f32.mrf.mxu0
      %v6888 = vadd.f32 0.0, %v6887
      %v6889 = vpop.f32.mrf.mxu0
      %6890 = vmatprep.mubr.bf16.mxu0 0
      %6891 = vmatmul.mubr.bf16.gmra.mxu0 %v6698
      %v6892 = vpop.f32.mrf.mxu0
      %v6893 = vadd.f32 0.0, %v6892
      %v6894 = vpop.f32.mrf.mxu0
      %v6895 = vpop.f32.mrf.mxu0
      %v6896 = vadd.f32 0.0, %v6895
      %v6897 = vpop.f32.mrf.mxu0
      %6898 = vmatprep.mubr.bf16.mxu0 0
      %6899 = vmatmul.mubr.bf16.gmra.mxu0 %v6701
      %v6900 = vpop.f32.mrf.mxu0
      %v6901 = vadd.f32 0.0, %v6900
      %v6902 = vpop.f32.mrf.mxu0
      %v6903 = vpop.f32.mrf.mxu0
      %v6904 = vadd.f32 0.0, %v6903
      %v6905 = vpop.f32.mrf.mxu0
      %6906 = vmatprep.mubr.bf16.mxu0 0
      %6907 = vmatmul.mubr.bf16.gmra.mxu0 %v6704
      %v6908 = vpop.f32.mrf.mxu0
      %v6909 = vadd.f32 0.0, %v6908
      %v6910 = vpop.f32.mrf.mxu0
      %v6911 = vpop.f32.mrf.mxu0
      %v6912 = vadd.f32 0.0, %v6911
      %v6913 = vpop.f32.mrf.mxu0
      %6914 = vmatprep.mubr.bf16.mxu0 0
      %6915 = vmatmul.mubr.bf16.gmra.mxu0 %v6707
      %v6916 = vpop.f32.mrf.mxu0
      %v6917 = vadd.f32 0.0, %v6916
      %v6918 = vpop.f32.mrf.mxu0
      %v6919 = vpop.f32.mrf.mxu0
      %v6920 = vadd.f32 0.0, %v6919
      %v6921 = vpop.f32.mrf.mxu0
      %6922 = vmatprep.mubr.bf16.mxu0 0
      %6923 = vmatmul.mubr.bf16.gmra.mxu0 %v6710
      %v6924 = vpop.f32.mrf.mxu0
      %v6925 = vadd.f32 0.0, %v6924
      %v6926 = vpop.f32.mrf.mxu0
      %v6927 = vpop.f32.mrf.mxu0
      %v6928 = vadd.f32 0.0, %v6927
      %v6929 = vpop.f32.mrf.mxu0
      %6930 = vmatprep.mubr.bf16.mxu0 0
      %6931 = vmatmul.mubr.bf16.gmra.mxu0 %v6713
      %v6932 = vpop.f32.mrf.mxu0
      %v6933 = vadd.f32 0.0, %v6932
      %v6934 = vpop.f32.mrf.mxu0
      %v6935 = vpop.f32.mrf.mxu0
      %v6936 = vadd.f32 0.0, %v6935
      %v6937 = vpop.f32.mrf.mxu0
      %6938 = vmatprep.mubr.bf16.mxu0 0
      %6939 = vmatmul.mubr.bf16.gmra.mxu0 %v6716
      %v6940 = vpop.f32.mrf.mxu0
      %v6941 = vadd.f32 0.0, %v6940
      %v6942 = vpop.f32.mrf.mxu0
      %v6943 = vpop.f32.mrf.mxu0
      %v6944 = vadd.f32 0.0, %v6943
      %v6945 = vpop.f32.mrf.mxu0
      %6946 = vmatprep.mubr.bf16.mxu0 0
      %6947 = vmatmul.mubr.bf16.gmra.mxu0 %v6719
      %v6948 = vpop.f32.mrf.mxu0
      %v6949 = vadd.f32 0.0, %v6948
      %v6950 = vpop.f32.mrf.mxu0
      %v6951 = vpop.f32.mrf.mxu0
      %v6952 = vadd.f32 0.0, %v6951
      %v6953 = vpop.f32.mrf.mxu0
      %6954 = vmatprep.mubr.bf16.mxu0 0
      %6955 = vmatmul.mubr.bf16.gmra.mxu0 %v6722
      %v6956 = vpop.f32.mrf.mxu0
      %v6957 = vadd.f32 0.0, %v6956
      %v6958 = vpop.f32.mrf.mxu0
      %v6959 = vpop.f32.mrf.mxu0
      %v6960 = vadd.f32 0.0, %v6959
      %v6961 = vpop.f32.mrf.mxu0
      %6962 = vmatprep.mubr.bf16.mxu0 0
      %6963 = vmatmul.mubr.bf16.gmra.mxu0 %v6725
      %v6964 = vpop.f32.mrf.mxu0
      %v6965 = vadd.f32 0.0, %v6964
      %v6966 = vpop.f32.mrf.mxu0
      %v6967 = vpop.f32.mrf.mxu0
      %v6968 = vadd.f32 0.0, %v6967
      %v6969 = vpop.f32.mrf.mxu0
      %6970 = vmatprep.mubr.bf16.mxu0 0
      %6971 = vmatmul.mubr.bf16.gmra.mxu0 %v6728
      %v6972 = vpop.f32.mrf.mxu0
      %v6973 = vadd.f32 0.0, %v6972
      %v6974 = vpop.f32.mrf.mxu0
      %v6975 = vpop.f32.mrf.mxu0
      %v6976 = vadd.f32 0.0, %v6975
      %v6977 = vpop.f32.mrf.mxu0
      %6978 = vmatprep.mubr.bf16.mxu0 0
      %6979 = vmatmul.mubr.bf16.gmra.mxu0 %v6731
      %v6980 = vpop.f32.mrf.mxu0
      %v6981 = vadd.f32 0.0, %v6980
      %v6982 = vpop.f32.mrf.mxu0
      %v6983 = vpop.f32.mrf.mxu0
      %v6984 = vadd.f32 0.0, %v6983
      %v6985 = vpop.f32.mrf.mxu0
      %6986 = vmatprep.mubr.bf16.mxu0 0
      %6987 = vmatmul.mubr.bf16.gmra.mxu0 %v6734
      %v6988 = vpop.f32.mrf.mxu0
      %v6989 = vadd.f32 0.0, %v6988
      %v6990 = vpop.f32.mrf.mxu0
      %v6991 = vpop.f32.mrf.mxu0
      %v6992 = vadd.f32 0.0, %v6991
      %v6993 = vpop.f32.mrf.mxu0
      %6994 = vmatprep.mubr.bf16.mxu0 0
      %6995 = vmatmul.mubr.bf16.gmra.mxu0 %v6737
      %v6996 = vpop.f32.mrf.mxu0
      %v6997 = vadd.f32 0.0, %v6996
      %v6998 = vpop.f32.mrf.mxu0
      %v6999 = vpop.f32.mrf.mxu0
      %v7000 = vadd.f32 0.0, %v6999
      %v7001 = vpop.f32.mrf.mxu0
      %7002 = vmatprep.mubr.bf16.mxu0 0
      %7003 = vmatmul.mubr.bf16.gmra.mxu0 %v6740
      %v7004 = vpop.f32.mrf.mxu0
      %v7005 = vadd.f32 0.0, %v7004
      %v7006 = vpop.f32.mrf.mxu0
      %v7007 = vpop.f32.mrf.mxu0
      %v7008 = vadd.f32 0.0, %v7007
      %v7009 = vpop.f32.mrf.mxu0
      %7010 = vmatprep.mubr.bf16.mxu0 0
      %7011 = vmatmul.mubr.bf16.gmra.mxu0 %v6743
      %v7012 = vpop.f32.mrf.mxu0
      %v7013 = vadd.f32 0.0, %v7012
      %v7014 = vpop.f32.mrf.mxu0
      %v7015 = vpop.f32.mrf.mxu0
      %v7016 = vadd.f32 0.0, %v7015
      %v7017 = vpop.f32.mrf.mxu0
      %7018 = vmatprep.mubr.bf16.mxu0 0
      %7019 = vmatmul.mubr.bf16.gmra.mxu0 %v6746
      %v7020 = vpop.f32.mrf.mxu0
      %v7021 = vadd.f32 0.0, %v7020
      %v7022 = vpop.f32.mrf.mxu0
      %v7023 = vpop.f32.mrf.mxu0
      %v7024 = vadd.f32 0.0, %v7023
      %v7025 = vpop.f32.mrf.mxu0
      %7026 = vmatprep.mubr.bf16.mxu0 0
      %7027 = vmatmul.mubr.bf16.gmra.mxu0 %v6749
      %v7028 = vpop.f32.mrf.mxu0
      %v7029 = vadd.f32 0.0, %v7028
      %v7030 = vpop.f32.mrf.mxu0
      %v7031 = vpop.f32.mrf.mxu0
      %v7032 = vadd.f32 0.0, %v7031
      %v7033 = vpop.f32.mrf.mxu0
      %7034 = vmatprep.mubr.bf16.mxu0 0
      %7035 = vmatmul.mubr.bf16.gmra.mxu0 %v6752
      %v7036 = vpop.f32.mrf.mxu0
      %v7037 = vadd.f32 0.0, %v7036
      %v7038 = vpop.f32.mrf.mxu0
      %v7039 = vpop.f32.mrf.mxu0
      %v7040 = vadd.f32 0.0, %v7039
      %v7041 = vpop.f32.mrf.mxu0
      %7042 = vdwg.mxu0
      %v7043 = vmul.f32 %v6789, %v1325
      %v7044 = vmul.f32 %v6792, %v1326
      %v7045 = vmul.f32 %v6797, %v1327
      %v7046 = vmul.f32 %v6800, %v1328
      %v7047 = vmul.f32 %v6805, %v1329
      %v7048 = vmul.f32 %v6808, %v1330
      %v7049 = vmul.f32 %v6813, %v1331
      %v7050 = vmul.f32 %v6816, %v1332
      %v7051 = vmul.f32 %v6821, %v1333
      %v7052 = vmul.f32 %v6824, %v1334
      %v7053 = vmul.f32 %v6829, %v1335
      %v7054 = vmul.f32 %v6832, %v1336
      %v7055 = vmul.f32 %v6837, %v1337
      %v7056 = vmul.f32 %v6840, %v1338
      %v7057 = vmul.f32 %v6845, %v1339
      %v7058 = vmul.f32 %v6848, %v1340
      %v7059 = vmul.f32 %v6853, %v1341
      %v7060 = vmul.f32 %v6856, %v1342
      %v7061 = vmul.f32 %v6861, %v1343
      %v7062 = vmul.f32 %v6864, %v1344
      %v7063 = vmul.f32 %v6869, %v1345
      %v7064 = vmul.f32 %v6872, %v1346
      %v7065 = vmul.f32 %v6877, %v1347
      %v7066 = vmul.f32 %v6880, %v1348
      %v7067 = vmul.f32 %v6885, %v1349
      %v7068 = vmul.f32 %v6888, %v1350
      %v7069 = vmul.f32 %v6893, %v1351
      %v7070 = vmul.f32 %v6896, %v1352
      %v7071 = vmul.f32 %v6901, %v1353
      %v7072 = vmul.f32 %v6904, %v1354
      %v7073 = vmul.f32 %v6909, %v1355
      %v7074 = vmul.f32 %v6912, %v1356
      %v7075 = vmul.f32 %v6917, %v1357
      %v7076 = vmul.f32 %v6920, %v1358
      %v7077 = vmul.f32 %v6925, %v1359
      %v7078 = vmul.f32 %v6928, %v1360
      %v7079 = vmul.f32 %v6933, %v1361
      %v7080 = vmul.f32 %v6936, %v1362
      %v7081 = vmul.f32 %v6941, %v1363
      %v7082 = vmul.f32 %v6944, %v1364
      %v7083 = vmul.f32 %v6949, %v1365
      %v7084 = vmul.f32 %v6952, %v1366
      %v7085 = vmul.f32 %v6957, %v1367
      %v7086 = vmul.f32 %v6960, %v1368
      %v7087 = vmul.f32 %v6965, %v1369
      %v7088 = vmul.f32 %v6968, %v1370
      %v7089 = vmul.f32 %v6973, %v1371
      %v7090 = vmul.f32 %v6976, %v1372
      %v7091 = vmul.f32 %v6981, %v1373
      %v7092 = vmul.f32 %v6984, %v1374
      %v7093 = vmul.f32 %v6989, %v1375
      %v7094 = vmul.f32 %v6992, %v1376
      %v7095 = vmul.f32 %v6997, %v1377
      %v7096 = vmul.f32 %v7000, %v1378
      %v7097 = vmul.f32 %v7005, %v1379
      %v7098 = vmul.f32 %v7008, %v1380
      %v7099 = vmul.f32 %v7013, %v1381
      %v7100 = vmul.f32 %v7016, %v1382
      %v7101 = vmul.f32 %v7021, %v1383
      %v7102 = vmul.f32 %v7024, %v1384
      %v7103 = vmul.f32 %v7029, %v1385
      %v7104 = vmul.f32 %v7032, %v1386
      %v7105 = vmul.f32 %v7037, %v1387
      %v7106 = vmul.f32 %v7040, %v1388
      %v7107 = vpack.c.bf16 %v7044, %v7043
      %v7108 = vpack.c.bf16 %v7046, %v7045
      %v7109 = vpack.c.bf16 %v7048, %v7047
      %v7110 = vpack.c.bf16 %v7050, %v7049
      %v7111 = vpack.c.bf16 %v7052, %v7051
      %v7112 = vpack.c.bf16 %v7054, %v7053
      %v7113 = vpack.c.bf16 %v7056, %v7055
      %v7114 = vpack.c.bf16 %v7058, %v7057
      %v7115 = vpack.c.bf16 %v7060, %v7059
      %v7116 = vpack.c.bf16 %v7062, %v7061
      %v7117 = vpack.c.bf16 %v7064, %v7063
      %v7118 = vpack.c.bf16 %v7066, %v7065
      %v7119 = vpack.c.bf16 %v7068, %v7067
      %v7120 = vpack.c.bf16 %v7070, %v7069
      %v7121 = vpack.c.bf16 %v7072, %v7071
      %v7122 = vpack.c.bf16 %v7074, %v7073
      %v7123 = vpack.c.bf16 %v7076, %v7075
      %v7124 = vpack.c.bf16 %v7078, %v7077
      %v7125 = vpack.c.bf16 %v7080, %v7079
      %v7126 = vpack.c.bf16 %v7082, %v7081
      %v7127 = vpack.c.bf16 %v7084, %v7083
      %v7128 = vpack.c.bf16 %v7086, %v7085
      %v7129 = vpack.c.bf16 %v7088, %v7087
      %v7130 = vpack.c.bf16 %v7090, %v7089
      %v7131 = vpack.c.bf16 %v7092, %v7091
      %v7132 = vpack.c.bf16 %v7094, %v7093
      %v7133 = vpack.c.bf16 %v7096, %v7095
      %v7134 = vpack.c.bf16 %v7098, %v7097
      %v7135 = vpack.c.bf16 %v7100, %v7099
      %v7136 = vpack.c.bf16 %v7102, %v7101
      %v7137 = vpack.c.bf16 %v7104, %v7103
      %v7138 = vpack.c.bf16 %v7106, %v7105
      %7139 = vmatprep.subr.bf16.mxu0 0
      %7140 = vmatpush1.bf16.msra.mxu0 %v7114
      %7141 = vmatprep.subr.bf16.mxu0 0
      %7142 = vmatpush1.bf16.msra.mxu0 %v7113
      %7143 = vmatprep.subr.bf16.mxu0 0
      %7144 = vmatpush1.bf16.msra.mxu0 %v7112
      %7145 = vmatprep.subr.bf16.mxu0 0
      %7146 = vmatpush1.bf16.msra.mxu0 %v7111
      %7147 = vmatprep.subr.bf16.mxu0 0
      %7148 = vmatpush1.bf16.msra.mxu0 %v7110
      %7149 = vmatprep.subr.bf16.mxu0 0
      %7150 = vmatpush1.bf16.msra.mxu0 %v7109
      %7151 = vmatprep.subr.bf16.mxu0 0
      %7152 = vmatpush1.bf16.msra.mxu0 %v7108
      %7153 = vmatprep.subr.bf16.mxu0 0
      %7154 = vmatpush1.bf16.msra.mxu0 %v7107
      %7155 = vmatprep.subr.bf16.mxu0 0
      %7156 = vmatpush2.bf16.msra.mxu0 %v7122
      %7157 = vmatprep.subr.bf16.mxu0 0
      %7158 = vmatpush2.bf16.msra.mxu0 %v7121
      %7159 = vmatprep.subr.bf16.mxu0 0
      %7160 = vmatpush2.bf16.msra.mxu0 %v7120
      %7161 = vmatprep.subr.bf16.mxu0 0
      %7162 = vmatpush2.bf16.msra.mxu0 %v7119
      %7163 = vmatprep.subr.bf16.mxu0 0
      %7164 = vmatpush2.bf16.msra.mxu0 %v7118
      %7165 = vmatprep.subr.bf16.mxu0 0
      %7166 = vmatpush2.bf16.msra.mxu0 %v7117
      %7167 = vmatprep.subr.bf16.mxu0 0
      %7168 = vmatpush2.bf16.msra.mxu0 %v7116
      %7169 = vmatprep.subr.bf16.mxu0 0
      %7170 = vmatpush2.bf16.msra.mxu0 %v7115
      %7171 = vmatprep.mubr.bf16.mxu0 %v3849
      %7172 = vmatmul.mubr.bf16.gmra.mxu0 %v3848
      %v7173 = vpop.f32.mrf.mxu0
      %v7174 = vadd.f32 0.0, %v7173
      %v7175 = vpop.f32.mrf.mxu0
      %v7176 = vpop.f32.mrf.mxu0
      %v7177 = vadd.f32 0.0, %v7176
      %v7178 = vpop.f32.mrf.mxu0
      %7179 = vmatprep.mubr.bf16.mxu0 %v3853
      %7180 = vmatmul.mubr.bf16.gmra.mxu0 %v3852
      %v7181 = vpop.f32.mrf.mxu0
      %v7182 = vadd.f32 0.0, %v7181
      %v7183 = vpop.f32.mrf.mxu0
      %v7184 = vpop.f32.mrf.mxu0
      %v7185 = vadd.f32 0.0, %v7184
      %v7186 = vpop.f32.mrf.mxu0
      %7187 = vmatprep.mubr.bf16.mxu0 %v3857
      %7188 = vmatmul.mubr.bf16.gmra.mxu0 %v3856
      %v7189 = vpop.f32.mrf.mxu0
      %v7190 = vadd.f32 0.0, %v7189
      %v7191 = vpop.f32.mrf.mxu0
      %v7192 = vpop.f32.mrf.mxu0
      %v7193 = vadd.f32 0.0, %v7192
      %v7194 = vpop.f32.mrf.mxu0
      %7195 = vmatprep.mubr.bf16.mxu0 %v3861
      %7196 = vmatmul.mubr.bf16.gmra.mxu0 %v3860
      %v7197 = vpop.f32.mrf.mxu0
      %v7198 = vadd.f32 0.0, %v7197
      %v7199 = vpop.f32.mrf.mxu0
      %v7200 = vpop.f32.mrf.mxu0
      %v7201 = vadd.f32 0.0, %v7200
      %v7202 = vpop.f32.mrf.mxu0
      %7203 = vdwg.mxu0
      %7204 = vmatprep.subr.bf16.mxu0 0
      %7205 = vmatpush1.bf16.msra.mxu0 %v7130
      %7206 = vmatprep.subr.bf16.mxu0 0
      %7207 = vmatpush1.bf16.msra.mxu0 %v7129
      %7208 = vmatprep.subr.bf16.mxu0 0
      %7209 = vmatpush1.bf16.msra.mxu0 %v7128
      %7210 = vmatprep.subr.bf16.mxu0 0
      %7211 = vmatpush1.bf16.msra.mxu0 %v7127
      %7212 = vmatprep.subr.bf16.mxu0 0
      %7213 = vmatpush1.bf16.msra.mxu0 %v7126
      %7214 = vmatprep.subr.bf16.mxu0 0
      %7215 = vmatpush1.bf16.msra.mxu0 %v7125
      %7216 = vmatprep.subr.bf16.mxu0 0
      %7217 = vmatpush1.bf16.msra.mxu0 %v7124
      %7218 = vmatprep.subr.bf16.mxu0 0
      %7219 = vmatpush1.bf16.msra.mxu0 %v7123
      %7220 = vmatprep.subr.bf16.mxu0 0
      %7221 = vmatpush2.bf16.msra.mxu0 %v7138
      %7222 = vmatprep.subr.bf16.mxu0 0
      %7223 = vmatpush2.bf16.msra.mxu0 %v7137
      %7224 = vmatprep.subr.bf16.mxu0 0
      %7225 = vmatpush2.bf16.msra.mxu0 %v7136
      %7226 = vmatprep.subr.bf16.mxu0 0
      %7227 = vmatpush2.bf16.msra.mxu0 %v7135
      %7228 = vmatprep.subr.bf16.mxu0 0
      %7229 = vmatpush2.bf16.msra.mxu0 %v7134
      %7230 = vmatprep.subr.bf16.mxu0 0
      %7231 = vmatpush2.bf16.msra.mxu0 %v7133
      %7232 = vmatprep.subr.bf16.mxu0 0
      %7233 = vmatpush2.bf16.msra.mxu0 %v7132
      %7234 = vmatprep.subr.bf16.mxu0 0
      %7235 = vmatpush2.bf16.msra.mxu0 %v7131
      %7236 = vmatprep.mubr.bf16.mxu0 %v3851
      %7237 = vmatmul.mubr.bf16.gmra.mxu0 %v3850
      %v7238 = vpop.f32.mrf.mxu0
      %v7239 = vadd.f32 %v7174, %v7238
      %v7240 = vpop.f32.mrf.mxu0
      %v7241 = vpop.f32.mrf.mxu0
      %v7242 = vadd.f32 %v7177, %v7241
      %v7243 = vpop.f32.mrf.mxu0
      %7244 = vmatprep.mubr.bf16.mxu0 %v3855
      %7245 = vmatmul.mubr.bf16.gmra.mxu0 %v3854
      %v7246 = vpop.f32.mrf.mxu0
      %v7247 = vadd.f32 %v7182, %v7246
      %v7248 = vpop.f32.mrf.mxu0
      %v7249 = vpop.f32.mrf.mxu0
      %v7250 = vadd.f32 %v7185, %v7249
      %v7251 = vpop.f32.mrf.mxu0
      %7252 = vmatprep.mubr.bf16.mxu0 %v3859
      %7253 = vmatmul.mubr.bf16.gmra.mxu0 %v3858
      %v7254 = vpop.f32.mrf.mxu0
      %v7255 = vadd.f32 %v7190, %v7254
      %v7256 = vpop.f32.mrf.mxu0
      %v7257 = vpop.f32.mrf.mxu0
      %v7258 = vadd.f32 %v7193, %v7257
      %v7259 = vpop.f32.mrf.mxu0
      %7260 = vmatprep.mubr.bf16.mxu0 %v3863
      %7261 = vmatmul.mubr.bf16.gmra.mxu0 %v3862
      %v7262 = vpop.f32.mrf.mxu0
      %v7263 = vadd.f32 %v7198, %v7262
      %v7264 = vpop.f32.mrf.mxu0
      %v7265 = vpop.f32.mrf.mxu0
      %v7266 = vadd.f32 %v7201, %v7265
      %v7267 = vpop.f32.mrf.mxu0
      %7268 = vdwg.mxu0
      %v7269 = vld [vmem:[%s2 + $0x12] sm:$0x1]
      %v7270 = vpack.c.bf16 %v7242, %v7239
      %v7271 = vpack.c.bf16 %v7250, %v7247
      %v7272 = vpack.c.bf16 %v7258, %v7255
      %v7273 = vpack.c.bf16 %v7266, %v7263
      %v7274 = vlaneseq
      %v7275 = vshrl.u32 %v7274, 7
      %v7276 = vsub.s32 0, %v7275
      %v7277 = vrot.slane %v7269, %v7276
      %7278 = vrot.lane.b32.xlu0 %v5059, 96
      %v7279 = vpop.permute.xlu0 %7278
      %7280 = vrot.lane.b32.xlu0 %v5060, 96
      %v7281 = vpop.permute.xlu0 %7280
      %v7285 = vsel %vm431, %v7270, 0
      %v7288 = vsel %vm431, %v7271, 0
      %v7291 = vsel %vm431, %v7272, 0
      %v7294 = vsel %vm431, %v7273, 0
      %7296 = vmatprep.subr.bf16.mxu0 0
      %7297 = vmatpush1.bf16.msra.mxu0 0
      %7298 = vmatprep.subr.bf16.mxu0 0
      %7299 = vmatpush1.bf16.msra.mxu0 0
      %7300 = vmatprep.subr.bf16.mxu0 0
      %7301 = vmatpush1.bf16.msra.mxu0 0
      %7302 = vmatprep.subr.bf16.mxu0 0
      %7303 = vmatpush1.bf16.msra.mxu0 0
      %7304 = vmatprep.subr.bf16.mxu0 0
      %7305 = vmatpush1.bf16.msra.mxu0 0
      %7306 = vmatprep.subr.bf16.mxu0 0
      %7307 = vmatpush1.bf16.msra.mxu0 0
      %7308 = vmatprep.subr.bf16.mxu0 0
      %7309 = vmatpush1.bf16.msra.mxu0 %v7281
      %7310 = vmatprep.subr.bf16.mxu0 0
      %7311 = vmatpush1.bf16.msra.mxu0 %v7279
      %7312 = vmatprep.subr.bf16.mxu0 0
      %7313 = vmatpush2.bf16.msra.mxu0 0
      %7314 = vmatprep.subr.bf16.mxu0 0
      %7315 = vmatpush2.bf16.msra.mxu0 0
      %7316 = vmatprep.subr.bf16.mxu0 0
      %7317 = vmatpush2.bf16.msra.mxu0 0
      %7318 = vmatprep.subr.bf16.mxu0 0
      %7319 = vmatpush2.bf16.msra.mxu0 0
      %7320 = vmatprep.subr.bf16.mxu0 0
      %7321 = vmatpush2.bf16.msra.mxu0 0
      %7322 = vmatprep.subr.bf16.mxu0 0
      %7323 = vmatpush2.bf16.msra.mxu0 0
      %7324 = vmatprep.subr.bf16.mxu0 0
      %7325 = vmatpush2.bf16.msra.mxu0 0
      %7326 = vmatprep.subr.bf16.mxu0 0
      %7327 = vmatpush2.bf16.msra.mxu0 0
      %7328 = vmatprep.mubr.bf16.mxu0 0
      %7329 = vmatmul.mubr.bf16.gmra.mxu0 %v7285
      %v7330 = vpop.f32.mrf.mxu0
      %v7331 = vadd.f32 %v7277, %v7330
      %v7332 = vpop.f32.mrf.mxu0
      %v7333 = vpop.f32.mrf.mxu0
      %v7334 = vadd.f32 %v7277, %v7333
      %v7335 = vpop.f32.mrf.mxu0
      %7336 = vmatprep.mubr.bf16.mxu0 0
      %7337 = vmatmul.mubr.bf16.gmra.mxu0 %v7288
      %v7338 = vpop.f32.mrf.mxu0
      %v7339 = vadd.f32 %v7277, %v7338
      %v7340 = vpop.f32.mrf.mxu0
      %v7341 = vpop.f32.mrf.mxu0
      %v7342 = vadd.f32 %v7277, %v7341
      %v7343 = vpop.f32.mrf.mxu0
      %7344 = vmatprep.mubr.bf16.mxu0 0
      %7345 = vmatmul.mubr.bf16.gmra.mxu0 %v7291
      %v7346 = vpop.f32.mrf.mxu0
      %v7347 = vadd.f32 %v7277, %v7346
      %v7348 = vpop.f32.mrf.mxu0
      %v7349 = vpop.f32.mrf.mxu0
      %v7350 = vadd.f32 %v7277, %v7349
      %v7351 = vpop.f32.mrf.mxu0
      %7352 = vmatprep.mubr.bf16.mxu0 0
      %7353 = vmatmul.mubr.bf16.gmra.mxu0 %v7294
      %v7354 = vpop.f32.mrf.mxu0
      %v7355 = vadd.f32 %v7277, %v7354
      %v7356 = vpop.f32.mrf.mxu0
      %v7357 = vpop.f32.mrf.mxu0
      %v7358 = vadd.f32 %v7277, %v7357
      %v7359 = vpop.f32.mrf.mxu0
      %7360 = vdwg.mxu0
      %v7361 = vadd.f32 %v4858, %v7331
      %v7362 = vadd.f32 %v4859, %v7334
      %v7363 = vadd.f32 %v4860, %v7339
      %v7364 = vadd.f32 %v4861, %v7342
      %v7365 = vadd.f32 %v4862, %v7347
      %v7366 = vadd.f32 %v4863, %v7350
      %v7367 = vadd.f32 %v4864, %v7355
      %v7368 = vadd.f32 %v4865, %v7358
      %v7369 = vld [vmem:[%s2 + $0x13] sm:$0x1]
      %v7370 = vld [vmem:[%s2 + $0x14] sm:$0x1]
      %v7371 = vsel %vm431, %v7361, 0.0
      %7372 = vadd.xlane.f32.xlu0 %v7371
      %v7373 = vpop.xlane.xlu0 %7372
      %v7374 = vsel %vm431, %v7362, 0.0
      %7375 = vadd.xlane.f32.xlu0 %v7374
      %v7376 = vpop.xlane.xlu0 %7375
      %v7377 = vsel %vm431, %v7363, 0.0
      %7378 = vadd.xlane.f32.xlu0 %v7377
      %v7379 = vpop.xlane.xlu0 %7378
      %v7380 = vsel %vm431, %v7364, 0.0
      %7381 = vadd.xlane.f32.xlu0 %v7380
      %v7382 = vpop.xlane.xlu0 %7381
      %v7383 = vsel %vm431, %v7365, 0.0
      %7384 = vadd.xlane.f32.xlu0 %v7383
      %v7385 = vpop.xlane.xlu0 %7384
      %v7386 = vsel %vm431, %v7366, 0.0
      %7387 = vadd.xlane.f32.xlu0 %v7386
      %v7388 = vpop.xlane.xlu0 %7387
      %v7389 = vsel %vm431, %v7367, 0.0
      %7390 = vadd.xlane.f32.xlu0 %v7389
      %v7391 = vpop.xlane.xlu0 %7390
      %v7392 = vsel %vm431, %v7368, 0.0
      %7393 = vadd.xlane.f32.xlu0 %v7392
      %v7394 = vpop.xlane.xlu0 %7393
      %v7395 = vmul.f32 %v7373, %v878
      %v7396 = vmul.f32 %v7376, %v878
      %v7397 = vmul.f32 %v7379, %v878
      %v7398 = vmul.f32 %v7382, %v878
      %v7399 = vmul.f32 %v7385, %v878
      %v7400 = vmul.f32 %v7388, %v878
      %v7401 = vmul.f32 %v7391, %v878
      %v7402 = vmul.f32 %v7394, %v878
      %v7403 = vmul.f32 %v7361, %v7361
      %v7404 = vmul.f32 %v7362, %v7362
      %v7405 = vmul.f32 %v7363, %v7363
      %v7406 = vmul.f32 %v7364, %v7364
      %v7407 = vmul.f32 %v7365, %v7365
      %v7408 = vmul.f32 %v7366, %v7366
      %v7409 = vmul.f32 %v7367, %v7367
      %v7410 = vmul.f32 %v7368, %v7368
      %v7411 = vsel %vm431, %v7403, 0.0
      %7412 = vadd.xlane.f32.xlu0 %v7411
      %v7413 = vpop.xlane.xlu0 %7412
      %v7414 = vsel %vm431, %v7404, 0.0
      %7415 = vadd.xlane.f32.xlu0 %v7414
      %v7416 = vpop.xlane.xlu0 %7415
      %v7417 = vsel %vm431, %v7405, 0.0
      %7418 = vadd.xlane.f32.xlu0 %v7417
      %v7419 = vpop.xlane.xlu0 %7418
      %v7420 = vsel %vm431, %v7406, 0.0
      %7421 = vadd.xlane.f32.xlu0 %v7420
      %v7422 = vpop.xlane.xlu0 %7421
      %v7423 = vsel %vm431, %v7407, 0.0
      %7424 = vadd.xlane.f32.xlu0 %v7423
      %v7425 = vpop.xlane.xlu0 %7424
      %v7426 = vsel %vm431, %v7408, 0.0
      %7427 = vadd.xlane.f32.xlu0 %v7426
      %v7428 = vpop.xlane.xlu0 %7427
      %v7429 = vsel %vm431, %v7409, 0.0
      %7430 = vadd.xlane.f32.xlu0 %v7429
      %v7431 = vpop.xlane.xlu0 %7430
      %v7432 = vsel %vm431, %v7410, 0.0
      %7433 = vadd.xlane.f32.xlu0 %v7432
      %v7434 = vpop.xlane.xlu0 %7433
      %v7435 = vmul.f32 %v7413, %v878
      %v7436 = vmul.f32 %v7416, %v878
      %v7437 = vmul.f32 %v7419, %v878
      %v7438 = vmul.f32 %v7422, %v878
      %v7439 = vmul.f32 %v7425, %v878
      %v7440 = vmul.f32 %v7428, %v878
      %v7441 = vmul.f32 %v7431, %v878
      %v7442 = vmul.f32 %v7434, %v878
      %v7443 = vmul.f32 %v7395, %v7395
      %v7444 = vmul.f32 %v7396, %v7396
      %v7445 = vmul.f32 %v7397, %v7397
      %v7446 = vmul.f32 %v7398, %v7398
      %v7447 = vmul.f32 %v7399, %v7399
      %v7448 = vmul.f32 %v7400, %v7400
      %v7449 = vmul.f32 %v7401, %v7401
      %v7450 = vmul.f32 %v7402, %v7402
      %v7451 = vsub.f32 %v7435, %v7443
      %v7452 = vsub.f32 %v7436, %v7444
      %v7453 = vsub.f32 %v7437, %v7445
      %v7454 = vsub.f32 %v7438, %v7446
      %v7455 = vsub.f32 %v7439, %v7447
      %v7456 = vsub.f32 %v7440, %v7448
      %v7457 = vsub.f32 %v7441, %v7449
      %v7458 = vsub.f32 %v7442, %v7450
      %v7459 = vsub.f32 %v7361, %v7395
      %v7460 = vsub.f32 %v7362, %v7396
      %v7461 = vsub.f32 %v7363, %v7397
      %v7462 = vsub.f32 %v7364, %v7398
      %v7463 = vsub.f32 %v7365, %v7399
      %v7464 = vsub.f32 %v7366, %v7400
      %v7465 = vsub.f32 %v7367, %v7401
      %v7466 = vsub.f32 %v7368, %v7402
      %v7467 = vadd.f32 %v7451, 1e-05
      %v7468 = vadd.f32 %v7452, 1e-05
      %v7469 = vadd.f32 %v7453, 1e-05
      %v7470 = vadd.f32 %v7454, 1e-05
      %v7471 = vadd.f32 %v7455, 1e-05
      %v7472 = vadd.f32 %v7456, 1e-05
      %v7473 = vadd.f32 %v7457, 1e-05
      %v7474 = vadd.f32 %v7458, 1e-05
      %v7475 = vrsqrt.pop %v7467
      %v7476 = vrsqrt.pop %v7468
      %v7477 = vrsqrt.pop %v7469
      %v7478 = vrsqrt.pop %v7470
      %v7479 = vrsqrt.pop %v7471
      %v7480 = vrsqrt.pop %v7472
      %v7481 = vrsqrt.pop %v7473
      %v7482 = vrsqrt.pop %v7474
      %v7483 = vmul.f32 %v7459, %v7475
      %v7484 = vmul.f32 %v7460, %v7476
      %v7485 = vmul.f32 %v7461, %v7477
      %v7486 = vmul.f32 %v7462, %v7478
      %v7487 = vmul.f32 %v7463, %v7479
      %v7488 = vmul.f32 %v7464, %v7480
      %v7489 = vmul.f32 %v7465, %v7481
      %v7490 = vmul.f32 %v7466, %v7482
      %v7491 = vlaneseq
      %v7492 = vshrl.u32 %v7491, 7
      %v7493 = vsub.s32 0, %v7492
      %v7494 = vrot.slane %v7369, %v7493
      %v7495 = vmul.f32 %v7483, %v7494
      %v7496 = vmul.f32 %v7484, %v7494
      %v7497 = vmul.f32 %v7485, %v7494
      %v7498 = vmul.f32 %v7486, %v7494
      %v7499 = vmul.f32 %v7487, %v7494
      %v7500 = vmul.f32 %v7488, %v7494
      %v7501 = vmul.f32 %v7489, %v7494
      %v7502 = vmul.f32 %v7490, %v7494
      %v7503 = vlaneseq
      %v7504 = vshrl.u32 %v7503, 7
      %v7505 = vsub.s32 0, %v7504
      %v7506 = vrot.slane %v7370, %v7505
      %v7507 = vadd.f32 %v7495, %v7506
      %v7508 = vadd.f32 %v7496, %v7506
      %v7509 = vadd.f32 %v7497, %v7506
      %v7510 = vadd.f32 %v7498, %v7506
      %v7511 = vadd.f32 %v7499, %v7506
      %v7512 = vadd.f32 %v7500, %v7506
      %v7513 = vadd.f32 %v7501, %v7506
      %v7514 = vadd.f32 %v7502, %v7506
      %v7515 = vld [vmem:[%s1 + $0xa8] sm:$0xf]
      %v7516 = vld [vmem:[%s1 + $0xac] sm:$0xf]
      %v7517 = vld [vmem:[%s1 + $0xb0] sm:$0xf]
      %v7518 = vld [vmem:[%s1 + $0xb4] sm:$0xf]
      %v7519 = vld [vmem:[%s2 + $0x15] sm:$0x1]
      %v7520 = vpack.c.bf16 %v7508, %v7507
      %v7521 = vpack.c.bf16 %v7510, %v7509
      %v7522 = vpack.c.bf16 %v7512, %v7511
      %v7523 = vpack.c.bf16 %v7514, %v7513
      %v7524 = vlaneseq
      %v7525 = vshrl.u32 %v7524, 7
      %v7526 = vsub.s32 0, %v7525
      %v7527 = vrot.slane %v7519, %v7526
      %v7532 = vunpack.c.l.b16 %v7515
      %v7533 = vunpack.c.l.b16 %v7516
      %v7534 = vunpack.c.l.b16 %v7517
      %v7535 = vunpack.c.l.b16 %v7518
      %v7536 = vpack.c.b16 %v7533, %v7532
      %v7537 = vpack.c.b16 %v7535, %v7534
      %v7541 = vsel %vm431, %v7520, 0
      %v7544 = vsel %vm431, %v7521, 0
      %v7547 = vsel %vm431, %v7522, 0
      %v7550 = vsel %vm431, %v7523, 0
      %7552 = vmatprep.subr.bf16.mxu0 0
      %7553 = vmatpush1.bf16.msra.mxu0 0
      %7554 = vmatprep.subr.bf16.mxu0 0
      %7555 = vmatpush1.bf16.msra.mxu0 0
      %7556 = vmatprep.subr.bf16.mxu0 0
      %7557 = vmatpush1.bf16.msra.mxu0 0
      %7558 = vmatprep.subr.bf16.mxu0 0
      %7559 = vmatpush1.bf16.msra.mxu0 0
      %7560 = vmatprep.subr.bf16.mxu0 0
      %7561 = vmatpush1.bf16.msra.mxu0 0
      %7562 = vmatprep.subr.bf16.mxu0 0
      %7563 = vmatpush1.bf16.msra.mxu0 0
      %7564 = vmatprep.subr.bf16.mxu0 0
      %7565 = vmatpush1.bf16.msra.mxu0 %v7537
      %7566 = vmatprep.subr.bf16.mxu0 0
      %7567 = vmatpush1.bf16.msra.mxu0 %v7536
      %7568 = vmatprep.subr.bf16.mxu0 0
      %7569 = vmatpush2.bf16.msra.mxu0 0
      %7570 = vmatprep.subr.bf16.mxu0 0
      %7571 = vmatpush2.bf16.msra.mxu0 0
      %7572 = vmatprep.subr.bf16.mxu0 0
      %7573 = vmatpush2.bf16.msra.mxu0 0
      %7574 = vmatprep.subr.bf16.mxu0 0
      %7575 = vmatpush2.bf16.msra.mxu0 0
      %7576 = vmatprep.subr.bf16.mxu0 0
      %7577 = vmatpush2.bf16.msra.mxu0 0
      %7578 = vmatprep.subr.bf16.mxu0 0
      %7579 = vmatpush2.bf16.msra.mxu0 0
      %7580 = vmatprep.subr.bf16.mxu0 0
      %7581 = vmatpush2.bf16.msra.mxu0 0
      %7582 = vmatprep.subr.bf16.mxu0 0
      %7583 = vmatpush2.bf16.msra.mxu0 0
      %7584 = vmatprep.mubr.bf16.mxu0 0
      %7585 = vmatmul.mubr.bf16.gmra.mxu0 %v7541
      %v7586 = vpop.f32.mrf.mxu0
      %v7587 = vadd.f32 %v7527, %v7586
      %v7588 = vpop.f32.mrf.mxu0
      %v7589 = vpop.f32.mrf.mxu0
      %v7590 = vadd.f32 %v7527, %v7589
      %v7591 = vpop.f32.mrf.mxu0
      %7592 = vmatprep.mubr.bf16.mxu0 0
      %7593 = vmatmul.mubr.bf16.gmra.mxu0 %v7544
      %v7594 = vpop.f32.mrf.mxu0
      %v7595 = vadd.f32 %v7527, %v7594
      %v7596 = vpop.f32.mrf.mxu0
      %v7597 = vpop.f32.mrf.mxu0
      %v7598 = vadd.f32 %v7527, %v7597
      %v7599 = vpop.f32.mrf.mxu0
      %7600 = vmatprep.mubr.bf16.mxu0 0
      %7601 = vmatmul.mubr.bf16.gmra.mxu0 %v7547
      %v7602 = vpop.f32.mrf.mxu0
      %v7603 = vadd.f32 %v7527, %v7602
      %v7604 = vpop.f32.mrf.mxu0
      %v7605 = vpop.f32.mrf.mxu0
      %v7606 = vadd.f32 %v7527, %v7605
      %v7607 = vpop.f32.mrf.mxu0
      %7608 = vmatprep.mubr.bf16.mxu0 0
      %7609 = vmatmul.mubr.bf16.gmra.mxu0 %v7550
      %v7610 = vpop.f32.mrf.mxu0
      %v7611 = vadd.f32 %v7527, %v7610
      %v7612 = vpop.f32.mrf.mxu0
      %v7613 = vpop.f32.mrf.mxu0
      %v7614 = vadd.f32 %v7527, %v7613
      %v7615 = vpop.f32.mrf.mxu0
      %7616 = vdwg.mxu0
      %v7617 = vmul.f32 %v7587, 0.5
      %v7618 = vmul.f32 %v7590, 0.5
      %v7619 = vmul.f32 %v7595, 0.5
      %v7620 = vmul.f32 %v7598, 0.5
      %v7621 = vmul.f32 %v7603, 0.5
      %v7622 = vmul.f32 %v7606, 0.5
      %v7623 = vmul.f32 %v7611, 0.5
      %v7624 = vmul.f32 %v7614, 0.5
      %v7625 = vmul.f32 %v7587, 0.70710677
      %v7626 = vmul.f32 %v7590, 0.70710677
      %v7627 = vmul.f32 %v7595, 0.70710677
      %v7628 = vmul.f32 %v7598, 0.70710677
      %v7629 = vmul.f32 %v7603, 0.70710677
      %v7630 = vmul.f32 %v7606, 0.70710677
      %v7631 = vmul.f32 %v7611, 0.70710677
      %v7632 = vmul.f32 %v7614, 0.70710677
      %v7633 = vand.u32 2147483647, %v7625
      %v7634 = vand.u32 2147483647, %v7626
      %v7635 = vand.u32 2147483647, %v7627
      %v7636 = vand.u32 2147483647, %v7628
      %v7637 = vand.u32 2147483647, %v7629
      %v7638 = vand.u32 2147483647, %v7630
      %v7639 = vand.u32 2147483647, %v7631
      %v7640 = vand.u32 2147483647, %v7632
      %v7641 = vmul.f32 %v7633, 0.3275911
      %v7642 = vmul.f32 %v7634, 0.3275911
      %v7643 = vmul.f32 %v7635, 0.3275911
      %v7644 = vmul.f32 %v7636, 0.3275911
      %v7645 = vmul.f32 %v7637, 0.3275911
      %v7646 = vmul.f32 %v7638, 0.3275911
      %v7647 = vmul.f32 %v7639, 0.3275911
      %v7648 = vmul.f32 %v7640, 0.3275911
      %v7649 = vadd.f32 %v7641, 1.0
      %v7650 = vadd.f32 %v7642, 1.0
      %v7651 = vadd.f32 %v7643, 1.0
      %v7652 = vadd.f32 %v7644, 1.0
      %v7653 = vadd.f32 %v7645, 1.0
      %v7654 = vadd.f32 %v7646, 1.0
      %v7655 = vadd.f32 %v7647, 1.0
      %v7656 = vadd.f32 %v7648, 1.0
      %v7657 = vrcp.pop %v7649
      %v7658 = vmul.f32 1.0, %v7657
      %v7659 = vrcp.pop %v7650
      %v7660 = vmul.f32 1.0, %v7659
      %v7661 = vrcp.pop %v7651
      %v7662 = vmul.f32 1.0, %v7661
      %v7663 = vrcp.pop %v7652
      %v7664 = vmul.f32 1.0, %v7663
      %v7665 = vrcp.pop %v7653
      %v7666 = vmul.f32 1.0, %v7665
      %v7667 = vrcp.pop %v7654
      %v7668 = vmul.f32 1.0, %v7667
      %v7669 = vrcp.pop %v7655
      %v7670 = vmul.f32 1.0, %v7669
      %v7671 = vrcp.pop %v7656
      %v7672 = vmul.f32 1.0, %v7671
      %v7673 = vmul.f32 %v7658, 1.0614054
      %v7674 = vmul.f32 %v7660, 1.0614054
      %v7675 = vmul.f32 %v7662, 1.0614054
      %v7676 = vmul.f32 %v7664, 1.0614054
      %v7677 = vmul.f32 %v7666, 1.0614054
      %v7678 = vmul.f32 %v7668, 1.0614054
      %v7679 = vmul.f32 %v7670, 1.0614054
      %v7680 = vmul.f32 %v7672, 1.0614054
      %v7681 = vadd.f32 %v7673, -1.4531521
      %v7682 = vadd.f32 %v7674, -1.4531521
      %v7683 = vadd.f32 %v7675, -1.4531521
      %v7684 = vadd.f32 %v7676, -1.4531521
      %v7685 = vadd.f32 %v7677, -1.4531521
      %v7686 = vadd.f32 %v7678, -1.4531521
      %v7687 = vadd.f32 %v7679, -1.4531521
      %v7688 = vadd.f32 %v7680, -1.4531521
      %v7689 = vmul.f32 %v7681, %v7658
      %v7690 = vmul.f32 %v7682, %v7660
      %v7691 = vmul.f32 %v7683, %v7662
      %v7692 = vmul.f32 %v7684, %v7664
      %v7693 = vmul.f32 %v7685, %v7666
      %v7694 = vmul.f32 %v7686, %v7668
      %v7695 = vmul.f32 %v7687, %v7670
      %v7696 = vmul.f32 %v7688, %v7672
      %v7697 = vadd.f32 %v7689, 1.4214138
      %v7698 = vadd.f32 %v7690, 1.4214138
      %v7699 = vadd.f32 %v7691, 1.4214138
      %v7700 = vadd.f32 %v7692, 1.4214138
      %v7701 = vadd.f32 %v7693, 1.4214138
      %v7702 = vadd.f32 %v7694, 1.4214138
      %v7703 = vadd.f32 %v7695, 1.4214138
      %v7704 = vadd.f32 %v7696, 1.4214138
      %v7705 = vmul.f32 %v7697, %v7658
      %v7706 = vmul.f32 %v7698, %v7660
      %v7707 = vmul.f32 %v7699, %v7662
      %v7708 = vmul.f32 %v7700, %v7664
      %v7709 = vmul.f32 %v7701, %v7666
      %v7710 = vmul.f32 %v7702, %v7668
      %v7711 = vmul.f32 %v7703, %v7670
      %v7712 = vmul.f32 %v7704, %v7672
      %v7713 = vadd.f32 %v7705, -0.28449672
      %v7714 = vadd.f32 %v7706, -0.28449672
      %v7715 = vadd.f32 %v7707, -0.28449672
      %v7716 = vadd.f32 %v7708, -0.28449672
      %v7717 = vadd.f32 %v7709, -0.28449672
      %v7718 = vadd.f32 %v7710, -0.28449672
      %v7719 = vadd.f32 %v7711, -0.28449672
      %v7720 = vadd.f32 %v7712, -0.28449672
      %v7721 = vmul.f32 %v7713, %v7658
      %v7722 = vmul.f32 %v7714, %v7660
      %v7723 = vmul.f32 %v7715, %v7662
      %v7724 = vmul.f32 %v7716, %v7664
      %v7725 = vmul.f32 %v7717, %v7666
      %v7726 = vmul.f32 %v7718, %v7668
      %v7727 = vmul.f32 %v7719, %v7670
      %v7728 = vmul.f32 %v7720, %v7672
      %v7729 = vadd.f32 %v7721, 0.2548296
      %v7730 = vadd.f32 %v7722, 0.2548296
      %v7731 = vadd.f32 %v7723, 0.2548296
      %v7732 = vadd.f32 %v7724, 0.2548296
      %v7733 = vadd.f32 %v7725, 0.2548296
      %v7734 = vadd.f32 %v7726, 0.2548296
      %v7735 = vadd.f32 %v7727, 0.2548296
      %v7736 = vadd.f32 %v7728, 0.2548296
      %v7737 = vmul.f32 %v7729, %v7658
      %v7738 = vmul.f32 %v7730, %v7660
      %v7739 = vmul.f32 %v7731, %v7662
      %v7740 = vmul.f32 %v7732, %v7664
      %v7741 = vmul.f32 %v7733, %v7666
      %v7742 = vmul.f32 %v7734, %v7668
      %v7743 = vmul.f32 %v7735, %v7670
      %v7744 = vmul.f32 %v7736, %v7672
      %v7745 = vsub.f32 0.0, %v7633
      %v7746 = vsub.f32 0.0, %v7634
      %v7747 = vsub.f32 0.0, %v7635
      %v7748 = vsub.f32 0.0, %v7636
      %v7749 = vsub.f32 0.0, %v7637
      %v7750 = vsub.f32 0.0, %v7638
      %v7751 = vsub.f32 0.0, %v7639
      %v7752 = vsub.f32 0.0, %v7640
      %v7753 = vmul.f32 %v7745, %v7633
      %v7754 = vmul.f32 %v7746, %v7634
      %v7755 = vmul.f32 %v7747, %v7635
      %v7756 = vmul.f32 %v7748, %v7636
      %v7757 = vmul.f32 %v7749, %v7637
      %v7758 = vmul.f32 %v7750, %v7638
      %v7759 = vmul.f32 %v7751, %v7639
      %v7760 = vmul.f32 %v7752, %v7640
      %v7761 = vmul.f32 %v7753, 1.442695
      %v7762 = vpow.pop %v7761
      %v7763 = vmul.f32 %v7754, 1.442695
      %v7764 = vpow.pop %v7763
      %v7765 = vmul.f32 %v7755, 1.442695
      %v7766 = vpow.pop %v7765
      %v7767 = vmul.f32 %v7756, 1.442695
      %v7768 = vpow.pop %v7767
      %v7769 = vmul.f32 %v7757, 1.442695
      %v7770 = vpow.pop %v7769
      %v7771 = vmul.f32 %v7758, 1.442695
      %v7772 = vpow.pop %v7771
      %v7773 = vmul.f32 %v7759, 1.442695
      %v7774 = vpow.pop %v7773
      %v7775 = vmul.f32 %v7760, 1.442695
      %v7776 = vpow.pop %v7775
      %v7777 = vmul.f32 %v7737, %v7762
      %v7778 = vmul.f32 %v7738, %v7764
      %v7779 = vmul.f32 %v7739, %v7766
      %v7780 = vmul.f32 %v7740, %v7768
      %v7781 = vmul.f32 %v7741, %v7770
      %v7782 = vmul.f32 %v7742, %v7772
      %v7783 = vmul.f32 %v7743, %v7774
      %v7784 = vmul.f32 %v7744, %v7776
      %v7785 = vsub.f32 1.0, %v7777
      %v7786 = vsub.f32 1.0, %v7778
      %v7787 = vsub.f32 1.0, %v7779
      %v7788 = vsub.f32 1.0, %v7780
      %v7789 = vsub.f32 1.0, %v7781
      %v7790 = vsub.f32 1.0, %v7782
      %v7791 = vsub.f32 1.0, %v7783
      %v7792 = vsub.f32 1.0, %v7784
      %vm7793 = vcmp.ge.f32.partialorder %v7625, 0.0
      %vm7794 = vcmp.ge.f32.partialorder %v7626, 0.0
      %vm7795 = vcmp.ge.f32.partialorder %v7627, 0.0
      %vm7796 = vcmp.ge.f32.partialorder %v7628, 0.0
      %vm7797 = vcmp.ge.f32.partialorder %v7629, 0.0
      %vm7798 = vcmp.ge.f32.partialorder %v7630, 0.0
      %vm7799 = vcmp.ge.f32.partialorder %v7631, 0.0
      %vm7800 = vcmp.ge.f32.partialorder %v7632, 0.0
      %v7801 = vsub.f32 0.0, %v7785
      %v7802 = vsub.f32 0.0, %v7786
      %v7803 = vsub.f32 0.0, %v7787
      %v7804 = vsub.f32 0.0, %v7788
      %v7805 = vsub.f32 0.0, %v7789
      %v7806 = vsub.f32 0.0, %v7790
      %v7807 = vsub.f32 0.0, %v7791
      %v7808 = vsub.f32 0.0, %v7792
      %v7809 = vsel %vm7793, %v7785, %v7801
      %v7810 = vsel %vm7794, %v7786, %v7802
      %v7811 = vsel %vm7795, %v7787, %v7803
      %v7812 = vsel %vm7796, %v7788, %v7804
      %v7813 = vsel %vm7797, %v7789, %v7805
      %v7814 = vsel %vm7798, %v7790, %v7806
      %v7815 = vsel %vm7799, %v7791, %v7807
      %v7816 = vsel %vm7800, %v7792, %v7808
      %v7817 = vadd.f32 %v7809, 1.0
      %v7818 = vadd.f32 %v7810, 1.0
      %v7819 = vadd.f32 %v7811, 1.0
      %v7820 = vadd.f32 %v7812, 1.0
      %v7821 = vadd.f32 %v7813, 1.0
      %v7822 = vadd.f32 %v7814, 1.0
      %v7823 = vadd.f32 %v7815, 1.0
      %v7824 = vadd.f32 %v7816, 1.0
      %v7825 = vmul.f32 %v7617, %v7817
      %v7826 = vmul.f32 %v7618, %v7818
      %v7827 = vmul.f32 %v7619, %v7819
      %v7828 = vmul.f32 %v7620, %v7820
      %v7829 = vmul.f32 %v7621, %v7821
      %v7830 = vmul.f32 %v7622, %v7822
      %v7831 = vmul.f32 %v7623, %v7823
      %v7832 = vmul.f32 %v7624, %v7824
      %v7833 = vld [vmem:[%s2 + $0x16] sm:$0x1]
      %v7834 = vpack.c.bf16 %v7826, %v7825
      %v7835 = vpack.c.bf16 %v7828, %v7827
      %v7836 = vpack.c.bf16 %v7830, %v7829
      %v7837 = vpack.c.bf16 %v7832, %v7831
      %v7838 = vlaneseq
      %v7839 = vshrl.u32 %v7838, 7
      %v7840 = vsub.s32 0, %v7839
      %v7841 = vrot.slane %v7833, %v7840
      %7842 = vrot.lane.b32.xlu0 %v4631, 96
      %v7843 = vpop.permute.xlu0 %7842
      %7844 = vrot.lane.b32.xlu0 %v4632, 96
      %v7845 = vpop.permute.xlu0 %7844
      %7846 = vrot.lane.b32.xlu0 %v4633, 96
      %v7847 = vpop.permute.xlu0 %7846
      %7848 = vrot.lane.b32.xlu0 %v4634, 96
      %v7849 = vpop.permute.xlu0 %7848
      %7850 = vrot.lane.b32.xlu0 %v4635, 96
      %v7851 = vpop.permute.xlu0 %7850
      %7852 = vrot.lane.b32.xlu0 %v4636, 96
      %v7853 = vpop.permute.xlu0 %7852
      %7854 = vrot.lane.b32.xlu0 %v4637, 96
      %v7855 = vpop.permute.xlu0 %7854
      %7856 = vrot.lane.b32.xlu0 %v4638, 96
      %v7857 = vpop.permute.xlu0 %7856
      %7866 = vmatprep.subr.bf16.mxu0 0
      %7867 = vmatpush1.bf16.msra.mxu0 %v7857
      %7868 = vmatprep.subr.bf16.mxu0 0
      %7869 = vmatpush1.bf16.msra.mxu0 %v7855
      %7870 = vmatprep.subr.bf16.mxu0 0
      %7871 = vmatpush1.bf16.msra.mxu0 %v7853
      %7872 = vmatprep.subr.bf16.mxu0 0
      %7873 = vmatpush1.bf16.msra.mxu0 %v7851
      %7874 = vmatprep.subr.bf16.mxu0 0
      %7875 = vmatpush1.bf16.msra.mxu0 %v7849
      %7876 = vmatprep.subr.bf16.mxu0 0
      %7877 = vmatpush1.bf16.msra.mxu0 %v7847
      %7878 = vmatprep.subr.bf16.mxu0 0
      %7879 = vmatpush1.bf16.msra.mxu0 %v7845
      %7880 = vmatprep.subr.bf16.mxu0 0
      %7881 = vmatpush1.bf16.msra.mxu0 %v7843
      %7882 = vmatprep.subr.bf16.mxu0 0
      %7883 = vmatpush2.bf16.msra.mxu0 0
      %7884 = vmatprep.subr.bf16.mxu0 0
      %7885 = vmatpush2.bf16.msra.mxu0 0
      %7886 = vmatprep.subr.bf16.mxu0 0
      %7887 = vmatpush2.bf16.msra.mxu0 0
      %7888 = vmatprep.subr.bf16.mxu0 0
      %7889 = vmatpush2.bf16.msra.mxu0 0
      %7890 = vmatprep.subr.bf16.mxu0 0
      %7891 = vmatpush2.bf16.msra.mxu0 0
      %7892 = vmatprep.subr.bf16.mxu0 0
      %7893 = vmatpush2.bf16.msra.mxu0 0
      %7894 = vmatprep.subr.bf16.mxu0 0
      %7895 = vmatpush2.bf16.msra.mxu0 0
      %7896 = vmatprep.subr.bf16.mxu0 0
      %7897 = vmatpush2.bf16.msra.mxu0 0
      %7898 = vmatprep.mubr.bf16.mxu0 0
      %7899 = vmatmul.mubr.bf16.gmra.mxu0 %v7834
      %v7900 = vpop.f32.mrf.mxu0
      %v7901 = vadd.f32 %v7841, %v7900
      %v7902 = vpop.f32.mrf.mxu0
      %v7903 = vpop.f32.mrf.mxu0
      %v7904 = vadd.f32 %v7841, %v7903
      %v7905 = vpop.f32.mrf.mxu0
      %7906 = vmatprep.mubr.bf16.mxu0 0
      %7907 = vmatmul.mubr.bf16.gmra.mxu0 %v7835
      %v7908 = vpop.f32.mrf.mxu0
      %v7909 = vadd.f32 %v7841, %v7908
      %v7910 = vpop.f32.mrf.mxu0
      %v7911 = vpop.f32.mrf.mxu0
      %v7912 = vadd.f32 %v7841, %v7911
      %v7913 = vpop.f32.mrf.mxu0
      %7914 = vmatprep.mubr.bf16.mxu0 0
      %7915 = vmatmul.mubr.bf16.gmra.mxu0 %v7836
      %v7916 = vpop.f32.mrf.mxu0
      %v7917 = vadd.f32 %v7841, %v7916
      %v7918 = vpop.f32.mrf.mxu0
      %v7919 = vpop.f32.mrf.mxu0
      %v7920 = vadd.f32 %v7841, %v7919
      %v7921 = vpop.f32.mrf.mxu0
      %7922 = vmatprep.mubr.bf16.mxu0 0
      %7923 = vmatmul.mubr.bf16.gmra.mxu0 %v7837
      %v7924 = vpop.f32.mrf.mxu0
      %v7925 = vadd.f32 %v7841, %v7924
      %v7926 = vpop.f32.mrf.mxu0
      %v7927 = vpop.f32.mrf.mxu0
      %v7928 = vadd.f32 %v7841, %v7927
      %v7929 = vpop.f32.mrf.mxu0
      %7930 = vdwg.mxu0
      %v7931 = vadd.f32 %v7507, %v7901
      %v7932 = vadd.f32 %v7508, %v7904
      %v7933 = vadd.f32 %v7509, %v7909
      %v7934 = vadd.f32 %v7510, %v7912
      %v7935 = vadd.f32 %v7511, %v7917
      %v7936 = vadd.f32 %v7512, %v7920
      %v7937 = vadd.f32 %v7513, %v7925
      %v7938 = vadd.f32 %v7514, %v7928
      %v7939 = vld [vmem:[%s2 + $0x17] sm:$0x1]
      %v7940 = vld [vmem:[%s2 + $0x18] sm:$0x1]
      %v7941 = vsel %vm431, %v7931, 0.0
      %7942 = vadd.xlane.f32.xlu0 %v7941
      %v7943 = vpop.xlane.xlu0 %7942
      %v7944 = vsel %vm431, %v7932, 0.0
      %7945 = vadd.xlane.f32.xlu0 %v7944
      %v7946 = vpop.xlane.xlu0 %7945
      %v7947 = vsel %vm431, %v7933, 0.0
      %7948 = vadd.xlane.f32.xlu0 %v7947
      %v7949 = vpop.xlane.xlu0 %7948
      %v7950 = vsel %vm431, %v7934, 0.0
      %7951 = vadd.xlane.f32.xlu0 %v7950
      %v7952 = vpop.xlane.xlu0 %7951
      %v7953 = vsel %vm431, %v7935, 0.0
      %7954 = vadd.xlane.f32.xlu0 %v7953
      %v7955 = vpop.xlane.xlu0 %7954
      %v7956 = vsel %vm431, %v7936, 0.0
      %7957 = vadd.xlane.f32.xlu0 %v7956
      %v7958 = vpop.xlane.xlu0 %7957
      %v7959 = vsel %vm431, %v7937, 0.0
      %7960 = vadd.xlane.f32.xlu0 %v7959
      %v7961 = vpop.xlane.xlu0 %7960
      %v7962 = vsel %vm431, %v7938, 0.0
      %7963 = vadd.xlane.f32.xlu0 %v7962
      %v7964 = vpop.xlane.xlu0 %7963
      %v7965 = vmul.f32 %v7943, %v878
      %v7966 = vmul.f32 %v7946, %v878
      %v7967 = vmul.f32 %v7949, %v878
      %v7968 = vmul.f32 %v7952, %v878
      %v7969 = vmul.f32 %v7955, %v878
      %v7970 = vmul.f32 %v7958, %v878
      %v7971 = vmul.f32 %v7961, %v878
      %v7972 = vmul.f32 %v7964, %v878
      %v7973 = vmul.f32 %v7931, %v7931
      %v7974 = vmul.f32 %v7932, %v7932
      %v7975 = vmul.f32 %v7933, %v7933
      %v7976 = vmul.f32 %v7934, %v7934
      %v7977 = vmul.f32 %v7935, %v7935
      %v7978 = vmul.f32 %v7936, %v7936
      %v7979 = vmul.f32 %v7937, %v7937
      %v7980 = vmul.f32 %v7938, %v7938
      %v7981 = vsel %vm431, %v7973, 0.0
      %7982 = vadd.xlane.f32.xlu0 %v7981
      %v7983 = vpop.xlane.xlu0 %7982
      %v7984 = vsel %vm431, %v7974, 0.0
      %7985 = vadd.xlane.f32.xlu0 %v7984
      %v7986 = vpop.xlane.xlu0 %7985
      %v7987 = vsel %vm431, %v7975, 0.0
      %7988 = vadd.xlane.f32.xlu0 %v7987
      %v7989 = vpop.xlane.xlu0 %7988
      %v7990 = vsel %vm431, %v7976, 0.0
      %7991 = vadd.xlane.f32.xlu0 %v7990
      %v7992 = vpop.xlane.xlu0 %7991
      %v7993 = vsel %vm431, %v7977, 0.0
      %7994 = vadd.xlane.f32.xlu0 %v7993
      %v7995 = vpop.xlane.xlu0 %7994
      %v7996 = vsel %vm431, %v7978, 0.0
      %7997 = vadd.xlane.f32.xlu0 %v7996
      %v7998 = vpop.xlane.xlu0 %7997
      %v7999 = vsel %vm431, %v7979, 0.0
      %8000 = vadd.xlane.f32.xlu0 %v7999
      %v8001 = vpop.xlane.xlu0 %8000
      %v8002 = vsel %vm431, %v7980, 0.0
      %8003 = vadd.xlane.f32.xlu0 %v8002
      %v8004 = vpop.xlane.xlu0 %8003
      %v8005 = vmul.f32 %v7983, %v878
      %v8006 = vmul.f32 %v7986, %v878
      %v8007 = vmul.f32 %v7989, %v878
      %v8008 = vmul.f32 %v7992, %v878
      %v8009 = vmul.f32 %v7995, %v878
      %v8010 = vmul.f32 %v7998, %v878
      %v8011 = vmul.f32 %v8001, %v878
      %v8012 = vmul.f32 %v8004, %v878
      %v8013 = vmul.f32 %v7965, %v7965
      %v8014 = vmul.f32 %v7966, %v7966
      %v8015 = vmul.f32 %v7967, %v7967
      %v8016 = vmul.f32 %v7968, %v7968
      %v8017 = vmul.f32 %v7969, %v7969
      %v8018 = vmul.f32 %v7970, %v7970
      %v8019 = vmul.f32 %v7971, %v7971
      %v8020 = vmul.f32 %v7972, %v7972
      %v8021 = vsub.f32 %v8005, %v8013
      %v8022 = vsub.f32 %v8006, %v8014
      %v8023 = vsub.f32 %v8007, %v8015
      %v8024 = vsub.f32 %v8008, %v8016
      %v8025 = vsub.f32 %v8009, %v8017
      %v8026 = vsub.f32 %v8010, %v8018
      %v8027 = vsub.f32 %v8011, %v8019
      %v8028 = vsub.f32 %v8012, %v8020
      %v8029 = vsub.f32 %v7931, %v7965
      %v8030 = vsub.f32 %v7932, %v7966
      %v8031 = vsub.f32 %v7933, %v7967
      %v8032 = vsub.f32 %v7934, %v7968
      %v8033 = vsub.f32 %v7935, %v7969
      %v8034 = vsub.f32 %v7936, %v7970
      %v8035 = vsub.f32 %v7937, %v7971
      %v8036 = vsub.f32 %v7938, %v7972
      %v8037 = vadd.f32 %v8021, 1e-05
      %v8038 = vadd.f32 %v8022, 1e-05
      %v8039 = vadd.f32 %v8023, 1e-05
      %v8040 = vadd.f32 %v8024, 1e-05
      %v8041 = vadd.f32 %v8025, 1e-05
      %v8042 = vadd.f32 %v8026, 1e-05
      %v8043 = vadd.f32 %v8027, 1e-05
      %v8044 = vadd.f32 %v8028, 1e-05
      %v8045 = vrsqrt.pop %v8037
      %v8046 = vrsqrt.pop %v8038
      %v8047 = vrsqrt.pop %v8039
      %v8048 = vrsqrt.pop %v8040
      %v8049 = vrsqrt.pop %v8041
      %v8050 = vrsqrt.pop %v8042
      %v8051 = vrsqrt.pop %v8043
      %v8052 = vrsqrt.pop %v8044
      %v8053 = vmul.f32 %v8029, %v8045
      %v8054 = vmul.f32 %v8030, %v8046
      %v8055 = vmul.f32 %v8031, %v8047
      %v8056 = vmul.f32 %v8032, %v8048
      %v8057 = vmul.f32 %v8033, %v8049
      %v8058 = vmul.f32 %v8034, %v8050
      %v8059 = vmul.f32 %v8035, %v8051
      %v8060 = vmul.f32 %v8036, %v8052
      %v8061 = vlaneseq
      %v8062 = vshrl.u32 %v8061, 7
      %v8063 = vsub.s32 0, %v8062
      %v8064 = vrot.slane %v7939, %v8063
      %v8065 = vmul.f32 %v8053, %v8064
      %v8066 = vmul.f32 %v8054, %v8064
      %v8067 = vmul.f32 %v8055, %v8064
      %v8068 = vmul.f32 %v8056, %v8064
      %v8069 = vmul.f32 %v8057, %v8064
      %v8070 = vmul.f32 %v8058, %v8064
      %v8071 = vmul.f32 %v8059, %v8064
      %v8072 = vmul.f32 %v8060, %v8064
      %v8073 = vlaneseq
      %v8074 = vshrl.u32 %v8073, 7
      %v8075 = vsub.s32 0, %v8074
      %v8076 = vrot.slane %v7940, %v8075
      %v8077 = vadd.f32 %v8065, %v8076
      %v8078 = vadd.f32 %v8066, %v8076
      %v8079 = vadd.f32 %v8067, %v8076
      %v8080 = vadd.f32 %v8068, %v8076
      %v8081 = vadd.f32 %v8069, %v8076
      %v8082 = vadd.f32 %v8070, %v8076
      %v8083 = vadd.f32 %v8071, %v8076
      %v8084 = vadd.f32 %v8072, %v8076
      %v8085 = vld [vmem:[%s2 + $0x19] sm:$0x1]
      %v8086 = vld [vmem:[%s2 + $0x1a] sm:$0x1]
      %v8087 = vld [vmem:[%s1 + $0xb8] sm:$0xf]
      %v8088 = vld [vmem:[%s1 + $0xbc] sm:$0xf]
      %v8089 = vld [vmem:[%s1 + $0xc0] sm:$0xf]
      %v8090 = vld [vmem:[%s1 + $0xc4] sm:$0xf]
      %v8091 = vld [vmem:[%s2 + $0x1b] sm:$0x1]
      %v8092 = vpack.c.bf16 %v8078, %v8077
      %v8093 = vpack.c.bf16 %v8080, %v8079
      %v8094 = vpack.c.bf16 %v8082, %v8081
      %v8095 = vpack.c.bf16 %v8084, %v8083
      %v8096 = vlaneseq
      %v8097 = vshrl.u32 %v8096, 7
      %v8098 = vsub.s32 0, %v8097
      %v8099 = vrot.slane %v8085, %v8098
      %8100 = vrot.lane.b32.xlu0 %v5059, 64
      %v8101 = vpop.permute.xlu0 %8100
      %8102 = vrot.lane.b32.xlu0 %v5060, 64
      %v8103 = vpop.permute.xlu0 %8102
      %v8107 = vsel %vm431, %v8092, 0
      %v8110 = vsel %vm431, %v8093, 0
      %v8113 = vsel %vm431, %v8094, 0
      %v8116 = vsel %vm431, %v8095, 0
      %8118 = vmatprep.subr.bf16.mxu0 0
      %8119 = vmatpush1.bf16.msra.mxu0 0
      %8120 = vmatprep.subr.bf16.mxu0 0
      %8121 = vmatpush1.bf16.msra.mxu0 0
      %8122 = vmatprep.subr.bf16.mxu0 0
      %8123 = vmatpush1.bf16.msra.mxu0 0
      %8124 = vmatprep.subr.bf16.mxu0 0
      %8125 = vmatpush1.bf16.msra.mxu0 0
      %8126 = vmatprep.subr.bf16.mxu0 0
      %8127 = vmatpush1.bf16.msra.mxu0 0
      %8128 = vmatprep.subr.bf16.mxu0 0
      %8129 = vmatpush1.bf16.msra.mxu0 0
      %8130 = vmatprep.subr.bf16.mxu0 0
      %8131 = vmatpush1.bf16.msra.mxu0 %v8103
      %8132 = vmatprep.subr.bf16.mxu0 0
      %8133 = vmatpush1.bf16.msra.mxu0 %v8101
      %8134 = vmatprep.subr.bf16.mxu0 0
      %8135 = vmatpush2.bf16.msra.mxu0 0
      %8136 = vmatprep.subr.bf16.mxu0 0
      %8137 = vmatpush2.bf16.msra.mxu0 0
      %8138 = vmatprep.subr.bf16.mxu0 0
      %8139 = vmatpush2.bf16.msra.mxu0 0
      %8140 = vmatprep.subr.bf16.mxu0 0
      %8141 = vmatpush2.bf16.msra.mxu0 0
      %8142 = vmatprep.subr.bf16.mxu0 0
      %8143 = vmatpush2.bf16.msra.mxu0 0
      %8144 = vmatprep.subr.bf16.mxu0 0
      %8145 = vmatpush2.bf16.msra.mxu0 0
      %8146 = vmatprep.subr.bf16.mxu0 0
      %8147 = vmatpush2.bf16.msra.mxu0 0
      %8148 = vmatprep.subr.bf16.mxu0 0
      %8149 = vmatpush2.bf16.msra.mxu0 0
      %8150 = vmatprep.mubr.bf16.mxu0 0
      %8151 = vmatmul.mubr.bf16.gmra.mxu0 %v8107
      %v8152 = vpop.f32.mrf.mxu0
      %v8153 = vadd.f32 %v8099, %v8152
      %v8154 = vpop.f32.mrf.mxu0
      %v8155 = vpop.f32.mrf.mxu0
      %v8156 = vadd.f32 %v8099, %v8155
      %v8157 = vpop.f32.mrf.mxu0
      %8158 = vmatprep.mubr.bf16.mxu0 0
      %8159 = vmatmul.mubr.bf16.gmra.mxu0 %v8110
      %v8160 = vpop.f32.mrf.mxu0
      %v8161 = vadd.f32 %v8099, %v8160
      %v8162 = vpop.f32.mrf.mxu0
      %v8163 = vpop.f32.mrf.mxu0
      %v8164 = vadd.f32 %v8099, %v8163
      %v8165 = vpop.f32.mrf.mxu0
      %8166 = vmatprep.mubr.bf16.mxu0 0
      %8167 = vmatmul.mubr.bf16.gmra.mxu0 %v8113
      %v8168 = vpop.f32.mrf.mxu0
      %v8169 = vadd.f32 %v8099, %v8168
      %v8170 = vpop.f32.mrf.mxu0
      %v8171 = vpop.f32.mrf.mxu0
      %v8172 = vadd.f32 %v8099, %v8171
      %v8173 = vpop.f32.mrf.mxu0
      %8174 = vmatprep.mubr.bf16.mxu0 0
      %8175 = vmatmul.mubr.bf16.gmra.mxu0 %v8116
      %v8176 = vpop.f32.mrf.mxu0
      %v8177 = vadd.f32 %v8099, %v8176
      %v8178 = vpop.f32.mrf.mxu0
      %v8179 = vpop.f32.mrf.mxu0
      %v8180 = vadd.f32 %v8099, %v8179
      %v8181 = vpop.f32.mrf.mxu0
      %8182 = vdwg.mxu0
      %v8183 = vmul.f32 %v8153, 0.5
      %v8184 = vmul.f32 %v8156, 0.5
      %v8185 = vmul.f32 %v8161, 0.5
      %v8186 = vmul.f32 %v8164, 0.5
      %v8187 = vmul.f32 %v8169, 0.5
      %v8188 = vmul.f32 %v8172, 0.5
      %v8189 = vmul.f32 %v8177, 0.5
      %v8190 = vmul.f32 %v8180, 0.5
      %v8191 = vlaneseq
      %v8192 = vshrl.u32 %v8191, 7
      %v8193 = vsub.s32 0, %v8192
      %v8194 = vrot.slane %v8086, %v8193
      %8195 = vrot.lane.b32.xlu0 %v5059, 32
      %v8196 = vpop.permute.xlu0 %8195
      %8197 = vrot.lane.b32.xlu0 %v5060, 32
      %v8198 = vpop.permute.xlu0 %8197
      %8201 = vmatprep.subr.bf16.mxu0 0
      %8202 = vmatpush1.bf16.msra.mxu0 0
      %8203 = vmatprep.subr.bf16.mxu0 0
      %8204 = vmatpush1.bf16.msra.mxu0 0
      %8205 = vmatprep.subr.bf16.mxu0 0
      %8206 = vmatpush1.bf16.msra.mxu0 0
      %8207 = vmatprep.subr.bf16.mxu0 0
      %8208 = vmatpush1.bf16.msra.mxu0 0
      %8209 = vmatprep.subr.bf16.mxu0 0
      %8210 = vmatpush1.bf16.msra.mxu0 0
      %8211 = vmatprep.subr.bf16.mxu0 0
      %8212 = vmatpush1.bf16.msra.mxu0 0
      %8213 = vmatprep.subr.bf16.mxu0 0
      %8214 = vmatpush1.bf16.msra.mxu0 %v8198
      %8215 = vmatprep.subr.bf16.mxu0 0
      %8216 = vmatpush1.bf16.msra.mxu0 %v8196
      %8217 = vmatprep.subr.bf16.mxu0 0
      %8218 = vmatpush2.bf16.msra.mxu0 0
      %8219 = vmatprep.subr.bf16.mxu0 0
      %8220 = vmatpush2.bf16.msra.mxu0 0
      %8221 = vmatprep.subr.bf16.mxu0 0
      %8222 = vmatpush2.bf16.msra.mxu0 0
      %8223 = vmatprep.subr.bf16.mxu0 0
      %8224 = vmatpush2.bf16.msra.mxu0 0
      %8225 = vmatprep.subr.bf16.mxu0 0
      %8226 = vmatpush2.bf16.msra.mxu0 0
      %8227 = vmatprep.subr.bf16.mxu0 0
      %8228 = vmatpush2.bf16.msra.mxu0 0
      %8229 = vmatprep.subr.bf16.mxu0 0
      %8230 = vmatpush2.bf16.msra.mxu0 0
      %8231 = vmatprep.subr.bf16.mxu0 0
      %8232 = vmatpush2.bf16.msra.mxu0 0
      %8233 = vmatprep.mubr.bf16.mxu0 0
      %8234 = vmatmul.mubr.bf16.gmra.mxu0 %v8107
      %v8235 = vpop.f32.mrf.mxu0
      %v8236 = vadd.f32 %v8194, %v8235
      %v8237 = vpop.f32.mrf.mxu0
      %v8238 = vpop.f32.mrf.mxu0
      %v8239 = vadd.f32 %v8194, %v8238
      %v8240 = vpop.f32.mrf.mxu0
      %8241 = vmatprep.mubr.bf16.mxu0 0
      %8242 = vmatmul.mubr.bf16.gmra.mxu0 %v8110
      %v8243 = vpop.f32.mrf.mxu0
      %v8244 = vadd.f32 %v8194, %v8243
      %v8245 = vpop.f32.mrf.mxu0
      %v8246 = vpop.f32.mrf.mxu0
      %v8247 = vadd.f32 %v8194, %v8246
      %v8248 = vpop.f32.mrf.mxu0
      %8249 = vmatprep.mubr.bf16.mxu0 0
      %8250 = vmatmul.mubr.bf16.gmra.mxu0 %v8113
      %v8251 = vpop.f32.mrf.mxu0
      %v8252 = vadd.f32 %v8194, %v8251
      %v8253 = vpop.f32.mrf.mxu0
      %v8254 = vpop.f32.mrf.mxu0
      %v8255 = vadd.f32 %v8194, %v8254
      %v8256 = vpop.f32.mrf.mxu0
      %8257 = vmatprep.mubr.bf16.mxu0 0
      %8258 = vmatmul.mubr.bf16.gmra.mxu0 %v8116
      %v8259 = vpop.f32.mrf.mxu0
      %v8260 = vadd.f32 %v8194, %v8259
      %v8261 = vpop.f32.mrf.mxu0
      %v8262 = vpop.f32.mrf.mxu0
      %v8263 = vadd.f32 %v8194, %v8262
      %v8264 = vpop.f32.mrf.mxu0
      %8265 = vdwg.mxu0
      %v8266 = vlaneseq
      %v8267 = vshrl.u32 %v8266, 7
      %v8268 = vsub.s32 0, %v8267
      %v8269 = vrot.slane %v8091, %v8268
      %v8274 = vunpack.c.l.b16 %v8087
      %v8275 = vunpack.c.l.b16 %v8088
      %v8276 = vunpack.c.l.b16 %v8089
      %v8277 = vunpack.c.l.b16 %v8090
      %v8278 = vpack.c.b16 %v8275, %v8274
      %v8279 = vpack.c.b16 %v8277, %v8276
      %8282 = vmatprep.subr.bf16.mxu0 0
      %8283 = vmatpush1.bf16.msra.mxu0 0
      %8284 = vmatprep.subr.bf16.mxu0 0
      %8285 = vmatpush1.bf16.msra.mxu0 0
      %8286 = vmatprep.subr.bf16.mxu0 0
      %8287 = vmatpush1.bf16.msra.mxu0 0
      %8288 = vmatprep.subr.bf16.mxu0 0
      %8289 = vmatpush1.bf16.msra.mxu0 0
      %8290 = vmatprep.subr.bf16.mxu0 0
      %8291 = vmatpush1.bf16.msra.mxu0 0
      %8292 = vmatprep.subr.bf16.mxu0 0
      %8293 = vmatpush1.bf16.msra.mxu0 0
      %8294 = vmatprep.subr.bf16.mxu0 0
      %8295 = vmatpush1.bf16.msra.mxu0 %v8279
      %8296 = vmatprep.subr.bf16.mxu0 0
      %8297 = vmatpush1.bf16.msra.mxu0 %v8278
      %8298 = vmatprep.subr.bf16.mxu0 0
      %8299 = vmatpush2.bf16.msra.mxu0 0
      %8300 = vmatprep.subr.bf16.mxu0 0
      %8301 = vmatpush2.bf16.msra.mxu0 0
      %8302 = vmatprep.subr.bf16.mxu0 0
      %8303 = vmatpush2.bf16.msra.mxu0 0
      %8304 = vmatprep.subr.bf16.mxu0 0
      %8305 = vmatpush2.bf16.msra.mxu0 0
      %8306 = vmatprep.subr.bf16.mxu0 0
      %8307 = vmatpush2.bf16.msra.mxu0 0
      %8308 = vmatprep.subr.bf16.mxu0 0
      %8309 = vmatpush2.bf16.msra.mxu0 0
      %8310 = vmatprep.subr.bf16.mxu0 0
      %8311 = vmatpush2.bf16.msra.mxu0 0
      %8312 = vmatprep.subr.bf16.mxu0 0
      %8313 = vmatpush2.bf16.msra.mxu0 0
      %8314 = vmatprep.mubr.bf16.mxu0 0
      %8315 = vmatmul.mubr.bf16.gmra.mxu0 %v8107
      %v8316 = vpop.f32.mrf.mxu0
      %v8317 = vadd.f32 %v8269, %v8316
      %v8318 = vpop.f32.mrf.mxu0
      %v8319 = vpop.f32.mrf.mxu0
      %v8320 = vadd.f32 %v8269, %v8319
      %v8321 = vpop.f32.mrf.mxu0
      %8322 = vmatprep.mubr.bf16.mxu0 0
      %8323 = vmatmul.mubr.bf16.gmra.mxu0 %v8110
      %v8324 = vpop.f32.mrf.mxu0
      %v8325 = vadd.f32 %v8269, %v8324
      %v8326 = vpop.f32.mrf.mxu0
      %v8327 = vpop.f32.mrf.mxu0
      %v8328 = vadd.f32 %v8269, %v8327
      %v8329 = vpop.f32.mrf.mxu0
      %8330 = vmatprep.mubr.bf16.mxu0 0
      %8331 = vmatmul.mubr.bf16.gmra.mxu0 %v8113
      %v8332 = vpop.f32.mrf.mxu0
      %v8333 = vadd.f32 %v8269, %v8332
      %v8334 = vpop.f32.mrf.mxu0
      %v8335 = vpop.f32.mrf.mxu0
      %v8336 = vadd.f32 %v8269, %v8335
      %v8337 = vpop.f32.mrf.mxu0
      %8338 = vmatprep.mubr.bf16.mxu0 0
      %8339 = vmatmul.mubr.bf16.gmra.mxu0 %v8116
      %v8340 = vpop.f32.mrf.mxu0
      %v8341 = vadd.f32 %v8269, %v8340
      %v8342 = vpop.f32.mrf.mxu0
      %v8343 = vpop.f32.mrf.mxu0
      %v8344 = vadd.f32 %v8269, %v8343
      %v8345 = vpop.f32.mrf.mxu0
      %8346 = vdwg.mxu0
      %v8347 = vpack.c.bf16 %v8184, %v8183
      %v8348 = vpack.c.bf16 %v8186, %v8185
      %v8349 = vpack.c.bf16 %v8188, %v8187
      %v8350 = vpack.c.bf16 %v8190, %v8189
      %8351 = vmatprep.subr.bf16.mxu0 0
      %8352 = vmatpush1.bf16.msra.mxu0 0
      %8353 = vmatprep.subr.bf16.mxu0 0
      %8354 = vmatpush1.bf16.msra.mxu0 0
      %8355 = vmatprep.subr.bf16.mxu0 0
      %8356 = vmatpush1.bf16.msra.mxu0 0
      %8357 = vmatprep.subr.bf16.mxu0 0
      %8358 = vmatpush1.bf16.msra.mxu0 0
      %8359 = vmatprep.subr.bf16.mxu0 0
      %8360 = vmatpush1.bf16.msra.mxu0 %v8350
      %8361 = vmatprep.subr.bf16.mxu0 0
      %8362 = vmatpush1.bf16.msra.mxu0 %v8349
      %8363 = vmatprep.subr.bf16.mxu0 0
      %8364 = vmatpush1.bf16.msra.mxu0 %v8348
      %8365 = vmatprep.subr.bf16.mxu0 0
      %8366 = vmatpush1.bf16.msra.mxu0 %v8347
      %8367 = vmatprep.subr.bf16.mxu0 0
      %8368 = vmatpush2.bf16.msra.mxu0 0
      %8369 = vmatprep.subr.bf16.mxu0 0
      %8370 = vmatpush2.bf16.msra.mxu0 0
      %8371 = vmatprep.subr.bf16.mxu0 0
      %8372 = vmatpush2.bf16.msra.mxu0 0
      %8373 = vmatprep.subr.bf16.mxu0 0
      %8374 = vmatpush2.bf16.msra.mxu0 0
      %8375 = vmatprep.subr.bf16.mxu0 0
      %8376 = vmatpush2.bf16.msra.mxu0 0
      %8377 = vmatprep.subr.bf16.mxu0 0
      %8378 = vmatpush2.bf16.msra.mxu0 0
      %8379 = vmatprep.subr.bf16.mxu0 0
      %8380 = vmatpush2.bf16.msra.mxu0 0
      %8381 = vmatprep.subr.bf16.mxu0 0
      %8382 = vmatpush2.bf16.msra.mxu0 0
      %8383 = vmatprep.mubr.bf16.mxu0 0
      %8384 = vmatmul.mubr.bf16.gmra.mxu0 %v1618
      %v8385 = vpop.f32.mrf.mxu0
      %v8386 = vadd.f32 0.0, %v8385
      %v8387 = vpop.f32.mrf.mxu0
      %v8388 = vpop.f32.mrf.mxu0
      %v8389 = vadd.f32 0.0, %v8388
      %v8390 = vpop.f32.mrf.mxu0
      %8391 = vmatprep.mubr.bf16.mxu0 0
      %8392 = vmatmul.mubr.bf16.gmra.mxu0 %v1621
      %v8393 = vpop.f32.mrf.mxu0
      %v8394 = vadd.f32 0.0, %v8393
      %v8395 = vpop.f32.mrf.mxu0
      %v8396 = vpop.f32.mrf.mxu0
      %v8397 = vadd.f32 0.0, %v8396
      %v8398 = vpop.f32.mrf.mxu0
      %8399 = vmatprep.mubr.bf16.mxu0 0
      %8400 = vmatmul.mubr.bf16.gmra.mxu0 %v1624
      %v8401 = vpop.f32.mrf.mxu0
      %v8402 = vadd.f32 0.0, %v8401
      %v8403 = vpop.f32.mrf.mxu0
      %v8404 = vpop.f32.mrf.mxu0
      %v8405 = vadd.f32 0.0, %v8404
      %v8406 = vpop.f32.mrf.mxu0
      %8407 = vmatprep.mubr.bf16.mxu0 0
      %8408 = vmatmul.mubr.bf16.gmra.mxu0 %v1627
      %v8409 = vpop.f32.mrf.mxu0
      %v8410 = vadd.f32 0.0, %v8409
      %v8411 = vpop.f32.mrf.mxu0
      %v8412 = vpop.f32.mrf.mxu0
      %v8413 = vadd.f32 0.0, %v8412
      %v8414 = vpop.f32.mrf.mxu0
      %8415 = vmatprep.mubr.bf16.mxu0 0
      %8416 = vmatmul.mubr.bf16.gmra.mxu0 %v1630
      %v8417 = vpop.f32.mrf.mxu0
      %v8418 = vadd.f32 0.0, %v8417
      %v8419 = vpop.f32.mrf.mxu0
      %v8420 = vpop.f32.mrf.mxu0
      %v8421 = vadd.f32 0.0, %v8420
      %v8422 = vpop.f32.mrf.mxu0
      %8423 = vmatprep.mubr.bf16.mxu0 0
      %8424 = vmatmul.mubr.bf16.gmra.mxu0 %v1633
      %v8425 = vpop.f32.mrf.mxu0
      %v8426 = vadd.f32 0.0, %v8425
      %v8427 = vpop.f32.mrf.mxu0
      %v8428 = vpop.f32.mrf.mxu0
      %v8429 = vadd.f32 0.0, %v8428
      %v8430 = vpop.f32.mrf.mxu0
      %8431 = vmatprep.mubr.bf16.mxu0 0
      %8432 = vmatmul.mubr.bf16.gmra.mxu0 %v1636
      %v8433 = vpop.f32.mrf.mxu0
      %v8434 = vadd.f32 0.0, %v8433
      %v8435 = vpop.f32.mrf.mxu0
      %v8436 = vpop.f32.mrf.mxu0
      %v8437 = vadd.f32 0.0, %v8436
      %v8438 = vpop.f32.mrf.mxu0
      %8439 = vmatprep.mubr.bf16.mxu0 0
      %8440 = vmatmul.mubr.bf16.gmra.mxu0 %v1639
      %v8441 = vpop.f32.mrf.mxu0
      %v8442 = vadd.f32 0.0, %v8441
      %v8443 = vpop.f32.mrf.mxu0
      %v8444 = vpop.f32.mrf.mxu0
      %v8445 = vadd.f32 0.0, %v8444
      %v8446 = vpop.f32.mrf.mxu0
      %8447 = vmatprep.mubr.bf16.mxu0 0
      %8448 = vmatmul.mubr.bf16.gmra.mxu0 %v1642
      %v8449 = vpop.f32.mrf.mxu0
      %v8450 = vadd.f32 0.0, %v8449
      %v8451 = vpop.f32.mrf.mxu0
      %v8452 = vpop.f32.mrf.mxu0
      %v8453 = vadd.f32 0.0, %v8452
      %v8454 = vpop.f32.mrf.mxu0
      %8455 = vmatprep.mubr.bf16.mxu0 0
      %8456 = vmatmul.mubr.bf16.gmra.mxu0 %v1645
      %v8457 = vpop.f32.mrf.mxu0
      %v8458 = vadd.f32 0.0, %v8457
      %v8459 = vpop.f32.mrf.mxu0
      %v8460 = vpop.f32.mrf.mxu0
      %v8461 = vadd.f32 0.0, %v8460
      %v8462 = vpop.f32.mrf.mxu0
      %8463 = vmatprep.mubr.bf16.mxu0 0
      %8464 = vmatmul.mubr.bf16.gmra.mxu0 %v1648
      %v8465 = vpop.f32.mrf.mxu0
      %v8466 = vadd.f32 0.0, %v8465
      %v8467 = vpop.f32.mrf.mxu0
      %v8468 = vpop.f32.mrf.mxu0
      %v8469 = vadd.f32 0.0, %v8468
      %v8470 = vpop.f32.mrf.mxu0
      %8471 = vmatprep.mubr.bf16.mxu0 0
      %8472 = vmatmul.mubr.bf16.gmra.mxu0 %v1651
      %v8473 = vpop.f32.mrf.mxu0
      %v8474 = vadd.f32 0.0, %v8473
      %v8475 = vpop.f32.mrf.mxu0
      %v8476 = vpop.f32.mrf.mxu0
      %v8477 = vadd.f32 0.0, %v8476
      %v8478 = vpop.f32.mrf.mxu0
      %8479 = vmatprep.mubr.bf16.mxu0 0
      %8480 = vmatmul.mubr.bf16.gmra.mxu0 %v1654
      %v8481 = vpop.f32.mrf.mxu0
      %v8482 = vadd.f32 0.0, %v8481
      %v8483 = vpop.f32.mrf.mxu0
      %v8484 = vpop.f32.mrf.mxu0
      %v8485 = vadd.f32 0.0, %v8484
      %v8486 = vpop.f32.mrf.mxu0
      %8487 = vmatprep.mubr.bf16.mxu0 0
      %8488 = vmatmul.mubr.bf16.gmra.mxu0 %v1657
      %v8489 = vpop.f32.mrf.mxu0
      %v8490 = vadd.f32 0.0, %v8489
      %v8491 = vpop.f32.mrf.mxu0
      %v8492 = vpop.f32.mrf.mxu0
      %v8493 = vadd.f32 0.0, %v8492
      %v8494 = vpop.f32.mrf.mxu0
      %8495 = vmatprep.mubr.bf16.mxu0 0
      %8496 = vmatmul.mubr.bf16.gmra.mxu0 %v1660
      %v8497 = vpop.f32.mrf.mxu0
      %v8498 = vadd.f32 0.0, %v8497
      %v8499 = vpop.f32.mrf.mxu0
      %v8500 = vpop.f32.mrf.mxu0
      %v8501 = vadd.f32 0.0, %v8500
      %v8502 = vpop.f32.mrf.mxu0
      %8503 = vmatprep.mubr.bf16.mxu0 0
      %8504 = vmatmul.mubr.bf16.gmra.mxu0 %v1663
      %v8505 = vpop.f32.mrf.mxu0
      %v8506 = vadd.f32 0.0, %v8505
      %v8507 = vpop.f32.mrf.mxu0
      %v8508 = vpop.f32.mrf.mxu0
      %v8509 = vadd.f32 0.0, %v8508
      %v8510 = vpop.f32.mrf.mxu0
      %8511 = vmatprep.mubr.bf16.mxu0 0
      %8512 = vmatmul.mubr.bf16.gmra.mxu0 %v1666
      %v8513 = vpop.f32.mrf.mxu0
      %v8514 = vadd.f32 0.0, %v8513
      %v8515 = vpop.f32.mrf.mxu0
      %v8516 = vpop.f32.mrf.mxu0
      %v8517 = vadd.f32 0.0, %v8516
      %v8518 = vpop.f32.mrf.mxu0
      %8519 = vmatprep.mubr.bf16.mxu0 0
      %8520 = vmatmul.mubr.bf16.gmra.mxu0 %v1669
      %v8521 = vpop.f32.mrf.mxu0
      %v8522 = vadd.f32 0.0, %v8521
      %v8523 = vpop.f32.mrf.mxu0
      %v8524 = vpop.f32.mrf.mxu0
      %v8525 = vadd.f32 0.0, %v8524
      %v8526 = vpop.f32.mrf.mxu0
      %8527 = vmatprep.mubr.bf16.mxu0 0
      %8528 = vmatmul.mubr.bf16.gmra.mxu0 %v1672
      %v8529 = vpop.f32.mrf.mxu0
      %v8530 = vadd.f32 0.0, %v8529
      %v8531 = vpop.f32.mrf.mxu0
      %v8532 = vpop.f32.mrf.mxu0
      %v8533 = vadd.f32 0.0, %v8532
      %v8534 = vpop.f32.mrf.mxu0
      %8535 = vmatprep.mubr.bf16.mxu0 0
      %8536 = vmatmul.mubr.bf16.gmra.mxu0 %v1675
      %v8537 = vpop.f32.mrf.mxu0
      %v8538 = vadd.f32 0.0, %v8537
      %v8539 = vpop.f32.mrf.mxu0
      %v8540 = vpop.f32.mrf.mxu0
      %v8541 = vadd.f32 0.0, %v8540
      %v8542 = vpop.f32.mrf.mxu0
      %8543 = vmatprep.mubr.bf16.mxu0 0
      %8544 = vmatmul.mubr.bf16.gmra.mxu0 %v1678
      %v8545 = vpop.f32.mrf.mxu0
      %v8546 = vadd.f32 0.0, %v8545
      %v8547 = vpop.f32.mrf.mxu0
      %v8548 = vpop.f32.mrf.mxu0
      %v8549 = vadd.f32 0.0, %v8548
      %v8550 = vpop.f32.mrf.mxu0
      %8551 = vmatprep.mubr.bf16.mxu0 0
      %8552 = vmatmul.mubr.bf16.gmra.mxu0 %v1681
      %v8553 = vpop.f32.mrf.mxu0
      %v8554 = vadd.f32 0.0, %v8553
      %v8555 = vpop.f32.mrf.mxu0
      %v8556 = vpop.f32.mrf.mxu0
      %v8557 = vadd.f32 0.0, %v8556
      %v8558 = vpop.f32.mrf.mxu0
      %8559 = vmatprep.mubr.bf16.mxu0 0
      %8560 = vmatmul.mubr.bf16.gmra.mxu0 %v1684
      %v8561 = vpop.f32.mrf.mxu0
      %v8562 = vadd.f32 0.0, %v8561
      %v8563 = vpop.f32.mrf.mxu0
      %v8564 = vpop.f32.mrf.mxu0
      %v8565 = vadd.f32 0.0, %v8564
      %v8566 = vpop.f32.mrf.mxu0
      %8567 = vmatprep.mubr.bf16.mxu0 0
      %8568 = vmatmul.mubr.bf16.gmra.mxu0 %v1687
      %v8569 = vpop.f32.mrf.mxu0
      %v8570 = vadd.f32 0.0, %v8569
      %v8571 = vpop.f32.mrf.mxu0
      %v8572 = vpop.f32.mrf.mxu0
      %v8573 = vadd.f32 0.0, %v8572
      %v8574 = vpop.f32.mrf.mxu0
      %8575 = vmatprep.mubr.bf16.mxu0 0
      %8576 = vmatmul.mubr.bf16.gmra.mxu0 %v1690
      %v8577 = vpop.f32.mrf.mxu0
      %v8578 = vadd.f32 0.0, %v8577
      %v8579 = vpop.f32.mrf.mxu0
      %v8580 = vpop.f32.mrf.mxu0
      %v8581 = vadd.f32 0.0, %v8580
      %v8582 = vpop.f32.mrf.mxu0
      %8583 = vmatprep.mubr.bf16.mxu0 0
      %8584 = vmatmul.mubr.bf16.gmra.mxu0 %v1693
      %v8585 = vpop.f32.mrf.mxu0
      %v8586 = vadd.f32 0.0, %v8585
      %v8587 = vpop.f32.mrf.mxu0
      %v8588 = vpop.f32.mrf.mxu0
      %v8589 = vadd.f32 0.0, %v8588
      %v8590 = vpop.f32.mrf.mxu0
      %8591 = vmatprep.mubr.bf16.mxu0 0
      %8592 = vmatmul.mubr.bf16.gmra.mxu0 %v1696
      %v8593 = vpop.f32.mrf.mxu0
      %v8594 = vadd.f32 0.0, %v8593
      %v8595 = vpop.f32.mrf.mxu0
      %v8596 = vpop.f32.mrf.mxu0
      %v8597 = vadd.f32 0.0, %v8596
      %v8598 = vpop.f32.mrf.mxu0
      %8599 = vmatprep.mubr.bf16.mxu0 0
      %8600 = vmatmul.mubr.bf16.gmra.mxu0 %v1699
      %v8601 = vpop.f32.mrf.mxu0
      %v8602 = vadd.f32 0.0, %v8601
      %v8603 = vpop.f32.mrf.mxu0
      %v8604 = vpop.f32.mrf.mxu0
      %v8605 = vadd.f32 0.0, %v8604
      %v8606 = vpop.f32.mrf.mxu0
      %8607 = vmatprep.mubr.bf16.mxu0 0
      %8608 = vmatmul.mubr.bf16.gmra.mxu0 %v1702
      %v8609 = vpop.f32.mrf.mxu0
      %v8610 = vadd.f32 0.0, %v8609
      %v8611 = vpop.f32.mrf.mxu0
      %v8612 = vpop.f32.mrf.mxu0
      %v8613 = vadd.f32 0.0, %v8612
      %v8614 = vpop.f32.mrf.mxu0
      %8615 = vmatprep.mubr.bf16.mxu0 0
      %8616 = vmatmul.mubr.bf16.gmra.mxu0 %v1705
      %v8617 = vpop.f32.mrf.mxu0
      %v8618 = vadd.f32 0.0, %v8617
      %v8619 = vpop.f32.mrf.mxu0
      %v8620 = vpop.f32.mrf.mxu0
      %v8621 = vadd.f32 0.0, %v8620
      %v8622 = vpop.f32.mrf.mxu0
      %8623 = vmatprep.mubr.bf16.mxu0 0
      %8624 = vmatmul.mubr.bf16.gmra.mxu0 %v1708
      %v8625 = vpop.f32.mrf.mxu0
      %v8626 = vadd.f32 0.0, %v8625
      %v8627 = vpop.f32.mrf.mxu0
      %v8628 = vpop.f32.mrf.mxu0
      %v8629 = vadd.f32 0.0, %v8628
      %v8630 = vpop.f32.mrf.mxu0
      %8631 = vmatprep.mubr.bf16.mxu0 0
      %8632 = vmatmul.mubr.bf16.gmra.mxu0 %v1711
      %v8633 = vpop.f32.mrf.mxu0
      %v8634 = vadd.f32 0.0, %v8633
      %v8635 = vpop.f32.mrf.mxu0
      %v8636 = vpop.f32.mrf.mxu0
      %v8637 = vadd.f32 0.0, %v8636
      %v8638 = vpop.f32.mrf.mxu0
      %8639 = vdwg.mxu0
      %v8640 = vmul.f32 %v8386, %v1325
      %v8641 = vmul.f32 %v8389, %v1326
      %v8642 = vmul.f32 %v8394, %v1327
      %v8643 = vmul.f32 %v8397, %v1328
      %v8644 = vmul.f32 %v8402, %v1329
      %v8645 = vmul.f32 %v8405, %v1330
      %v8646 = vmul.f32 %v8410, %v1331
      %v8647 = vmul.f32 %v8413, %v1332
      %v8648 = vmul.f32 %v8418, %v1333
      %v8649 = vmul.f32 %v8421, %v1334
      %v8650 = vmul.f32 %v8426, %v1335
      %v8651 = vmul.f32 %v8429, %v1336
      %v8652 = vmul.f32 %v8434, %v1337
      %v8653 = vmul.f32 %v8437, %v1338
      %v8654 = vmul.f32 %v8442, %v1339
      %v8655 = vmul.f32 %v8445, %v1340
      %v8656 = vmul.f32 %v8450, %v1341
      %v8657 = vmul.f32 %v8453, %v1342
      %v8658 = vmul.f32 %v8458, %v1343
      %v8659 = vmul.f32 %v8461, %v1344
      %v8660 = vmul.f32 %v8466, %v1345
      %v8661 = vmul.f32 %v8469, %v1346
      %v8662 = vmul.f32 %v8474, %v1347
      %v8663 = vmul.f32 %v8477, %v1348
      %v8664 = vmul.f32 %v8482, %v1349
      %v8665 = vmul.f32 %v8485, %v1350
      %v8666 = vmul.f32 %v8490, %v1351
      %v8667 = vmul.f32 %v8493, %v1352
      %v8668 = vmul.f32 %v8498, %v1353
      %v8669 = vmul.f32 %v8501, %v1354
      %v8670 = vmul.f32 %v8506, %v1355
      %v8671 = vmul.f32 %v8509, %v1356
      %v8672 = vmul.f32 %v8514, %v1357
      %v8673 = vmul.f32 %v8517, %v1358
      %v8674 = vmul.f32 %v8522, %v1359
      %v8675 = vmul.f32 %v8525, %v1360
      %v8676 = vmul.f32 %v8530, %v1361
      %v8677 = vmul.f32 %v8533, %v1362
      %v8678 = vmul.f32 %v8538, %v1363
      %v8679 = vmul.f32 %v8541, %v1364
      %v8680 = vmul.f32 %v8546, %v1365
      %v8681 = vmul.f32 %v8549, %v1366
      %v8682 = vmul.f32 %v8554, %v1367
      %v8683 = vmul.f32 %v8557, %v1368
      %v8684 = vmul.f32 %v8562, %v1369
      %v8685 = vmul.f32 %v8565, %v1370
      %v8686 = vmul.f32 %v8570, %v1371
      %v8687 = vmul.f32 %v8573, %v1372
      %v8688 = vmul.f32 %v8578, %v1373
      %v8689 = vmul.f32 %v8581, %v1374
      %v8690 = vmul.f32 %v8586, %v1375
      %v8691 = vmul.f32 %v8589, %v1376
      %v8692 = vmul.f32 %v8594, %v1377
      %v8693 = vmul.f32 %v8597, %v1378
      %v8694 = vmul.f32 %v8602, %v1379
      %v8695 = vmul.f32 %v8605, %v1380
      %v8696 = vmul.f32 %v8610, %v1381
      %v8697 = vmul.f32 %v8613, %v1382
      %v8698 = vmul.f32 %v8618, %v1383
      %v8699 = vmul.f32 %v8621, %v1384
      %v8700 = vmul.f32 %v8626, %v1385
      %v8701 = vmul.f32 %v8629, %v1386
      %v8702 = vmul.f32 %v8634, %v1387
      %v8703 = vmul.f32 %v8637, %v1388
      %v8704 = vpack.c.bf16 %v8641, %v8640
      %v8705 = vpack.c.bf16 %v8643, %v8642
      %v8706 = vpack.c.bf16 %v8645, %v8644
      %v8707 = vpack.c.bf16 %v8647, %v8646
      %v8708 = vpack.c.bf16 %v8649, %v8648
      %v8709 = vpack.c.bf16 %v8651, %v8650
      %v8710 = vpack.c.bf16 %v8653, %v8652
      %v8711 = vpack.c.bf16 %v8655, %v8654
      %v8712 = vpack.c.bf16 %v8657, %v8656
      %v8713 = vpack.c.bf16 %v8659, %v8658
      %v8714 = vpack.c.bf16 %v8661, %v8660
      %v8715 = vpack.c.bf16 %v8663, %v8662
      %v8716 = vpack.c.bf16 %v8665, %v8664
      %v8717 = vpack.c.bf16 %v8667, %v8666
      %v8718 = vpack.c.bf16 %v8669, %v8668
      %v8719 = vpack.c.bf16 %v8671, %v8670
      %v8720 = vpack.c.bf16 %v8673, %v8672
      %v8721 = vpack.c.bf16 %v8675, %v8674
      %v8722 = vpack.c.bf16 %v8677, %v8676
      %v8723 = vpack.c.bf16 %v8679, %v8678
      %v8724 = vpack.c.bf16 %v8681, %v8680
      %v8725 = vpack.c.bf16 %v8683, %v8682
      %v8726 = vpack.c.bf16 %v8685, %v8684
      %v8727 = vpack.c.bf16 %v8687, %v8686
      %v8728 = vpack.c.bf16 %v8689, %v8688
      %v8729 = vpack.c.bf16 %v8691, %v8690
      %v8730 = vpack.c.bf16 %v8693, %v8692
      %v8731 = vpack.c.bf16 %v8695, %v8694
      %v8732 = vpack.c.bf16 %v8697, %v8696
      %v8733 = vpack.c.bf16 %v8699, %v8698
      %v8734 = vpack.c.bf16 %v8701, %v8700
      %v8735 = vpack.c.bf16 %v8703, %v8702
      %v8736 = vpack.c.bf16 %v8239, %v8236
      %v8737 = vpack.c.bf16 %v8247, %v8244
      %v8738 = vpack.c.bf16 %v8255, %v8252
      %v8739 = vpack.c.bf16 %v8263, %v8260
      %v8741 = vsel %vm431, %v8704, 0
      %v8744 = vsel %vm431, %v8705, 0
      %v8747 = vsel %vm431, %v8706, 0
      %v8750 = vsel %vm431, %v8707, 0
      %v8753 = vsel %vm431, %v8708, 0
      %v8756 = vsel %vm431, %v8709, 0
      %v8759 = vsel %vm431, %v8710, 0
      %v8762 = vsel %vm431, %v8711, 0
      %v8765 = vsel %vm431, %v8712, 0
      %v8768 = vsel %vm431, %v8713, 0
      %v8771 = vsel %vm431, %v8714, 0
      %v8774 = vsel %vm431, %v8715, 0
      %v8777 = vsel %vm431, %v8716, 0
      %v8780 = vsel %vm431, %v8717, 0
      %v8783 = vsel %vm431, %v8718, 0
      %v8786 = vsel %vm431, %v8719, 0
      %v8789 = vsel %vm431, %v8720, 0
      %v8792 = vsel %vm431, %v8721, 0
      %v8795 = vsel %vm431, %v8722, 0
      %v8798 = vsel %vm431, %v8723, 0
      %v8801 = vsel %vm431, %v8724, 0
      %v8804 = vsel %vm431, %v8725, 0
      %v8807 = vsel %vm431, %v8726, 0
      %v8810 = vsel %vm431, %v8727, 0
      %v8813 = vsel %vm431, %v8728, 0
      %v8816 = vsel %vm431, %v8729, 0
      %v8819 = vsel %vm431, %v8730, 0
      %v8822 = vsel %vm431, %v8731, 0
      %v8825 = vsel %vm431, %v8732, 0
      %v8828 = vsel %vm431, %v8733, 0
      %v8831 = vsel %vm431, %v8734, 0
      %v8834 = vsel %vm431, %v8735, 0
      %v8837 = vsel %vm431, %v8736, 0
      %v8840 = vsel %vm431, %v8737, 0
      %v8843 = vsel %vm431, %v8738, 0
      %v8846 = vsel %vm431, %v8739, 0
      %8848 = vmatprep.subr.bf16.mxu0 0
      %8849 = vmatpush1.bf16.xpose.msra.mxu0 0
      %8850 = vmatprep.subr.bf16.mxu0 0
      %8851 = vmatpush1.bf16.xpose.msra.mxu0 0
      %8852 = vmatprep.subr.bf16.mxu0 0
      %8853 = vmatpush1.bf16.xpose.msra.mxu0 0
      %8854 = vmatprep.subr.bf16.mxu0 0
      %8855 = vmatpush1.bf16.xpose.msra.mxu0 0
      %8856 = vmatprep.subr.bf16.mxu0 0
      %8857 = vmatpush1.bf16.xpose.msra.mxu0 %v8846
      %8858 = vmatprep.subr.bf16.mxu0 0
      %8859 = vmatpush1.bf16.xpose.msra.mxu0 %v8843
      %8860 = vmatprep.subr.bf16.mxu0 0
      %8861 = vmatpush1.bf16.xpose.msra.mxu0 %v8840
      %8862 = vmatprep.subr.bf16.mxu0 0
      %8863 = vmatpush1.bf16.xpose.msra.mxu0 %v8837
      %8864 = vmatprep.subr.bf16.mxu0 0
      %8865 = vmatpush2.bf16.xpose.msra.mxu0 0
      %8866 = vmatprep.subr.bf16.mxu0 0
      %8867 = vmatpush2.bf16.xpose.msra.mxu0 0
      %8868 = vmatprep.subr.bf16.mxu0 0
      %8869 = vmatpush2.bf16.xpose.msra.mxu0 0
      %8870 = vmatprep.subr.bf16.mxu0 0
      %8871 = vmatpush2.bf16.xpose.msra.mxu0 0
      %8872 = vmatprep.subr.bf16.mxu0 0
      %8873 = vmatpush2.bf16.xpose.msra.mxu0 0
      %8874 = vmatprep.subr.bf16.mxu0 0
      %8875 = vmatpush2.bf16.xpose.msra.mxu0 0
      %8876 = vmatprep.subr.bf16.mxu0 0
      %8877 = vmatpush2.bf16.xpose.msra.mxu0 0
      %8878 = vmatprep.subr.bf16.mxu0 0
      %8879 = vmatpush2.bf16.xpose.msra.mxu0 0
      %8880 = vmatprep.mubr.bf16.mxu0 0
      %8881 = vmatmul.mubr.bf16.gmra.mxu0 %v8741
      %v8882 = vpop.f32.mrf.mxu0
      %v8883 = vadd.f32 %v2102, %v8882
      %v8884 = vpop.f32.mrf.mxu0
      %v8885 = vpop.f32.mrf.mxu0
      %v8886 = vadd.f32 %v2103, %v8885
      %v8887 = vpop.f32.mrf.mxu0
      %8888 = vmatprep.mubr.bf16.mxu0 0
      %8889 = vmatmul.mubr.bf16.gmra.mxu0 %v8744
      %v8890 = vpop.f32.mrf.mxu0
      %v8891 = vadd.f32 %v2104, %v8890
      %v8892 = vpop.f32.mrf.mxu0
      %v8893 = vpop.f32.mrf.mxu0
      %v8894 = vadd.f32 %v2105, %v8893
      %v8895 = vpop.f32.mrf.mxu0
      %8896 = vmatprep.mubr.bf16.mxu0 0
      %8897 = vmatmul.mubr.bf16.gmra.mxu0 %v8747
      %v8898 = vpop.f32.mrf.mxu0
      %v8899 = vadd.f32 %v2106, %v8898
      %v8900 = vpop.f32.mrf.mxu0
      %v8901 = vpop.f32.mrf.mxu0
      %v8902 = vadd.f32 %v2107, %v8901
      %v8903 = vpop.f32.mrf.mxu0
      %8904 = vmatprep.mubr.bf16.mxu0 0
      %8905 = vmatmul.mubr.bf16.gmra.mxu0 %v8750
      %v8906 = vpop.f32.mrf.mxu0
      %v8907 = vadd.f32 %v2108, %v8906
      %v8908 = vpop.f32.mrf.mxu0
      %v8909 = vpop.f32.mrf.mxu0
      %v8910 = vadd.f32 %v2109, %v8909
      %v8911 = vpop.f32.mrf.mxu0
      %8912 = vmatprep.mubr.bf16.mxu0 0
      %8913 = vmatmul.mubr.bf16.gmra.mxu0 %v8753
      %v8914 = vpop.f32.mrf.mxu0
      %v8915 = vadd.f32 %v2110, %v8914
      %v8916 = vpop.f32.mrf.mxu0
      %v8917 = vpop.f32.mrf.mxu0
      %v8918 = vadd.f32 %v2111, %v8917
      %v8919 = vpop.f32.mrf.mxu0
      %8920 = vmatprep.mubr.bf16.mxu0 0
      %8921 = vmatmul.mubr.bf16.gmra.mxu0 %v8756
      %v8922 = vpop.f32.mrf.mxu0
      %v8923 = vadd.f32 %v2112, %v8922
      %v8924 = vpop.f32.mrf.mxu0
      %v8925 = vpop.f32.mrf.mxu0
      %v8926 = vadd.f32 %v2113, %v8925
      %v8927 = vpop.f32.mrf.mxu0
      %8928 = vmatprep.mubr.bf16.mxu0 0
      %8929 = vmatmul.mubr.bf16.gmra.mxu0 %v8759
      %v8930 = vpop.f32.mrf.mxu0
      %v8931 = vadd.f32 %v2114, %v8930
      %v8932 = vpop.f32.mrf.mxu0
      %v8933 = vpop.f32.mrf.mxu0
      %v8934 = vadd.f32 %v2115, %v8933
      %v8935 = vpop.f32.mrf.mxu0
      %8936 = vmatprep.mubr.bf16.mxu0 0
      %8937 = vmatmul.mubr.bf16.gmra.mxu0 %v8762
      %v8938 = vpop.f32.mrf.mxu0
      %v8939 = vadd.f32 %v2116, %v8938
      %v8940 = vpop.f32.mrf.mxu0
      %v8941 = vpop.f32.mrf.mxu0
      %v8942 = vadd.f32 %v2117, %v8941
      %v8943 = vpop.f32.mrf.mxu0
      %8944 = vmatprep.mubr.bf16.mxu0 0
      %8945 = vmatmul.mubr.bf16.gmra.mxu0 %v8765
      %v8946 = vpop.f32.mrf.mxu0
      %v8947 = vadd.f32 %v2118, %v8946
      %v8948 = vpop.f32.mrf.mxu0
      %v8949 = vpop.f32.mrf.mxu0
      %v8950 = vadd.f32 %v2119, %v8949
      %v8951 = vpop.f32.mrf.mxu0
      %8952 = vmatprep.mubr.bf16.mxu0 0
      %8953 = vmatmul.mubr.bf16.gmra.mxu0 %v8768
      %v8954 = vpop.f32.mrf.mxu0
      %v8955 = vadd.f32 %v2120, %v8954
      %v8956 = vpop.f32.mrf.mxu0
      %v8957 = vpop.f32.mrf.mxu0
      %v8958 = vadd.f32 %v2121, %v8957
      %v8959 = vpop.f32.mrf.mxu0
      %8960 = vmatprep.mubr.bf16.mxu0 0
      %8961 = vmatmul.mubr.bf16.gmra.mxu0 %v8771
      %v8962 = vpop.f32.mrf.mxu0
      %v8963 = vadd.f32 %v2122, %v8962
      %v8964 = vpop.f32.mrf.mxu0
      %v8965 = vpop.f32.mrf.mxu0
      %v8966 = vadd.f32 %v2123, %v8965
      %v8967 = vpop.f32.mrf.mxu0
      %8968 = vmatprep.mubr.bf16.mxu0 0
      %8969 = vmatmul.mubr.bf16.gmra.mxu0 %v8774
      %v8970 = vpop.f32.mrf.mxu0
      %v8971 = vadd.f32 %v2124, %v8970
      %v8972 = vpop.f32.mrf.mxu0
      %v8973 = vpop.f32.mrf.mxu0
      %v8974 = vadd.f32 %v2125, %v8973
      %v8975 = vpop.f32.mrf.mxu0
      %8976 = vmatprep.mubr.bf16.mxu0 0
      %8977 = vmatmul.mubr.bf16.gmra.mxu0 %v8777
      %v8978 = vpop.f32.mrf.mxu0
      %v8979 = vadd.f32 %v2126, %v8978
      %v8980 = vpop.f32.mrf.mxu0
      %v8981 = vpop.f32.mrf.mxu0
      %v8982 = vadd.f32 %v2127, %v8981
      %v8983 = vpop.f32.mrf.mxu0
      %8984 = vmatprep.mubr.bf16.mxu0 0
      %8985 = vmatmul.mubr.bf16.gmra.mxu0 %v8780
      %v8986 = vpop.f32.mrf.mxu0
      %v8987 = vadd.f32 %v2128, %v8986
      %v8988 = vpop.f32.mrf.mxu0
      %v8989 = vpop.f32.mrf.mxu0
      %v8990 = vadd.f32 %v2129, %v8989
      %v8991 = vpop.f32.mrf.mxu0
      %8992 = vmatprep.mubr.bf16.mxu0 0
      %8993 = vmatmul.mubr.bf16.gmra.mxu0 %v8783
      %v8994 = vpop.f32.mrf.mxu0
      %v8995 = vadd.f32 %v2130, %v8994
      %v8996 = vpop.f32.mrf.mxu0
      %v8997 = vpop.f32.mrf.mxu0
      %v8998 = vadd.f32 %v2131, %v8997
      %v8999 = vpop.f32.mrf.mxu0
      %9000 = vmatprep.mubr.bf16.mxu0 0
      %9001 = vmatmul.mubr.bf16.gmra.mxu0 %v8786
      %v9002 = vpop.f32.mrf.mxu0
      %v9003 = vadd.f32 %v2132, %v9002
      %v9004 = vpop.f32.mrf.mxu0
      %v9005 = vpop.f32.mrf.mxu0
      %v9006 = vadd.f32 %v2133, %v9005
      %v9007 = vpop.f32.mrf.mxu0
      %9008 = vmatprep.mubr.bf16.mxu0 0
      %9009 = vmatmul.mubr.bf16.gmra.mxu0 %v8789
      %v9010 = vpop.f32.mrf.mxu0
      %v9011 = vadd.f32 %v2134, %v9010
      %v9012 = vpop.f32.mrf.mxu0
      %v9013 = vpop.f32.mrf.mxu0
      %v9014 = vadd.f32 %v2135, %v9013
      %v9015 = vpop.f32.mrf.mxu0
      %9016 = vmatprep.mubr.bf16.mxu0 0
      %9017 = vmatmul.mubr.bf16.gmra.mxu0 %v8792
      %v9018 = vpop.f32.mrf.mxu0
      %v9019 = vadd.f32 %v2136, %v9018
      %v9020 = vpop.f32.mrf.mxu0
      %v9021 = vpop.f32.mrf.mxu0
      %v9022 = vadd.f32 %v2137, %v9021
      %v9023 = vpop.f32.mrf.mxu0
      %9024 = vmatprep.mubr.bf16.mxu0 0
      %9025 = vmatmul.mubr.bf16.gmra.mxu0 %v8795
      %v9026 = vpop.f32.mrf.mxu0
      %v9027 = vadd.f32 %v2138, %v9026
      %v9028 = vpop.f32.mrf.mxu0
      %v9029 = vpop.f32.mrf.mxu0
      %v9030 = vadd.f32 %v2139, %v9029
      %v9031 = vpop.f32.mrf.mxu0
      %9032 = vmatprep.mubr.bf16.mxu0 0
      %9033 = vmatmul.mubr.bf16.gmra.mxu0 %v8798
      %v9034 = vpop.f32.mrf.mxu0
      %v9035 = vadd.f32 %v2140, %v9034
      %v9036 = vpop.f32.mrf.mxu0
      %v9037 = vpop.f32.mrf.mxu0
      %v9038 = vadd.f32 %v2141, %v9037
      %v9039 = vpop.f32.mrf.mxu0
      %9040 = vmatprep.mubr.bf16.mxu0 0
      %9041 = vmatmul.mubr.bf16.gmra.mxu0 %v8801
      %v9042 = vpop.f32.mrf.mxu0
      %v9043 = vadd.f32 %v2142, %v9042
      %v9044 = vpop.f32.mrf.mxu0
      %v9045 = vpop.f32.mrf.mxu0
      %v9046 = vadd.f32 %v2143, %v9045
      %v9047 = vpop.f32.mrf.mxu0
      %9048 = vmatprep.mubr.bf16.mxu0 0
      %9049 = vmatmul.mubr.bf16.gmra.mxu0 %v8804
      %v9050 = vpop.f32.mrf.mxu0
      %v9051 = vadd.f32 %v2144, %v9050
      %v9052 = vpop.f32.mrf.mxu0
      %v9053 = vpop.f32.mrf.mxu0
      %v9054 = vadd.f32 %v2145, %v9053
      %v9055 = vpop.f32.mrf.mxu0
      %9056 = vmatprep.mubr.bf16.mxu0 0
      %9057 = vmatmul.mubr.bf16.gmra.mxu0 %v8807
      %v9058 = vpop.f32.mrf.mxu0
      %v9059 = vadd.f32 %v2146, %v9058
      %v9060 = vpop.f32.mrf.mxu0
      %v9061 = vpop.f32.mrf.mxu0
      %v9062 = vadd.f32 %v2147, %v9061
      %v9063 = vpop.f32.mrf.mxu0
      %9064 = vmatprep.mubr.bf16.mxu0 0
      %9065 = vmatmul.mubr.bf16.gmra.mxu0 %v8810
      %v9066 = vpop.f32.mrf.mxu0
      %v9067 = vadd.f32 %v2148, %v9066
      %v9068 = vpop.f32.mrf.mxu0
      %v9069 = vpop.f32.mrf.mxu0
      %v9070 = vadd.f32 %v2149, %v9069
      %v9071 = vpop.f32.mrf.mxu0
      %9072 = vmatprep.mubr.bf16.mxu0 0
      %9073 = vmatmul.mubr.bf16.gmra.mxu0 %v8813
      %v9074 = vpop.f32.mrf.mxu0
      %v9075 = vadd.f32 %v2150, %v9074
      %v9076 = vpop.f32.mrf.mxu0
      %v9077 = vpop.f32.mrf.mxu0
      %v9078 = vadd.f32 %v2151, %v9077
      %v9079 = vpop.f32.mrf.mxu0
      %9080 = vmatprep.mubr.bf16.mxu0 0
      %9081 = vmatmul.mubr.bf16.gmra.mxu0 %v8816
      %v9082 = vpop.f32.mrf.mxu0
      %v9083 = vadd.f32 %v2152, %v9082
      %v9084 = vpop.f32.mrf.mxu0
      %v9085 = vpop.f32.mrf.mxu0
      %v9086 = vadd.f32 %v2153, %v9085
      %v9087 = vpop.f32.mrf.mxu0
      %9088 = vmatprep.mubr.bf16.mxu0 0
      %9089 = vmatmul.mubr.bf16.gmra.mxu0 %v8819
      %v9090 = vpop.f32.mrf.mxu0
      %v9091 = vadd.f32 %v2154, %v9090
      %v9092 = vpop.f32.mrf.mxu0
      %v9093 = vpop.f32.mrf.mxu0
      %v9094 = vadd.f32 %v2155, %v9093
      %v9095 = vpop.f32.mrf.mxu0
      %9096 = vmatprep.mubr.bf16.mxu0 0
      %9097 = vmatmul.mubr.bf16.gmra.mxu0 %v8822
      %v9098 = vpop.f32.mrf.mxu0
      %v9099 = vadd.f32 %v2156, %v9098
      %v9100 = vpop.f32.mrf.mxu0
      %v9101 = vpop.f32.mrf.mxu0
      %v9102 = vadd.f32 %v2157, %v9101
      %v9103 = vpop.f32.mrf.mxu0
      %9104 = vmatprep.mubr.bf16.mxu0 0
      %9105 = vmatmul.mubr.bf16.gmra.mxu0 %v8825
      %v9106 = vpop.f32.mrf.mxu0
      %v9107 = vadd.f32 %v2158, %v9106
      %v9108 = vpop.f32.mrf.mxu0
      %v9109 = vpop.f32.mrf.mxu0
      %v9110 = vadd.f32 %v2159, %v9109
      %v9111 = vpop.f32.mrf.mxu0
      %9112 = vmatprep.mubr.bf16.mxu0 0
      %9113 = vmatmul.mubr.bf16.gmra.mxu0 %v8828
      %v9114 = vpop.f32.mrf.mxu0
      %v9115 = vadd.f32 %v2160, %v9114
      %v9116 = vpop.f32.mrf.mxu0
      %v9117 = vpop.f32.mrf.mxu0
      %v9118 = vadd.f32 %v2161, %v9117
      %v9119 = vpop.f32.mrf.mxu0
      %9120 = vmatprep.mubr.bf16.mxu0 0
      %9121 = vmatmul.mubr.bf16.gmra.mxu0 %v8831
      %v9122 = vpop.f32.mrf.mxu0
      %v9123 = vadd.f32 %v2162, %v9122
      %v9124 = vpop.f32.mrf.mxu0
      %v9125 = vpop.f32.mrf.mxu0
      %v9126 = vadd.f32 %v2163, %v9125
      %v9127 = vpop.f32.mrf.mxu0
      %9128 = vmatprep.mubr.bf16.mxu0 0
      %9129 = vmatmul.mubr.bf16.gmra.mxu0 %v8834
      %v9130 = vpop.f32.mrf.mxu0
      %v9131 = vadd.f32 %v2164, %v9130
      %v9132 = vpop.f32.mrf.mxu0
      %v9133 = vpop.f32.mrf.mxu0
      %v9134 = vadd.f32 %v2165, %v9133
      %v9135 = vpop.f32.mrf.mxu0
      %9136 = vdwg.mxu0
      %v9137 = vsel %vm766, %v8883, -inf
      %9138 = vmax.xlane.f32.xlu0 %v9137
      %v9139 = vpop.xlane.xlu0 %9138
      %v9140 = vsel %vm766, %v8886, -inf
      %9141 = vmax.xlane.f32.xlu0 %v9140
      %v9142 = vpop.xlane.xlu0 %9141
      %v9143 = vsel %vm766, %v8891, -inf
      %9144 = vmax.xlane.f32.xlu0 %v9143
      %v9145 = vpop.xlane.xlu0 %9144
      %v9146 = vsel %vm766, %v8894, -inf
      %9147 = vmax.xlane.f32.xlu0 %v9146
      %v9148 = vpop.xlane.xlu0 %9147
      %v9149 = vsel %vm766, %v8899, -inf
      %9150 = vmax.xlane.f32.xlu0 %v9149
      %v9151 = vpop.xlane.xlu0 %9150
      %v9152 = vsel %vm766, %v8902, -inf
      %9153 = vmax.xlane.f32.xlu0 %v9152
      %v9154 = vpop.xlane.xlu0 %9153
      %v9155 = vsel %vm766, %v8907, -inf
      %9156 = vmax.xlane.f32.xlu0 %v9155
      %v9157 = vpop.xlane.xlu0 %9156
      %v9158 = vsel %vm766, %v8910, -inf
      %9159 = vmax.xlane.f32.xlu0 %v9158
      %v9160 = vpop.xlane.xlu0 %9159
      %v9161 = vsel %vm766, %v8915, -inf
      %9162 = vmax.xlane.f32.xlu0 %v9161
      %v9163 = vpop.xlane.xlu0 %9162
      %v9164 = vsel %vm766, %v8918, -inf
      %9165 = vmax.xlane.f32.xlu0 %v9164
      %v9166 = vpop.xlane.xlu0 %9165
      %v9167 = vsel %vm766, %v8923, -inf
      %9168 = vmax.xlane.f32.xlu0 %v9167
      %v9169 = vpop.xlane.xlu0 %9168
      %v9170 = vsel %vm766, %v8926, -inf
      %9171 = vmax.xlane.f32.xlu0 %v9170
      %v9172 = vpop.xlane.xlu0 %9171
      %v9173 = vsel %vm766, %v8931, -inf
      %9174 = vmax.xlane.f32.xlu0 %v9173
      %v9175 = vpop.xlane.xlu0 %9174
      %v9176 = vsel %vm766, %v8934, -inf
      %9177 = vmax.xlane.f32.xlu0 %v9176
      %v9178 = vpop.xlane.xlu0 %9177
      %v9179 = vsel %vm766, %v8939, -inf
      %9180 = vmax.xlane.f32.xlu0 %v9179
      %v9181 = vpop.xlane.xlu0 %9180
      %v9182 = vsel %vm766, %v8942, -inf
      %9183 = vmax.xlane.f32.xlu0 %v9182
      %v9184 = vpop.xlane.xlu0 %9183
      %v9185 = vsel %vm766, %v8947, -inf
      %9186 = vmax.xlane.f32.xlu0 %v9185
      %v9187 = vpop.xlane.xlu0 %9186
      %v9188 = vsel %vm766, %v8950, -inf
      %9189 = vmax.xlane.f32.xlu0 %v9188
      %v9190 = vpop.xlane.xlu0 %9189
      %v9191 = vsel %vm766, %v8955, -inf
      %9192 = vmax.xlane.f32.xlu0 %v9191
      %v9193 = vpop.xlane.xlu0 %9192
      %v9194 = vsel %vm766, %v8958, -inf
      %9195 = vmax.xlane.f32.xlu0 %v9194
      %v9196 = vpop.xlane.xlu0 %9195
      %v9197 = vsel %vm766, %v8963, -inf
      %9198 = vmax.xlane.f32.xlu0 %v9197
      %v9199 = vpop.xlane.xlu0 %9198
      %v9200 = vsel %vm766, %v8966, -inf
      %9201 = vmax.xlane.f32.xlu0 %v9200
      %v9202 = vpop.xlane.xlu0 %9201
      %v9203 = vsel %vm766, %v8971, -inf
      %9204 = vmax.xlane.f32.xlu0 %v9203
      %v9205 = vpop.xlane.xlu0 %9204
      %v9206 = vsel %vm766, %v8974, -inf
      %9207 = vmax.xlane.f32.xlu0 %v9206
      %v9208 = vpop.xlane.xlu0 %9207
      %v9209 = vsel %vm766, %v8979, -inf
      %9210 = vmax.xlane.f32.xlu0 %v9209
      %v9211 = vpop.xlane.xlu0 %9210
      %v9212 = vsel %vm766, %v8982, -inf
      %9213 = vmax.xlane.f32.xlu0 %v9212
      %v9214 = vpop.xlane.xlu0 %9213
      %v9215 = vsel %vm766, %v8987, -inf
      %9216 = vmax.xlane.f32.xlu0 %v9215
      %v9217 = vpop.xlane.xlu0 %9216
      %v9218 = vsel %vm766, %v8990, -inf
      %9219 = vmax.xlane.f32.xlu0 %v9218
      %v9220 = vpop.xlane.xlu0 %9219
      %v9221 = vsel %vm766, %v8995, -inf
      %9222 = vmax.xlane.f32.xlu0 %v9221
      %v9223 = vpop.xlane.xlu0 %9222
      %v9224 = vsel %vm766, %v8998, -inf
      %9225 = vmax.xlane.f32.xlu0 %v9224
      %v9226 = vpop.xlane.xlu0 %9225
      %v9227 = vsel %vm766, %v9003, -inf
      %9228 = vmax.xlane.f32.xlu0 %v9227
      %v9229 = vpop.xlane.xlu0 %9228
      %v9230 = vsel %vm766, %v9006, -inf
      %9231 = vmax.xlane.f32.xlu0 %v9230
      %v9232 = vpop.xlane.xlu0 %9231
      %v9233 = vsel %vm766, %v9011, -inf
      %9234 = vmax.xlane.f32.xlu0 %v9233
      %v9235 = vpop.xlane.xlu0 %9234
      %v9236 = vsel %vm766, %v9014, -inf
      %9237 = vmax.xlane.f32.xlu0 %v9236
      %v9238 = vpop.xlane.xlu0 %9237
      %v9239 = vsel %vm766, %v9019, -inf
      %9240 = vmax.xlane.f32.xlu0 %v9239
      %v9241 = vpop.xlane.xlu0 %9240
      %v9242 = vsel %vm766, %v9022, -inf
      %9243 = vmax.xlane.f32.xlu0 %v9242
      %v9244 = vpop.xlane.xlu0 %9243
      %v9245 = vsel %vm766, %v9027, -inf
      %9246 = vmax.xlane.f32.xlu0 %v9245
      %v9247 = vpop.xlane.xlu0 %9246
      %v9248 = vsel %vm766, %v9030, -inf
      %9249 = vmax.xlane.f32.xlu0 %v9248
      %v9250 = vpop.xlane.xlu0 %9249
      %v9251 = vsel %vm766, %v9035, -inf
      %9252 = vmax.xlane.f32.xlu0 %v9251
      %v9253 = vpop.xlane.xlu0 %9252
      %v9254 = vsel %vm766, %v9038, -inf
      %9255 = vmax.xlane.f32.xlu0 %v9254
      %v9256 = vpop.xlane.xlu0 %9255
      %v9257 = vsel %vm766, %v9043, -inf
      %9258 = vmax.xlane.f32.xlu0 %v9257
      %v9259 = vpop.xlane.xlu0 %9258
      %v9260 = vsel %vm766, %v9046, -inf
      %9261 = vmax.xlane.f32.xlu0 %v9260
      %v9262 = vpop.xlane.xlu0 %9261
      %v9263 = vsel %vm766, %v9051, -inf
      %9264 = vmax.xlane.f32.xlu0 %v9263
      %v9265 = vpop.xlane.xlu0 %9264
      %v9266 = vsel %vm766, %v9054, -inf
      %9267 = vmax.xlane.f32.xlu0 %v9266
      %v9268 = vpop.xlane.xlu0 %9267
      %v9269 = vsel %vm766, %v9059, -inf
      %9270 = vmax.xlane.f32.xlu0 %v9269
      %v9271 = vpop.xlane.xlu0 %9270
      %v9272 = vsel %vm766, %v9062, -inf
      %9273 = vmax.xlane.f32.xlu0 %v9272
      %v9274 = vpop.xlane.xlu0 %9273
      %v9275 = vsel %vm766, %v9067, -inf
      %9276 = vmax.xlane.f32.xlu0 %v9275
      %v9277 = vpop.xlane.xlu0 %9276
      %v9278 = vsel %vm766, %v9070, -inf
      %9279 = vmax.xlane.f32.xlu0 %v9278
      %v9280 = vpop.xlane.xlu0 %9279
      %v9281 = vsel %vm766, %v9075, -inf
      %9282 = vmax.xlane.f32.xlu0 %v9281
      %v9283 = vpop.xlane.xlu0 %9282
      %v9284 = vsel %vm766, %v9078, -inf
      %9285 = vmax.xlane.f32.xlu0 %v9284
      %v9286 = vpop.xlane.xlu0 %9285
      %v9287 = vsel %vm766, %v9083, -inf
      %9288 = vmax.xlane.f32.xlu0 %v9287
      %v9289 = vpop.xlane.xlu0 %9288
      %v9290 = vsel %vm766, %v9086, -inf
      %9291 = vmax.xlane.f32.xlu0 %v9290
      %v9292 = vpop.xlane.xlu0 %9291
      %v9293 = vsel %vm766, %v9091, -inf
      %9294 = vmax.xlane.f32.xlu0 %v9293
      %v9295 = vpop.xlane.xlu0 %9294
      %v9296 = vsel %vm766, %v9094, -inf
      %9297 = vmax.xlane.f32.xlu0 %v9296
      %v9298 = vpop.xlane.xlu0 %9297
      %v9299 = vsel %vm766, %v9099, -inf
      %9300 = vmax.xlane.f32.xlu0 %v9299
      %v9301 = vpop.xlane.xlu0 %9300
      %v9302 = vsel %vm766, %v9102, -inf
      %9303 = vmax.xlane.f32.xlu0 %v9302
      %v9304 = vpop.xlane.xlu0 %9303
      %v9305 = vsel %vm766, %v9107, -inf
      %9306 = vmax.xlane.f32.xlu0 %v9305
      %v9307 = vpop.xlane.xlu0 %9306
      %v9308 = vsel %vm766, %v9110, -inf
      %9309 = vmax.xlane.f32.xlu0 %v9308
      %v9310 = vpop.xlane.xlu0 %9309
      %v9311 = vsel %vm766, %v9115, -inf
      %9312 = vmax.xlane.f32.xlu0 %v9311
      %v9313 = vpop.xlane.xlu0 %9312
      %v9314 = vsel %vm766, %v9118, -inf
      %9315 = vmax.xlane.f32.xlu0 %v9314
      %v9316 = vpop.xlane.xlu0 %9315
      %v9317 = vsel %vm766, %v9123, -inf
      %9318 = vmax.xlane.f32.xlu0 %v9317
      %v9319 = vpop.xlane.xlu0 %9318
      %v9320 = vsel %vm766, %v9126, -inf
      %9321 = vmax.xlane.f32.xlu0 %v9320
      %v9322 = vpop.xlane.xlu0 %9321
      %v9323 = vsel %vm766, %v9131, -inf
      %9324 = vmax.xlane.f32.xlu0 %v9323
      %v9325 = vpop.xlane.xlu0 %9324
      %v9326 = vsel %vm766, %v9134, -inf
      %9327 = vmax.xlane.f32.xlu0 %v9326
      %v9328 = vpop.xlane.xlu0 %9327
      %v9329 = vsub.f32 %v8883, %v9139
      %v9330 = vsub.f32 %v8886, %v9142
      %v9331 = vsub.f32 %v8891, %v9145
      %v9332 = vsub.f32 %v8894, %v9148
      %v9333 = vsub.f32 %v8899, %v9151
      %v9334 = vsub.f32 %v8902, %v9154
      %v9335 = vsub.f32 %v8907, %v9157
      %v9336 = vsub.f32 %v8910, %v9160
      %v9337 = vsub.f32 %v8915, %v9163
      %v9338 = vsub.f32 %v8918, %v9166
      %v9339 = vsub.f32 %v8923, %v9169
      %v9340 = vsub.f32 %v8926, %v9172
      %v9341 = vsub.f32 %v8931, %v9175
      %v9342 = vsub.f32 %v8934, %v9178
      %v9343 = vsub.f32 %v8939, %v9181
      %v9344 = vsub.f32 %v8942, %v9184
      %v9345 = vsub.f32 %v8947, %v9187
      %v9346 = vsub.f32 %v8950, %v9190
      %v9347 = vsub.f32 %v8955, %v9193
      %v9348 = vsub.f32 %v8958, %v9196
      %v9349 = vsub.f32 %v8963, %v9199
      %v9350 = vsub.f32 %v8966, %v9202
      %v9351 = vsub.f32 %v8971, %v9205
      %v9352 = vsub.f32 %v8974, %v9208
      %v9353 = vsub.f32 %v8979, %v9211
      %v9354 = vsub.f32 %v8982, %v9214
      %v9355 = vsub.f32 %v8987, %v9217
      %v9356 = vsub.f32 %v8990, %v9220
      %v9357 = vsub.f32 %v8995, %v9223
      %v9358 = vsub.f32 %v8998, %v9226
      %v9359 = vsub.f32 %v9003, %v9229
      %v9360 = vsub.f32 %v9006, %v9232
      %v9361 = vsub.f32 %v9011, %v9235
      %v9362 = vsub.f32 %v9014, %v9238
      %v9363 = vsub.f32 %v9019, %v9241
      %v9364 = vsub.f32 %v9022, %v9244
      %v9365 = vsub.f32 %v9027, %v9247
      %v9366 = vsub.f32 %v9030, %v9250
      %v9367 = vsub.f32 %v9035, %v9253
      %v9368 = vsub.f32 %v9038, %v9256
      %v9369 = vsub.f32 %v9043, %v9259
      %v9370 = vsub.f32 %v9046, %v9262
      %v9371 = vsub.f32 %v9051, %v9265
      %v9372 = vsub.f32 %v9054, %v9268
      %v9373 = vsub.f32 %v9059, %v9271
      %v9374 = vsub.f32 %v9062, %v9274
      %v9375 = vsub.f32 %v9067, %v9277
      %v9376 = vsub.f32 %v9070, %v9280
      %v9377 = vsub.f32 %v9075, %v9283
      %v9378 = vsub.f32 %v9078, %v9286
      %v9379 = vsub.f32 %v9083, %v9289
      %v9380 = vsub.f32 %v9086, %v9292
      %v9381 = vsub.f32 %v9091, %v9295
      %v9382 = vsub.f32 %v9094, %v9298
      %v9383 = vsub.f32 %v9099, %v9301
      %v9384 = vsub.f32 %v9102, %v9304
      %v9385 = vsub.f32 %v9107, %v9307
      %v9386 = vsub.f32 %v9110, %v9310
      %v9387 = vsub.f32 %v9115, %v9313
      %v9388 = vsub.f32 %v9118, %v9316
      %v9389 = vsub.f32 %v9123, %v9319
      %v9390 = vsub.f32 %v9126, %v9322
      %v9391 = vsub.f32 %v9131, %v9325
      %v9392 = vsub.f32 %v9134, %v9328
      %v9393 = vmul.f32 %v9329, 1.442695
      %v9394 = vpow.pop %v9393
      %v9395 = vmul.f32 %v9330, 1.442695
      %v9396 = vpow.pop %v9395
      %v9397 = vmul.f32 %v9331, 1.442695
      %v9398 = vpow.pop %v9397
      %v9399 = vmul.f32 %v9332, 1.442695
      %v9400 = vpow.pop %v9399
      %v9401 = vmul.f32 %v9333, 1.442695
      %v9402 = vpow.pop %v9401
      %v9403 = vmul.f32 %v9334, 1.442695
      %v9404 = vpow.pop %v9403
      %v9405 = vmul.f32 %v9335, 1.442695
      %v9406 = vpow.pop %v9405
      %v9407 = vmul.f32 %v9336, 1.442695
      %v9408 = vpow.pop %v9407
      %v9409 = vmul.f32 %v9337, 1.442695
      %v9410 = vpow.pop %v9409
      %v9411 = vmul.f32 %v9338, 1.442695
      %v9412 = vpow.pop %v9411
      %v9413 = vmul.f32 %v9339, 1.442695
      %v9414 = vpow.pop %v9413
      %v9415 = vmul.f32 %v9340, 1.442695
      %v9416 = vpow.pop %v9415
      %v9417 = vmul.f32 %v9341, 1.442695
      %v9418 = vpow.pop %v9417
      %v9419 = vmul.f32 %v9342, 1.442695
      %v9420 = vpow.pop %v9419
      %v9421 = vmul.f32 %v9343, 1.442695
      %v9422 = vpow.pop %v9421
      %v9423 = vmul.f32 %v9344, 1.442695
      %v9424 = vpow.pop %v9423
      %v9425 = vmul.f32 %v9345, 1.442695
      %v9426 = vpow.pop %v9425
      %v9427 = vmul.f32 %v9346, 1.442695
      %v9428 = vpow.pop %v9427
      %v9429 = vmul.f32 %v9347, 1.442695
      %v9430 = vpow.pop %v9429
      %v9431 = vmul.f32 %v9348, 1.442695
      %v9432 = vpow.pop %v9431
      %v9433 = vmul.f32 %v9349, 1.442695
      %v9434 = vpow.pop %v9433
      %v9435 = vmul.f32 %v9350, 1.442695
      %v9436 = vpow.pop %v9435
      %v9437 = vmul.f32 %v9351, 1.442695
      %v9438 = vpow.pop %v9437
      %v9439 = vmul.f32 %v9352, 1.442695
      %v9440 = vpow.pop %v9439
      %v9441 = vmul.f32 %v9353, 1.442695
      %v9442 = vpow.pop %v9441
      %v9443 = vmul.f32 %v9354, 1.442695
      %v9444 = vpow.pop %v9443
      %v9445 = vmul.f32 %v9355, 1.442695
      %v9446 = vpow.pop %v9445
      %v9447 = vmul.f32 %v9356, 1.442695
      %v9448 = vpow.pop %v9447
      %v9449 = vmul.f32 %v9357, 1.442695
      %v9450 = vpow.pop %v9449
      %v9451 = vmul.f32 %v9358, 1.442695
      %v9452 = vpow.pop %v9451
      %v9453 = vmul.f32 %v9359, 1.442695
      %v9454 = vpow.pop %v9453
      %v9455 = vmul.f32 %v9360, 1.442695
      %v9456 = vpow.pop %v9455
      %v9457 = vmul.f32 %v9361, 1.442695
      %v9458 = vpow.pop %v9457
      %v9459 = vmul.f32 %v9362, 1.442695
      %v9460 = vpow.pop %v9459
      %v9461 = vmul.f32 %v9363, 1.442695
      %v9462 = vpow.pop %v9461
      %v9463 = vmul.f32 %v9364, 1.442695
      %v9464 = vpow.pop %v9463
      %v9465 = vmul.f32 %v9365, 1.442695
      %v9466 = vpow.pop %v9465
      %v9467 = vmul.f32 %v9366, 1.442695
      %v9468 = vpow.pop %v9467
      %v9469 = vmul.f32 %v9367, 1.442695
      %v9470 = vpow.pop %v9469
      %v9471 = vmul.f32 %v9368, 1.442695
      %v9472 = vpow.pop %v9471
      %v9473 = vmul.f32 %v9369, 1.442695
      %v9474 = vpow.pop %v9473
      %v9475 = vmul.f32 %v9370, 1.442695
      %v9476 = vpow.pop %v9475
      %v9477 = vmul.f32 %v9371, 1.442695
      %v9478 = vpow.pop %v9477
      %v9479 = vmul.f32 %v9372, 1.442695
      %v9480 = vpow.pop %v9479
      %v9481 = vmul.f32 %v9373, 1.442695
      %v9482 = vpow.pop %v9481
      %v9483 = vmul.f32 %v9374, 1.442695
      %v9484 = vpow.pop %v9483
      %v9485 = vmul.f32 %v9375, 1.442695
      %v9486 = vpow.pop %v9485
      %v9487 = vmul.f32 %v9376, 1.442695
      %v9488 = vpow.pop %v9487
      %v9489 = vmul.f32 %v9377, 1.442695
      %v9490 = vpow.pop %v9489
      %v9491 = vmul.f32 %v9378, 1.442695
      %v9492 = vpow.pop %v9491
      %v9493 = vmul.f32 %v9379, 1.442695
      %v9494 = vpow.pop %v9493
      %v9495 = vmul.f32 %v9380, 1.442695
      %v9496 = vpow.pop %v9495
      %v9497 = vmul.f32 %v9381, 1.442695
      %v9498 = vpow.pop %v9497
      %v9499 = vmul.f32 %v9382, 1.442695
      %v9500 = vpow.pop %v9499
      %v9501 = vmul.f32 %v9383, 1.442695
      %v9502 = vpow.pop %v9501
      %v9503 = vmul.f32 %v9384, 1.442695
      %v9504 = vpow.pop %v9503
      %v9505 = vmul.f32 %v9385, 1.442695
      %v9506 = vpow.pop %v9505
      %v9507 = vmul.f32 %v9386, 1.442695
      %v9508 = vpow.pop %v9507
      %v9509 = vmul.f32 %v9387, 1.442695
      %v9510 = vpow.pop %v9509
      %v9511 = vmul.f32 %v9388, 1.442695
      %v9512 = vpow.pop %v9511
      %v9513 = vmul.f32 %v9389, 1.442695
      %v9514 = vpow.pop %v9513
      %v9515 = vmul.f32 %v9390, 1.442695
      %v9516 = vpow.pop %v9515
      %v9517 = vmul.f32 %v9391, 1.442695
      %v9518 = vpow.pop %v9517
      %v9519 = vmul.f32 %v9392, 1.442695
      %v9520 = vpow.pop %v9519
      %v9521 = vsel %vm766, %v9394, 0.0
      %9522 = vadd.xlane.f32.xlu0 %v9521
      %v9523 = vpop.xlane.xlu0 %9522
      %v9524 = vsel %vm766, %v9396, 0.0
      %9525 = vadd.xlane.f32.xlu0 %v9524
      %v9526 = vpop.xlane.xlu0 %9525
      %v9527 = vsel %vm766, %v9398, 0.0
      %9528 = vadd.xlane.f32.xlu0 %v9527
      %v9529 = vpop.xlane.xlu0 %9528
      %v9530 = vsel %vm766, %v9400, 0.0
      %9531 = vadd.xlane.f32.xlu0 %v9530
      %v9532 = vpop.xlane.xlu0 %9531
      %v9533 = vsel %vm766, %v9402, 0.0
      %9534 = vadd.xlane.f32.xlu0 %v9533
      %v9535 = vpop.xlane.xlu0 %9534
      %v9536 = vsel %vm766, %v9404, 0.0
      %9537 = vadd.xlane.f32.xlu0 %v9536
      %v9538 = vpop.xlane.xlu0 %9537
      %v9539 = vsel %vm766, %v9406, 0.0
      %9540 = vadd.xlane.f32.xlu0 %v9539
      %v9541 = vpop.xlane.xlu0 %9540
      %v9542 = vsel %vm766, %v9408, 0.0
      %9543 = vadd.xlane.f32.xlu0 %v9542
      %v9544 = vpop.xlane.xlu0 %9543
      %v9545 = vsel %vm766, %v9410, 0.0
      %9546 = vadd.xlane.f32.xlu0 %v9545
      %v9547 = vpop.xlane.xlu0 %9546
      %v9548 = vsel %vm766, %v9412, 0.0
      %9549 = vadd.xlane.f32.xlu0 %v9548
      %v9550 = vpop.xlane.xlu0 %9549
      %v9551 = vsel %vm766, %v9414, 0.0
      %9552 = vadd.xlane.f32.xlu0 %v9551
      %v9553 = vpop.xlane.xlu0 %9552
      %v9554 = vsel %vm766, %v9416, 0.0
      %9555 = vadd.xlane.f32.xlu0 %v9554
      %v9556 = vpop.xlane.xlu0 %9555
      %v9557 = vsel %vm766, %v9418, 0.0
      %9558 = vadd.xlane.f32.xlu0 %v9557
      %v9559 = vpop.xlane.xlu0 %9558
      %v9560 = vsel %vm766, %v9420, 0.0
      %9561 = vadd.xlane.f32.xlu0 %v9560
      %v9562 = vpop.xlane.xlu0 %9561
      %v9563 = vsel %vm766, %v9422, 0.0
      %9564 = vadd.xlane.f32.xlu0 %v9563
      %v9565 = vpop.xlane.xlu0 %9564
      %v9566 = vsel %vm766, %v9424, 0.0
      %9567 = vadd.xlane.f32.xlu0 %v9566
      %v9568 = vpop.xlane.xlu0 %9567
      %v9569 = vsel %vm766, %v9426, 0.0
      %9570 = vadd.xlane.f32.xlu0 %v9569
      %v9571 = vpop.xlane.xlu0 %9570
      %v9572 = vsel %vm766, %v9428, 0.0
      %9573 = vadd.xlane.f32.xlu0 %v9572
      %v9574 = vpop.xlane.xlu0 %9573
      %v9575 = vsel %vm766, %v9430, 0.0
      %9576 = vadd.xlane.f32.xlu0 %v9575
      %v9577 = vpop.xlane.xlu0 %9576
      %v9578 = vsel %vm766, %v9432, 0.0
      %9579 = vadd.xlane.f32.xlu0 %v9578
      %v9580 = vpop.xlane.xlu0 %9579
      %v9581 = vsel %vm766, %v9434, 0.0
      %9582 = vadd.xlane.f32.xlu0 %v9581
      %v9583 = vpop.xlane.xlu0 %9582
      %v9584 = vsel %vm766, %v9436, 0.0
      %9585 = vadd.xlane.f32.xlu0 %v9584
      %v9586 = vpop.xlane.xlu0 %9585
      %v9587 = vsel %vm766, %v9438, 0.0
      %9588 = vadd.xlane.f32.xlu0 %v9587
      %v9589 = vpop.xlane.xlu0 %9588
      %v9590 = vsel %vm766, %v9440, 0.0
      %9591 = vadd.xlane.f32.xlu0 %v9590
      %v9592 = vpop.xlane.xlu0 %9591
      %v9593 = vsel %vm766, %v9442, 0.0
      %9594 = vadd.xlane.f32.xlu0 %v9593
      %v9595 = vpop.xlane.xlu0 %9594
      %v9596 = vsel %vm766, %v9444, 0.0
      %9597 = vadd.xlane.f32.xlu0 %v9596
      %v9598 = vpop.xlane.xlu0 %9597
      %v9599 = vsel %vm766, %v9446, 0.0
      %9600 = vadd.xlane.f32.xlu0 %v9599
      %v9601 = vpop.xlane.xlu0 %9600
      %v9602 = vsel %vm766, %v9448, 0.0
      %9603 = vadd.xlane.f32.xlu0 %v9602
      %v9604 = vpop.xlane.xlu0 %9603
      %v9605 = vsel %vm766, %v9450, 0.0
      %9606 = vadd.xlane.f32.xlu0 %v9605
      %v9607 = vpop.xlane.xlu0 %9606
      %v9608 = vsel %vm766, %v9452, 0.0
      %9609 = vadd.xlane.f32.xlu0 %v9608
      %v9610 = vpop.xlane.xlu0 %9609
      %v9611 = vsel %vm766, %v9454, 0.0
      %9612 = vadd.xlane.f32.xlu0 %v9611
      %v9613 = vpop.xlane.xlu0 %9612
      %v9614 = vsel %vm766, %v9456, 0.0
      %9615 = vadd.xlane.f32.xlu0 %v9614
      %v9616 = vpop.xlane.xlu0 %9615
      %v9617 = vsel %vm766, %v9458, 0.0
      %9618 = vadd.xlane.f32.xlu0 %v9617
      %v9619 = vpop.xlane.xlu0 %9618
      %v9620 = vsel %vm766, %v9460, 0.0
      %9621 = vadd.xlane.f32.xlu0 %v9620
      %v9622 = vpop.xlane.xlu0 %9621
      %v9623 = vsel %vm766, %v9462, 0.0
      %9624 = vadd.xlane.f32.xlu0 %v9623
      %v9625 = vpop.xlane.xlu0 %9624
      %v9626 = vsel %vm766, %v9464, 0.0
      %9627 = vadd.xlane.f32.xlu0 %v9626
      %v9628 = vpop.xlane.xlu0 %9627
      %v9629 = vsel %vm766, %v9466, 0.0
      %9630 = vadd.xlane.f32.xlu0 %v9629
      %v9631 = vpop.xlane.xlu0 %9630
      %v9632 = vsel %vm766, %v9468, 0.0
      %9633 = vadd.xlane.f32.xlu0 %v9632
      %v9634 = vpop.xlane.xlu0 %9633
      %v9635 = vsel %vm766, %v9470, 0.0
      %9636 = vadd.xlane.f32.xlu0 %v9635
      %v9637 = vpop.xlane.xlu0 %9636
      %v9638 = vsel %vm766, %v9472, 0.0
      %9639 = vadd.xlane.f32.xlu0 %v9638
      %v9640 = vpop.xlane.xlu0 %9639
      %v9641 = vsel %vm766, %v9474, 0.0
      %9642 = vadd.xlane.f32.xlu0 %v9641
      %v9643 = vpop.xlane.xlu0 %9642
      %v9644 = vsel %vm766, %v9476, 0.0
      %9645 = vadd.xlane.f32.xlu0 %v9644
      %v9646 = vpop.xlane.xlu0 %9645
      %v9647 = vsel %vm766, %v9478, 0.0
      %9648 = vadd.xlane.f32.xlu0 %v9647
      %v9649 = vpop.xlane.xlu0 %9648
      %v9650 = vsel %vm766, %v9480, 0.0
      %9651 = vadd.xlane.f32.xlu0 %v9650
      %v9652 = vpop.xlane.xlu0 %9651
      %v9653 = vsel %vm766, %v9482, 0.0
      %9654 = vadd.xlane.f32.xlu0 %v9653
      %v9655 = vpop.xlane.xlu0 %9654
      %v9656 = vsel %vm766, %v9484, 0.0
      %9657 = vadd.xlane.f32.xlu0 %v9656
      %v9658 = vpop.xlane.xlu0 %9657
      %v9659 = vsel %vm766, %v9486, 0.0
      %9660 = vadd.xlane.f32.xlu0 %v9659
      %v9661 = vpop.xlane.xlu0 %9660
      %v9662 = vsel %vm766, %v9488, 0.0
      %9663 = vadd.xlane.f32.xlu0 %v9662
      %v9664 = vpop.xlane.xlu0 %9663
      %v9665 = vsel %vm766, %v9490, 0.0
      %9666 = vadd.xlane.f32.xlu0 %v9665
      %v9667 = vpop.xlane.xlu0 %9666
      %v9668 = vsel %vm766, %v9492, 0.0
      %9669 = vadd.xlane.f32.xlu0 %v9668
      %v9670 = vpop.xlane.xlu0 %9669
      %v9671 = vsel %vm766, %v9494, 0.0
      %9672 = vadd.xlane.f32.xlu0 %v9671
      %v9673 = vpop.xlane.xlu0 %9672
      %v9674 = vsel %vm766, %v9496, 0.0
      %9675 = vadd.xlane.f32.xlu0 %v9674
      %v9676 = vpop.xlane.xlu0 %9675
      %v9677 = vsel %vm766, %v9498, 0.0
      %9678 = vadd.xlane.f32.xlu0 %v9677
      %v9679 = vpop.xlane.xlu0 %9678
      %v9680 = vsel %vm766, %v9500, 0.0
      %9681 = vadd.xlane.f32.xlu0 %v9680
      %v9682 = vpop.xlane.xlu0 %9681
      %v9683 = vsel %vm766, %v9502, 0.0
      %9684 = vadd.xlane.f32.xlu0 %v9683
      %v9685 = vpop.xlane.xlu0 %9684
      %v9686 = vsel %vm766, %v9504, 0.0
      %9687 = vadd.xlane.f32.xlu0 %v9686
      %v9688 = vpop.xlane.xlu0 %9687
      %v9689 = vsel %vm766, %v9506, 0.0
      %9690 = vadd.xlane.f32.xlu0 %v9689
      %v9691 = vpop.xlane.xlu0 %9690
      %v9692 = vsel %vm766, %v9508, 0.0
      %9693 = vadd.xlane.f32.xlu0 %v9692
      %v9694 = vpop.xlane.xlu0 %9693
      %v9695 = vsel %vm766, %v9510, 0.0
      %9696 = vadd.xlane.f32.xlu0 %v9695
      %v9697 = vpop.xlane.xlu0 %9696
      %v9698 = vsel %vm766, %v9512, 0.0
      %9699 = vadd.xlane.f32.xlu0 %v9698
      %v9700 = vpop.xlane.xlu0 %9699
      %v9701 = vsel %vm766, %v9514, 0.0
      %9702 = vadd.xlane.f32.xlu0 %v9701
      %v9703 = vpop.xlane.xlu0 %9702
      %v9704 = vsel %vm766, %v9516, 0.0
      %9705 = vadd.xlane.f32.xlu0 %v9704
      %v9706 = vpop.xlane.xlu0 %9705
      %v9707 = vsel %vm766, %v9518, 0.0
      %9708 = vadd.xlane.f32.xlu0 %v9707
      %v9709 = vpop.xlane.xlu0 %9708
      %v9710 = vsel %vm766, %v9520, 0.0
      %9711 = vadd.xlane.f32.xlu0 %v9710
      %v9712 = vpop.xlane.xlu0 %9711
      %v9713 = vrcp.pop %v9523
      %v9714 = vmul.f32 %v9394, %v9713
      %v9715 = vrcp.pop %v9526
      %v9716 = vmul.f32 %v9396, %v9715
      %v9717 = vrcp.pop %v9529
      %v9718 = vmul.f32 %v9398, %v9717
      %v9719 = vrcp.pop %v9532
      %v9720 = vmul.f32 %v9400, %v9719
      %v9721 = vrcp.pop %v9535
      %v9722 = vmul.f32 %v9402, %v9721
      %v9723 = vrcp.pop %v9538
      %v9724 = vmul.f32 %v9404, %v9723
      %v9725 = vrcp.pop %v9541
      %v9726 = vmul.f32 %v9406, %v9725
      %v9727 = vrcp.pop %v9544
      %v9728 = vmul.f32 %v9408, %v9727
      %v9729 = vrcp.pop %v9547
      %v9730 = vmul.f32 %v9410, %v9729
      %v9731 = vrcp.pop %v9550
      %v9732 = vmul.f32 %v9412, %v9731
      %v9733 = vrcp.pop %v9553
      %v9734 = vmul.f32 %v9414, %v9733
      %v9735 = vrcp.pop %v9556
      %v9736 = vmul.f32 %v9416, %v9735
      %v9737 = vrcp.pop %v9559
      %v9738 = vmul.f32 %v9418, %v9737
      %v9739 = vrcp.pop %v9562
      %v9740 = vmul.f32 %v9420, %v9739
      %v9741 = vrcp.pop %v9565
      %v9742 = vmul.f32 %v9422, %v9741
      %v9743 = vrcp.pop %v9568
      %v9744 = vmul.f32 %v9424, %v9743
      %v9745 = vrcp.pop %v9571
      %v9746 = vmul.f32 %v9426, %v9745
      %v9747 = vrcp.pop %v9574
      %v9748 = vmul.f32 %v9428, %v9747
      %v9749 = vrcp.pop %v9577
      %v9750 = vmul.f32 %v9430, %v9749
      %v9751 = vrcp.pop %v9580
      %v9752 = vmul.f32 %v9432, %v9751
      %v9753 = vrcp.pop %v9583
      %v9754 = vmul.f32 %v9434, %v9753
      %v9755 = vrcp.pop %v9586
      %v9756 = vmul.f32 %v9436, %v9755
      %v9757 = vrcp.pop %v9589
      %v9758 = vmul.f32 %v9438, %v9757
      %v9759 = vrcp.pop %v9592
      %v9760 = vmul.f32 %v9440, %v9759
      %v9761 = vrcp.pop %v9595
      %v9762 = vmul.f32 %v9442, %v9761
      %v9763 = vrcp.pop %v9598
      %v9764 = vmul.f32 %v9444, %v9763
      %v9765 = vrcp.pop %v9601
      %v9766 = vmul.f32 %v9446, %v9765
      %v9767 = vrcp.pop %v9604
      %v9768 = vmul.f32 %v9448, %v9767
      %v9769 = vrcp.pop %v9607
      %v9770 = vmul.f32 %v9450, %v9769
      %v9771 = vrcp.pop %v9610
      %v9772 = vmul.f32 %v9452, %v9771
      %v9773 = vrcp.pop %v9613
      %v9774 = vmul.f32 %v9454, %v9773
      %v9775 = vrcp.pop %v9616
      %v9776 = vmul.f32 %v9456, %v9775
      %v9777 = vrcp.pop %v9619
      %v9778 = vmul.f32 %v9458, %v9777
      %v9779 = vrcp.pop %v9622
      %v9780 = vmul.f32 %v9460, %v9779
      %v9781 = vrcp.pop %v9625
      %v9782 = vmul.f32 %v9462, %v9781
      %v9783 = vrcp.pop %v9628
      %v9784 = vmul.f32 %v9464, %v9783
      %v9785 = vrcp.pop %v9631
      %v9786 = vmul.f32 %v9466, %v9785
      %v9787 = vrcp.pop %v9634
      %v9788 = vmul.f32 %v9468, %v9787
      %v9789 = vrcp.pop %v9637
      %v9790 = vmul.f32 %v9470, %v9789
      %v9791 = vrcp.pop %v9640
      %v9792 = vmul.f32 %v9472, %v9791
      %v9793 = vrcp.pop %v9643
      %v9794 = vmul.f32 %v9474, %v9793
      %v9795 = vrcp.pop %v9646
      %v9796 = vmul.f32 %v9476, %v9795
      %v9797 = vrcp.pop %v9649
      %v9798 = vmul.f32 %v9478, %v9797
      %v9799 = vrcp.pop %v9652
      %v9800 = vmul.f32 %v9480, %v9799
      %v9801 = vrcp.pop %v9655
      %v9802 = vmul.f32 %v9482, %v9801
      %v9803 = vrcp.pop %v9658
      %v9804 = vmul.f32 %v9484, %v9803
      %v9805 = vrcp.pop %v9661
      %v9806 = vmul.f32 %v9486, %v9805
      %v9807 = vrcp.pop %v9664
      %v9808 = vmul.f32 %v9488, %v9807
      %v9809 = vrcp.pop %v9667
      %v9810 = vmul.f32 %v9490, %v9809
      %v9811 = vrcp.pop %v9670
      %v9812 = vmul.f32 %v9492, %v9811
      %v9813 = vrcp.pop %v9673
      %v9814 = vmul.f32 %v9494, %v9813
      %v9815 = vrcp.pop %v9676
      %v9816 = vmul.f32 %v9496, %v9815
      %v9817 = vrcp.pop %v9679
      %v9818 = vmul.f32 %v9498, %v9817
      %v9819 = vrcp.pop %v9682
      %v9820 = vmul.f32 %v9500, %v9819
      %v9821 = vrcp.pop %v9685
      %v9822 = vmul.f32 %v9502, %v9821
      %v9823 = vrcp.pop %v9688
      %v9824 = vmul.f32 %v9504, %v9823
      %v9825 = vrcp.pop %v9691
      %v9826 = vmul.f32 %v9506, %v9825
      %v9827 = vrcp.pop %v9694
      %v9828 = vmul.f32 %v9508, %v9827
      %v9829 = vrcp.pop %v9697
      %v9830 = vmul.f32 %v9510, %v9829
      %v9831 = vrcp.pop %v9700
      %v9832 = vmul.f32 %v9512, %v9831
      %v9833 = vrcp.pop %v9703
      %v9834 = vmul.f32 %v9514, %v9833
      %v9835 = vrcp.pop %v9706
      %v9836 = vmul.f32 %v9516, %v9835
      %v9837 = vrcp.pop %v9709
      %v9838 = vmul.f32 %v9518, %v9837
      %v9839 = vrcp.pop %v9712
      %v9840 = vmul.f32 %v9520, %v9839
      %v9841 = vpack.c.bf16 %v9716, %v9714
      %v9842 = vpack.c.bf16 %v9720, %v9718
      %v9843 = vpack.c.bf16 %v9724, %v9722
      %v9844 = vpack.c.bf16 %v9728, %v9726
      %v9845 = vpack.c.bf16 %v9732, %v9730
      %v9846 = vpack.c.bf16 %v9736, %v9734
      %v9847 = vpack.c.bf16 %v9740, %v9738
      %v9848 = vpack.c.bf16 %v9744, %v9742
      %v9849 = vpack.c.bf16 %v9748, %v9746
      %v9850 = vpack.c.bf16 %v9752, %v9750
      %v9851 = vpack.c.bf16 %v9756, %v9754
      %v9852 = vpack.c.bf16 %v9760, %v9758
      %v9853 = vpack.c.bf16 %v9764, %v9762
      %v9854 = vpack.c.bf16 %v9768, %v9766
      %v9855 = vpack.c.bf16 %v9772, %v9770
      %v9856 = vpack.c.bf16 %v9776, %v9774
      %v9857 = vpack.c.bf16 %v9780, %v9778
      %v9858 = vpack.c.bf16 %v9784, %v9782
      %v9859 = vpack.c.bf16 %v9788, %v9786
      %v9860 = vpack.c.bf16 %v9792, %v9790
      %v9861 = vpack.c.bf16 %v9796, %v9794
      %v9862 = vpack.c.bf16 %v9800, %v9798
      %v9863 = vpack.c.bf16 %v9804, %v9802
      %v9864 = vpack.c.bf16 %v9808, %v9806
      %v9865 = vpack.c.bf16 %v9812, %v9810
      %v9866 = vpack.c.bf16 %v9816, %v9814
      %v9867 = vpack.c.bf16 %v9820, %v9818
      %v9868 = vpack.c.bf16 %v9824, %v9822
      %v9869 = vpack.c.bf16 %v9828, %v9826
      %v9870 = vpack.c.bf16 %v9832, %v9830
      %v9871 = vpack.c.bf16 %v9836, %v9834
      %v9872 = vpack.c.bf16 %v9840, %v9838
      %v9873 = vpack.c.bf16 %v8320, %v8317
      %v9874 = vpack.c.bf16 %v8328, %v8325
      %v9875 = vpack.c.bf16 %v8336, %v8333
      %v9876 = vpack.c.bf16 %v8344, %v8341
      %v9878 = vsel %vm766, %v9841, 0
      %v9881 = vsel %vm766, %v9842, 0
      %v9884 = vsel %vm766, %v9843, 0
      %v9887 = vsel %vm766, %v9844, 0
      %v9890 = vsel %vm766, %v9845, 0
      %v9893 = vsel %vm766, %v9846, 0
      %v9896 = vsel %vm766, %v9847, 0
      %v9899 = vsel %vm766, %v9848, 0
      %v9902 = vsel %vm766, %v9849, 0
      %v9905 = vsel %vm766, %v9850, 0
      %v9908 = vsel %vm766, %v9851, 0
      %v9911 = vsel %vm766, %v9852, 0
      %v9914 = vsel %vm766, %v9853, 0
      %v9917 = vsel %vm766, %v9854, 0
      %v9920 = vsel %vm766, %v9855, 0
      %v9923 = vsel %vm766, %v9856, 0
      %v9926 = vsel %vm766, %v9857, 0
      %v9929 = vsel %vm766, %v9858, 0
      %v9932 = vsel %vm766, %v9859, 0
      %v9935 = vsel %vm766, %v9860, 0
      %v9938 = vsel %vm766, %v9861, 0
      %v9941 = vsel %vm766, %v9862, 0
      %v9944 = vsel %vm766, %v9863, 0
      %v9947 = vsel %vm766, %v9864, 0
      %v9950 = vsel %vm766, %v9865, 0
      %v9953 = vsel %vm766, %v9866, 0
      %v9956 = vsel %vm766, %v9867, 0
      %v9959 = vsel %vm766, %v9868, 0
      %v9962 = vsel %vm766, %v9869, 0
      %v9965 = vsel %vm766, %v9870, 0
      %v9968 = vsel %vm766, %v9871, 0
      %v9971 = vsel %vm766, %v9872, 0
      %9973 = vmatprep.subr.bf16.mxu0 0
      %9974 = vmatpush1.bf16.msra.mxu0 0
      %9975 = vmatprep.subr.bf16.mxu0 0
      %9976 = vmatpush1.bf16.msra.mxu0 0
      %9977 = vmatprep.subr.bf16.mxu0 0
      %9978 = vmatpush1.bf16.msra.mxu0 0
      %9979 = vmatprep.subr.bf16.mxu0 0
      %9980 = vmatpush1.bf16.msra.mxu0 0
      %9981 = vmatprep.subr.bf16.mxu0 0
      %9982 = vmatpush1.bf16.msra.mxu0 %v9876
      %9983 = vmatprep.subr.bf16.mxu0 0
      %9984 = vmatpush1.bf16.msra.mxu0 %v9875
      %9985 = vmatprep.subr.bf16.mxu0 0
      %9986 = vmatpush1.bf16.msra.mxu0 %v9874
      %9987 = vmatprep.subr.bf16.mxu0 0
      %9988 = vmatpush1.bf16.msra.mxu0 %v9873
      %9989 = vmatprep.subr.bf16.mxu0 0
      %9990 = vmatpush2.bf16.msra.mxu0 0
      %9991 = vmatprep.subr.bf16.mxu0 0
      %9992 = vmatpush2.bf16.msra.mxu0 0
      %9993 = vmatprep.subr.bf16.mxu0 0
      %9994 = vmatpush2.bf16.msra.mxu0 0
      %9995 = vmatprep.subr.bf16.mxu0 0
      %9996 = vmatpush2.bf16.msra.mxu0 0
      %9997 = vmatprep.subr.bf16.mxu0 0
      %9998 = vmatpush2.bf16.msra.mxu0 0
      %9999 = vmatprep.subr.bf16.mxu0 0
      %10000 = vmatpush2.bf16.msra.mxu0 0
      %10001 = vmatprep.subr.bf16.mxu0 0
      %10002 = vmatpush2.bf16.msra.mxu0 0
      %10003 = vmatprep.subr.bf16.mxu0 0
      %10004 = vmatpush2.bf16.msra.mxu0 0
      %10005 = vmatprep.mubr.bf16.mxu0 0
      %10006 = vmatmul.mubr.bf16.gmra.mxu0 %v9878
      %v10007 = vpop.f32.mrf.mxu0
      %v10008 = vadd.f32 0.0, %v10007
      %v10009 = vpop.f32.mrf.mxu0
      %v10010 = vpop.f32.mrf.mxu0
      %v10011 = vadd.f32 0.0, %v10010
      %v10012 = vpop.f32.mrf.mxu0
      %10013 = vmatprep.mubr.bf16.mxu0 0
      %10014 = vmatmul.mubr.bf16.gmra.mxu0 %v9881
      %v10015 = vpop.f32.mrf.mxu0
      %v10016 = vadd.f32 0.0, %v10015
      %v10017 = vpop.f32.mrf.mxu0
      %v10018 = vpop.f32.mrf.mxu0
      %v10019 = vadd.f32 0.0, %v10018
      %v10020 = vpop.f32.mrf.mxu0
      %10021 = vmatprep.mubr.bf16.mxu0 0
      %10022 = vmatmul.mubr.bf16.gmra.mxu0 %v9884
      %v10023 = vpop.f32.mrf.mxu0
      %v10024 = vadd.f32 0.0, %v10023
      %v10025 = vpop.f32.mrf.mxu0
      %v10026 = vpop.f32.mrf.mxu0
      %v10027 = vadd.f32 0.0, %v10026
      %v10028 = vpop.f32.mrf.mxu0
      %10029 = vmatprep.mubr.bf16.mxu0 0
      %10030 = vmatmul.mubr.bf16.gmra.mxu0 %v9887
      %v10031 = vpop.f32.mrf.mxu0
      %v10032 = vadd.f32 0.0, %v10031
      %v10033 = vpop.f32.mrf.mxu0
      %v10034 = vpop.f32.mrf.mxu0
      %v10035 = vadd.f32 0.0, %v10034
      %v10036 = vpop.f32.mrf.mxu0
      %10037 = vmatprep.mubr.bf16.mxu0 0
      %10038 = vmatmul.mubr.bf16.gmra.mxu0 %v9890
      %v10039 = vpop.f32.mrf.mxu0
      %v10040 = vadd.f32 0.0, %v10039
      %v10041 = vpop.f32.mrf.mxu0
      %v10042 = vpop.f32.mrf.mxu0
      %v10043 = vadd.f32 0.0, %v10042
      %v10044 = vpop.f32.mrf.mxu0
      %10045 = vmatprep.mubr.bf16.mxu0 0
      %10046 = vmatmul.mubr.bf16.gmra.mxu0 %v9893
      %v10047 = vpop.f32.mrf.mxu0
      %v10048 = vadd.f32 0.0, %v10047
      %v10049 = vpop.f32.mrf.mxu0
      %v10050 = vpop.f32.mrf.mxu0
      %v10051 = vadd.f32 0.0, %v10050
      %v10052 = vpop.f32.mrf.mxu0
      %10053 = vmatprep.mubr.bf16.mxu0 0
      %10054 = vmatmul.mubr.bf16.gmra.mxu0 %v9896
      %v10055 = vpop.f32.mrf.mxu0
      %v10056 = vadd.f32 0.0, %v10055
      %v10057 = vpop.f32.mrf.mxu0
      %v10058 = vpop.f32.mrf.mxu0
      %v10059 = vadd.f32 0.0, %v10058
      %v10060 = vpop.f32.mrf.mxu0
      %10061 = vmatprep.mubr.bf16.mxu0 0
      %10062 = vmatmul.mubr.bf16.gmra.mxu0 %v9899
      %v10063 = vpop.f32.mrf.mxu0
      %v10064 = vadd.f32 0.0, %v10063
      %v10065 = vpop.f32.mrf.mxu0
      %v10066 = vpop.f32.mrf.mxu0
      %v10067 = vadd.f32 0.0, %v10066
      %v10068 = vpop.f32.mrf.mxu0
      %10069 = vmatprep.mubr.bf16.mxu0 0
      %10070 = vmatmul.mubr.bf16.gmra.mxu0 %v9902
      %v10071 = vpop.f32.mrf.mxu0
      %v10072 = vadd.f32 0.0, %v10071
      %v10073 = vpop.f32.mrf.mxu0
      %v10074 = vpop.f32.mrf.mxu0
      %v10075 = vadd.f32 0.0, %v10074
      %v10076 = vpop.f32.mrf.mxu0
      %10077 = vmatprep.mubr.bf16.mxu0 0
      %10078 = vmatmul.mubr.bf16.gmra.mxu0 %v9905
      %v10079 = vpop.f32.mrf.mxu0
      %v10080 = vadd.f32 0.0, %v10079
      %v10081 = vpop.f32.mrf.mxu0
      %v10082 = vpop.f32.mrf.mxu0
      %v10083 = vadd.f32 0.0, %v10082
      %v10084 = vpop.f32.mrf.mxu0
      %10085 = vmatprep.mubr.bf16.mxu0 0
      %10086 = vmatmul.mubr.bf16.gmra.mxu0 %v9908
      %v10087 = vpop.f32.mrf.mxu0
      %v10088 = vadd.f32 0.0, %v10087
      %v10089 = vpop.f32.mrf.mxu0
      %v10090 = vpop.f32.mrf.mxu0
      %v10091 = vadd.f32 0.0, %v10090
      %v10092 = vpop.f32.mrf.mxu0
      %10093 = vmatprep.mubr.bf16.mxu0 0
      %10094 = vmatmul.mubr.bf16.gmra.mxu0 %v9911
      %v10095 = vpop.f32.mrf.mxu0
      %v10096 = vadd.f32 0.0, %v10095
      %v10097 = vpop.f32.mrf.mxu0
      %v10098 = vpop.f32.mrf.mxu0
      %v10099 = vadd.f32 0.0, %v10098
      %v10100 = vpop.f32.mrf.mxu0
      %10101 = vmatprep.mubr.bf16.mxu0 0
      %10102 = vmatmul.mubr.bf16.gmra.mxu0 %v9914
      %v10103 = vpop.f32.mrf.mxu0
      %v10104 = vadd.f32 0.0, %v10103
      %v10105 = vpop.f32.mrf.mxu0
      %v10106 = vpop.f32.mrf.mxu0
      %v10107 = vadd.f32 0.0, %v10106
      %v10108 = vpop.f32.mrf.mxu0
      %10109 = vmatprep.mubr.bf16.mxu0 0
      %10110 = vmatmul.mubr.bf16.gmra.mxu0 %v9917
      %v10111 = vpop.f32.mrf.mxu0
      %v10112 = vadd.f32 0.0, %v10111
      %v10113 = vpop.f32.mrf.mxu0
      %v10114 = vpop.f32.mrf.mxu0
      %v10115 = vadd.f32 0.0, %v10114
      %v10116 = vpop.f32.mrf.mxu0
      %10117 = vmatprep.mubr.bf16.mxu0 0
      %10118 = vmatmul.mubr.bf16.gmra.mxu0 %v9920
      %v10119 = vpop.f32.mrf.mxu0
      %v10120 = vadd.f32 0.0, %v10119
      %v10121 = vpop.f32.mrf.mxu0
      %v10122 = vpop.f32.mrf.mxu0
      %v10123 = vadd.f32 0.0, %v10122
      %v10124 = vpop.f32.mrf.mxu0
      %10125 = vmatprep.mubr.bf16.mxu0 0
      %10126 = vmatmul.mubr.bf16.gmra.mxu0 %v9923
      %v10127 = vpop.f32.mrf.mxu0
      %v10128 = vadd.f32 0.0, %v10127
      %v10129 = vpop.f32.mrf.mxu0
      %v10130 = vpop.f32.mrf.mxu0
      %v10131 = vadd.f32 0.0, %v10130
      %v10132 = vpop.f32.mrf.mxu0
      %10133 = vmatprep.mubr.bf16.mxu0 0
      %10134 = vmatmul.mubr.bf16.gmra.mxu0 %v9926
      %v10135 = vpop.f32.mrf.mxu0
      %v10136 = vadd.f32 0.0, %v10135
      %v10137 = vpop.f32.mrf.mxu0
      %v10138 = vpop.f32.mrf.mxu0
      %v10139 = vadd.f32 0.0, %v10138
      %v10140 = vpop.f32.mrf.mxu0
      %10141 = vmatprep.mubr.bf16.mxu0 0
      %10142 = vmatmul.mubr.bf16.gmra.mxu0 %v9929
      %v10143 = vpop.f32.mrf.mxu0
      %v10144 = vadd.f32 0.0, %v10143
      %v10145 = vpop.f32.mrf.mxu0
      %v10146 = vpop.f32.mrf.mxu0
      %v10147 = vadd.f32 0.0, %v10146
      %v10148 = vpop.f32.mrf.mxu0
      %10149 = vmatprep.mubr.bf16.mxu0 0
      %10150 = vmatmul.mubr.bf16.gmra.mxu0 %v9932
      %v10151 = vpop.f32.mrf.mxu0
      %v10152 = vadd.f32 0.0, %v10151
      %v10153 = vpop.f32.mrf.mxu0
      %v10154 = vpop.f32.mrf.mxu0
      %v10155 = vadd.f32 0.0, %v10154
      %v10156 = vpop.f32.mrf.mxu0
      %10157 = vmatprep.mubr.bf16.mxu0 0
      %10158 = vmatmul.mubr.bf16.gmra.mxu0 %v9935
      %v10159 = vpop.f32.mrf.mxu0
      %v10160 = vadd.f32 0.0, %v10159
      %v10161 = vpop.f32.mrf.mxu0
      %v10162 = vpop.f32.mrf.mxu0
      %v10163 = vadd.f32 0.0, %v10162
      %v10164 = vpop.f32.mrf.mxu0
      %10165 = vmatprep.mubr.bf16.mxu0 0
      %10166 = vmatmul.mubr.bf16.gmra.mxu0 %v9938
      %v10167 = vpop.f32.mrf.mxu0
      %v10168 = vadd.f32 0.0, %v10167
      %v10169 = vpop.f32.mrf.mxu0
      %v10170 = vpop.f32.mrf.mxu0
      %v10171 = vadd.f32 0.0, %v10170
      %v10172 = vpop.f32.mrf.mxu0
      %10173 = vmatprep.mubr.bf16.mxu0 0
      %10174 = vmatmul.mubr.bf16.gmra.mxu0 %v9941
      %v10175 = vpop.f32.mrf.mxu0
      %v10176 = vadd.f32 0.0, %v10175
      %v10177 = vpop.f32.mrf.mxu0
      %v10178 = vpop.f32.mrf.mxu0
      %v10179 = vadd.f32 0.0, %v10178
      %v10180 = vpop.f32.mrf.mxu0
      %10181 = vmatprep.mubr.bf16.mxu0 0
      %10182 = vmatmul.mubr.bf16.gmra.mxu0 %v9944
      %v10183 = vpop.f32.mrf.mxu0
      %v10184 = vadd.f32 0.0, %v10183
      %v10185 = vpop.f32.mrf.mxu0
      %v10186 = vpop.f32.mrf.mxu0
      %v10187 = vadd.f32 0.0, %v10186
      %v10188 = vpop.f32.mrf.mxu0
      %10189 = vmatprep.mubr.bf16.mxu0 0
      %10190 = vmatmul.mubr.bf16.gmra.mxu0 %v9947
      %v10191 = vpop.f32.mrf.mxu0
      %v10192 = vadd.f32 0.0, %v10191
      %v10193 = vpop.f32.mrf.mxu0
      %v10194 = vpop.f32.mrf.mxu0
      %v10195 = vadd.f32 0.0, %v10194
      %v10196 = vpop.f32.mrf.mxu0
      %10197 = vmatprep.mubr.bf16.mxu0 0
      %10198 = vmatmul.mubr.bf16.gmra.mxu0 %v9950
      %v10199 = vpop.f32.mrf.mxu0
      %v10200 = vadd.f32 0.0, %v10199
      %v10201 = vpop.f32.mrf.mxu0
      %v10202 = vpop.f32.mrf.mxu0
      %v10203 = vadd.f32 0.0, %v10202
      %v10204 = vpop.f32.mrf.mxu0
      %10205 = vmatprep.mubr.bf16.mxu0 0
      %10206 = vmatmul.mubr.bf16.gmra.mxu0 %v9953
      %v10207 = vpop.f32.mrf.mxu0
      %v10208 = vadd.f32 0.0, %v10207
      %v10209 = vpop.f32.mrf.mxu0
      %v10210 = vpop.f32.mrf.mxu0
      %v10211 = vadd.f32 0.0, %v10210
      %v10212 = vpop.f32.mrf.mxu0
      %10213 = vmatprep.mubr.bf16.mxu0 0
      %10214 = vmatmul.mubr.bf16.gmra.mxu0 %v9956
      %v10215 = vpop.f32.mrf.mxu0
      %v10216 = vadd.f32 0.0, %v10215
      %v10217 = vpop.f32.mrf.mxu0
      %v10218 = vpop.f32.mrf.mxu0
      %v10219 = vadd.f32 0.0, %v10218
      %v10220 = vpop.f32.mrf.mxu0
      %10221 = vmatprep.mubr.bf16.mxu0 0
      %10222 = vmatmul.mubr.bf16.gmra.mxu0 %v9959
      %v10223 = vpop.f32.mrf.mxu0
      %v10224 = vadd.f32 0.0, %v10223
      %v10225 = vpop.f32.mrf.mxu0
      %v10226 = vpop.f32.mrf.mxu0
      %v10227 = vadd.f32 0.0, %v10226
      %v10228 = vpop.f32.mrf.mxu0
      %10229 = vmatprep.mubr.bf16.mxu0 0
      %10230 = vmatmul.mubr.bf16.gmra.mxu0 %v9962
      %v10231 = vpop.f32.mrf.mxu0
      %v10232 = vadd.f32 0.0, %v10231
      %v10233 = vpop.f32.mrf.mxu0
      %v10234 = vpop.f32.mrf.mxu0
      %v10235 = vadd.f32 0.0, %v10234
      %v10236 = vpop.f32.mrf.mxu0
      %10237 = vmatprep.mubr.bf16.mxu0 0
      %10238 = vmatmul.mubr.bf16.gmra.mxu0 %v9965
      %v10239 = vpop.f32.mrf.mxu0
      %v10240 = vadd.f32 0.0, %v10239
      %v10241 = vpop.f32.mrf.mxu0
      %v10242 = vpop.f32.mrf.mxu0
      %v10243 = vadd.f32 0.0, %v10242
      %v10244 = vpop.f32.mrf.mxu0
      %10245 = vmatprep.mubr.bf16.mxu0 0
      %10246 = vmatmul.mubr.bf16.gmra.mxu0 %v9968
      %v10247 = vpop.f32.mrf.mxu0
      %v10248 = vadd.f32 0.0, %v10247
      %v10249 = vpop.f32.mrf.mxu0
      %v10250 = vpop.f32.mrf.mxu0
      %v10251 = vadd.f32 0.0, %v10250
      %v10252 = vpop.f32.mrf.mxu0
      %10253 = vmatprep.mubr.bf16.mxu0 0
      %10254 = vmatmul.mubr.bf16.gmra.mxu0 %v9971
      %v10255 = vpop.f32.mrf.mxu0
      %v10256 = vadd.f32 0.0, %v10255
      %v10257 = vpop.f32.mrf.mxu0
      %v10258 = vpop.f32.mrf.mxu0
      %v10259 = vadd.f32 0.0, %v10258
      %v10260 = vpop.f32.mrf.mxu0
      %10261 = vdwg.mxu0
      %v10262 = vmul.f32 %v10008, %v1325
      %v10263 = vmul.f32 %v10011, %v1326
      %v10264 = vmul.f32 %v10016, %v1327
      %v10265 = vmul.f32 %v10019, %v1328
      %v10266 = vmul.f32 %v10024, %v1329
      %v10267 = vmul.f32 %v10027, %v1330
      %v10268 = vmul.f32 %v10032, %v1331
      %v10269 = vmul.f32 %v10035, %v1332
      %v10270 = vmul.f32 %v10040, %v1333
      %v10271 = vmul.f32 %v10043, %v1334
      %v10272 = vmul.f32 %v10048, %v1335
      %v10273 = vmul.f32 %v10051, %v1336
      %v10274 = vmul.f32 %v10056, %v1337
      %v10275 = vmul.f32 %v10059, %v1338
      %v10276 = vmul.f32 %v10064, %v1339
      %v10277 = vmul.f32 %v10067, %v1340
      %v10278 = vmul.f32 %v10072, %v1341
      %v10279 = vmul.f32 %v10075, %v1342
      %v10280 = vmul.f32 %v10080, %v1343
      %v10281 = vmul.f32 %v10083, %v1344
      %v10282 = vmul.f32 %v10088, %v1345
      %v10283 = vmul.f32 %v10091, %v1346
      %v10284 = vmul.f32 %v10096, %v1347
      %v10285 = vmul.f32 %v10099, %v1348
      %v10286 = vmul.f32 %v10104, %v1349
      %v10287 = vmul.f32 %v10107, %v1350
      %v10288 = vmul.f32 %v10112, %v1351
      %v10289 = vmul.f32 %v10115, %v1352
      %v10290 = vmul.f32 %v10120, %v1353
      %v10291 = vmul.f32 %v10123, %v1354
      %v10292 = vmul.f32 %v10128, %v1355
      %v10293 = vmul.f32 %v10131, %v1356
      %v10294 = vmul.f32 %v10136, %v1357
      %v10295 = vmul.f32 %v10139, %v1358
      %v10296 = vmul.f32 %v10144, %v1359
      %v10297 = vmul.f32 %v10147, %v1360
      %v10298 = vmul.f32 %v10152, %v1361
      %v10299 = vmul.f32 %v10155, %v1362
      %v10300 = vmul.f32 %v10160, %v1363
      %v10301 = vmul.f32 %v10163, %v1364
      %v10302 = vmul.f32 %v10168, %v1365
      %v10303 = vmul.f32 %v10171, %v1366
      %v10304 = vmul.f32 %v10176, %v1367
      %v10305 = vmul.f32 %v10179, %v1368
      %v10306 = vmul.f32 %v10184, %v1369
      %v10307 = vmul.f32 %v10187, %v1370
      %v10308 = vmul.f32 %v10192, %v1371
      %v10309 = vmul.f32 %v10195, %v1372
      %v10310 = vmul.f32 %v10200, %v1373
      %v10311 = vmul.f32 %v10203, %v1374
      %v10312 = vmul.f32 %v10208, %v1375
      %v10313 = vmul.f32 %v10211, %v1376
      %v10314 = vmul.f32 %v10216, %v1377
      %v10315 = vmul.f32 %v10219, %v1378
      %v10316 = vmul.f32 %v10224, %v1379
      %v10317 = vmul.f32 %v10227, %v1380
      %v10318 = vmul.f32 %v10232, %v1381
      %v10319 = vmul.f32 %v10235, %v1382
      %v10320 = vmul.f32 %v10240, %v1383
      %v10321 = vmul.f32 %v10243, %v1384
      %v10322 = vmul.f32 %v10248, %v1385
      %v10323 = vmul.f32 %v10251, %v1386
      %v10324 = vmul.f32 %v10256, %v1387
      %v10325 = vmul.f32 %v10259, %v1388
      %v10326 = vpack.c.bf16 %v10263, %v10262
      %v10327 = vpack.c.bf16 %v10265, %v10264
      %v10328 = vpack.c.bf16 %v10267, %v10266
      %v10329 = vpack.c.bf16 %v10269, %v10268
      %v10330 = vpack.c.bf16 %v10271, %v10270
      %v10331 = vpack.c.bf16 %v10273, %v10272
      %v10332 = vpack.c.bf16 %v10275, %v10274
      %v10333 = vpack.c.bf16 %v10277, %v10276
      %v10334 = vpack.c.bf16 %v10279, %v10278
      %v10335 = vpack.c.bf16 %v10281, %v10280
      %v10336 = vpack.c.bf16 %v10283, %v10282
      %v10337 = vpack.c.bf16 %v10285, %v10284
      %v10338 = vpack.c.bf16 %v10287, %v10286
      %v10339 = vpack.c.bf16 %v10289, %v10288
      %v10340 = vpack.c.bf16 %v10291, %v10290
      %v10341 = vpack.c.bf16 %v10293, %v10292
      %v10342 = vpack.c.bf16 %v10295, %v10294
      %v10343 = vpack.c.bf16 %v10297, %v10296
      %v10344 = vpack.c.bf16 %v10299, %v10298
      %v10345 = vpack.c.bf16 %v10301, %v10300
      %v10346 = vpack.c.bf16 %v10303, %v10302
      %v10347 = vpack.c.bf16 %v10305, %v10304
      %v10348 = vpack.c.bf16 %v10307, %v10306
      %v10349 = vpack.c.bf16 %v10309, %v10308
      %v10350 = vpack.c.bf16 %v10311, %v10310
      %v10351 = vpack.c.bf16 %v10313, %v10312
      %v10352 = vpack.c.bf16 %v10315, %v10314
      %v10353 = vpack.c.bf16 %v10317, %v10316
      %v10354 = vpack.c.bf16 %v10319, %v10318
      %v10355 = vpack.c.bf16 %v10321, %v10320
      %v10356 = vpack.c.bf16 %v10323, %v10322
      %v10357 = vpack.c.bf16 %v10325, %v10324
      %10358 = vmatprep.subr.bf16.mxu0 0
      %10359 = vmatpush1.bf16.msra.mxu0 %v10333
      %10360 = vmatprep.subr.bf16.mxu0 0
      %10361 = vmatpush1.bf16.msra.mxu0 %v10332
      %10362 = vmatprep.subr.bf16.mxu0 0
      %10363 = vmatpush1.bf16.msra.mxu0 %v10331
      %10364 = vmatprep.subr.bf16.mxu0 0
      %10365 = vmatpush1.bf16.msra.mxu0 %v10330
      %10366 = vmatprep.subr.bf16.mxu0 0
      %10367 = vmatpush1.bf16.msra.mxu0 %v10329
      %10368 = vmatprep.subr.bf16.mxu0 0
      %10369 = vmatpush1.bf16.msra.mxu0 %v10328
      %10370 = vmatprep.subr.bf16.mxu0 0
      %10371 = vmatpush1.bf16.msra.mxu0 %v10327
      %10372 = vmatprep.subr.bf16.mxu0 0
      %10373 = vmatpush1.bf16.msra.mxu0 %v10326
      %10374 = vmatprep.subr.bf16.mxu0 0
      %10375 = vmatpush2.bf16.msra.mxu0 %v10341
      %10376 = vmatprep.subr.bf16.mxu0 0
      %10377 = vmatpush2.bf16.msra.mxu0 %v10340
      %10378 = vmatprep.subr.bf16.mxu0 0
      %10379 = vmatpush2.bf16.msra.mxu0 %v10339
      %10380 = vmatprep.subr.bf16.mxu0 0
      %10381 = vmatpush2.bf16.msra.mxu0 %v10338
      %10382 = vmatprep.subr.bf16.mxu0 0
      %10383 = vmatpush2.bf16.msra.mxu0 %v10337
      %10384 = vmatprep.subr.bf16.mxu0 0
      %10385 = vmatpush2.bf16.msra.mxu0 %v10336
      %10386 = vmatprep.subr.bf16.mxu0 0
      %10387 = vmatpush2.bf16.msra.mxu0 %v10335
      %10388 = vmatprep.subr.bf16.mxu0 0
      %10389 = vmatpush2.bf16.msra.mxu0 %v10334
      %10390 = vmatprep.mubr.bf16.mxu0 %v3849
      %10391 = vmatmul.mubr.bf16.gmra.mxu0 %v3848
      %v10392 = vpop.f32.mrf.mxu0
      %v10393 = vadd.f32 0.0, %v10392
      %v10394 = vpop.f32.mrf.mxu0
      %v10395 = vpop.f32.mrf.mxu0
      %v10396 = vadd.f32 0.0, %v10395
      %v10397 = vpop.f32.mrf.mxu0
      %10398 = vmatprep.mubr.bf16.mxu0 %v3853
      %10399 = vmatmul.mubr.bf16.gmra.mxu0 %v3852
      %v10400 = vpop.f32.mrf.mxu0
      %v10401 = vadd.f32 0.0, %v10400
      %v10402 = vpop.f32.mrf.mxu0
      %v10403 = vpop.f32.mrf.mxu0
      %v10404 = vadd.f32 0.0, %v10403
      %v10405 = vpop.f32.mrf.mxu0
      %10406 = vmatprep.mubr.bf16.mxu0 %v3857
      %10407 = vmatmul.mubr.bf16.gmra.mxu0 %v3856
      %v10408 = vpop.f32.mrf.mxu0
      %v10409 = vadd.f32 0.0, %v10408
      %v10410 = vpop.f32.mrf.mxu0
      %v10411 = vpop.f32.mrf.mxu0
      %v10412 = vadd.f32 0.0, %v10411
      %v10413 = vpop.f32.mrf.mxu0
      %10414 = vmatprep.mubr.bf16.mxu0 %v3861
      %10415 = vmatmul.mubr.bf16.gmra.mxu0 %v3860
      %v10416 = vpop.f32.mrf.mxu0
      %v10417 = vadd.f32 0.0, %v10416
      %v10418 = vpop.f32.mrf.mxu0
      %v10419 = vpop.f32.mrf.mxu0
      %v10420 = vadd.f32 0.0, %v10419
      %v10421 = vpop.f32.mrf.mxu0
      %10422 = vdwg.mxu0
      %10423 = vmatprep.subr.bf16.mxu0 0
      %10424 = vmatpush1.bf16.msra.mxu0 %v10349
      %10425 = vmatprep.subr.bf16.mxu0 0
      %10426 = vmatpush1.bf16.msra.mxu0 %v10348
      %10427 = vmatprep.subr.bf16.mxu0 0
      %10428 = vmatpush1.bf16.msra.mxu0 %v10347
      %10429 = vmatprep.subr.bf16.mxu0 0
      %10430 = vmatpush1.bf16.msra.mxu0 %v10346
      %10431 = vmatprep.subr.bf16.mxu0 0
      %10432 = vmatpush1.bf16.msra.mxu0 %v10345
      %10433 = vmatprep.subr.bf16.mxu0 0
      %10434 = vmatpush1.bf16.msra.mxu0 %v10344
      %10435 = vmatprep.subr.bf16.mxu0 0
      %10436 = vmatpush1.bf16.msra.mxu0 %v10343
      %10437 = vmatprep.subr.bf16.mxu0 0
      %10438 = vmatpush1.bf16.msra.mxu0 %v10342
      %10439 = vmatprep.subr.bf16.mxu0 0
      %10440 = vmatpush2.bf16.msra.mxu0 %v10357
      %10441 = vmatprep.subr.bf16.mxu0 0
      %10442 = vmatpush2.bf16.msra.mxu0 %v10356
      %10443 = vmatprep.subr.bf16.mxu0 0
      %10444 = vmatpush2.bf16.msra.mxu0 %v10355
      %10445 = vmatprep.subr.bf16.mxu0 0
      %10446 = vmatpush2.bf16.msra.mxu0 %v10354
      %10447 = vmatprep.subr.bf16.mxu0 0
      %10448 = vmatpush2.bf16.msra.mxu0 %v10353
      %10449 = vmatprep.subr.bf16.mxu0 0
      %10450 = vmatpush2.bf16.msra.mxu0 %v10352
      %10451 = vmatprep.subr.bf16.mxu0 0
      %10452 = vmatpush2.bf16.msra.mxu0 %v10351
      %10453 = vmatprep.subr.bf16.mxu0 0
      %10454 = vmatpush2.bf16.msra.mxu0 %v10350
      %10455 = vmatprep.mubr.bf16.mxu0 %v3851
      %10456 = vmatmul.mubr.bf16.gmra.mxu0 %v3850
      %v10457 = vpop.f32.mrf.mxu0
      %v10458 = vadd.f32 %v10393, %v10457
      %v10459 = vpop.f32.mrf.mxu0
      %v10460 = vpop.f32.mrf.mxu0
      %v10461 = vadd.f32 %v10396, %v10460
      %v10462 = vpop.f32.mrf.mxu0
      %10463 = vmatprep.mubr.bf16.mxu0 %v3855
      %10464 = vmatmul.mubr.bf16.gmra.mxu0 %v3854
      %v10465 = vpop.f32.mrf.mxu0
      %v10466 = vadd.f32 %v10401, %v10465
      %v10467 = vpop.f32.mrf.mxu0
      %v10468 = vpop.f32.mrf.mxu0
      %v10469 = vadd.f32 %v10404, %v10468
      %v10470 = vpop.f32.mrf.mxu0
      %10471 = vmatprep.mubr.bf16.mxu0 %v3859
      %10472 = vmatmul.mubr.bf16.gmra.mxu0 %v3858
      %v10473 = vpop.f32.mrf.mxu0
      %v10474 = vadd.f32 %v10409, %v10473
      %v10475 = vpop.f32.mrf.mxu0
      %v10476 = vpop.f32.mrf.mxu0
      %v10477 = vadd.f32 %v10412, %v10476
      %v10478 = vpop.f32.mrf.mxu0
      %10479 = vmatprep.mubr.bf16.mxu0 %v3863
      %10480 = vmatmul.mubr.bf16.gmra.mxu0 %v3862
      %v10481 = vpop.f32.mrf.mxu0
      %v10482 = vadd.f32 %v10417, %v10481
      %v10483 = vpop.f32.mrf.mxu0
      %v10484 = vpop.f32.mrf.mxu0
      %v10485 = vadd.f32 %v10420, %v10484
      %v10486 = vpop.f32.mrf.mxu0
      %10487 = vdwg.mxu0
      %v10488 = vld [vmem:[%s2 + $0x1c] sm:$0x1]
      %v10489 = vpack.c.bf16 %v10461, %v10458
      %v10490 = vpack.c.bf16 %v10469, %v10466
      %v10491 = vpack.c.bf16 %v10477, %v10474
      %v10492 = vpack.c.bf16 %v10485, %v10482
      %v10493 = vlaneseq
      %v10494 = vshrl.u32 %v10493, 7
      %v10495 = vsub.s32 0, %v10494
      %v10496 = vrot.slane %v10488, %v10495
      %10497 = vrot.lane.b32.xlu0 %v8278, 96
      %v10498 = vpop.permute.xlu0 %10497
      %10499 = vrot.lane.b32.xlu0 %v8279, 96
      %v10500 = vpop.permute.xlu0 %10499
      %v10504 = vsel %vm431, %v10489, 0
      %v10507 = vsel %vm431, %v10490, 0
      %v10510 = vsel %vm431, %v10491, 0
      %v10513 = vsel %vm431, %v10492, 0
      %10515 = vmatprep.subr.bf16.mxu0 0
      %10516 = vmatpush1.bf16.msra.mxu0 0
      %10517 = vmatprep.subr.bf16.mxu0 0
      %10518 = vmatpush1.bf16.msra.mxu0 0
      %10519 = vmatprep.subr.bf16.mxu0 0
      %10520 = vmatpush1.bf16.msra.mxu0 0
      %10521 = vmatprep.subr.bf16.mxu0 0
      %10522 = vmatpush1.bf16.msra.mxu0 0
      %10523 = vmatprep.subr.bf16.mxu0 0
      %10524 = vmatpush1.bf16.msra.mxu0 0
      %10525 = vmatprep.subr.bf16.mxu0 0
      %10526 = vmatpush1.bf16.msra.mxu0 0
      %10527 = vmatprep.subr.bf16.mxu0 0
      %10528 = vmatpush1.bf16.msra.mxu0 %v10500
      %10529 = vmatprep.subr.bf16.mxu0 0
      %10530 = vmatpush1.bf16.msra.mxu0 %v10498
      %10531 = vmatprep.subr.bf16.mxu0 0
      %10532 = vmatpush2.bf16.msra.mxu0 0
      %10533 = vmatprep.subr.bf16.mxu0 0
      %10534 = vmatpush2.bf16.msra.mxu0 0
      %10535 = vmatprep.subr.bf16.mxu0 0
      %10536 = vmatpush2.bf16.msra.mxu0 0
      %10537 = vmatprep.subr.bf16.mxu0 0
      %10538 = vmatpush2.bf16.msra.mxu0 0
      %10539 = vmatprep.subr.bf16.mxu0 0
      %10540 = vmatpush2.bf16.msra.mxu0 0
      %10541 = vmatprep.subr.bf16.mxu0 0
      %10542 = vmatpush2.bf16.msra.mxu0 0
      %10543 = vmatprep.subr.bf16.mxu0 0
      %10544 = vmatpush2.bf16.msra.mxu0 0
      %10545 = vmatprep.subr.bf16.mxu0 0
      %10546 = vmatpush2.bf16.msra.mxu0 0
      %10547 = vmatprep.mubr.bf16.mxu0 0
      %10548 = vmatmul.mubr.bf16.gmra.mxu0 %v10504
      %v10549 = vpop.f32.mrf.mxu0
      %v10550 = vadd.f32 %v10496, %v10549
      %v10551 = vpop.f32.mrf.mxu0
      %v10552 = vpop.f32.mrf.mxu0
      %v10553 = vadd.f32 %v10496, %v10552
      %v10554 = vpop.f32.mrf.mxu0
      %10555 = vmatprep.mubr.bf16.mxu0 0
      %10556 = vmatmul.mubr.bf16.gmra.mxu0 %v10507
      %v10557 = vpop.f32.mrf.mxu0
      %v10558 = vadd.f32 %v10496, %v10557
      %v10559 = vpop.f32.mrf.mxu0
      %v10560 = vpop.f32.mrf.mxu0
      %v10561 = vadd.f32 %v10496, %v10560
      %v10562 = vpop.f32.mrf.mxu0
      %10563 = vmatprep.mubr.bf16.mxu0 0
      %10564 = vmatmul.mubr.bf16.gmra.mxu0 %v10510
      %v10565 = vpop.f32.mrf.mxu0
      %v10566 = vadd.f32 %v10496, %v10565
      %v10567 = vpop.f32.mrf.mxu0
      %v10568 = vpop.f32.mrf.mxu0
      %v10569 = vadd.f32 %v10496, %v10568
      %v10570 = vpop.f32.mrf.mxu0
      %10571 = vmatprep.mubr.bf16.mxu0 0
      %10572 = vmatmul.mubr.bf16.gmra.mxu0 %v10513
      %v10573 = vpop.f32.mrf.mxu0
      %v10574 = vadd.f32 %v10496, %v10573
      %v10575 = vpop.f32.mrf.mxu0
      %v10576 = vpop.f32.mrf.mxu0
      %v10577 = vadd.f32 %v10496, %v10576
      %v10578 = vpop.f32.mrf.mxu0
      %10579 = vdwg.mxu0
      %v10580 = vadd.f32 %v10550, %v8077
      %v10581 = vadd.f32 %v10553, %v8078
      %v10582 = vadd.f32 %v10558, %v8079
      %v10583 = vadd.f32 %v10561, %v8080
      %v10584 = vadd.f32 %v10566, %v8081
      %v10585 = vadd.f32 %v10569, %v8082
      %v10586 = vadd.f32 %v10574, %v8083
      %v10587 = vadd.f32 %v10577, %v8084
      %v10588 = vsel %vm286, 1, 0
      %v10589 = vcvt.s32.f32 %v10588
      %v10590 = vpack.c.bf16 %v10589, %v10589
      %v10591 = vpack.c.bf16 %v10581, %v10580
      %v10592 = vpack.c.bf16 %v10583, %v10582
      %v10593 = vpack.c.bf16 %v10585, %v10584
      %v10594 = vpack.c.bf16 %v10587, %v10586
      %v10596 = vsel %vm766, %v10590, 0
      %10598 = vmatprep.subr.bf16.mxu0 0
      %10599 = vmatpush1.bf16.msra.mxu0 0
      %10600 = vmatprep.subr.bf16.mxu0 0
      %10601 = vmatpush1.bf16.msra.mxu0 0
      %10602 = vmatprep.subr.bf16.mxu0 0
      %10603 = vmatpush1.bf16.msra.mxu0 0
      %10604 = vmatprep.subr.bf16.mxu0 0
      %10605 = vmatpush1.bf16.msra.mxu0 0
      %10606 = vmatprep.subr.bf16.mxu0 0
      %10607 = vmatpush1.bf16.msra.mxu0 %v10594
      %10608 = vmatprep.subr.bf16.mxu0 0
      %10609 = vmatpush1.bf16.msra.mxu0 %v10593
      %10610 = vmatprep.subr.bf16.mxu0 0
      %10611 = vmatpush1.bf16.msra.mxu0 %v10592
      %10612 = vmatprep.subr.bf16.mxu0 0
      %10613 = vmatpush1.bf16.msra.mxu0 %v10591
      %10614 = vmatprep.subr.bf16.mxu0 0
      %10615 = vmatpush2.bf16.msra.mxu0 0
      %10616 = vmatprep.subr.bf16.mxu0 0
      %10617 = vmatpush2.bf16.msra.mxu0 0
      %10618 = vmatprep.subr.bf16.mxu0 0
      %10619 = vmatpush2.bf16.msra.mxu0 0
      %10620 = vmatprep.subr.bf16.mxu0 0
      %10621 = vmatpush2.bf16.msra.mxu0 0
      %10622 = vmatprep.subr.bf16.mxu0 0
      %10623 = vmatpush2.bf16.msra.mxu0 0
      %10624 = vmatprep.subr.bf16.mxu0 0
      %10625 = vmatpush2.bf16.msra.mxu0 0
      %10626 = vmatprep.subr.bf16.mxu0 0
      %10627 = vmatpush2.bf16.msra.mxu0 0
      %10628 = vmatprep.subr.bf16.mxu0 0
      %10629 = vmatpush2.bf16.msra.mxu0 0
      %10630 = vmatprep.mubr.bf16.mxu0 0
      %10631 = vmatmul.mubr.bf16.gmra.mxu0 %v10596
      %v10632 = vpop.f32.mrf.mxu0
      %v10633 = vadd.f32 0.0, %v10632
      %v10634 = vpop.f32.mrf.mxu0
      %v10635 = vpop.f32.mrf.mxu0
      %v10636 = vpop.f32.mrf.mxu0
      %10637 = vdwg.mxu0
      %v10638 = vld [vmem:[%s2 + $0x1d] sm:$0x1]
      %v10639 = vld [vmem:[%s2 + $0x1e] sm:$0x1]
      %v10640 = vsel %vm431, %v10633, 0.0
      %10641 = vadd.xlane.f32.xlu0 %v10640
      %v10642 = vpop.xlane.xlu0 %10641
      %v10643 = vmul.f32 %v10642, %v878
      %v10644 = vmul.f32 %v10633, %v10633
      %v10645 = vsel %vm431, %v10644, 0.0
      %10646 = vadd.xlane.f32.xlu0 %v10645
      %v10647 = vpop.xlane.xlu0 %10646
      %v10648 = vmul.f32 %v10647, %v878
      %v10649 = vmul.f32 %v10643, %v10643
      %v10650 = vsub.f32 %v10648, %v10649
      %v10651 = vsub.f32 %v10633, %v10643
      %v10652 = vadd.f32 %v10650, 1e-05
      %v10653 = vrsqrt.pop %v10652
      %v10654 = vmul.f32 %v10651, %v10653
      %v10655 = vlaneseq
      %v10656 = vshrl.u32 %v10655, 7
      %v10657 = vsub.s32 0, %v10656
      %v10658 = vrot.slane %v10638, %v10657
      %v10659 = vmul.f32 %v10654, %v10658
      %v10660 = vlaneseq
      %v10661 = vshrl.u32 %v10660, 7
      %v10662 = vsub.s32 0, %v10661
      %v10663 = vrot.slane %v10639, %v10662
      %v10664 = vadd.f32 %v10659, %v10663
      %v10665 = vld [vmem:[%s2 + $0x1f] sm:$0x1]
      %v10666 = vpack.c.bf16 %v10664, %v10664
      %v10667 = vlaneseq
      %v10668 = vshrl.u32 %v10667, 7
      %v10669 = vsub.s32 0, %v10668
      %v10670 = vrot.slane %v10665, %v10669
      %10671 = vrot.lane.b32.xlu0 %v8278, 64
      %v10672 = vpop.permute.xlu0 %10671
      %10673 = vrot.lane.b32.xlu0 %v8279, 64
      %v10674 = vpop.permute.xlu0 %10673
      %v10678 = vsel %vm431, %v10666, 0
      %10680 = vmatprep.subr.bf16.mxu0 0
      %10681 = vmatpush1.bf16.msra.mxu0 0
      %10682 = vmatprep.subr.bf16.mxu0 0
      %10683 = vmatpush1.bf16.msra.mxu0 0
      %10684 = vmatprep.subr.bf16.mxu0 0
      %10685 = vmatpush1.bf16.msra.mxu0 0
      %10686 = vmatprep.subr.bf16.mxu0 0
      %10687 = vmatpush1.bf16.msra.mxu0 0
      %10688 = vmatprep.subr.bf16.mxu0 0
      %10689 = vmatpush1.bf16.msra.mxu0 0
      %10690 = vmatprep.subr.bf16.mxu0 0
      %10691 = vmatpush1.bf16.msra.mxu0 0
      %10692 = vmatprep.subr.bf16.mxu0 0
      %10693 = vmatpush1.bf16.msra.mxu0 %v10674
      %10694 = vmatprep.subr.bf16.mxu0 0
      %10695 = vmatpush1.bf16.msra.mxu0 %v10672
      %10696 = vmatprep.subr.bf16.mxu0 0
      %10697 = vmatpush2.bf16.msra.mxu0 0
      %10698 = vmatprep.subr.bf16.mxu0 0
      %10699 = vmatpush2.bf16.msra.mxu0 0
      %10700 = vmatprep.subr.bf16.mxu0 0
      %10701 = vmatpush2.bf16.msra.mxu0 0
      %10702 = vmatprep.subr.bf16.mxu0 0
      %10703 = vmatpush2.bf16.msra.mxu0 0
      %10704 = vmatprep.subr.bf16.mxu0 0
      %10705 = vmatpush2.bf16.msra.mxu0 0
      %10706 = vmatprep.subr.bf16.mxu0 0
      %10707 = vmatpush2.bf16.msra.mxu0 0
      %10708 = vmatprep.subr.bf16.mxu0 0
      %10709 = vmatpush2.bf16.msra.mxu0 0
      %10710 = vmatprep.subr.bf16.mxu0 0
      %10711 = vmatpush2.bf16.msra.mxu0 0
      %10712 = vmatprep.mubr.bf16.mxu0 0
      %10713 = vmatmul.mubr.bf16.gmra.mxu0 %v10678
      %v10714 = vpop.f32.mrf.mxu0
      %v10715 = vadd.f32 %v10670, %v10714
      %v10716 = vpop.f32.mrf.mxu0
      %v10717 = vpop.f32.mrf.mxu0
      %v10718 = vpop.f32.mrf.mxu0
      %10719 = vdwg.mxu0
      %v10720 = vmul.f32 %v10715, 0.5
      %v10721 = vmul.f32 %v10715, 0.70710677
      %v10722 = vand.u32 2147483647, %v10721
      %v10723 = vmul.f32 %v10722, 0.3275911
      %v10724 = vadd.f32 %v10723, 1.0
      %v10725 = vrcp.pop %v10724
      %v10726 = vmul.f32 1.0, %v10725
      %v10727 = vmul.f32 %v10726, 1.0614054
      %v10728 = vadd.f32 %v10727, -1.4531521
      %v10729 = vmul.f32 %v10728, %v10726
      %v10730 = vadd.f32 %v10729, 1.4214138
      %v10731 = vmul.f32 %v10730, %v10726
      %v10732 = vadd.f32 %v10731, -0.28449672
      %v10733 = vmul.f32 %v10732, %v10726
      %v10734 = vadd.f32 %v10733, 0.2548296
      %v10735 = vmul.f32 %v10734, %v10726
      %v10736 = vsub.f32 0.0, %v10722
      %v10737 = vmul.f32 %v10736, %v10722
      %v10738 = vmul.f32 %v10737, 1.442695
      %v10739 = vpow.pop %v10738
      %v10740 = vmul.f32 %v10735, %v10739
      %v10741 = vsub.f32 1.0, %v10740
      %vm10742 = vcmp.ge.f32.partialorder %v10721, 0.0
      %v10743 = vsub.f32 0.0, %v10741
      %v10744 = vsel %vm10742, %v10741, %v10743
      %v10745 = vadd.f32 %v10744, 1.0
      %v10746 = vmul.f32 %v10720, %v10745
      %v10747 = vld [vmem:[%s2 + $0x20] sm:$0x1]
      %v10748 = vpack.c.bf16 %v10746, %v10746
      %v10749 = vlaneseq
      %v10750 = vshrl.u32 %v10749, 7
      %v10751 = vsub.s32 0, %v10750
      %v10752 = vrot.slane %v10747, %v10751
      %10753 = vrot.lane.b32.xlu0 %v8278, 32
      %v10754 = vpop.permute.xlu0 %10753
      %10755 = vrot.lane.b32.xlu0 %v8279, 32
      %v10756 = vpop.permute.xlu0 %10755
      %v10760 = vsel %vm431, %v10748, 0
      %10762 = vmatprep.subr.bf16.mxu0 0
      %10763 = vmatpush1.bf16.msra.mxu0 0
      %10764 = vmatprep.subr.bf16.mxu0 0
      %10765 = vmatpush1.bf16.msra.mxu0 0
      %10766 = vmatprep.subr.bf16.mxu0 0
      %10767 = vmatpush1.bf16.msra.mxu0 0
      %10768 = vmatprep.subr.bf16.mxu0 0
      %10769 = vmatpush1.bf16.msra.mxu0 0
      %10770 = vmatprep.subr.bf16.mxu0 0
      %10771 = vmatpush1.bf16.msra.mxu0 0
      %10772 = vmatprep.subr.bf16.mxu0 0
      %10773 = vmatpush1.bf16.msra.mxu0 0
      %10774 = vmatprep.subr.bf16.mxu0 0
      %10775 = vmatpush1.bf16.msra.mxu0 %v10756
      %10776 = vmatprep.subr.bf16.mxu0 0
      %10777 = vmatpush1.bf16.msra.mxu0 %v10754
      %10778 = vmatprep.subr.bf16.mxu0 0
      %10779 = vmatpush2.bf16.msra.mxu0 0
      %10780 = vmatprep.subr.bf16.mxu0 0
      %10781 = vmatpush2.bf16.msra.mxu0 0
      %10782 = vmatprep.subr.bf16.mxu0 0
      %10783 = vmatpush2.bf16.msra.mxu0 0
      %10784 = vmatprep.subr.bf16.mxu0 0
      %10785 = vmatpush2.bf16.msra.mxu0 0
      %10786 = vmatprep.subr.bf16.mxu0 0
      %10787 = vmatpush2.bf16.msra.mxu0 0
      %10788 = vmatprep.subr.bf16.mxu0 0
      %10789 = vmatpush2.bf16.msra.mxu0 0
      %10790 = vmatprep.subr.bf16.mxu0 0
      %10791 = vmatpush2.bf16.msra.mxu0 0
      %10792 = vmatprep.subr.bf16.mxu0 0
      %10793 = vmatpush2.bf16.msra.mxu0 0
      %10794 = vmatprep.mubr.bf16.mxu0 0
      %10795 = vmatmul.mubr.bf16.gmra.mxu0 %v10760
      %v10796 = vpop.f32.mrf.mxu0
      %v10797 = vadd.f32 %v10752, %v10796
      %v10798 = vpop.f32.mrf.mxu0
      %v10799 = vpop.f32.mrf.mxu0
      %v10800 = vpop.f32.mrf.mxu0
      %10801 = vdwg.mxu0
      %v10802 = vmul.f32 %v10797, 0.5
      %v10803 = vmul.f32 %v10797, 0.70710677
      %v10804 = vand.u32 2147483647, %v10803
      %v10805 = vmul.f32 %v10804, 0.3275911
      %v10806 = vadd.f32 %v10805, 1.0
      %v10807 = vrcp.pop %v10806
      %v10808 = vmul.f32 1.0, %v10807
      %v10809 = vmul.f32 %v10808, 1.0614054
      %v10810 = vadd.f32 %v10809, -1.4531521
      %v10811 = vmul.f32 %v10810, %v10808
      %v10812 = vadd.f32 %v10811, 1.4214138
      %v10813 = vmul.f32 %v10812, %v10808
      %v10814 = vadd.f32 %v10813, -0.28449672
      %v10815 = vmul.f32 %v10814, %v10808
      %v10816 = vadd.f32 %v10815, 0.2548296
      %v10817 = vmul.f32 %v10816, %v10808
      %v10818 = vsub.f32 0.0, %v10804
      %v10819 = vmul.f32 %v10818, %v10804
      %v10820 = vmul.f32 %v10819, 1.442695
      %v10821 = vpow.pop %v10820
      %v10822 = vmul.f32 %v10817, %v10821
      %v10823 = vsub.f32 1.0, %v10822
      %vm10824 = vcmp.ge.f32.partialorder %v10803, 0.0
      %v10825 = vsub.f32 0.0, %v10823
      %v10826 = vsel %vm10824, %v10823, %v10825
      %v10827 = vadd.f32 %v10826, 1.0
      %v10828 = vmul.f32 %v10802, %v10827
      %v10829 = vld [vmem:[%s2 + $0x21] sm:$0x1]
      %v10830 = vpack.c.bf16 %v10828, %v10828
      %v10831 = vlaneseq
      %v10832 = vshrl.u32 %v10831, 7
      %v10833 = vsub.s32 0, %v10832
      %v10834 = vrot.slane %v10829, %v10833
      %10835 = vrot.lane.b32.xlu0 %v326, 96
      %v10836 = vpop.permute.xlu0 %10835
      %v10839 = vsel %vm328, %v10830, 0
      %10841 = vmatprep.subr.bf16.mxu0 0
      %10842 = vmatpush1.bf16.msra.mxu0 0
      %10843 = vmatprep.subr.bf16.mxu0 0
      %10844 = vmatpush1.bf16.msra.mxu0 0
      %10845 = vmatprep.subr.bf16.mxu0 0
      %10846 = vmatpush1.bf16.msra.mxu0 0
      %10847 = vmatprep.subr.bf16.mxu0 0
      %10848 = vmatpush1.bf16.msra.mxu0 0
      %10849 = vmatprep.subr.bf16.mxu0 0
      %10850 = vmatpush1.bf16.msra.mxu0 0
      %10851 = vmatprep.subr.bf16.mxu0 0
      %10852 = vmatpush1.bf16.msra.mxu0 0
      %10853 = vmatprep.subr.bf16.mxu0 0
      %10854 = vmatpush1.bf16.msra.mxu0 0
      %10855 = vmatprep.subr.bf16.mxu0 0
      %10856 = vmatpush1.bf16.msra.mxu0 %v10836
      %10857 = vmatprep.subr.bf16.mxu0 0
      %10858 = vmatpush2.bf16.msra.mxu0 0
      %10859 = vmatprep.subr.bf16.mxu0 0
      %10860 = vmatpush2.bf16.msra.mxu0 0
      %10861 = vmatprep.subr.bf16.mxu0 0
      %10862 = vmatpush2.bf16.msra.mxu0 0
      %10863 = vmatprep.subr.bf16.mxu0 0
      %10864 = vmatpush2.bf16.msra.mxu0 0
      %10865 = vmatprep.subr.bf16.mxu0 0
      %10866 = vmatpush2.bf16.msra.mxu0 0
      %10867 = vmatprep.subr.bf16.mxu0 0
      %10868 = vmatpush2.bf16.msra.mxu0 0
      %10869 = vmatprep.subr.bf16.mxu0 0
      %10870 = vmatpush2.bf16.msra.mxu0 0
      %10871 = vmatprep.subr.bf16.mxu0 0
      %10872 = vmatpush2.bf16.msra.mxu0 0
      %10873 = vmatprep.mubr.bf16.mxu0 0
      %10874 = vmatmul.mubr.bf16.gmra.mxu0 %v10839
      %v10875 = vpop.f32.mrf.mxu0
      %v10876 = vadd.f32 %v10834, %v10875
      %v10877 = vpop.f32.mrf.mxu0
      %v10878 = vpop.f32.mrf.mxu0
      %v10879 = vpop.f32.mrf.mxu0
      %10880 = vdwg.mxu0
      %vm10881 = vcmask 7168
      %10882 = vst.msk [vmem:[%s278] sm:$0xff] %vm10881, %v10876
      %p10883 = scmp.lt.s32.totalorder %s18, 1
      %s10884 = scalar_select %p10883, %s18, 1
      %s10885 = smul.addr %s10884, 8
      %s10886 = scalar_lea.vmem %s7, %s10885
      // Predicated region
      $region49: #{forward.1} parent=47 // pred_check
        %p10887 = pneg %p188
      $region50: #{forward.1} parent=47 // pred_check_branch
        %10889 = sbr.rel (%p10887) target = $region52
      $region51: #{forward.1} parent=47 // pred_region
        _
      $region52: #{forward.1} parent=47 // pred_fallthru
        _
    $region48: #{forward.1} parent=5 // pred_fallthru
      _
    %p10890 = scmp.le.s32.totalorder 2, %s13
    // Predicated region
    $region53: #{forward.1} parent=5 // pred_check
      %p10891 = pneg %p10890
    $region54: #{forward.1} parent=5 // pred_check_branch
      %10893 = sbr.rel (%p10891) target = $region56
    $region55: #{forward.1} parent=5 // pred_region
      %s10894 = ssub.s32 %s13, 2
      // Predicated region
      $region57: #{forward.1} parent=55 // pred_check
        %p10895 = pneg %p194
      $region58: #{forward.1} parent=55 // pred_check_branch
        %10897 = sbr.rel (%p10895) target = $region60
      $region59: #{forward.1} parent=55 // pred_region
        %p10898 = scmp.lt.s32.totalorder %s19, 1
        %s10899 = scalar_select %p10898, %s19, 1
        %s10900 = smul.addr %s10899, 8
        %s10901 = scalar_lea.vmem %s7, %s10900
      $region60: #{forward.1} parent=55 // pred_fallthru
        _
    $region56: #{forward.1} parent=5 // pred_fallthru
      _
  $region6: #{forward.1} parent=0 // loop_footer
    %s17 = sadd.s32 1, %s13
  $region7: #{forward.1} parent=0 // loop_footer_branch
    %12 = sbr.rel target = $region3
  $region8: #{forward.1} parent=0 // loop_exit
    _

</llo_original>
